<compile_context>
chip_gen: v6e
topology: v6e:2x2x1
jax: 0.10.0
libtpu: 0.0.40
codegen_flags: <defaults>
</compile_context>

<pallas_src>
import functools

import jax
import jax.numpy as jnp
from jax.experimental import pallas as pl
from jax.experimental.pallas import tpu as pltpu


# ---------------------------------------------------------------------------
# Pallas kernel: fused (patches @ W_folded) + bias -> activation
# ---------------------------------------------------------------------------
def _fused_conv_kernel(p_ref, w_ref, b_ref, o_ref, *, act, neg_slope):
    # bf16 x bf16 -> f32 accumulate on the MXU.
    acc = jnp.dot(p_ref[...], w_ref[...], preferred_element_type=jnp.float32)
    y = acc + b_ref[...]  # (tile_m, tile_n) + (1, tile_n), f32 epilogue
    if act == "lrelu":
        y = jnp.where(y >= 0, y, neg_slope * y)
    else:  # "sigmoid"
        y = jax.nn.sigmoid(y)
    o_ref[...] = y.astype(o_ref.dtype)


def _round_up(x, m):
    return (x + m - 1) // m * m


def _choose_tiles(M, N):
    """Pick (tile_m, tile_n) for an (M, K) @ (K, N) fused conv matmul."""
    # N tile: keep lane-dense 128-wide blocks when N allows (unmasked vst);
    # for N < 128 the full extent is the only legal (and sensible) choice.
    if N > 128 and N % 128 == 0:
        tile_n = 128
    else:
        tile_n = N
    n_tiles_n = N // tile_n

    # M tile: multiple of 16 (bf16 sublane packing).  Aim for >= 2 grid
    # programs overall so both TensorCores (v7x megacore) get work and the
    # next tile's DMA can pipeline behind compute; cap at 512 rows.
    if M <= 16:
        tile_m = 16
    elif n_tiles_n >= 2:
        tile_m = min(512, _round_up(M, 16))
    else:
        tile_m = min(512, _round_up(-(-M // 2), 16))
    return tile_m, tile_n


def fused_conv_matmul(patches, w2d, bias, act, out_dtype):
    """patches: (M, K), w2d: (K, N), bias: (N,). Returns (M, N) in out_dtype."""
    M, K = patches.shape
    _, N = w2d.shape

    tile_m, tile_n = _choose_tiles(M, N)
    Mp = _round_up(M, tile_m)
    if Mp != M:
        patches = jnp.pad(patches, ((0, Mp - M), (0, 0)))

    p = patches.astype(jnp.bfloat16)
    w = w2d.astype(jnp.bfloat16)
    b = bias.reshape(1, N).astype(jnp.float32)

    kernel = functools.partial(_fused_conv_kernel, act=act, neg_slope=0.2)
    out = pl.pallas_call(
        kernel,
        out_shape=jax.ShapeDtypeStruct((Mp, N), out_dtype),
        grid=(Mp // tile_m, N // tile_n),
        in_specs=[
            pl.BlockSpec((tile_m, K), lambda i, j: (i, 0)),   # patches tile
            pl.BlockSpec((K, tile_n), lambda i, j: (0, j)),   # weight slab
            pl.BlockSpec((1, tile_n), lambda i, j: (0, j)),   # folded bias
        ],
        out_specs=pl.BlockSpec((tile_m, tile_n), lambda i, j: (i, j)),
        compiler_params=pltpu.CompilerParams(
            dimension_semantics=("parallel", "parallel"),
        ),
    )(p, w, b)

    if Mp != M:
        out = out[:M]
    return out


# ---------------------------------------------------------------------------
# Glue: im2col for 3x3x3 conv, padding=1, given strides (NDHWC layout)
# ---------------------------------------------------------------------------
def im2col3d(x, strides):
    """x: (N, D, H, W, C) -> patches (N*Do*Ho*Wo, 27*C), plus output dims."""
    n, d, h, w, c = x.shape
    sd, sh, sw = strides
    xp = jnp.pad(x, ((0, 0), (1, 1), (1, 1), (1, 1), (0, 0)))
    do = (d + 2 - 3) // sd + 1
    ho = (h + 2 - 3) // sh + 1
    wo = (w + 2 - 3) // sw + 1
    cols = []
    for kd in range(3):
        for kh in range(3):
            for kw in range(3):
                sl = xp[
                    :,
                    kd : kd + sd * (do - 1) + 1 : sd,
                    kh : kh + sh * (ho - 1) + 1 : sh,
                    kw : kw + sw * (wo - 1) + 1 : sw,
                    :,
                ]
                cols.append(sl)
    patches = jnp.concatenate(cols, axis=-1)  # (N, Do, Ho, Wo, 27*C), tap-major
    return patches.reshape(n * do * ho * wo, 27 * c), (n, do, ho, wo)


def weight_to_2d(w):
    """w: (out_c, in_c, 3, 3, 3) -> (27*in_c, out_c), matching im2col K order."""
    return jnp.transpose(w, (2, 3, 4, 1, 0)).reshape(-1, w.shape[0])


# ---------------------------------------------------------------------------
# Parameter init (Xavier-normal conv weights, zero bias, identity-init BN)
# ---------------------------------------------------------------------------
def xavier_normal(key, out_c, in_c):
    fan_in = in_c * 27
    fan_out = out_c * 27
    std = (2.0 / (fan_in + fan_out)) ** 0.5
    return std * jax.random.normal(key, (out_c, in_c, 3, 3, 3), dtype=jnp.float32)


def init_params(key):
    ks = jax.random.split(key, 4)
    layers = [(2, 64), (64, 128), (128, 256), (256, 1)]
    params = []
    for k, (cin, cout) in zip(ks, layers):
        w = xavier_normal(k, cout, cin)
        b = jnp.zeros((cout,), jnp.float32)
        params.append((w, b))
    return params


# ---------------------------------------------------------------------------
# Forward pass
# ---------------------------------------------------------------------------
BN_EPS = 1e-5


def discriminator_forward(x, y, params):
    # x, y: (N, 1, D, H, W) NCDHW, concatenated on channels -> 2 channels.
    h = jnp.concatenate([x, y], axis=1)          # (N, 2, D, H, W)
    h = jnp.transpose(h, (0, 2, 3, 4, 1))        # NDHWC
    h = h.astype(jnp.bfloat16)                   # bf16 activations end-to-end

    strides = [(2, 2, 2), (2, 2, 2), (2, 2, 2), (4, 4, 1)]

    # BatchNorm eval fold (identity running stats): scale = 1/sqrt(var+eps).
    bn_scale_const = 1.0 / jnp.sqrt(1.0 + BN_EPS)

    for li in range(3):
        w, b = params[li]
        cout = w.shape[0]
        patches, (n, do, ho, wo) = im2col3d(h, strides[li])
        # Fold BN scale into weight columns and conv bias (f32, once).
        w2d = weight_to_2d(w) * bn_scale_const
        bias = b * bn_scale_const
        out2d = fused_conv_matmul(patches, w2d, bias, act="lrelu",
                                  out_dtype=jnp.bfloat16)
        # Dropout(0.2) is identity in eval mode.
        h = out2d.reshape(n, do, ho, wo, cout)

    # Final conv: bias + sigmoid (no BN), stride (4, 4, 1), out channels = 1.
    w, b = params[3]
    patches, (n, do, ho, wo) = im2col3d(h, strides[3])
    w2d = weight_to_2d(w)
    out2d = fused_conv_matmul(patches, w2d, b, act="sigmoid",
                              out_dtype=jnp.float32)
    # Out channels == 1, so NDHWC flatten order equals NCDHW flatten order.
    return out2d.reshape(n, do * ho * wo)


# ---------------------------------------------------------------------------
if __name__ == "__main__":
    key = jax.random.PRNGKey(0)
    kx, ky, kp = jax.random.split(key, 3)

    # Small volumes consistent with the conv stack: 16 -> 8 -> 4 -> 2 -> (1,1,2)
    x = jax.random.normal(kx, (2, 1, 16, 16, 16), dtype=jnp.float32)
    y = jax.random.normal(ky, (2, 1, 16, 16, 16), dtype=jnp.float32)
    params = init_params(kp)

    out = jax.jit(discriminator_forward)(x, y, params)
    out = jax.block_until_ready(out)

    assert out.shape == (2, 2), out.shape
    assert bool(jnp.all(jnp.isfinite(out)))
    assert bool(jnp.all((out >= 0.0) & (out <= 1.0)))
    print("KERNEL_OK")
</pallas_src>

<mosaic_0001>
module attributes {stable_mosaic.version = 11 : i64} {
  func.func @_fused_conv_kernel(%arg0: i32, %arg1: i32, %arg2: memref<512x54xbf16, #tpu.memory_space<vmem>>, %arg3: memref<54x64xbf16, #tpu.memory_space<vmem>>, %arg4: memref<1x64xf32, #tpu.memory_space<vmem>>, %arg5: memref<512x64xbf16, #tpu.memory_space<vmem>>) attributes {dimension_semantics = [#tpu.dimension_semantics<parallel>, #tpu.dimension_semantics<parallel>], iteration_bounds = array<i64: 2, 1>, scalar_prefetch = 0 : i64, scratch_operands = 0 : i64, tpu.core_type = #tpu.core_type<tc>, window_params = [{transform_indices = @transform_0, window_bounds = array<i64: 512, 54>}, {transform_indices = @transform_1, window_bounds = array<i64: 54, 64>}, {transform_indices = @transform_2, window_bounds = array<i64: 1, 64>}, {transform_indices = @transform_3, window_bounds = array<i64: 512, 64>}]} {
    %c0 = arith.constant 0 : index
    %c0_0 = arith.constant 0 : index
    %0 = vector.load %arg2[%c0, %c0_0] : memref<512x54xbf16, #tpu.memory_space<vmem>>, vector<512x54xbf16>
    %c0_1 = arith.constant 0 : index
    %c0_2 = arith.constant 0 : index
    %1 = vector.load %arg3[%c0_1, %c0_2] : memref<54x64xbf16, #tpu.memory_space<vmem>>, vector<54x64xbf16>
    %cst = arith.constant dense<0.000000e+00> : vector<512x64xf32>
    %2 = tpu.matmul %0, %1, %cst {dimension_numbers = #tpu.dot_dimension_numbers<[1], [0], [0], [1], [0, 0, 1, 1], [], []>} : vector<512x54xbf16>, vector<54x64xbf16>, vector<512x64xf32> -> vector<512x64xf32>
    %c0_3 = arith.constant 0 : index
    %c0_4 = arith.constant 0 : index
    %3 = vector.load %arg4[%c0_3, %c0_4] : memref<1x64xf32, #tpu.memory_space<vmem>>, vector<1x64xf32>
    %4 = vector.broadcast %3 : vector<1x64xf32> to vector<512x64xf32>
    %5 = arith.addf %2, %4 : vector<512x64xf32>
    %cst_5 = arith.constant 0.000000e+00 : f32
    %6 = vector.broadcast %cst_5 : f32 to vector<512x64xf32>
    %7 = arith.cmpf oge, %5, %6 : vector<512x64xf32>
    %cst_6 = arith.constant 2.000000e-01 : f32
    %8 = vector.broadcast %cst_6 : f32 to vector<512x64xf32>
    %9 = arith.mulf %8, %5 : vector<512x64xf32>
    %10 = arith.select %7, %5, %9 : vector<512x64xi1>, vector<512x64xf32>
    %11 = arith.truncf %10 : vector<512x64xf32> to vector<512x64xbf16>
    %c0_7 = arith.constant 0 : index
    %c0_8 = arith.constant 0 : index
    %12 = vector.load %arg5[%c0_7, %c0_8] : memref<512x64xbf16, #tpu.memory_space<vmem>>, vector<512x64xbf16>
    tpu.vector_store %arg5[%c0_7, %c0_8], %11 {strides = array<i32>} : memref<512x64xbf16, #tpu.memory_space<vmem>>, vector<512x64xbf16>,
    return
  }
  func.func @transform_0(%arg0: i32, %arg1: i32) -> (i32, i32) {
    %c0_i32 = arith.constant 0 : i32
    %c0_i32_0 = arith.constant 0 : i32
    return %arg0, %c0_i32 : i32, i32
  }
  func.func @transform_1(%arg0: i32, %arg1: i32) -> (i32, i32) {
    %c0_i32 = arith.constant 0 : i32
    %c0_i32_0 = arith.constant 0 : i32
    return %c0_i32, %arg1 : i32, i32
  }
  func.func @transform_2(%arg0: i32, %arg1: i32) -> (i32, i32) {
    %c0_i32 = arith.constant 0 : i32
    %c0_i32_0 = arith.constant 0 : i32
    return %c0_i32, %arg1 : i32, i32
  }
  func.func @transform_3(%arg0: i32, %arg1: i32) -> (i32, i32) {
    %c0_i32 = arith.constant 0 : i32
    return %arg0, %arg1 : i32, i32
  }
}

module attributes {stable_mosaic.version = 11 : i64} {
  func.func @_fused_conv_kernel(%arg0: i32, %arg1: i32, %arg2: memref<64x1728xbf16, #tpu.memory_space<vmem>>, %arg3: memref<1728x128xbf16, #tpu.memory_space<vmem>>, %arg4: memref<1x128xf32, #tpu.memory_space<vmem>>, %arg5: memref<64x128xbf16, #tpu.memory_space<vmem>>) attributes {dimension_semantics = [#tpu.dimension_semantics<parallel>, #tpu.dimension_semantics<parallel>], iteration_bounds = array<i64: 2, 1>, scalar_prefetch = 0 : i64, scratch_operands = 0 : i64, tpu.core_type = #tpu.core_type<tc>, window_params = [{transform_indices = @transform_0, window_bounds = array<i64: 64, 1728>}, {transform_indices = @transform_1, window_bounds = array<i64: 1728, 128>}, {transform_indices = @transform_2, window_bounds = array<i64: 1, 128>}, {transform_indices = @transform_3, window_bounds = array<i64: 64, 128>}]} {
    %c0 = arith.constant 0 : index
    %c0_0 = arith.constant 0 : index
    %0 = vector.load %arg2[%c0, %c0_0] : memref<64x1728xbf16, #tpu.memory_space<vmem>>, vector<64x1728xbf16>
    %c0_1 = arith.constant 0 : index
    %c0_2 = arith.constant 0 : index
    %1 = vector.load %arg3[%c0_1, %c0_2] : memref<1728x128xbf16, #tpu.memory_space<vmem>>, vector<1728x128xbf16>
    %cst = arith.constant dense<0.000000e+00> : vector<64x128xf32>
    %2 = tpu.matmul %0, %1, %cst {dimension_numbers = #tpu.dot_dimension_numbers<[1], [0], [0], [1], [0, 0, 1, 1], [], []>} : vector<64x1728xbf16>, vector<1728x128xbf16>, vector<64x128xf32> -> vector<64x128xf32>
    %c0_3 = arith.constant 0 : index
    %c0_4 = arith.constant 0 : index
    %3 = vector.load %arg4[%c0_3, %c0_4] : memref<1x128xf32, #tpu.memory_space<vmem>>, vector<1x128xf32>
    %4 = vector.broadcast %3 : vector<1x128xf32> to vector<64x128xf32>
    %5 = arith.addf %2, %4 : vector<64x128xf32>
    %cst_5 = arith.constant 0.000000e+00 : f32
    %6 = vector.broadcast %cst_5 : f32 to vector<64x128xf32>
    %7 = arith.cmpf oge, %5, %6 : vector<64x128xf32>
    %cst_6 = arith.constant 2.000000e-01 : f32
    %8 = vector.broadcast %cst_6 : f32 to vector<64x128xf32>
    %9 = arith.mulf %8, %5 : vector<64x128xf32>
    %10 = arith.select %7, %5, %9 : vector<64x128xi1>, vector<64x128xf32>
    %11 = arith.truncf %10 : vector<64x128xf32> to vector<64x128xbf16>
    %c0_7 = arith.constant 0 : index
    %c0_8 = arith.constant 0 : index
    %12 = vector.load %arg5[%c0_7, %c0_8] : memref<64x128xbf16, #tpu.memory_space<vmem>>, vector<64x128xbf16>
    tpu.vector_store %arg5[%c0_7, %c0_8], %11 {strides = array<i32>} : memref<64x128xbf16, #tpu.memory_space<vmem>>, vector<64x128xbf16>,
    return
  }
  func.func @transform_0(%arg0: i32, %arg1: i32) -> (i32, i32) {
    %c0_i32 = arith.constant 0 : i32
    %c0_i32_0 = arith.constant 0 : i32
    return %arg0, %c0_i32 : i32, i32
  }
  func.func @transform_1(%arg0: i32, %arg1: i32) -> (i32, i32) {
    %c0_i32 = arith.constant 0 : i32
    %c0_i32_0 = arith.constant 0 : i32
    return %c0_i32, %arg1 : i32, i32
  }
  func.func @transform_2(%arg0: i32, %arg1: i32) -> (i32, i32) {
    %c0_i32 = arith.constant 0 : i32
    %c0_i32_0 = arith.constant 0 : i32
    return %c0_i32, %arg1 : i32, i32
  }
  func.func @transform_3(%arg0: i32, %arg1: i32) -> (i32, i32) {
    %c0_i32 = arith.constant 0 : i32
    return %arg0, %arg1 : i32, i32
  }
}

module attributes {stable_mosaic.version = 11 : i64} {
  func.func @_fused_conv_kernel(%arg0: i32, %arg1: i32, %arg2: memref<16x3456xbf16, #tpu.memory_space<vmem>>, %arg3: memref<3456x128xbf16, #tpu.memory_space<vmem>>, %arg4: memref<1x128xf32, #tpu.memory_space<vmem>>, %arg5: memref<16x128xbf16, #tpu.memory_space<vmem>>) attributes {dimension_semantics = [#tpu.dimension_semantics<parallel>, #tpu.dimension_semantics<parallel>], iteration_bounds = array<i64: 1, 2>, scalar_prefetch = 0 : i64, scratch_operands = 0 : i64, tpu.core_type = #tpu.core_type<tc>, window_params = [{transform_indices = @transform_0, window_bounds = array<i64: 16, 3456>}, {transform_indices = @transform_1, window_bounds = array<i64: 3456, 128>}, {transform_indices = @transform_2, window_bounds = array<i64: 1, 128>}, {transform_indices = @transform_3, window_bounds = array<i64: 16, 128>}]} {
    %c0 = arith.constant 0 : index
    %c0_0 = arith.constant 0 : index
    %0 = vector.load %arg2[%c0, %c0_0] : memref<16x3456xbf16, #tpu.memory_space<vmem>>, vector<16x3456xbf16>
    %c0_1 = arith.constant 0 : index
    %c0_2 = arith.constant 0 : index
    %1 = vector.load %arg3[%c0_1, %c0_2] : memref<3456x128xbf16, #tpu.memory_space<vmem>>, vector<3456x128xbf16>
    %cst = arith.constant dense<0.000000e+00> : vector<16x128xf32>
    %2 = tpu.matmul %0, %1, %cst {dimension_numbers = #tpu.dot_dimension_numbers<[1], [0], [0], [1], [0, 0, 1, 1], [], []>} : vector<16x3456xbf16>, vector<3456x128xbf16>, vector<16x128xf32> -> vector<16x128xf32>
    %c0_3 = arith.constant 0 : index
    %c0_4 = arith.constant 0 : index
    %3 = vector.load %arg4[%c0_3, %c0_4] : memref<1x128xf32, #tpu.memory_space<vmem>>, vector<1x128xf32>
    %4 = vector.broadcast %3 : vector<1x128xf32> to vector<16x128xf32>
    %5 = arith.addf %2, %4 : vector<16x128xf32>
    %cst_5 = arith.constant 0.000000e+00 : f32
    %6 = vector.broadcast %cst_5 : f32 to vector<16x128xf32>
    %7 = arith.cmpf oge, %5, %6 : vector<16x128xf32>
    %cst_6 = arith.constant 2.000000e-01 : f32
    %8 = vector.broadcast %cst_6 : f32 to vector<16x128xf32>
    %9 = arith.mulf %8, %5 : vector<16x128xf32>
    %10 = arith.select %7, %5, %9 : vector<16x128xi1>, vector<16x128xf32>
    %11 = arith.truncf %10 : vector<16x128xf32> to vector<16x128xbf16>
    %c0_7 = arith.constant 0 : index
    %c0_8 = arith.constant 0 : index
    %12 = vector.load %arg5[%c0_7, %c0_8] : memref<16x128xbf16, #tpu.memory_space<vmem>>, vector<16x128xbf16>
    tpu.vector_store %arg5[%c0_7, %c0_8], %11 {strides = array<i32>} : memref<16x128xbf16, #tpu.memory_space<vmem>>, vector<16x128xbf16>,
    return
  }
  func.func @transform_0(%arg0: i32, %arg1: i32) -> (i32, i32) {
    %c0_i32 = arith.constant 0 : i32
    %c0_i32_0 = arith.constant 0 : i32
    return %arg0, %c0_i32 : i32, i32
  }
  func.func @transform_1(%arg0: i32, %arg1: i32) -> (i32, i32) {
    %c0_i32 = arith.constant 0 : i32
    %c0_i32_0 = arith.constant 0 : i32
    return %c0_i32, %arg1 : i32, i32
  }
  func.func @transform_2(%arg0: i32, %arg1: i32) -> (i32, i32) {
    %c0_i32 = arith.constant 0 : i32
    %c0_i32_0 = arith.constant 0 : i32
    return %c0_i32, %arg1 : i32, i32
  }
  func.func @transform_3(%arg0: i32, %arg1: i32) -> (i32, i32) {
    %c0_i32 = arith.constant 0 : i32
    return %arg0, %arg1 : i32, i32
  }
}

module attributes {stable_mosaic.version = 11 : i64} {
  func.func @_fused_conv_kernel(%arg0: i32, %arg1: i32, %arg2: memref<16x6912xbf16, #tpu.memory_space<vmem>>, %arg3: memref<6912x1xbf16, #tpu.memory_space<vmem>>, %arg4: memref<1x1xf32, #tpu.memory_space<vmem>>, %arg5: memref<16x1xf32, #tpu.memory_space<vmem>>) attributes {dimension_semantics = [#tpu.dimension_semantics<parallel>, #tpu.dimension_semantics<parallel>], iteration_bounds = array<i64: 1, 1>, scalar_prefetch = 0 : i64, scratch_operands = 0 : i64, tpu.core_type = #tpu.core_type<tc>, window_params = [{transform_indices = @transform_0, window_bounds = array<i64: 16, 6912>}, {transform_indices = @transform_1, window_bounds = array<i64: 6912, 1>}, {transform_indices = @transform_2, window_bounds = array<i64: 1, 1>}, {transform_indices = @transform_3, window_bounds = array<i64: 16, 1>}]} {
    %c0 = arith.constant 0 : index
    %c0_0 = arith.constant 0 : index
    %0 = vector.load %arg2[%c0, %c0_0] : memref<16x6912xbf16, #tpu.memory_space<vmem>>, vector<16x6912xbf16>
    %c0_1 = arith.constant 0 : index
    %c0_2 = arith.constant 0 : index
    %1 = vector.load %arg3[%c0_1, %c0_2] : memref<6912x1xbf16, #tpu.memory_space<vmem>>, vector<6912x1xbf16>
    %cst = arith.constant dense<0.000000e+00> : vector<16x1xf32>
    %2 = tpu.matmul %0, %1, %cst {dimension_numbers = #tpu.dot_dimension_numbers<[1], [0], [0], [1], [0, 0, 1, 1], [], []>} : vector<16x6912xbf16>, vector<6912x1xbf16>, vector<16x1xf32> -> vector<16x1xf32>
    %c0_3 = arith.constant 0 : index
    %c0_4 = arith.constant 0 : index
    %3 = vector.load %arg4[%c0_3, %c0_4] : memref<1x1xf32, #tpu.memory_space<vmem>>, vector<1x1xf32>
    %4 = vector.broadcast %3 : vector<1x1xf32> to vector<16x1xf32>
    %5 = arith.addf %2, %4 : vector<16x1xf32>
    %6 = arith.negf %5 : vector<16x1xf32>
    %7 = math.exp %6 : vector<16x1xf32>
    %cst_5 = arith.constant 1.000000e+00 : f32
    %8 = vector.broadcast %cst_5 : f32 to vector<16x1xf32>
    %9 = arith.addf %8, %7 : vector<16x1xf32>
    %10 = arith.divf %8, %9 : vector<16x1xf32>
    %c0_6 = arith.constant 0 : index
    %c0_7 = arith.constant 0 : index
    %11 = vector.load %arg5[%c0_6, %c0_7] : memref<16x1xf32, #tpu.memory_space<vmem>>, vector<16x1xf32>
    tpu.vector_store %arg5[%c0_6, %c0_7], %10 {strides = array<i32>} : memref<16x1xf32, #tpu.memory_space<vmem>>, vector<16x1xf32>,
    return
  }
  func.func @transform_0(%arg0: i32, %arg1: i32) -> (i32, i32) {
    %c0_i32 = arith.constant 0 : i32
    %c0_i32_0 = arith.constant 0 : i32
    return %arg0, %c0_i32 : i32, i32
  }
  func.func @transform_1(%arg0: i32, %arg1: i32) -> (i32, i32) {
    %c0_i32 = arith.constant 0 : i32
    %c0_i32_0 = arith.constant 0 : i32
    return %c0_i32, %arg1 : i32, i32
  }
  func.func @transform_2(%arg0: i32, %arg1: i32) -> (i32, i32) {
    %c0_i32 = arith.constant 0 : i32
    %c0_i32_0 = arith.constant 0 : i32
    return %c0_i32, %arg1 : i32, i32
  }
  func.func @transform_3(%arg0: i32, %arg1: i32) -> (i32, i32) {
    %c0_i32 = arith.constant 0 : i32
    return %arg0, %arg1 : i32, i32
  }
}

</mosaic_0001>

<llo_original>
// kernel: discriminator_forward.4
$region0: #{discriminator_forward.4}
  #allocation0 [shape = 'u32[]', space=smem, size = 0x4, offset = 0x4, fixed_abs, tag = 'smem constant byte address 0x4 - core index']
  #allocation1 [shape = 'u32[144,128]{1,0:T(1,128)}', space=vmem, size = 0x12000, scoped, tag = 'internal scratch']
  %s0 = inlined_call_operand.vmem [shape: bf16[1024,54], index: 0, kind: input, shape index: {}]
  %s1 = inlined_call_operand.vmem [shape: bf16[54,64], index: 1, kind: input, shape index: {}]
  %s2 = inlined_call_operand.vmem [shape: f32[1,64], index: 2, kind: input, shape index: {}]
  %s3 = inlined_call_operand.vmem [shape: bf16[1024,64], index: 3, kind: output, shape index: {}]
  %s4 = sld [smem:[#allocation0]]
  $region45: #{discriminator_forward.4} parent=0
    _
  %s6 = ssub.s32 1, %s4
  %s7 = scalar_select 0, %s6, %s4
  loop: start=0, step=1, limit=4
  $region2: #{discriminator_forward.4} parent=0 // loop_pre_header
    _
  $region3: #{discriminator_forward.4} parent=0 // loop_header
    %s9 = sphi 0, %s13
    %p10 = scmp.ge.s32.totalorder %s9, 4
    %s16 = sphi 0, %s28
    %s17 = sphi 0, %s24
    %s18 = sphi 0, %s16
    %s19 = sphi 0, %s17
    %s20 = sphi 0, %s18
    %s21 = sphi 0, %s19
    %s31 = sphi 0, %s33
    %s34 = sphi 0, %s31
    %s35 = sphi 0, %s34
    %s51 = sphi 0, %s35
    %s57 = sphi 0, %s59
    %s60 = sphi 0, %s57
    %s61 = sphi 0, %s60
    %s77 = sphi 0, %s61
    %s83 = sphi 0, %s85
    %s86 = sphi 0, %s83
    %s87 = sphi 0, %s86
    %s103 = sphi 0, %s87
    %s111 = sphi 0, %s113
    %s114 = sphi 0, %s111
    %s115 = sphi 0, %s114
    %s131 = sphi 0, %s115
  $region4: #{discriminator_forward.4} parent=0 // loop_header_branch
    %12 = sbr.rel (%p10) target = $region8
  $region5: #{discriminator_forward.4} parent=0 // loop_body
    %s14 = ssub.s32 %s9, 1
    %s15 = ssub.s32 %s9, 2
    %s22 = sadd.s32 1, %s17
    %p23 = scmp.ge.s32.totalorder %s22, 1
    %s24 = scalar_select %p23, 0, %s22
    %s25 = sadd.s32 1, %s16
    %s26 = scalar_select %p23, %s25, %s16
    %p27 = scmp.ge.s32.totalorder %s26, 2
    %s28 = scalar_select %p27, 0, %s26
    %s29 = ssub.s32 %s16, %s28
    %p30 = scmp.eq.s32.totalorder %s29, 0
    %s32 = sadd.s32 %s31, 1
    %s33 = scalar_select %p30, %s31, %s32
    %p36 = pneg %p30
    %p37 = scmp.eq.s32.totalorder %s9, 1
    %p38 = por %p36, %p37
    %p39 = scmp.ne.s32.totalorder %s31, %s34
    %p40 = scmp.eq.s32.totalorder %s9, 0
    %p41 = por %p39, %p40
    %p42 = scmp.ne.s32.totalorder %s31, %s34
    %p43 = scmp.eq.s32.totalorder %s14, 1
    %p44 = por %p42, %p43
    %p45 = scmp.ne.s32.totalorder %s34, %s35
    %p46 = scmp.eq.s32.totalorder %s14, 0
    %p47 = por %p45, %p46
    %p48 = scmp.ne.s32.totalorder %s34, %s35
    %p49 = scmp.eq.s32.totalorder %s15, 1
    %p50 = por %p48, %p49
    %p52 = scmp.ne.s32.totalorder %s35, %s51
    %p53 = scmp.eq.s32.totalorder %s15, 0
    %p54 = por %p52, %p53
    %s55 = ssub.s32 %s17, %s24
    %p56 = scmp.eq.s32.totalorder %s55, 0
    %s58 = sadd.s32 %s57, 1
    %s59 = scalar_select %p56, %s57, %s58
    %p62 = pneg %p56
    %p63 = scmp.eq.s32.totalorder %s9, 1
    %p64 = por %p62, %p63
    %p65 = scmp.ne.s32.totalorder %s57, %s60
    %p66 = scmp.eq.s32.totalorder %s9, 0
    %p67 = por %p65, %p66
    %p68 = scmp.ne.s32.totalorder %s57, %s60
    %p69 = scmp.eq.s32.totalorder %s14, 1
    %p70 = por %p68, %p69
    %p71 = scmp.ne.s32.totalorder %s60, %s61
    %p72 = scmp.eq.s32.totalorder %s14, 0
    %p73 = por %p71, %p72
    %p74 = scmp.ne.s32.totalorder %s60, %s61
    %p75 = scmp.eq.s32.totalorder %s15, 1
    %p76 = por %p74, %p75
    %p78 = scmp.ne.s32.totalorder %s61, %s77
    %p79 = scmp.eq.s32.totalorder %s15, 0
    %p80 = por %p78, %p79
    %s81 = ssub.s32 %s17, %s24
    %p82 = scmp.eq.s32.totalorder %s81, 0
    %s84 = sadd.s32 %s83, 1
    %s85 = scalar_select %p82, %s83, %s84
    %p88 = pneg %p82
    %p89 = scmp.eq.s32.totalorder %s9, 1
    %p90 = por %p88, %p89
    %p91 = scmp.ne.s32.totalorder %s83, %s86
    %p92 = scmp.eq.s32.totalorder %s9, 0
    %p93 = por %p91, %p92
    %p94 = scmp.ne.s32.totalorder %s83, %s86
    %p95 = scmp.eq.s32.totalorder %s14, 1
    %p96 = por %p94, %p95
    %p97 = scmp.ne.s32.totalorder %s86, %s87
    %p98 = scmp.eq.s32.totalorder %s14, 0
    %p99 = por %p97, %p98
    %p100 = scmp.ne.s32.totalorder %s86, %s87
    %p101 = scmp.eq.s32.totalorder %s15, 1
    %p102 = por %p100, %p101
    %p104 = scmp.ne.s32.totalorder %s87, %s103
    %p105 = scmp.eq.s32.totalorder %s15, 0
    %p106 = por %p104, %p105
    %s107 = ssub.s32 %s16, %s28
    %s108 = ssub.s32 %s17, %s24
    %s109 = sor.u32 %s107, %s108
    %p110 = scmp.eq.s32.totalorder %s109, 0
    %s112 = sadd.s32 %s111, 1
    %s113 = scalar_select %p110, %s111, %s112
    %p116 = pneg %p110
    %p117 = scmp.eq.s32.totalorder %s9, 1
    %p118 = por %p116, %p117
    %p119 = scmp.ne.s32.totalorder %s111, %s114
    %p120 = scmp.eq.s32.totalorder %s9, 0
    %p121 = por %p119, %p120
    %p122 = scmp.ne.s32.totalorder %s111, %s114
    %p123 = scmp.eq.s32.totalorder %s14, 1
    %p124 = por %p122, %p123
    %p125 = scmp.ne.s32.totalorder %s114, %s115
    %p126 = scmp.eq.s32.totalorder %s14, 0
    %p127 = por %p125, %p126
    %p128 = scmp.ne.s32.totalorder %s114, %s115
    %p129 = scmp.eq.s32.totalorder %s15, 1
    %p130 = por %p128, %p129
    %p132 = scmp.ne.s32.totalorder %s115, %s131
    %p133 = scmp.eq.s32.totalorder %s15, 0
    %p134 = por %p132, %p133
    %p135 = scmp.le.s32.totalorder 1, %s9
    %p136 = scmp.lt.s32.totalorder %s9, 3
    %p137 = pnand %p135, %p136
    %p138 = pneg %p137
    // Predicated region
    $region9: #{discriminator_forward.4} parent=5 // pred_check
      _
    $region10: #{discriminator_forward.4} parent=5 // pred_check_branch
      %140 = sbr.rel (%p137) target = $region12
    $region11: #{discriminator_forward.4} parent=5 // pred_region
      %s141 = ssub.s32 %s9, 1
      // Predicated region
      $region13: #{discriminator_forward.4} parent=11 // pred_check
        %p142 = pneg %p73
      $region14: #{discriminator_forward.4} parent=11 // pred_check_branch
        %144 = sbr.rel (%p142) target = $region16
      $region15: #{discriminator_forward.4} parent=11 // pred_region
        %p145 = scmp.lt.s32.totalorder %s19, 0
        %s146 = scalar_select %p145, %s19, 0
        %s147 = smul.addr %s146, 4
        %s148 = scalar_lea.vmem %s1, %s147
      $region16: #{discriminator_forward.4} parent=11 // pred_fallthru
        _
      // Predicated region
      $region17: #{discriminator_forward.4} parent=11 // pred_check
        %p149 = pneg %p99
      $region18: #{discriminator_forward.4} parent=11 // pred_check_branch
        %151 = sbr.rel (%p149) target = $region20
      $region19: #{discriminator_forward.4} parent=11 // pred_region
        %p152 = scmp.lt.s32.totalorder %s19, 0
        %s153 = scalar_select %p152, %s19, 0
        %s154 = scalar_lea.vmem %s2, %s153
      $region20: #{discriminator_forward.4} parent=11 // pred_fallthru
        _
    $region12: #{discriminator_forward.4} parent=5 // pred_fallthru
      _
    %p155 = scmp.lt.s32.totalorder %s9, 2
    // Predicated region
    $region21: #{discriminator_forward.4} parent=5 // pred_check
      %p156 = pneg %p155
    $region22: #{discriminator_forward.4} parent=5 // pred_check_branch
      %158 = sbr.rel (%p156) target = $region24
    $region23: #{discriminator_forward.4} parent=5 // pred_region
      // Predicated region
      $region25: #{discriminator_forward.4} parent=23 // pred_check
        %p159 = pneg %p41
      $region26: #{discriminator_forward.4} parent=23 // pred_check_branch
        %161 = sbr.rel (%p159) target = $region28
      $region27: #{discriminator_forward.4} parent=23 // pred_region
        %s162 = smul.u32 64, %s16
        %p163 = scmp.lt.s32.totalorder %s162, 127
        %s164 = scalar_select %p163, %s162, 127
        %s165 = smul.addr %s164, 4
        %s166 = scalar_lea.vmem %s0, %s165
        %s167 = smul.u32 64, %s16
      $region28: #{discriminator_forward.4} parent=23 // pred_fallthru
        _
    $region24: #{discriminator_forward.4} parent=5 // pred_fallthru
      _
    %p168 = scmp.le.s32.totalorder 1, %s9
    %p169 = scmp.lt.s32.totalorder %s9, 3
    %p170 = pnand %p168, %p169
    %p171 = pneg %p170
    // Predicated region
    $region29: #{discriminator_forward.4} parent=5 // pred_check
      _
    $region30: #{discriminator_forward.4} parent=5 // pred_check_branch
      %173 = sbr.rel (%p170) target = $region32
    $region31: #{discriminator_forward.4} parent=5 // pred_region
      %s174 = ssub.s32 %s9, 1
      %s175 = smul.u32 64, %s18
      %p176 = scmp.lt.s32.totalorder %s175, 127
      %s177 = scalar_select %p176, %s175, 127
      %s178 = smul.addr %s177, 4
      %s179 = scalar_lea.vmem %s0, %s178
      %p180 = pneg %p47
      %p181 = pneg %p44
      %p182 = scmp.lt.s32.totalorder %s19, 0
      %s183 = scalar_select %p182, %s19, 0
      %s184 = smul.addr %s183, 4
      %s185 = scalar_lea.vmem %s1, %s184
      %p186 = pneg %p73
      %p187 = pneg %p70
      %p188 = scmp.lt.s32.totalorder %s19, 0
      %s189 = scalar_select %p188, %s19, 0
      %s190 = scalar_lea.vmem %s2, %s189
      %p191 = pneg %p99
      %p192 = pneg %p96
      %p193 = pneg %p127
      %p194 = pneg %p124
      %s195 = smul.u32 64, %s18
      %p196 = scmp.lt.s32.totalorder %s195, 127
      %s197 = scalar_select %p196, %s195, 127
      %p198 = scmp.lt.s32.totalorder %s19, 0
      %s199 = scalar_select %p198, %s19, 0
      %s200 = sadd.s32 %s199, %s197
      %s201 = smul.addr %s200, 4
      %s202 = scalar_lea.vmem %s3, %s201
      %s203 = smul.u32 64, %s18
      %p204 = scmp.lt.s32.totalorder %s203, 127
      %s205 = scalar_select %p204, %s203, 127
      %s206 = smul.addr %s205, 4
      %s207 = scalar_lea.vmem %s0, %s206
      %s208 = smul.u32 64, %s18
      %p209 = scmp.lt.s32.totalorder %s19, 0
      %s210 = scalar_select %p209, %s19, 0
      %s211 = smul.addr %s210, 4
      %s212 = scalar_lea.vmem %s1, %s211
      %p213 = scmp.lt.s32.totalorder %s19, 0
      %s214 = scalar_select %p213, %s19, 0
      %s215 = scalar_lea.vmem %s2, %s214
      %s216 = smul.u32 64, %s18
      %p217 = scmp.lt.s32.totalorder %s216, 127
      %s218 = scalar_select %p217, %s216, 127
      %p219 = scmp.lt.s32.totalorder %s19, 0
      %s220 = scalar_select %p219, %s19, 0
      %s221 = sadd.s32 %s220, %s218
      %s222 = smul.addr %s221, 4
      %s223 = scalar_lea.vmem %s3, %s222
      %s224 = smul.u32 64, %s18
      %v226 = vld [vmem:[%s207] sm:$0xf]
      %v227 = vld [vmem:[%s207 + $0x4] sm:$0xf]
      %v228 = vld [vmem:[%s207 + $0x8] sm:$0xf]
      %v229 = vld [vmem:[%s207 + $0xc] sm:$0xf]
      %v230 = vld [vmem:[%s207 + $0x10] sm:$0xf]
      %v231 = vld [vmem:[%s207 + $0x14] sm:$0xf]
      %v232 = vld [vmem:[%s207 + $0x18] sm:$0xf]
      %v233 = vld [vmem:[%s207 + $0x1c] sm:$0xf]
      %v234 = vld [vmem:[%s207 + $0x20] sm:$0xf]
      %v235 = vld [vmem:[%s207 + $0x24] sm:$0xf]
      %v236 = vld [vmem:[%s207 + $0x28] sm:$0xf]
      %v237 = vld [vmem:[%s207 + $0x2c] sm:$0xf]
      %v238 = vld [vmem:[%s207 + $0x30] sm:$0xf]
      %v239 = vld [vmem:[%s207 + $0x34] sm:$0xf]
      %v240 = vld [vmem:[%s207 + $0x38] sm:$0xf]
      %v241 = vld [vmem:[%s207 + $0x3c] sm:$0xf]
      %v242 = vld [vmem:[%s207 + $0x40] sm:$0xf]
      %v243 = vld [vmem:[%s207 + $0x44] sm:$0xf]
      %v244 = vld [vmem:[%s207 + $0x48] sm:$0xf]
      %v245 = vld [vmem:[%s207 + $0x4c] sm:$0xf]
      %v246 = vld [vmem:[%s207 + $0x50] sm:$0xf]
      %v247 = vld [vmem:[%s207 + $0x54] sm:$0xf]
      %v248 = vld [vmem:[%s207 + $0x58] sm:$0xf]
      %v249 = vld [vmem:[%s207 + $0x5c] sm:$0xf]
      %v250 = vld [vmem:[%s207 + $0x60] sm:$0xf]
      %v251 = vld [vmem:[%s207 + $0x64] sm:$0xf]
      %v252 = vld [vmem:[%s207 + $0x68] sm:$0xf]
      %v253 = vld [vmem:[%s207 + $0x6c] sm:$0xf]
      %v254 = vld [vmem:[%s207 + $0x70] sm:$0xf]
      %v255 = vld [vmem:[%s207 + $0x74] sm:$0xf]
      %v256 = vld [vmem:[%s207 + $0x78] sm:$0xf]
      %v257 = vld [vmem:[%s207 + $0x7c] sm:$0xf]
      %v258 = vld [vmem:[%s207 + $0x80] sm:$0xf]
      %v259 = vld [vmem:[%s207 + $0x84] sm:$0xf]
      %v260 = vld [vmem:[%s207 + $0x88] sm:$0xf]
      %v261 = vld [vmem:[%s207 + $0x8c] sm:$0xf]
      %v262 = vld [vmem:[%s207 + $0x90] sm:$0xf]
      %v263 = vld [vmem:[%s207 + $0x94] sm:$0xf]
      %v264 = vld [vmem:[%s207 + $0x98] sm:$0xf]
      %v265 = vld [vmem:[%s207 + $0x9c] sm:$0xf]
      %v266 = vld [vmem:[%s207 + $0xa0] sm:$0xf]
      %v267 = vld [vmem:[%s207 + $0xa4] sm:$0xf]
      %v268 = vld [vmem:[%s207 + $0xa8] sm:$0xf]
      %v269 = vld [vmem:[%s207 + $0xac] sm:$0xf]
      %v270 = vld [vmem:[%s207 + $0xb0] sm:$0xf]
      %v271 = vld [vmem:[%s207 + $0xb4] sm:$0xf]
      %v272 = vld [vmem:[%s207 + $0xb8] sm:$0xf]
      %v273 = vld [vmem:[%s207 + $0xbc] sm:$0xf]
      %v274 = vld [vmem:[%s207 + $0xc0] sm:$0xf]
      %v275 = vld [vmem:[%s207 + $0xc4] sm:$0xf]
      %v276 = vld [vmem:[%s207 + $0xc8] sm:$0xf]
      %v277 = vld [vmem:[%s207 + $0xcc] sm:$0xf]
      %v278 = vld [vmem:[%s207 + $0xd0] sm:$0xf]
      %v279 = vld [vmem:[%s207 + $0xd4] sm:$0xf]
      %v280 = vld [vmem:[%s207 + $0xd8] sm:$0xf]
      %v281 = vld [vmem:[%s207 + $0xdc] sm:$0xf]
      %v282 = vld [vmem:[%s207 + $0xe0] sm:$0xf]
      %v283 = vld [vmem:[%s207 + $0xe4] sm:$0xf]
      %v284 = vld [vmem:[%s207 + $0xe8] sm:$0xf]
      %v285 = vld [vmem:[%s207 + $0xec] sm:$0xf]
      %v286 = vld [vmem:[%s207 + $0xf0] sm:$0xf]
      %v287 = vld [vmem:[%s207 + $0xf4] sm:$0xf]
      %v288 = vld [vmem:[%s207 + $0xf8] sm:$0xf]
      %v289 = vld [vmem:[%s207 + $0xfc] sm:$0xf]
      %v290 = vld [vmem:[%s212] sm:$0xf]
      %v291 = vld [vmem:[%s212 + $0x4] sm:$0xf]
      %v292 = vld [vmem:[%s212 + $0x8] sm:$0xf]
      %v293 = vld [vmem:[%s212 + $0xc] sm:$0xf]
      %v294 = vld [vmem:[%s212 + $0x10] sm:$0xf]
      %v295 = vld [vmem:[%s212 + $0x14] sm:$0xf]
      %v296 = vld [vmem:[%s212 + $0x18] sm:$0x7]
      %v297 = vld [vmem:[%s215] sm:$0x1]
      %v299 = vlaneseq
      %v300 = vshrl.u32 %v299, 7
      %v301 = vsub.s32 0, %v300
      %v302 = vrot.slane %v297, %v301
      %v368 = vunpack.c.l.b16 %v226
      %v369 = vunpack.c.l.b16 %v227
      %v370 = vunpack.c.l.b16 %v228
      %v371 = vunpack.c.l.b16 %v229
      %v372 = vunpack.c.l.b16 %v230
      %v373 = vunpack.c.l.b16 %v231
      %v374 = vunpack.c.l.b16 %v232
      %v375 = vunpack.c.l.b16 %v233
      %v376 = vunpack.c.l.b16 %v234
      %v377 = vunpack.c.l.b16 %v235
      %v378 = vunpack.c.l.b16 %v236
      %v379 = vunpack.c.l.b16 %v237
      %v380 = vunpack.c.l.b16 %v238
      %v381 = vunpack.c.l.b16 %v239
      %v382 = vunpack.c.l.b16 %v240
      %v383 = vunpack.c.l.b16 %v241
      %v384 = vunpack.c.l.b16 %v242
      %v385 = vunpack.c.l.b16 %v243
      %v386 = vunpack.c.l.b16 %v244
      %v387 = vunpack.c.l.b16 %v245
      %v388 = vunpack.c.l.b16 %v246
      %v389 = vunpack.c.l.b16 %v247
      %v390 = vunpack.c.l.b16 %v248
      %v391 = vunpack.c.l.b16 %v249
      %v392 = vunpack.c.l.b16 %v250
      %v393 = vunpack.c.l.b16 %v251
      %v394 = vunpack.c.l.b16 %v252
      %v395 = vunpack.c.l.b16 %v253
      %v396 = vunpack.c.l.b16 %v254
      %v397 = vunpack.c.l.b16 %v255
      %v398 = vunpack.c.l.b16 %v256
      %v399 = vunpack.c.l.b16 %v257
      %v400 = vunpack.c.l.b16 %v258
      %v401 = vunpack.c.l.b16 %v259
      %v402 = vunpack.c.l.b16 %v260
      %v403 = vunpack.c.l.b16 %v261
      %v404 = vunpack.c.l.b16 %v262
      %v405 = vunpack.c.l.b16 %v263
      %v406 = vunpack.c.l.b16 %v264
      %v407 = vunpack.c.l.b16 %v265
      %v408 = vunpack.c.l.b16 %v266
      %v409 = vunpack.c.l.b16 %v267
      %v410 = vunpack.c.l.b16 %v268
      %v411 = vunpack.c.l.b16 %v269
      %v412 = vunpack.c.l.b16 %v270
      %v413 = vunpack.c.l.b16 %v271
      %v414 = vunpack.c.l.b16 %v272
      %v415 = vunpack.c.l.b16 %v273
      %v416 = vunpack.c.l.b16 %v274
      %v417 = vunpack.c.l.b16 %v275
      %v418 = vunpack.c.l.b16 %v276
      %v419 = vunpack.c.l.b16 %v277
      %v420 = vunpack.c.l.b16 %v278
      %v421 = vunpack.c.l.b16 %v279
      %v422 = vunpack.c.l.b16 %v280
      %v423 = vunpack.c.l.b16 %v281
      %v424 = vunpack.c.l.b16 %v282
      %v425 = vunpack.c.l.b16 %v283
      %v426 = vunpack.c.l.b16 %v284
      %v427 = vunpack.c.l.b16 %v285
      %v428 = vunpack.c.l.b16 %v286
      %v429 = vunpack.c.l.b16 %v287
      %v430 = vunpack.c.l.b16 %v288
      %v431 = vunpack.c.l.b16 %v289
      %v432 = vpack.c.b16 %v369, %v368
      %v433 = vpack.c.b16 %v371, %v370
      %v434 = vpack.c.b16 %v373, %v372
      %v435 = vpack.c.b16 %v375, %v374
      %v436 = vpack.c.b16 %v377, %v376
      %v437 = vpack.c.b16 %v379, %v378
      %v438 = vpack.c.b16 %v381, %v380
      %v439 = vpack.c.b16 %v383, %v382
      %v440 = vpack.c.b16 %v385, %v384
      %v441 = vpack.c.b16 %v387, %v386
      %v442 = vpack.c.b16 %v389, %v388
      %v443 = vpack.c.b16 %v391, %v390
      %v444 = vpack.c.b16 %v393, %v392
      %v445 = vpack.c.b16 %v395, %v394
      %v446 = vpack.c.b16 %v397, %v396
      %v447 = vpack.c.b16 %v399, %v398
      %v448 = vpack.c.b16 %v401, %v400
      %v449 = vpack.c.b16 %v403, %v402
      %v450 = vpack.c.b16 %v405, %v404
      %v451 = vpack.c.b16 %v407, %v406
      %v452 = vpack.c.b16 %v409, %v408
      %v453 = vpack.c.b16 %v411, %v410
      %v454 = vpack.c.b16 %v413, %v412
      %v455 = vpack.c.b16 %v415, %v414
      %v456 = vpack.c.b16 %v417, %v416
      %v457 = vpack.c.b16 %v419, %v418
      %v458 = vpack.c.b16 %v421, %v420
      %v459 = vpack.c.b16 %v423, %v422
      %v460 = vpack.c.b16 %v425, %v424
      %v461 = vpack.c.b16 %v427, %v426
      %v462 = vpack.c.b16 %v429, %v428
      %v463 = vpack.c.b16 %v431, %v430
      %v471 = vunpack.c.l.b16 %v290
      %v472 = vunpack.c.l.b16 %v291
      %v473 = vunpack.c.l.b16 %v292
      %v474 = vunpack.c.l.b16 %v293
      %v475 = vunpack.c.l.b16 %v294
      %v476 = vunpack.c.l.b16 %v295
      %v477 = vunpack.c.l.b16 %v296
      %v478 = vpack.c.b16 %v472, %v471
      %v479 = vpack.c.b16 %v474, %v473
      %v480 = vpack.c.b16 %v476, %v475
      %v481 = vpack.c.b16 %v477, %v477
      %vm485 = vcmask 441344
      %v487 = vsel %vm485, %v432, 0
      %v490 = vsel %vm485, %v433, 0
      %v493 = vsel %vm485, %v434, 0
      %v496 = vsel %vm485, %v435, 0
      %v499 = vsel %vm485, %v436, 0
      %v502 = vsel %vm485, %v437, 0
      %v505 = vsel %vm485, %v438, 0
      %v508 = vsel %vm485, %v439, 0
      %v511 = vsel %vm485, %v440, 0
      %v514 = vsel %vm485, %v441, 0
      %v517 = vsel %vm485, %v442, 0
      %v520 = vsel %vm485, %v443, 0
      %v523 = vsel %vm485, %v444, 0
      %v526 = vsel %vm485, %v445, 0
      %v529 = vsel %vm485, %v446, 0
      %v532 = vsel %vm485, %v447, 0
      %v535 = vsel %vm485, %v448, 0
      %v538 = vsel %vm485, %v449, 0
      %v541 = vsel %vm485, %v450, 0
      %v544 = vsel %vm485, %v451, 0
      %v547 = vsel %vm485, %v452, 0
      %v550 = vsel %vm485, %v453, 0
      %v553 = vsel %vm485, %v454, 0
      %v556 = vsel %vm485, %v455, 0
      %v559 = vsel %vm485, %v456, 0
      %v562 = vsel %vm485, %v457, 0
      %v565 = vsel %vm485, %v458, 0
      %v568 = vsel %vm485, %v459, 0
      %v571 = vsel %vm485, %v460, 0
      %v574 = vsel %vm485, %v461, 0
      %v577 = vsel %vm485, %v462, 0
      %v580 = vsel %vm485, %v463, 0
      %vm582 = vcmask 1042432
      %v584 = vsel %vm582, %v481, 0
      %586 = vmatprep.subr.bf16.mxu0 0
      %587 = vmatpush1.bf16.msra.mxu0 0
      %588 = vmatprep.subr.bf16.mxu0 0
      %589 = vmatpush1.bf16.msra.mxu0 0
      %590 = vmatprep.subr.bf16.mxu0 0
      %591 = vmatpush1.bf16.msra.mxu0 0
      %592 = vmatprep.subr.bf16.mxu0 0
      %593 = vmatpush1.bf16.msra.mxu0 0
      %594 = vmatprep.subr.bf16.mxu0 0
      %595 = vmatpush1.bf16.msra.mxu0 %v584
      %596 = vmatprep.subr.bf16.mxu0 0
      %597 = vmatpush1.bf16.msra.mxu0 %v480
      %598 = vmatprep.subr.bf16.mxu0 0
      %599 = vmatpush1.bf16.msra.mxu0 %v479
      %600 = vmatprep.subr.bf16.mxu0 0
      %601 = vmatpush1.bf16.msra.mxu0 %v478
      %602 = vmatprep.subr.bf16.mxu0 0
      %603 = vmatpush2.bf16.msra.mxu0 0
      %604 = vmatprep.subr.bf16.mxu0 0
      %605 = vmatpush2.bf16.msra.mxu0 0
      %606 = vmatprep.subr.bf16.mxu0 0
      %607 = vmatpush2.bf16.msra.mxu0 0
      %608 = vmatprep.subr.bf16.mxu0 0
      %609 = vmatpush2.bf16.msra.mxu0 0
      %610 = vmatprep.subr.bf16.mxu0 0
      %611 = vmatpush2.bf16.msra.mxu0 0
      %612 = vmatprep.subr.bf16.mxu0 0
      %613 = vmatpush2.bf16.msra.mxu0 0
      %614 = vmatprep.subr.bf16.mxu0 0
      %615 = vmatpush2.bf16.msra.mxu0 0
      %616 = vmatprep.subr.bf16.mxu0 0
      %617 = vmatpush2.bf16.msra.mxu0 0
      %618 = vmatprep.mubr.bf16.mxu0 0
      %619 = vmatmul.mubr.bf16.gmra.mxu0 %v487
      %v620 = vpop.f32.mrf.mxu0
      %v621 = vadd.f32 %v302, %v620
      %v622 = vpop.f32.mrf.mxu0
      %v623 = vpop.f32.mrf.mxu0
      %v624 = vadd.f32 %v302, %v623
      %v625 = vpop.f32.mrf.mxu0
      %626 = vmatprep.mubr.bf16.mxu0 0
      %627 = vmatmul.mubr.bf16.gmra.mxu0 %v490
      %v628 = vpop.f32.mrf.mxu0
      %v629 = vadd.f32 %v302, %v628
      %v630 = vpop.f32.mrf.mxu0
      %v631 = vpop.f32.mrf.mxu0
      %v632 = vadd.f32 %v302, %v631
      %v633 = vpop.f32.mrf.mxu0
      %634 = vmatprep.mubr.bf16.mxu0 0
      %635 = vmatmul.mubr.bf16.gmra.mxu0 %v493
      %v636 = vpop.f32.mrf.mxu0
      %v637 = vadd.f32 %v302, %v636
      %v638 = vpop.f32.mrf.mxu0
      %v639 = vpop.f32.mrf.mxu0
      %v640 = vadd.f32 %v302, %v639
      %v641 = vpop.f32.mrf.mxu0
      %642 = vmatprep.mubr.bf16.mxu0 0
      %643 = vmatmul.mubr.bf16.gmra.mxu0 %v496
      %v644 = vpop.f32.mrf.mxu0
      %v645 = vadd.f32 %v302, %v644
      %v646 = vpop.f32.mrf.mxu0
      %v647 = vpop.f32.mrf.mxu0
      %v648 = vadd.f32 %v302, %v647
      %v649 = vpop.f32.mrf.mxu0
      %650 = vmatprep.mubr.bf16.mxu0 0
      %651 = vmatmul.mubr.bf16.gmra.mxu0 %v499
      %v652 = vpop.f32.mrf.mxu0
      %v653 = vadd.f32 %v302, %v652
      %v654 = vpop.f32.mrf.mxu0
      %v655 = vpop.f32.mrf.mxu0
      %v656 = vadd.f32 %v302, %v655
      %v657 = vpop.f32.mrf.mxu0
      %658 = vmatprep.mubr.bf16.mxu0 0
      %659 = vmatmul.mubr.bf16.gmra.mxu0 %v502
      %v660 = vpop.f32.mrf.mxu0
      %v661 = vadd.f32 %v302, %v660
      %v662 = vpop.f32.mrf.mxu0
      %v663 = vpop.f32.mrf.mxu0
      %v664 = vadd.f32 %v302, %v663
      %v665 = vpop.f32.mrf.mxu0
      %666 = vmatprep.mubr.bf16.mxu0 0
      %667 = vmatmul.mubr.bf16.gmra.mxu0 %v505
      %v668 = vpop.f32.mrf.mxu0
      %v669 = vadd.f32 %v302, %v668
      %v670 = vpop.f32.mrf.mxu0
      %v671 = vpop.f32.mrf.mxu0
      %v672 = vadd.f32 %v302, %v671
      %v673 = vpop.f32.mrf.mxu0
      %674 = vmatprep.mubr.bf16.mxu0 0
      %675 = vmatmul.mubr.bf16.gmra.mxu0 %v508
      %v676 = vpop.f32.mrf.mxu0
      %v677 = vadd.f32 %v302, %v676
      %v678 = vpop.f32.mrf.mxu0
      %v679 = vpop.f32.mrf.mxu0
      %v680 = vadd.f32 %v302, %v679
      %v681 = vpop.f32.mrf.mxu0
      %682 = vmatprep.mubr.bf16.mxu0 0
      %683 = vmatmul.mubr.bf16.gmra.mxu0 %v511
      %v684 = vpop.f32.mrf.mxu0
      %v685 = vadd.f32 %v302, %v684
      %v686 = vpop.f32.mrf.mxu0
      %v687 = vpop.f32.mrf.mxu0
      %v688 = vadd.f32 %v302, %v687
      %v689 = vpop.f32.mrf.mxu0
      %690 = vmatprep.mubr.bf16.mxu0 0
      %691 = vmatmul.mubr.bf16.gmra.mxu0 %v514
      %v692 = vpop.f32.mrf.mxu0
      %v693 = vadd.f32 %v302, %v692
      %v694 = vpop.f32.mrf.mxu0
      %v695 = vpop.f32.mrf.mxu0
      %v696 = vadd.f32 %v302, %v695
      %v697 = vpop.f32.mrf.mxu0
      %698 = vmatprep.mubr.bf16.mxu0 0
      %699 = vmatmul.mubr.bf16.gmra.mxu0 %v517
      %v700 = vpop.f32.mrf.mxu0
      %v701 = vadd.f32 %v302, %v700
      %v702 = vpop.f32.mrf.mxu0
      %v703 = vpop.f32.mrf.mxu0
      %v704 = vadd.f32 %v302, %v703
      %v705 = vpop.f32.mrf.mxu0
      %706 = vmatprep.mubr.bf16.mxu0 0
      %707 = vmatmul.mubr.bf16.gmra.mxu0 %v520
      %v708 = vpop.f32.mrf.mxu0
      %v709 = vadd.f32 %v302, %v708
      %v710 = vpop.f32.mrf.mxu0
      %v711 = vpop.f32.mrf.mxu0
      %v712 = vadd.f32 %v302, %v711
      %v713 = vpop.f32.mrf.mxu0
      %714 = vmatprep.mubr.bf16.mxu0 0
      %715 = vmatmul.mubr.bf16.gmra.mxu0 %v523
      %v716 = vpop.f32.mrf.mxu0
      %v717 = vadd.f32 %v302, %v716
      %v718 = vpop.f32.mrf.mxu0
      %v719 = vpop.f32.mrf.mxu0
      %v720 = vadd.f32 %v302, %v719
      %v721 = vpop.f32.mrf.mxu0
      %722 = vmatprep.mubr.bf16.mxu0 0
      %723 = vmatmul.mubr.bf16.gmra.mxu0 %v526
      %v724 = vpop.f32.mrf.mxu0
      %v725 = vadd.f32 %v302, %v724
      %v726 = vpop.f32.mrf.mxu0
      %v727 = vpop.f32.mrf.mxu0
      %v728 = vadd.f32 %v302, %v727
      %v729 = vpop.f32.mrf.mxu0
      %730 = vmatprep.mubr.bf16.mxu0 0
      %731 = vmatmul.mubr.bf16.gmra.mxu0 %v529
      %v732 = vpop.f32.mrf.mxu0
      %v733 = vadd.f32 %v302, %v732
      %v734 = vpop.f32.mrf.mxu0
      %v735 = vpop.f32.mrf.mxu0
      %v736 = vadd.f32 %v302, %v735
      %v737 = vpop.f32.mrf.mxu0
      %738 = vmatprep.mubr.bf16.mxu0 0
      %739 = vmatmul.mubr.bf16.gmra.mxu0 %v532
      %v740 = vpop.f32.mrf.mxu0
      %v741 = vadd.f32 %v302, %v740
      %v742 = vpop.f32.mrf.mxu0
      %v743 = vpop.f32.mrf.mxu0
      %v744 = vadd.f32 %v302, %v743
      %v745 = vpop.f32.mrf.mxu0
      %746 = vmatprep.mubr.bf16.mxu0 0
      %747 = vmatmul.mubr.bf16.gmra.mxu0 %v535
      %v748 = vpop.f32.mrf.mxu0
      %v749 = vadd.f32 %v302, %v748
      %v750 = vpop.f32.mrf.mxu0
      %v751 = vpop.f32.mrf.mxu0
      %v752 = vadd.f32 %v302, %v751
      %v753 = vpop.f32.mrf.mxu0
      %754 = vmatprep.mubr.bf16.mxu0 0
      %755 = vmatmul.mubr.bf16.gmra.mxu0 %v538
      %v756 = vpop.f32.mrf.mxu0
      %v757 = vadd.f32 %v302, %v756
      %v758 = vpop.f32.mrf.mxu0
      %v759 = vpop.f32.mrf.mxu0
      %v760 = vadd.f32 %v302, %v759
      %v761 = vpop.f32.mrf.mxu0
      %762 = vmatprep.mubr.bf16.mxu0 0
      %763 = vmatmul.mubr.bf16.gmra.mxu0 %v541
      %v764 = vpop.f32.mrf.mxu0
      %v765 = vadd.f32 %v302, %v764
      %v766 = vpop.f32.mrf.mxu0
      %v767 = vpop.f32.mrf.mxu0
      %v768 = vadd.f32 %v302, %v767
      %v769 = vpop.f32.mrf.mxu0
      %770 = vmatprep.mubr.bf16.mxu0 0
      %771 = vmatmul.mubr.bf16.gmra.mxu0 %v544
      %v772 = vpop.f32.mrf.mxu0
      %v773 = vadd.f32 %v302, %v772
      %v774 = vpop.f32.mrf.mxu0
      %v775 = vpop.f32.mrf.mxu0
      %v776 = vadd.f32 %v302, %v775
      %v777 = vpop.f32.mrf.mxu0
      %778 = vmatprep.mubr.bf16.mxu0 0
      %779 = vmatmul.mubr.bf16.gmra.mxu0 %v547
      %v780 = vpop.f32.mrf.mxu0
      %v781 = vadd.f32 %v302, %v780
      %v782 = vpop.f32.mrf.mxu0
      %v783 = vpop.f32.mrf.mxu0
      %v784 = vadd.f32 %v302, %v783
      %v785 = vpop.f32.mrf.mxu0
      %786 = vmatprep.mubr.bf16.mxu0 0
      %787 = vmatmul.mubr.bf16.gmra.mxu0 %v550
      %v788 = vpop.f32.mrf.mxu0
      %v789 = vadd.f32 %v302, %v788
      %v790 = vpop.f32.mrf.mxu0
      %v791 = vpop.f32.mrf.mxu0
      %v792 = vadd.f32 %v302, %v791
      %v793 = vpop.f32.mrf.mxu0
      %794 = vmatprep.mubr.bf16.mxu0 0
      %795 = vmatmul.mubr.bf16.gmra.mxu0 %v553
      %v796 = vpop.f32.mrf.mxu0
      %v797 = vadd.f32 %v302, %v796
      %v798 = vpop.f32.mrf.mxu0
      %v799 = vpop.f32.mrf.mxu0
      %v800 = vadd.f32 %v302, %v799
      %v801 = vpop.f32.mrf.mxu0
      %802 = vmatprep.mubr.bf16.mxu0 0
      %803 = vmatmul.mubr.bf16.gmra.mxu0 %v556
      %v804 = vpop.f32.mrf.mxu0
      %v805 = vadd.f32 %v302, %v804
      %v806 = vpop.f32.mrf.mxu0
      %v807 = vpop.f32.mrf.mxu0
      %v808 = vadd.f32 %v302, %v807
      %v809 = vpop.f32.mrf.mxu0
      %810 = vmatprep.mubr.bf16.mxu0 0
      %811 = vmatmul.mubr.bf16.gmra.mxu0 %v559
      %v812 = vpop.f32.mrf.mxu0
      %v813 = vadd.f32 %v302, %v812
      %v814 = vpop.f32.mrf.mxu0
      %v815 = vpop.f32.mrf.mxu0
      %v816 = vadd.f32 %v302, %v815
      %v817 = vpop.f32.mrf.mxu0
      %818 = vmatprep.mubr.bf16.mxu0 0
      %819 = vmatmul.mubr.bf16.gmra.mxu0 %v562
      %v820 = vpop.f32.mrf.mxu0
      %v821 = vadd.f32 %v302, %v820
      %v822 = vpop.f32.mrf.mxu0
      %v823 = vpop.f32.mrf.mxu0
      %v824 = vadd.f32 %v302, %v823
      %v825 = vpop.f32.mrf.mxu0
      %826 = vmatprep.mubr.bf16.mxu0 0
      %827 = vmatmul.mubr.bf16.gmra.mxu0 %v565
      %v828 = vpop.f32.mrf.mxu0
      %v829 = vadd.f32 %v302, %v828
      %v830 = vpop.f32.mrf.mxu0
      %v831 = vpop.f32.mrf.mxu0
      %v832 = vadd.f32 %v302, %v831
      %v833 = vpop.f32.mrf.mxu0
      %834 = vmatprep.mubr.bf16.mxu0 0
      %835 = vmatmul.mubr.bf16.gmra.mxu0 %v568
      %v836 = vpop.f32.mrf.mxu0
      %v837 = vadd.f32 %v302, %v836
      %v838 = vpop.f32.mrf.mxu0
      %v839 = vpop.f32.mrf.mxu0
      %v840 = vadd.f32 %v302, %v839
      %v841 = vpop.f32.mrf.mxu0
      %842 = vmatprep.mubr.bf16.mxu0 0
      %843 = vmatmul.mubr.bf16.gmra.mxu0 %v571
      %v844 = vpop.f32.mrf.mxu0
      %v845 = vadd.f32 %v302, %v844
      %v846 = vpop.f32.mrf.mxu0
      %v847 = vpop.f32.mrf.mxu0
      %v848 = vadd.f32 %v302, %v847
      %v849 = vpop.f32.mrf.mxu0
      %850 = vmatprep.mubr.bf16.mxu0 0
      %851 = vmatmul.mubr.bf16.gmra.mxu0 %v574
      %v852 = vpop.f32.mrf.mxu0
      %v853 = vadd.f32 %v302, %v852
      %v854 = vpop.f32.mrf.mxu0
      %v855 = vpop.f32.mrf.mxu0
      %v856 = vadd.f32 %v302, %v855
      %v857 = vpop.f32.mrf.mxu0
      %858 = vmatprep.mubr.bf16.mxu0 0
      %859 = vmatmul.mubr.bf16.gmra.mxu0 %v577
      %v860 = vpop.f32.mrf.mxu0
      %v861 = vadd.f32 %v302, %v860
      %v862 = vpop.f32.mrf.mxu0
      %v863 = vpop.f32.mrf.mxu0
      %v864 = vadd.f32 %v302, %v863
      %v865 = vpop.f32.mrf.mxu0
      %866 = vmatprep.mubr.bf16.mxu0 0
      %867 = vmatmul.mubr.bf16.gmra.mxu0 %v580
      %v868 = vpop.f32.mrf.mxu0
      %v869 = vadd.f32 %v302, %v868
      %v870 = vpop.f32.mrf.mxu0
      %v871 = vpop.f32.mrf.mxu0
      %v872 = vadd.f32 %v302, %v871
      %v873 = vpop.f32.mrf.mxu0
      %874 = vdwg.mxu0
      %vm875 = vcmp.ge.f32.partialorder %v621, 0.0
      %vm876 = vcmp.ge.f32.partialorder %v624, 0.0
      %vm877 = vcmp.ge.f32.partialorder %v629, 0.0
      %vm878 = vcmp.ge.f32.partialorder %v632, 0.0
      %vm879 = vcmp.ge.f32.partialorder %v637, 0.0
      %vm880 = vcmp.ge.f32.partialorder %v640, 0.0
      %vm881 = vcmp.ge.f32.partialorder %v645, 0.0
      %vm882 = vcmp.ge.f32.partialorder %v648, 0.0
      %vm883 = vcmp.ge.f32.partialorder %v653, 0.0
      %vm884 = vcmp.ge.f32.partialorder %v656, 0.0
      %vm885 = vcmp.ge.f32.partialorder %v661, 0.0
      %vm886 = vcmp.ge.f32.partialorder %v664, 0.0
      %vm887 = vcmp.ge.f32.partialorder %v669, 0.0
      %vm888 = vcmp.ge.f32.partialorder %v672, 0.0
      %vm889 = vcmp.ge.f32.partialorder %v677, 0.0
      %vm890 = vcmp.ge.f32.partialorder %v680, 0.0
      %vm891 = vcmp.ge.f32.partialorder %v685, 0.0
      %vm892 = vcmp.ge.f32.partialorder %v688, 0.0
      %vm893 = vcmp.ge.f32.partialorder %v693, 0.0
      %vm894 = vcmp.ge.f32.partialorder %v696, 0.0
      %vm895 = vcmp.ge.f32.partialorder %v701, 0.0
      %vm896 = vcmp.ge.f32.partialorder %v704, 0.0
      %vm897 = vcmp.ge.f32.partialorder %v709, 0.0
      %vm898 = vcmp.ge.f32.partialorder %v712, 0.0
      %vm899 = vcmp.ge.f32.partialorder %v717, 0.0
      %vm900 = vcmp.ge.f32.partialorder %v720, 0.0
      %vm901 = vcmp.ge.f32.partialorder %v725, 0.0
      %vm902 = vcmp.ge.f32.partialorder %v728, 0.0
      %vm903 = vcmp.ge.f32.partialorder %v733, 0.0
      %vm904 = vcmp.ge.f32.partialorder %v736, 0.0
      %vm905 = vcmp.ge.f32.partialorder %v741, 0.0
      %vm906 = vcmp.ge.f32.partialorder %v744, 0.0
      %vm907 = vcmp.ge.f32.partialorder %v749, 0.0
      %vm908 = vcmp.ge.f32.partialorder %v752, 0.0
      %vm909 = vcmp.ge.f32.partialorder %v757, 0.0
      %vm910 = vcmp.ge.f32.partialorder %v760, 0.0
      %vm911 = vcmp.ge.f32.partialorder %v765, 0.0
      %vm912 = vcmp.ge.f32.partialorder %v768, 0.0
      %vm913 = vcmp.ge.f32.partialorder %v773, 0.0
      %vm914 = vcmp.ge.f32.partialorder %v776, 0.0
      %vm915 = vcmp.ge.f32.partialorder %v781, 0.0
      %vm916 = vcmp.ge.f32.partialorder %v784, 0.0
      %vm917 = vcmp.ge.f32.partialorder %v789, 0.0
      %vm918 = vcmp.ge.f32.partialorder %v792, 0.0
      %vm919 = vcmp.ge.f32.partialorder %v797, 0.0
      %vm920 = vcmp.ge.f32.partialorder %v800, 0.0
      %vm921 = vcmp.ge.f32.partialorder %v805, 0.0
      %vm922 = vcmp.ge.f32.partialorder %v808, 0.0
      %vm923 = vcmp.ge.f32.partialorder %v813, 0.0
      %vm924 = vcmp.ge.f32.partialorder %v816, 0.0
      %vm925 = vcmp.ge.f32.partialorder %v821, 0.0
      %vm926 = vcmp.ge.f32.partialorder %v824, 0.0
      %vm927 = vcmp.ge.f32.partialorder %v829, 0.0
      %vm928 = vcmp.ge.f32.partialorder %v832, 0.0
      %vm929 = vcmp.ge.f32.partialorder %v837, 0.0
      %vm930 = vcmp.ge.f32.partialorder %v840, 0.0
      %vm931 = vcmp.ge.f32.partialorder %v845, 0.0
      %vm932 = vcmp.ge.f32.partialorder %v848, 0.0
      %vm933 = vcmp.ge.f32.partialorder %v853, 0.0
      %vm934 = vcmp.ge.f32.partialorder %v856, 0.0
      %vm935 = vcmp.ge.f32.partialorder %v861, 0.0
      %vm936 = vcmp.ge.f32.partialorder %v864, 0.0
      %vm937 = vcmp.ge.f32.partialorder %v869, 0.0
      %vm938 = vcmp.ge.f32.partialorder %v872, 0.0
      %v939 = vmul.f32 %v621, 0.2
      %v940 = vmul.f32 %v624, 0.2
      %v941 = vmul.f32 %v629, 0.2
      %v942 = vmul.f32 %v632, 0.2
      %v943 = vmul.f32 %v637, 0.2
      %v944 = vmul.f32 %v640, 0.2
      %v945 = vmul.f32 %v645, 0.2
      %v946 = vmul.f32 %v648, 0.2
      %v947 = vmul.f32 %v653, 0.2
      %v948 = vmul.f32 %v656, 0.2
      %v949 = vmul.f32 %v661, 0.2
      %v950 = vmul.f32 %v664, 0.2
      %v951 = vmul.f32 %v669, 0.2
      %v952 = vmul.f32 %v672, 0.2
      %v953 = vmul.f32 %v677, 0.2
      %v954 = vmul.f32 %v680, 0.2
      %v955 = vmul.f32 %v685, 0.2
      %v956 = vmul.f32 %v688, 0.2
      %v957 = vmul.f32 %v693, 0.2
      %v958 = vmul.f32 %v696, 0.2
      %v959 = vmul.f32 %v701, 0.2
      %v960 = vmul.f32 %v704, 0.2
      %v961 = vmul.f32 %v709, 0.2
      %v962 = vmul.f32 %v712, 0.2
      %v963 = vmul.f32 %v717, 0.2
      %v964 = vmul.f32 %v720, 0.2
      %v965 = vmul.f32 %v725, 0.2
      %v966 = vmul.f32 %v728, 0.2
      %v967 = vmul.f32 %v733, 0.2
      %v968 = vmul.f32 %v736, 0.2
      %v969 = vmul.f32 %v741, 0.2
      %v970 = vmul.f32 %v744, 0.2
      %v971 = vmul.f32 %v749, 0.2
      %v972 = vmul.f32 %v752, 0.2
      %v973 = vmul.f32 %v757, 0.2
      %v974 = vmul.f32 %v760, 0.2
      %v975 = vmul.f32 %v765, 0.2
      %v976 = vmul.f32 %v768, 0.2
      %v977 = vmul.f32 %v773, 0.2
      %v978 = vmul.f32 %v776, 0.2
      %v979 = vmul.f32 %v781, 0.2
      %v980 = vmul.f32 %v784, 0.2
      %v981 = vmul.f32 %v789, 0.2
      %v982 = vmul.f32 %v792, 0.2
      %v983 = vmul.f32 %v797, 0.2
      %v984 = vmul.f32 %v800, 0.2
      %v985 = vmul.f32 %v805, 0.2
      %v986 = vmul.f32 %v808, 0.2
      %v987 = vmul.f32 %v813, 0.2
      %v988 = vmul.f32 %v816, 0.2
      %v989 = vmul.f32 %v821, 0.2
      %v990 = vmul.f32 %v824, 0.2
      %v991 = vmul.f32 %v829, 0.2
      %v992 = vmul.f32 %v832, 0.2
      %v993 = vmul.f32 %v837, 0.2
      %v994 = vmul.f32 %v840, 0.2
      %v995 = vmul.f32 %v845, 0.2
      %v996 = vmul.f32 %v848, 0.2
      %v997 = vmul.f32 %v853, 0.2
      %v998 = vmul.f32 %v856, 0.2
      %v999 = vmul.f32 %v861, 0.2
      %v1000 = vmul.f32 %v864, 0.2
      %v1001 = vmul.f32 %v869, 0.2
      %v1002 = vmul.f32 %v872, 0.2
      %v1003 = vsel %vm875, %v621, %v939
      %v1004 = vsel %vm876, %v624, %v940
      %v1005 = vsel %vm877, %v629, %v941
      %v1006 = vsel %vm878, %v632, %v942
      %v1007 = vsel %vm879, %v637, %v943
      %v1008 = vsel %vm880, %v640, %v944
      %v1009 = vsel %vm881, %v645, %v945
      %v1010 = vsel %vm882, %v648, %v946
      %v1011 = vsel %vm883, %v653, %v947
      %v1012 = vsel %vm884, %v656, %v948
      %v1013 = vsel %vm885, %v661, %v949
      %v1014 = vsel %vm886, %v664, %v950
      %v1015 = vsel %vm887, %v669, %v951
      %v1016 = vsel %vm888, %v672, %v952
      %v1017 = vsel %vm889, %v677, %v953
      %v1018 = vsel %vm890, %v680, %v954
      %v1019 = vsel %vm891, %v685, %v955
      %v1020 = vsel %vm892, %v688, %v956
      %v1021 = vsel %vm893, %v693, %v957
      %v1022 = vsel %vm894, %v696, %v958
      %v1023 = vsel %vm895, %v701, %v959
      %v1024 = vsel %vm896, %v704, %v960
      %v1025 = vsel %vm897, %v709, %v961
      %v1026 = vsel %vm898, %v712, %v962
      %v1027 = vsel %vm899, %v717, %v963
      %v1028 = vsel %vm900, %v720, %v964
      %v1029 = vsel %vm901, %v725, %v965
      %v1030 = vsel %vm902, %v728, %v966
      %v1031 = vsel %vm903, %v733, %v967
      %v1032 = vsel %vm904, %v736, %v968
      %v1033 = vsel %vm905, %v741, %v969
      %v1034 = vsel %vm906, %v744, %v970
      %v1035 = vsel %vm907, %v749, %v971
      %v1036 = vsel %vm908, %v752, %v972
      %v1037 = vsel %vm909, %v757, %v973
      %v1038 = vsel %vm910, %v760, %v974
      %v1039 = vsel %vm911, %v765, %v975
      %v1040 = vsel %vm912, %v768, %v976
      %v1041 = vsel %vm913, %v773, %v977
      %v1042 = vsel %vm914, %v776, %v978
      %v1043 = vsel %vm915, %v781, %v979
      %v1044 = vsel %vm916, %v784, %v980
      %v1045 = vsel %vm917, %v789, %v981
      %v1046 = vsel %vm918, %v792, %v982
      %v1047 = vsel %vm919, %v797, %v983
      %v1048 = vsel %vm920, %v800, %v984
      %v1049 = vsel %vm921, %v805, %v985
      %v1050 = vsel %vm922, %v808, %v986
      %v1051 = vsel %vm923, %v813, %v987
      %v1052 = vsel %vm924, %v816, %v988
      %v1053 = vsel %vm925, %v821, %v989
      %v1054 = vsel %vm926, %v824, %v990
      %v1055 = vsel %vm927, %v829, %v991
      %v1056 = vsel %vm928, %v832, %v992
      %v1057 = vsel %vm929, %v837, %v993
      %v1058 = vsel %vm930, %v840, %v994
      %v1059 = vsel %vm931, %v845, %v995
      %v1060 = vsel %vm932, %v848, %v996
      %v1061 = vsel %vm933, %v853, %v997
      %v1062 = vsel %vm934, %v856, %v998
      %v1063 = vsel %vm935, %v861, %v999
      %v1064 = vsel %vm936, %v864, %v1000
      %v1065 = vsel %vm937, %v869, %v1001
      %v1066 = vsel %vm938, %v872, %v1002
      %v1067 = vpack.c.bf16 %v1004, %v1003
      %v1068 = vpack.c.bf16 %v1006, %v1005
      %v1069 = vpack.c.bf16 %v1008, %v1007
      %v1070 = vpack.c.bf16 %v1010, %v1009
      %v1071 = vpack.c.bf16 %v1012, %v1011
      %v1072 = vpack.c.bf16 %v1014, %v1013
      %v1073 = vpack.c.bf16 %v1016, %v1015
      %v1074 = vpack.c.bf16 %v1018, %v1017
      %v1075 = vpack.c.bf16 %v1020, %v1019
      %v1076 = vpack.c.bf16 %v1022, %v1021
      %v1077 = vpack.c.bf16 %v1024, %v1023
      %v1078 = vpack.c.bf16 %v1026, %v1025
      %v1079 = vpack.c.bf16 %v1028, %v1027
      %v1080 = vpack.c.bf16 %v1030, %v1029
      %v1081 = vpack.c.bf16 %v1032, %v1031
      %v1082 = vpack.c.bf16 %v1034, %v1033
      %v1083 = vpack.c.bf16 %v1036, %v1035
      %v1084 = vpack.c.bf16 %v1038, %v1037
      %v1085 = vpack.c.bf16 %v1040, %v1039
      %v1086 = vpack.c.bf16 %v1042, %v1041
      %v1087 = vpack.c.bf16 %v1044, %v1043
      %v1088 = vpack.c.bf16 %v1046, %v1045
      %v1089 = vpack.c.bf16 %v1048, %v1047
      %v1090 = vpack.c.bf16 %v1050, %v1049
      %v1091 = vpack.c.bf16 %v1052, %v1051
      %v1092 = vpack.c.bf16 %v1054, %v1053
      %v1093 = vpack.c.bf16 %v1056, %v1055
      %v1094 = vpack.c.bf16 %v1058, %v1057
      %v1095 = vpack.c.bf16 %v1060, %v1059
      %v1096 = vpack.c.bf16 %v1062, %v1061
      %v1097 = vpack.c.bf16 %v1064, %v1063
      %v1098 = vpack.c.bf16 %v1066, %v1065
      %v1131 = vunpack.c.l.b16 %v1067
      %v1132 = vunpack.c.h.b16 %v1067
      %v1133 = vunpack.c.l.b16 %v1068
      %v1134 = vunpack.c.h.b16 %v1068
      %v1135 = vunpack.c.l.b16 %v1069
      %v1136 = vunpack.c.h.b16 %v1069
      %v1137 = vunpack.c.l.b16 %v1070
      %v1138 = vunpack.c.h.b16 %v1070
      %v1139 = vunpack.c.l.b16 %v1071
      %v1140 = vunpack.c.h.b16 %v1071
      %v1141 = vunpack.c.l.b16 %v1072
      %v1142 = vunpack.c.h.b16 %v1072
      %v1143 = vunpack.c.l.b16 %v1073
      %v1144 = vunpack.c.h.b16 %v1073
      %v1145 = vunpack.c.l.b16 %v1074
      %v1146 = vunpack.c.h.b16 %v1074
      %v1147 = vunpack.c.l.b16 %v1075
      %v1148 = vunpack.c.h.b16 %v1075
      %v1149 = vunpack.c.l.b16 %v1076
      %v1150 = vunpack.c.h.b16 %v1076
      %v1151 = vunpack.c.l.b16 %v1077
      %v1152 = vunpack.c.h.b16 %v1077
      %v1153 = vunpack.c.l.b16 %v1078
      %v1154 = vunpack.c.h.b16 %v1078
      %v1155 = vunpack.c.l.b16 %v1079
      %v1156 = vunpack.c.h.b16 %v1079
      %v1157 = vunpack.c.l.b16 %v1080
      %v1158 = vunpack.c.h.b16 %v1080
      %v1159 = vunpack.c.l.b16 %v1081
      %v1160 = vunpack.c.h.b16 %v1081
      %v1161 = vunpack.c.l.b16 %v1082
      %v1162 = vunpack.c.h.b16 %v1082
      %v1163 = vunpack.c.l.b16 %v1083
      %v1164 = vunpack.c.h.b16 %v1083
      %v1165 = vunpack.c.l.b16 %v1084
      %v1166 = vunpack.c.h.b16 %v1084
      %v1167 = vunpack.c.l.b16 %v1085
      %v1168 = vunpack.c.h.b16 %v1085
      %v1169 = vunpack.c.l.b16 %v1086
      %v1170 = vunpack.c.h.b16 %v1086
      %v1171 = vunpack.c.l.b16 %v1087
      %v1172 = vunpack.c.h.b16 %v1087
      %v1173 = vunpack.c.l.b16 %v1088
      %v1174 = vunpack.c.h.b16 %v1088
      %v1175 = vunpack.c.l.b16 %v1089
      %v1176 = vunpack.c.h.b16 %v1089
      %v1177 = vunpack.c.l.b16 %v1090
      %v1178 = vunpack.c.h.b16 %v1090
      %v1179 = vunpack.c.l.b16 %v1091
      %v1180 = vunpack.c.h.b16 %v1091
      %v1181 = vunpack.c.l.b16 %v1092
      %v1182 = vunpack.c.h.b16 %v1092
      %v1183 = vunpack.c.l.b16 %v1093
      %v1184 = vunpack.c.h.b16 %v1093
      %v1185 = vunpack.c.l.b16 %v1094
      %v1186 = vunpack.c.h.b16 %v1094
      %v1187 = vunpack.c.l.b16 %v1095
      %v1188 = vunpack.c.h.b16 %v1095
      %v1189 = vunpack.c.l.b16 %v1096
      %v1190 = vunpack.c.h.b16 %v1096
      %v1191 = vunpack.c.l.b16 %v1097
      %v1192 = vunpack.c.h.b16 %v1097
      %v1193 = vunpack.c.l.b16 %v1098
      %v1194 = vunpack.c.h.b16 %v1098
      %v1195 = vpack.c.b16 %v1131, %v1131
      %v1196 = vpack.c.b16 %v1132, %v1132
      %v1197 = vpack.c.b16 %v1133, %v1133
      %v1198 = vpack.c.b16 %v1134, %v1134
      %v1199 = vpack.c.b16 %v1135, %v1135
      %v1200 = vpack.c.b16 %v1136, %v1136
      %v1201 = vpack.c.b16 %v1137, %v1137
      %v1202 = vpack.c.b16 %v1138, %v1138
      %v1203 = vpack.c.b16 %v1139, %v1139
      %v1204 = vpack.c.b16 %v1140, %v1140
      %v1205 = vpack.c.b16 %v1141, %v1141
      %v1206 = vpack.c.b16 %v1142, %v1142
      %v1207 = vpack.c.b16 %v1143, %v1143
      %v1208 = vpack.c.b16 %v1144, %v1144
      %v1209 = vpack.c.b16 %v1145, %v1145
      %v1210 = vpack.c.b16 %v1146, %v1146
      %v1211 = vpack.c.b16 %v1147, %v1147
      %v1212 = vpack.c.b16 %v1148, %v1148
      %v1213 = vpack.c.b16 %v1149, %v1149
      %v1214 = vpack.c.b16 %v1150, %v1150
      %v1215 = vpack.c.b16 %v1151, %v1151
      %v1216 = vpack.c.b16 %v1152, %v1152
      %v1217 = vpack.c.b16 %v1153, %v1153
      %v1218 = vpack.c.b16 %v1154, %v1154
      %v1219 = vpack.c.b16 %v1155, %v1155
      %v1220 = vpack.c.b16 %v1156, %v1156
      %v1221 = vpack.c.b16 %v1157, %v1157
      %v1222 = vpack.c.b16 %v1158, %v1158
      %v1223 = vpack.c.b16 %v1159, %v1159
      %v1224 = vpack.c.b16 %v1160, %v1160
      %v1225 = vpack.c.b16 %v1161, %v1161
      %v1226 = vpack.c.b16 %v1162, %v1162
      %v1227 = vpack.c.b16 %v1163, %v1163
      %v1228 = vpack.c.b16 %v1164, %v1164
      %v1229 = vpack.c.b16 %v1165, %v1165
      %v1230 = vpack.c.b16 %v1166, %v1166
      %v1231 = vpack.c.b16 %v1167, %v1167
      %v1232 = vpack.c.b16 %v1168, %v1168
      %v1233 = vpack.c.b16 %v1169, %v1169
      %v1234 = vpack.c.b16 %v1170, %v1170
      %v1235 = vpack.c.b16 %v1171, %v1171
      %v1236 = vpack.c.b16 %v1172, %v1172
      %v1237 = vpack.c.b16 %v1173, %v1173
      %v1238 = vpack.c.b16 %v1174, %v1174
      %v1239 = vpack.c.b16 %v1175, %v1175
      %v1240 = vpack.c.b16 %v1176, %v1176
      %v1241 = vpack.c.b16 %v1177, %v1177
      %v1242 = vpack.c.b16 %v1178, %v1178
      %v1243 = vpack.c.b16 %v1179, %v1179
      %v1244 = vpack.c.b16 %v1180, %v1180
      %v1245 = vpack.c.b16 %v1181, %v1181
      %v1246 = vpack.c.b16 %v1182, %v1182
      %v1247 = vpack.c.b16 %v1183, %v1183
      %v1248 = vpack.c.b16 %v1184, %v1184
      %v1249 = vpack.c.b16 %v1185, %v1185
      %v1250 = vpack.c.b16 %v1186, %v1186
      %v1251 = vpack.c.b16 %v1187, %v1187
      %v1252 = vpack.c.b16 %v1188, %v1188
      %v1253 = vpack.c.b16 %v1189, %v1189
      %v1254 = vpack.c.b16 %v1190, %v1190
      %v1255 = vpack.c.b16 %v1191, %v1191
      %v1256 = vpack.c.b16 %v1192, %v1192
      %v1257 = vpack.c.b16 %v1193, %v1193
      %v1258 = vpack.c.b16 %v1194, %v1194
      %vm1323 = vcmask 519168
      %1324 = vst.msk [vmem:[%s223] sm:$0xf] %vm1323, %v1195
      %1325 = vst.msk [vmem:[%s223 + $0x4] sm:$0xf] %vm1323, %v1196
      %1326 = vst.msk [vmem:[%s223 + $0x8] sm:$0xf] %vm1323, %v1197
      %1327 = vst.msk [vmem:[%s223 + $0xc] sm:$0xf] %vm1323, %v1198
      %1328 = vst.msk [vmem:[%s223 + $0x10] sm:$0xf] %vm1323, %v1199
      %1329 = vst.msk [vmem:[%s223 + $0x14] sm:$0xf] %vm1323, %v1200
      %1330 = vst.msk [vmem:[%s223 + $0x18] sm:$0xf] %vm1323, %v1201
      %1331 = vst.msk [vmem:[%s223 + $0x1c] sm:$0xf] %vm1323, %v1202
      %1332 = vst.msk [vmem:[%s223 + $0x20] sm:$0xf] %vm1323, %v1203
      %1333 = vst.msk [vmem:[%s223 + $0x24] sm:$0xf] %vm1323, %v1204
      %1334 = vst.msk [vmem:[%s223 + $0x28] sm:$0xf] %vm1323, %v1205
      %1335 = vst.msk [vmem:[%s223 + $0x2c] sm:$0xf] %vm1323, %v1206
      %1336 = vst.msk [vmem:[%s223 + $0x30] sm:$0xf] %vm1323, %v1207
      %1337 = vst.msk [vmem:[%s223 + $0x34] sm:$0xf] %vm1323, %v1208
      %1338 = vst.msk [vmem:[%s223 + $0x38] sm:$0xf] %vm1323, %v1209
      %1339 = vst.msk [vmem:[%s223 + $0x3c] sm:$0xf] %vm1323, %v1210
      %1340 = vst.msk [vmem:[%s223 + $0x40] sm:$0xf] %vm1323, %v1211
      %1341 = vst.msk [vmem:[%s223 + $0x44] sm:$0xf] %vm1323, %v1212
      %1342 = vst.msk [vmem:[%s223 + $0x48] sm:$0xf] %vm1323, %v1213
      %1343 = vst.msk [vmem:[%s223 + $0x4c] sm:$0xf] %vm1323, %v1214
      %1344 = vst.msk [vmem:[%s223 + $0x50] sm:$0xf] %vm1323, %v1215
      %1345 = vst.msk [vmem:[%s223 + $0x54] sm:$0xf] %vm1323, %v1216
      %1346 = vst.msk [vmem:[%s223 + $0x58] sm:$0xf] %vm1323, %v1217
      %1347 = vst.msk [vmem:[%s223 + $0x5c] sm:$0xf] %vm1323, %v1218
      %1348 = vst.msk [vmem:[%s223 + $0x60] sm:$0xf] %vm1323, %v1219
      %1349 = vst.msk [vmem:[%s223 + $0x64] sm:$0xf] %vm1323, %v1220
      %1350 = vst.msk [vmem:[%s223 + $0x68] sm:$0xf] %vm1323, %v1221
      %1351 = vst.msk [vmem:[%s223 + $0x6c] sm:$0xf] %vm1323, %v1222
      %1352 = vst.msk [vmem:[%s223 + $0x70] sm:$0xf] %vm1323, %v1223
      %1353 = vst.msk [vmem:[%s223 + $0x74] sm:$0xf] %vm1323, %v1224
      %1354 = vst.msk [vmem:[%s223 + $0x78] sm:$0xf] %vm1323, %v1225
      %1355 = vst.msk [vmem:[%s223 + $0x7c] sm:$0xf] %vm1323, %v1226
      %1356 = vst.msk [vmem:[%s223 + $0x80] sm:$0xf] %vm1323, %v1227
      %1357 = vst.msk [vmem:[%s223 + $0x84] sm:$0xf] %vm1323, %v1228
      %1358 = vst.msk [vmem:[%s223 + $0x88] sm:$0xf] %vm1323, %v1229
      %1359 = vst.msk [vmem:[%s223 + $0x8c] sm:$0xf] %vm1323, %v1230
      %1360 = vst.msk [vmem:[%s223 + $0x90] sm:$0xf] %vm1323, %v1231
      %1361 = vst.msk [vmem:[%s223 + $0x94] sm:$0xf] %vm1323, %v1232
      %1362 = vst.msk [vmem:[%s223 + $0x98] sm:$0xf] %vm1323, %v1233
      %1363 = vst.msk [vmem:[%s223 + $0x9c] sm:$0xf] %vm1323, %v1234
      %1364 = vst.msk [vmem:[%s223 + $0xa0] sm:$0xf] %vm1323, %v1235
      %1365 = vst.msk [vmem:[%s223 + $0xa4] sm:$0xf] %vm1323, %v1236
      %1366 = vst.msk [vmem:[%s223 + $0xa8] sm:$0xf] %vm1323, %v1237
      %1367 = vst.msk [vmem:[%s223 + $0xac] sm:$0xf] %vm1323, %v1238
      %1368 = vst.msk [vmem:[%s223 + $0xb0] sm:$0xf] %vm1323, %v1239
      %1369 = vst.msk [vmem:[%s223 + $0xb4] sm:$0xf] %vm1323, %v1240
      %1370 = vst.msk [vmem:[%s223 + $0xb8] sm:$0xf] %vm1323, %v1241
      %1371 = vst.msk [vmem:[%s223 + $0xbc] sm:$0xf] %vm1323, %v1242
      %1372 = vst.msk [vmem:[%s223 + $0xc0] sm:$0xf] %vm1323, %v1243
      %1373 = vst.msk [vmem:[%s223 + $0xc4] sm:$0xf] %vm1323, %v1244
      %1374 = vst.msk [vmem:[%s223 + $0xc8] sm:$0xf] %vm1323, %v1245
      %1375 = vst.msk [vmem:[%s223 + $0xcc] sm:$0xf] %vm1323, %v1246
      %1376 = vst.msk [vmem:[%s223 + $0xd0] sm:$0xf] %vm1323, %v1247
      %1377 = vst.msk [vmem:[%s223 + $0xd4] sm:$0xf] %vm1323, %v1248
      %1378 = vst.msk [vmem:[%s223 + $0xd8] sm:$0xf] %vm1323, %v1249
      %1379 = vst.msk [vmem:[%s223 + $0xdc] sm:$0xf] %vm1323, %v1250
      %1380 = vst.msk [vmem:[%s223 + $0xe0] sm:$0xf] %vm1323, %v1251
      %1381 = vst.msk [vmem:[%s223 + $0xe4] sm:$0xf] %vm1323, %v1252
      %1382 = vst.msk [vmem:[%s223 + $0xe8] sm:$0xf] %vm1323, %v1253
      %1383 = vst.msk [vmem:[%s223 + $0xec] sm:$0xf] %vm1323, %v1254
      %1384 = vst.msk [vmem:[%s223 + $0xf0] sm:$0xf] %vm1323, %v1255
      %1385 = vst.msk [vmem:[%s223 + $0xf4] sm:$0xf] %vm1323, %v1256
      %1386 = vst.msk [vmem:[%s223 + $0xf8] sm:$0xf] %vm1323, %v1257
      %1387 = vst.msk [vmem:[%s223 + $0xfc] sm:$0xf] %vm1323, %v1258
      %s1388 = smul.u32 64, %s18
      %p1389 = scmp.lt.s32.totalorder %s1388, 127
      %s1390 = scalar_select %p1389, %s1388, 127
      %p1391 = scmp.lt.s32.totalorder %s19, 0
      %s1392 = scalar_select %p1391, %s19, 0
      %s1393 = sadd.s32 %s1392, %s1390
      %s1394 = smul.addr %s1393, 4
      %s1395 = scalar_lea.vmem %s3, %s1394
      // Predicated region
      $region33: #{discriminator_forward.4} parent=31 // pred_check
        %p1396 = pneg %p124
      $region34: #{discriminator_forward.4} parent=31 // pred_check_branch
        %1398 = sbr.rel (%p1396) target = $region36
      $region35: #{discriminator_forward.4} parent=31 // pred_region
        %s1399 = smul.u32 64, %s18
      $region36: #{discriminator_forward.4} parent=31 // pred_fallthru
        _
    $region32: #{discriminator_forward.4} parent=5 // pred_fallthru
      _
    %p1400 = scmp.le.s32.totalorder 2, %s9
    // Predicated region
    $region37: #{discriminator_forward.4} parent=5 // pred_check
      %p1401 = pneg %p1400
    $region38: #{discriminator_forward.4} parent=5 // pred_check_branch
      %1403 = sbr.rel (%p1401) target = $region40
    $region39: #{discriminator_forward.4} parent=5 // pred_region
      %s1404 = ssub.s32 %s9, 2
      // Predicated region
      $region41: #{discriminator_forward.4} parent=39 // pred_check
        %p1405 = pneg %p130
      $region42: #{discriminator_forward.4} parent=39 // pred_check_branch
        %1407 = sbr.rel (%p1405) target = $region44
      $region43: #{discriminator_forward.4} parent=39 // pred_region
        %s1408 = smul.u32 64, %s20
        %p1409 = scmp.lt.s32.totalorder %s1408, 127
        %s1410 = scalar_select %p1409, %s1408, 127
        %p1411 = scmp.lt.s32.totalorder %s21, 0
        %s1412 = scalar_select %p1411, %s21, 0
        %s1413 = sadd.s32 %s1412, %s1410
        %s1414 = smul.addr %s1413, 4
        %s1415 = scalar_lea.vmem %s3, %s1414
      $region44: #{discriminator_forward.4} parent=39 // pred_fallthru
        _
    $region40: #{discriminator_forward.4} parent=5 // pred_fallthru
      _
  $region6: #{discriminator_forward.4} parent=0 // loop_footer
    %s13 = sadd.s32 1, %s9
  $region7: #{discriminator_forward.4} parent=0 // loop_footer_branch
    %8 = sbr.rel target = $region3
  $region8: #{discriminator_forward.4} parent=0 // loop_exit
    _

// kernel: discriminator_forward.5
$region0: #{discriminator_forward.5}
  #allocation0 [shape = 'u32[]', space=smem, size = 0x4, offset = 0x4, fixed_abs, tag = 'smem constant byte address 0x4 - core index']
  #allocation1 [shape = 'u32[144,128]{1,0:T(1,128)}', space=vmem, size = 0x12000, scoped, tag = 'internal scratch']
  %s0 = inlined_call_operand.vmem [shape: bf16[128,1728], index: 0, kind: input, shape index: {}]
  %s1 = inlined_call_operand.vmem [shape: bf16[1728,128], index: 1, kind: input, shape index: {}]
  %s2 = inlined_call_operand.vmem [shape: f32[1,128], index: 2, kind: input, shape index: {}]
  %s3 = inlined_call_operand.vmem [shape: bf16[128,128], index: 3, kind: output, shape index: {}]
  %s4 = sld [smem:[#allocation0]]
  $region45: #{discriminator_forward.5} parent=0
    _
  %s6 = ssub.s32 1, %s4
  %s7 = scalar_select 0, %s6, %s4
  loop: start=0, step=1, limit=4
  $region2: #{discriminator_forward.5} parent=0 // loop_pre_header
    _
  $region3: #{discriminator_forward.5} parent=0 // loop_header
    %s9 = sphi 0, %s13
    %p10 = scmp.ge.s32.totalorder %s9, 4
    %s16 = sphi 0, %s28
    %s17 = sphi 0, %s24
    %s18 = sphi 0, %s16
    %s19 = sphi 0, %s17
    %s20 = sphi 0, %s18
    %s21 = sphi 0, %s19
    %s31 = sphi 0, %s33
    %s34 = sphi 0, %s31
    %s35 = sphi 0, %s34
    %s51 = sphi 0, %s35
    %s57 = sphi 0, %s59
    %s60 = sphi 0, %s57
    %s61 = sphi 0, %s60
    %s77 = sphi 0, %s61
    %s83 = sphi 0, %s85
    %s86 = sphi 0, %s83
    %s87 = sphi 0, %s86
    %s103 = sphi 0, %s87
    %s111 = sphi 0, %s113
    %s114 = sphi 0, %s111
    %s115 = sphi 0, %s114
    %s131 = sphi 0, %s115
  $region4: #{discriminator_forward.5} parent=0 // loop_header_branch
    %12 = sbr.rel (%p10) target = $region8
  $region5: #{discriminator_forward.5} parent=0 // loop_body
    %s14 = ssub.s32 %s9, 1
    %s15 = ssub.s32 %s9, 2
    %s22 = sadd.s32 1, %s17
    %p23 = scmp.ge.s32.totalorder %s22, 1
    %s24 = scalar_select %p23, 0, %s22
    %s25 = sadd.s32 1, %s16
    %s26 = scalar_select %p23, %s25, %s16
    %p27 = scmp.ge.s32.totalorder %s26, 2
    %s28 = scalar_select %p27, 0, %s26
    %s29 = ssub.s32 %s16, %s28
    %p30 = scmp.eq.s32.totalorder %s29, 0
    %s32 = sadd.s32 %s31, 1
    %s33 = scalar_select %p30, %s31, %s32
    %p36 = pneg %p30
    %p37 = scmp.eq.s32.totalorder %s9, 1
    %p38 = por %p36, %p37
    %p39 = scmp.ne.s32.totalorder %s31, %s34
    %p40 = scmp.eq.s32.totalorder %s9, 0
    %p41 = por %p39, %p40
    %p42 = scmp.ne.s32.totalorder %s31, %s34
    %p43 = scmp.eq.s32.totalorder %s14, 1
    %p44 = por %p42, %p43
    %p45 = scmp.ne.s32.totalorder %s34, %s35
    %p46 = scmp.eq.s32.totalorder %s14, 0
    %p47 = por %p45, %p46
    %p48 = scmp.ne.s32.totalorder %s34, %s35
    %p49 = scmp.eq.s32.totalorder %s15, 1
    %p50 = por %p48, %p49
    %p52 = scmp.ne.s32.totalorder %s35, %s51
    %p53 = scmp.eq.s32.totalorder %s15, 0
    %p54 = por %p52, %p53
    %s55 = ssub.s32 %s17, %s24
    %p56 = scmp.eq.s32.totalorder %s55, 0
    %s58 = sadd.s32 %s57, 1
    %s59 = scalar_select %p56, %s57, %s58
    %p62 = pneg %p56
    %p63 = scmp.eq.s32.totalorder %s9, 1
    %p64 = por %p62, %p63
    %p65 = scmp.ne.s32.totalorder %s57, %s60
    %p66 = scmp.eq.s32.totalorder %s9, 0
    %p67 = por %p65, %p66
    %p68 = scmp.ne.s32.totalorder %s57, %s60
    %p69 = scmp.eq.s32.totalorder %s14, 1
    %p70 = por %p68, %p69
    %p71 = scmp.ne.s32.totalorder %s60, %s61
    %p72 = scmp.eq.s32.totalorder %s14, 0
    %p73 = por %p71, %p72
    %p74 = scmp.ne.s32.totalorder %s60, %s61
    %p75 = scmp.eq.s32.totalorder %s15, 1
    %p76 = por %p74, %p75
    %p78 = scmp.ne.s32.totalorder %s61, %s77
    %p79 = scmp.eq.s32.totalorder %s15, 0
    %p80 = por %p78, %p79
    %s81 = ssub.s32 %s17, %s24
    %p82 = scmp.eq.s32.totalorder %s81, 0
    %s84 = sadd.s32 %s83, 1
    %s85 = scalar_select %p82, %s83, %s84
    %p88 = pneg %p82
    %p89 = scmp.eq.s32.totalorder %s9, 1
    %p90 = por %p88, %p89
    %p91 = scmp.ne.s32.totalorder %s83, %s86
    %p92 = scmp.eq.s32.totalorder %s9, 0
    %p93 = por %p91, %p92
    %p94 = scmp.ne.s32.totalorder %s83, %s86
    %p95 = scmp.eq.s32.totalorder %s14, 1
    %p96 = por %p94, %p95
    %p97 = scmp.ne.s32.totalorder %s86, %s87
    %p98 = scmp.eq.s32.totalorder %s14, 0
    %p99 = por %p97, %p98
    %p100 = scmp.ne.s32.totalorder %s86, %s87
    %p101 = scmp.eq.s32.totalorder %s15, 1
    %p102 = por %p100, %p101
    %p104 = scmp.ne.s32.totalorder %s87, %s103
    %p105 = scmp.eq.s32.totalorder %s15, 0
    %p106 = por %p104, %p105
    %s107 = ssub.s32 %s16, %s28
    %s108 = ssub.s32 %s17, %s24
    %s109 = sor.u32 %s107, %s108
    %p110 = scmp.eq.s32.totalorder %s109, 0
    %s112 = sadd.s32 %s111, 1
    %s113 = scalar_select %p110, %s111, %s112
    %p116 = pneg %p110
    %p117 = scmp.eq.s32.totalorder %s9, 1
    %p118 = por %p116, %p117
    %p119 = scmp.ne.s32.totalorder %s111, %s114
    %p120 = scmp.eq.s32.totalorder %s9, 0
    %p121 = por %p119, %p120
    %p122 = scmp.ne.s32.totalorder %s111, %s114
    %p123 = scmp.eq.s32.totalorder %s14, 1
    %p124 = por %p122, %p123
    %p125 = scmp.ne.s32.totalorder %s114, %s115
    %p126 = scmp.eq.s32.totalorder %s14, 0
    %p127 = por %p125, %p126
    %p128 = scmp.ne.s32.totalorder %s114, %s115
    %p129 = scmp.eq.s32.totalorder %s15, 1
    %p130 = por %p128, %p129
    %p132 = scmp.ne.s32.totalorder %s115, %s131
    %p133 = scmp.eq.s32.totalorder %s15, 0
    %p134 = por %p132, %p133
    %p135 = scmp.le.s32.totalorder 1, %s9
    %p136 = scmp.lt.s32.totalorder %s9, 3
    %p137 = pnand %p135, %p136
    %p138 = pneg %p137
    // Predicated region
    $region9: #{discriminator_forward.5} parent=5 // pred_check
      _
    $region10: #{discriminator_forward.5} parent=5 // pred_check_branch
      %140 = sbr.rel (%p137) target = $region12
    $region11: #{discriminator_forward.5} parent=5 // pred_region
      %s141 = ssub.s32 %s9, 1
      // Predicated region
      $region13: #{discriminator_forward.5} parent=11 // pred_check
        %p142 = pneg %p73
      $region14: #{discriminator_forward.5} parent=11 // pred_check_branch
        %144 = sbr.rel (%p142) target = $region16
      $region15: #{discriminator_forward.5} parent=11 // pred_region
        %p145 = scmp.lt.s32.totalorder %s19, 0
        %s146 = scalar_select %p145, %s19, 0
        %s147 = smul.addr %s146, 4
        %s148 = scalar_lea.vmem %s1, %s147
      $region16: #{discriminator_forward.5} parent=11 // pred_fallthru
        _
      // Predicated region
      $region17: #{discriminator_forward.5} parent=11 // pred_check
        %p149 = pneg %p99
      $region18: #{discriminator_forward.5} parent=11 // pred_check_branch
        %151 = sbr.rel (%p149) target = $region20
      $region19: #{discriminator_forward.5} parent=11 // pred_region
        %p152 = scmp.lt.s32.totalorder %s19, 0
        %s153 = scalar_select %p152, %s19, 0
        %s154 = scalar_lea.vmem %s2, %s153
      $region20: #{discriminator_forward.5} parent=11 // pred_fallthru
        _
    $region12: #{discriminator_forward.5} parent=5 // pred_fallthru
      _
    %p155 = scmp.lt.s32.totalorder %s9, 2
    // Predicated region
    $region21: #{discriminator_forward.5} parent=5 // pred_check
      %p156 = pneg %p155
    $region22: #{discriminator_forward.5} parent=5 // pred_check_branch
      %158 = sbr.rel (%p156) target = $region24
    $region23: #{discriminator_forward.5} parent=5 // pred_region
      // Predicated region
      $region25: #{discriminator_forward.5} parent=23 // pred_check
        %p159 = pneg %p41
      $region26: #{discriminator_forward.5} parent=23 // pred_check_branch
        %161 = sbr.rel (%p159) target = $region28
      $region27: #{discriminator_forward.5} parent=23 // pred_region
        %s162 = smul.u32 8, %s16
        %p163 = scmp.lt.s32.totalorder %s162, 15
        %s164 = scalar_select %p163, %s162, 15
        %s165 = smul.addr %s164, 14
        %s166 = smul.addr %s165, 4
        %s167 = scalar_lea.vmem %s0, %s166
        %s168 = smul.u32 8, %s16
      $region28: #{discriminator_forward.5} parent=23 // pred_fallthru
        _
    $region24: #{discriminator_forward.5} parent=5 // pred_fallthru
      _
    %p169 = scmp.le.s32.totalorder 1, %s9
    %p170 = scmp.lt.s32.totalorder %s9, 3
    %p171 = pnand %p169, %p170
    %p172 = pneg %p171
    // Predicated region
    $region29: #{discriminator_forward.5} parent=5 // pred_check
      _
    $region30: #{discriminator_forward.5} parent=5 // pred_check_branch
      %174 = sbr.rel (%p171) target = $region32
    $region31: #{discriminator_forward.5} parent=5 // pred_region
      %s175 = ssub.s32 %s9, 1
      %s176 = smul.u32 8, %s18
      %p177 = scmp.lt.s32.totalorder %s176, 15
      %s178 = scalar_select %p177, %s176, 15
      %s179 = smul.addr %s178, 14
      %s180 = smul.addr %s179, 4
      %s181 = scalar_lea.vmem %s0, %s180
      %p182 = pneg %p47
      %p183 = pneg %p44
      %p184 = scmp.lt.s32.totalorder %s19, 0
      %s185 = scalar_select %p184, %s19, 0
      %s186 = smul.addr %s185, 4
      %s187 = scalar_lea.vmem %s1, %s186
      %p188 = pneg %p73
      %p189 = pneg %p70
      %p190 = scmp.lt.s32.totalorder %s19, 0
      %s191 = scalar_select %p190, %s19, 0
      %s192 = scalar_lea.vmem %s2, %s191
      %p193 = pneg %p99
      %p194 = pneg %p96
      %p195 = pneg %p127
      %p196 = pneg %p124
      %s197 = smul.u32 8, %s18
      %p198 = scmp.lt.s32.totalorder %s197, 15
      %s199 = scalar_select %p198, %s197, 15
      %p200 = scmp.lt.s32.totalorder %s19, 0
      %s201 = scalar_select %p200, %s19, 0
      %s202 = sadd.s32 %s201, %s199
      %s203 = smul.addr %s202, 4
      %s204 = scalar_lea.vmem %s3, %s203
      %s205 = smul.u32 8, %s18
      %p206 = scmp.lt.s32.totalorder %s205, 15
      %s207 = scalar_select %p206, %s205, 15
      %s208 = smul.addr %s207, 14
      %s209 = smul.addr %s208, 4
      %s210 = scalar_lea.vmem %s0, %s209
      %s211 = smul.u32 8, %s18
      %p212 = scmp.lt.s32.totalorder %s19, 0
      %s213 = scalar_select %p212, %s19, 0
      %s214 = smul.addr %s213, 4
      %s215 = scalar_lea.vmem %s1, %s214
      %p216 = scmp.lt.s32.totalorder %s19, 0
      %s217 = scalar_select %p216, %s19, 0
      %s218 = scalar_lea.vmem %s2, %s217
      %s219 = smul.u32 8, %s18
      %p220 = scmp.lt.s32.totalorder %s219, 15
      %s221 = scalar_select %p220, %s219, 15
      %p222 = scmp.lt.s32.totalorder %s19, 0
      %s223 = scalar_select %p222, %s19, 0
      %s224 = sadd.s32 %s223, %s221
      %s225 = smul.addr %s224, 4
      %s226 = scalar_lea.vmem %s3, %s225
      %s227 = smul.u32 8, %s18
      %v229 = vld [vmem:[%s210] sm:$0xff]
      %v230 = vld [vmem:[%s210 + $0x8] sm:$0xff]
      %v231 = vld [vmem:[%s210 + $0x10] sm:$0xff]
      %v232 = vld [vmem:[%s210 + $0x18] sm:$0xff]
      %v233 = vld [vmem:[%s210 + $0x20] sm:$0xff]
      %v234 = vld [vmem:[%s210 + $0x28] sm:$0xff]
      %v235 = vld [vmem:[%s210 + $0x30] sm:$0xff]
      %v236 = vld [vmem:[%s210 + $0x38] sm:$0xff]
      %v237 = vld [vmem:[%s210 + $0x40] sm:$0xff]
      %v238 = vld [vmem:[%s210 + $0x48] sm:$0xff]
      %v239 = vld [vmem:[%s210 + $0x50] sm:$0xff]
      %v240 = vld [vmem:[%s210 + $0x58] sm:$0xff]
      %v241 = vld [vmem:[%s210 + $0x60] sm:$0xff]
      %v242 = vld [vmem:[%s210 + $0x68] sm:$0xff]
      %v243 = vld [vmem:[%s210 + $0x70] sm:$0xff]
      %v244 = vld [vmem:[%s210 + $0x78] sm:$0xff]
      %v245 = vld [vmem:[%s210 + $0x80] sm:$0xff]
      %v246 = vld [vmem:[%s210 + $0x88] sm:$0xff]
      %v247 = vld [vmem:[%s210 + $0x90] sm:$0xff]
      %v248 = vld [vmem:[%s210 + $0x98] sm:$0xff]
      %v249 = vld [vmem:[%s210 + $0xa0] sm:$0xff]
      %v250 = vld [vmem:[%s210 + $0xa8] sm:$0xff]
      %v251 = vld [vmem:[%s210 + $0xb0] sm:$0xff]
      %v252 = vld [vmem:[%s210 + $0xb8] sm:$0xff]
      %v253 = vld [vmem:[%s210 + $0xc0] sm:$0xff]
      %v254 = vld [vmem:[%s210 + $0xc8] sm:$0xff]
      %v255 = vld [vmem:[%s210 + $0xd0] sm:$0xff]
      %v256 = vld [vmem:[%s210 + $0xd8] sm:$0xff]
      %v257 = vld [vmem:[%s210 + $0xe0] sm:$0xff]
      %v258 = vld [vmem:[%s210 + $0xe8] sm:$0xff]
      %v259 = vld [vmem:[%s210 + $0xf0] sm:$0xff]
      %v260 = vld [vmem:[%s210 + $0xf8] sm:$0xff]
      %v261 = vld [vmem:[%s210 + $0x100] sm:$0xff]
      %v262 = vld [vmem:[%s210 + $0x108] sm:$0xff]
      %v263 = vld [vmem:[%s210 + $0x110] sm:$0xff]
      %v264 = vld [vmem:[%s210 + $0x118] sm:$0xff]
      %v265 = vld [vmem:[%s210 + $0x120] sm:$0xff]
      %v266 = vld [vmem:[%s210 + $0x128] sm:$0xff]
      %v267 = vld [vmem:[%s210 + $0x130] sm:$0xff]
      %v268 = vld [vmem:[%s210 + $0x138] sm:$0xff]
      %v269 = vld [vmem:[%s210 + $0x140] sm:$0xff]
      %v270 = vld [vmem:[%s210 + $0x148] sm:$0xff]
      %v271 = vld [vmem:[%s210 + $0x150] sm:$0xff]
      %v272 = vld [vmem:[%s210 + $0x158] sm:$0xff]
      %v273 = vld [vmem:[%s210 + $0x160] sm:$0xff]
      %v274 = vld [vmem:[%s210 + $0x168] sm:$0xff]
      %v275 = vld [vmem:[%s210 + $0x170] sm:$0xff]
      %v276 = vld [vmem:[%s210 + $0x178] sm:$0xff]
      %v277 = vld [vmem:[%s210 + $0x180] sm:$0xff]
      %v278 = vld [vmem:[%s210 + $0x188] sm:$0xff]
      %v279 = vld [vmem:[%s210 + $0x190] sm:$0xff]
      %v280 = vld [vmem:[%s210 + $0x198] sm:$0xff]
      %v281 = vld [vmem:[%s210 + $0x1a0] sm:$0xff]
      %v282 = vld [vmem:[%s210 + $0x1a8] sm:$0xff]
      %v283 = vld [vmem:[%s210 + $0x1b0] sm:$0xff]
      %v284 = vld [vmem:[%s210 + $0x1b8] sm:$0xff]
      %v285 = vld [vmem:[%s215] sm:$0xf]
      %v286 = vld [vmem:[%s215 + $0x4] sm:$0xf]
      %v287 = vld [vmem:[%s215 + $0x8] sm:$0xf]
      %v288 = vld [vmem:[%s215 + $0xc] sm:$0xf]
      %v289 = vld [vmem:[%s215 + $0x10] sm:$0xf]
      %v290 = vld [vmem:[%s215 + $0x14] sm:$0xf]
      %v291 = vld [vmem:[%s215 + $0x18] sm:$0xf]
      %v292 = vld [vmem:[%s215 + $0x1c] sm:$0xf]
      %v293 = vld [vmem:[%s215 + $0x20] sm:$0xf]
      %v294 = vld [vmem:[%s215 + $0x24] sm:$0xf]
      %v295 = vld [vmem:[%s215 + $0x28] sm:$0xf]
      %v296 = vld [vmem:[%s215 + $0x2c] sm:$0xf]
      %v297 = vld [vmem:[%s215 + $0x30] sm:$0xf]
      %v298 = vld [vmem:[%s215 + $0x34] sm:$0xf]
      %v299 = vld [vmem:[%s215 + $0x38] sm:$0xf]
      %v300 = vld [vmem:[%s215 + $0x3c] sm:$0xf]
      %v301 = vld [vmem:[%s215 + $0x40] sm:$0xf]
      %v302 = vld [vmem:[%s215 + $0x44] sm:$0xf]
      %v303 = vld [vmem:[%s215 + $0x48] sm:$0xf]
      %v304 = vld [vmem:[%s215 + $0x4c] sm:$0xf]
      %v305 = vld [vmem:[%s215 + $0x50] sm:$0xf]
      %v306 = vld [vmem:[%s215 + $0x54] sm:$0xf]
      %v307 = vld [vmem:[%s215 + $0x58] sm:$0xf]
      %v308 = vld [vmem:[%s215 + $0x5c] sm:$0xf]
      %v309 = vld [vmem:[%s215 + $0x60] sm:$0xf]
      %v310 = vld [vmem:[%s215 + $0x64] sm:$0xf]
      %v311 = vld [vmem:[%s215 + $0x68] sm:$0xf]
      %v312 = vld [vmem:[%s215 + $0x6c] sm:$0xf]
      %v313 = vld [vmem:[%s215 + $0x70] sm:$0xf]
      %v314 = vld [vmem:[%s215 + $0x74] sm:$0xf]
      %v315 = vld [vmem:[%s215 + $0x78] sm:$0xf]
      %v316 = vld [vmem:[%s215 + $0x7c] sm:$0xf]
      %v317 = vld [vmem:[%s215 + $0x80] sm:$0xf]
      %v318 = vld [vmem:[%s215 + $0x84] sm:$0xf]
      %v319 = vld [vmem:[%s215 + $0x88] sm:$0xf]
      %v320 = vld [vmem:[%s215 + $0x8c] sm:$0xf]
      %v321 = vld [vmem:[%s215 + $0x90] sm:$0xf]
      %v322 = vld [vmem:[%s215 + $0x94] sm:$0xf]
      %v323 = vld [vmem:[%s215 + $0x98] sm:$0xf]
      %v324 = vld [vmem:[%s215 + $0x9c] sm:$0xf]
      %v325 = vld [vmem:[%s215 + $0xa0] sm:$0xf]
      %v326 = vld [vmem:[%s215 + $0xa4] sm:$0xf]
      %v327 = vld [vmem:[%s215 + $0xa8] sm:$0xf]
      %v328 = vld [vmem:[%s215 + $0xac] sm:$0xf]
      %v329 = vld [vmem:[%s215 + $0xb0] sm:$0xf]
      %v330 = vld [vmem:[%s215 + $0xb4] sm:$0xf]
      %v331 = vld [vmem:[%s215 + $0xb8] sm:$0xf]
      %v332 = vld [vmem:[%s215 + $0xbc] sm:$0xf]
      %v333 = vld [vmem:[%s215 + $0xc0] sm:$0xf]
      %v334 = vld [vmem:[%s215 + $0xc4] sm:$0xf]
      %v335 = vld [vmem:[%s215 + $0xc8] sm:$0xf]
      %v336 = vld [vmem:[%s215 + $0xcc] sm:$0xf]
      %v337 = vld [vmem:[%s215 + $0xd0] sm:$0xf]
      %v338 = vld [vmem:[%s215 + $0xd4] sm:$0xf]
      %v339 = vld [vmem:[%s215 + $0xd8] sm:$0xf]
      %v340 = vld [vmem:[%s215 + $0xdc] sm:$0xf]
      %v341 = vld [vmem:[%s215 + $0xe0] sm:$0xf]
      %v342 = vld [vmem:[%s215 + $0xe4] sm:$0xf]
      %v343 = vld [vmem:[%s215 + $0xe8] sm:$0xf]
      %v344 = vld [vmem:[%s215 + $0xec] sm:$0xf]
      %v345 = vld [vmem:[%s215 + $0xf0] sm:$0xf]
      %v346 = vld [vmem:[%s215 + $0xf4] sm:$0xf]
      %v347 = vld [vmem:[%s215 + $0xf8] sm:$0xf]
      %v348 = vld [vmem:[%s215 + $0xfc] sm:$0xf]
      %v349 = vld [vmem:[%s215 + $0x100] sm:$0xf]
      %v350 = vld [vmem:[%s215 + $0x104] sm:$0xf]
      %v351 = vld [vmem:[%s215 + $0x108] sm:$0xf]
      %v352 = vld [vmem:[%s215 + $0x10c] sm:$0xf]
      %v353 = vld [vmem:[%s215 + $0x110] sm:$0xf]
      %v354 = vld [vmem:[%s215 + $0x114] sm:$0xf]
      %v355 = vld [vmem:[%s215 + $0x118] sm:$0xf]
      %v356 = vld [vmem:[%s215 + $0x11c] sm:$0xf]
      %v357 = vld [vmem:[%s215 + $0x120] sm:$0xf]
      %v358 = vld [vmem:[%s215 + $0x124] sm:$0xf]
      %v359 = vld [vmem:[%s215 + $0x128] sm:$0xf]
      %v360 = vld [vmem:[%s215 + $0x12c] sm:$0xf]
      %v361 = vld [vmem:[%s215 + $0x130] sm:$0xf]
      %v362 = vld [vmem:[%s215 + $0x134] sm:$0xf]
      %v363 = vld [vmem:[%s215 + $0x138] sm:$0xf]
      %v364 = vld [vmem:[%s215 + $0x13c] sm:$0xf]
      %v365 = vld [vmem:[%s215 + $0x140] sm:$0xf]
      %v366 = vld [vmem:[%s215 + $0x144] sm:$0xf]
      %v367 = vld [vmem:[%s215 + $0x148] sm:$0xf]
      %v368 = vld [vmem:[%s215 + $0x14c] sm:$0xf]
      %v369 = vld [vmem:[%s215 + $0x150] sm:$0xf]
      %v370 = vld [vmem:[%s215 + $0x154] sm:$0xf]
      %v371 = vld [vmem:[%s215 + $0x158] sm:$0xf]
      %v372 = vld [vmem:[%s215 + $0x15c] sm:$0xf]
      %v373 = vld [vmem:[%s215 + $0x160] sm:$0xf]
      %v374 = vld [vmem:[%s215 + $0x164] sm:$0xf]
      %v375 = vld [vmem:[%s215 + $0x168] sm:$0xf]
      %v376 = vld [vmem:[%s215 + $0x16c] sm:$0xf]
      %v377 = vld [vmem:[%s215 + $0x170] sm:$0xf]
      %v378 = vld [vmem:[%s215 + $0x174] sm:$0xf]
      %v379 = vld [vmem:[%s215 + $0x178] sm:$0xf]
      %v380 = vld [vmem:[%s215 + $0x17c] sm:$0xf]
      %v381 = vld [vmem:[%s215 + $0x180] sm:$0xf]
      %v382 = vld [vmem:[%s215 + $0x184] sm:$0xf]
      %v383 = vld [vmem:[%s215 + $0x188] sm:$0xf]
      %v384 = vld [vmem:[%s215 + $0x18c] sm:$0xf]
      %v385 = vld [vmem:[%s215 + $0x190] sm:$0xf]
      %v386 = vld [vmem:[%s215 + $0x194] sm:$0xf]
      %v387 = vld [vmem:[%s215 + $0x198] sm:$0xf]
      %v388 = vld [vmem:[%s215 + $0x19c] sm:$0xf]
      %v389 = vld [vmem:[%s215 + $0x1a0] sm:$0xf]
      %v390 = vld [vmem:[%s215 + $0x1a4] sm:$0xf]
      %v391 = vld [vmem:[%s215 + $0x1a8] sm:$0xf]
      %v392 = vld [vmem:[%s215 + $0x1ac] sm:$0xf]
      %v393 = vld [vmem:[%s215 + $0x1b0] sm:$0xf]
      %v394 = vld [vmem:[%s215 + $0x1b4] sm:$0xf]
      %v395 = vld [vmem:[%s215 + $0x1b8] sm:$0xf]
      %v396 = vld [vmem:[%s215 + $0x1bc] sm:$0xf]
      %v397 = vld [vmem:[%s215 + $0x1c0] sm:$0xf]
      %v398 = vld [vmem:[%s215 + $0x1c4] sm:$0xf]
      %v399 = vld [vmem:[%s215 + $0x1c8] sm:$0xf]
      %v400 = vld [vmem:[%s215 + $0x1cc] sm:$0xf]
      %v401 = vld [vmem:[%s215 + $0x1d0] sm:$0xf]
      %v402 = vld [vmem:[%s215 + $0x1d4] sm:$0xf]
      %v403 = vld [vmem:[%s215 + $0x1d8] sm:$0xf]
      %v404 = vld [vmem:[%s215 + $0x1dc] sm:$0xf]
      %v405 = vld [vmem:[%s215 + $0x1e0] sm:$0xf]
      %v406 = vld [vmem:[%s215 + $0x1e4] sm:$0xf]
      %v407 = vld [vmem:[%s215 + $0x1e8] sm:$0xf]
      %v408 = vld [vmem:[%s215 + $0x1ec] sm:$0xf]
      %v409 = vld [vmem:[%s215 + $0x1f0] sm:$0xf]
      %v410 = vld [vmem:[%s215 + $0x1f4] sm:$0xf]
      %v411 = vld [vmem:[%s215 + $0x1f8] sm:$0xf]
      %v412 = vld [vmem:[%s215 + $0x1fc] sm:$0xf]
      %v413 = vld [vmem:[%s215 + $0x200] sm:$0xf]
      %v414 = vld [vmem:[%s215 + $0x204] sm:$0xf]
      %v415 = vld [vmem:[%s215 + $0x208] sm:$0xf]
      %v416 = vld [vmem:[%s215 + $0x20c] sm:$0xf]
      %v417 = vld [vmem:[%s215 + $0x210] sm:$0xf]
      %v418 = vld [vmem:[%s215 + $0x214] sm:$0xf]
      %v419 = vld [vmem:[%s215 + $0x218] sm:$0xf]
      %v420 = vld [vmem:[%s215 + $0x21c] sm:$0xf]
      %v421 = vld [vmem:[%s215 + $0x220] sm:$0xf]
      %v422 = vld [vmem:[%s215 + $0x224] sm:$0xf]
      %v423 = vld [vmem:[%s215 + $0x228] sm:$0xf]
      %v424 = vld [vmem:[%s215 + $0x22c] sm:$0xf]
      %v425 = vld [vmem:[%s215 + $0x230] sm:$0xf]
      %v426 = vld [vmem:[%s215 + $0x234] sm:$0xf]
      %v427 = vld [vmem:[%s215 + $0x238] sm:$0xf]
      %v428 = vld [vmem:[%s215 + $0x23c] sm:$0xf]
      %v429 = vld [vmem:[%s215 + $0x240] sm:$0xf]
      %v430 = vld [vmem:[%s215 + $0x244] sm:$0xf]
      %v431 = vld [vmem:[%s215 + $0x248] sm:$0xf]
      %v432 = vld [vmem:[%s215 + $0x24c] sm:$0xf]
      %v433 = vld [vmem:[%s215 + $0x250] sm:$0xf]
      %v434 = vld [vmem:[%s215 + $0x254] sm:$0xf]
      %v435 = vld [vmem:[%s215 + $0x258] sm:$0xf]
      %v436 = vld [vmem:[%s215 + $0x25c] sm:$0xf]
      %v437 = vld [vmem:[%s215 + $0x260] sm:$0xf]
      %v438 = vld [vmem:[%s215 + $0x264] sm:$0xf]
      %v439 = vld [vmem:[%s215 + $0x268] sm:$0xf]
      %v440 = vld [vmem:[%s215 + $0x26c] sm:$0xf]
      %v441 = vld [vmem:[%s215 + $0x270] sm:$0xf]
      %v442 = vld [vmem:[%s215 + $0x274] sm:$0xf]
      %v443 = vld [vmem:[%s215 + $0x278] sm:$0xf]
      %v444 = vld [vmem:[%s215 + $0x27c] sm:$0xf]
      %v445 = vld [vmem:[%s215 + $0x280] sm:$0xf]
      %v446 = vld [vmem:[%s215 + $0x284] sm:$0xf]
      %v447 = vld [vmem:[%s215 + $0x288] sm:$0xf]
      %v448 = vld [vmem:[%s215 + $0x28c] sm:$0xf]
      %v449 = vld [vmem:[%s215 + $0x290] sm:$0xf]
      %v450 = vld [vmem:[%s215 + $0x294] sm:$0xf]
      %v451 = vld [vmem:[%s215 + $0x298] sm:$0xf]
      %v452 = vld [vmem:[%s215 + $0x29c] sm:$0xf]
      %v453 = vld [vmem:[%s215 + $0x2a0] sm:$0xf]
      %v454 = vld [vmem:[%s215 + $0x2a4] sm:$0xf]
      %v455 = vld [vmem:[%s215 + $0x2a8] sm:$0xf]
      %v456 = vld [vmem:[%s215 + $0x2ac] sm:$0xf]
      %v457 = vld [vmem:[%s215 + $0x2b0] sm:$0xf]
      %v458 = vld [vmem:[%s215 + $0x2b4] sm:$0xf]
      %v459 = vld [vmem:[%s215 + $0x2b8] sm:$0xf]
      %v460 = vld [vmem:[%s215 + $0x2bc] sm:$0xf]
      %v461 = vld [vmem:[%s215 + $0x2c0] sm:$0xf]
      %v462 = vld [vmem:[%s215 + $0x2c4] sm:$0xf]
      %v463 = vld [vmem:[%s215 + $0x2c8] sm:$0xf]
      %v464 = vld [vmem:[%s215 + $0x2cc] sm:$0xf]
      %v465 = vld [vmem:[%s215 + $0x2d0] sm:$0xf]
      %v466 = vld [vmem:[%s215 + $0x2d4] sm:$0xf]
      %v467 = vld [vmem:[%s215 + $0x2d8] sm:$0xf]
      %v468 = vld [vmem:[%s215 + $0x2dc] sm:$0xf]
      %v469 = vld [vmem:[%s215 + $0x2e0] sm:$0xf]
      %v470 = vld [vmem:[%s215 + $0x2e4] sm:$0xf]
      %v471 = vld [vmem:[%s215 + $0x2e8] sm:$0xf]
      %v472 = vld [vmem:[%s215 + $0x2ec] sm:$0xf]
      %v473 = vld [vmem:[%s215 + $0x2f0] sm:$0xf]
      %v474 = vld [vmem:[%s215 + $0x2f4] sm:$0xf]
      %v475 = vld [vmem:[%s215 + $0x2f8] sm:$0xf]
      %v476 = vld [vmem:[%s215 + $0x2fc] sm:$0xf]
      %v477 = vld [vmem:[%s215 + $0x300] sm:$0xf]
      %v478 = vld [vmem:[%s215 + $0x304] sm:$0xf]
      %v479 = vld [vmem:[%s215 + $0x308] sm:$0xf]
      %v480 = vld [vmem:[%s215 + $0x30c] sm:$0xf]
      %v481 = vld [vmem:[%s215 + $0x310] sm:$0xf]
      %v482 = vld [vmem:[%s215 + $0x314] sm:$0xf]
      %v483 = vld [vmem:[%s215 + $0x318] sm:$0xf]
      %v484 = vld [vmem:[%s215 + $0x31c] sm:$0xf]
      %v485 = vld [vmem:[%s215 + $0x320] sm:$0xf]
      %v486 = vld [vmem:[%s215 + $0x324] sm:$0xf]
      %v487 = vld [vmem:[%s215 + $0x328] sm:$0xf]
      %v488 = vld [vmem:[%s215 + $0x32c] sm:$0xf]
      %v489 = vld [vmem:[%s215 + $0x330] sm:$0xf]
      %v490 = vld [vmem:[%s215 + $0x334] sm:$0xf]
      %v491 = vld [vmem:[%s215 + $0x338] sm:$0xf]
      %v492 = vld [vmem:[%s215 + $0x33c] sm:$0xf]
      %v493 = vld [vmem:[%s215 + $0x340] sm:$0xf]
      %v494 = vld [vmem:[%s215 + $0x344] sm:$0xf]
      %v495 = vld [vmem:[%s215 + $0x348] sm:$0xf]
      %v496 = vld [vmem:[%s215 + $0x34c] sm:$0xf]
      %v497 = vld [vmem:[%s215 + $0x350] sm:$0xf]
      %v498 = vld [vmem:[%s215 + $0x354] sm:$0xf]
      %v499 = vld [vmem:[%s215 + $0x358] sm:$0xf]
      %v500 = vld [vmem:[%s215 + $0x35c] sm:$0xf]
      %v501 = vld [vmem:[%s218] sm:$0x1]
      %v503 = vlaneseq
      %v504 = vshrl.u32 %v503, 7
      %v505 = vsub.s32 0, %v504
      %v506 = vrot.slane %v501, %v505
      %v564 = vunpack.c.l.b16 %v229
      %v565 = vunpack.c.h.b16 %v229
      %v566 = vunpack.c.l.b16 %v230
      %v567 = vunpack.c.h.b16 %v230
      %v568 = vunpack.c.l.b16 %v231
      %v569 = vunpack.c.h.b16 %v231
      %v570 = vunpack.c.l.b16 %v232
      %v571 = vunpack.c.h.b16 %v232
      %v572 = vunpack.c.l.b16 %v233
      %v573 = vunpack.c.h.b16 %v233
      %v574 = vunpack.c.l.b16 %v234
      %v575 = vunpack.c.h.b16 %v234
      %v576 = vunpack.c.l.b16 %v235
      %v577 = vunpack.c.h.b16 %v235
      %v578 = vunpack.c.l.b16 %v236
      %v579 = vunpack.c.h.b16 %v236
      %v580 = vunpack.c.l.b16 %v237
      %v581 = vunpack.c.h.b16 %v237
      %v582 = vunpack.c.l.b16 %v238
      %v583 = vunpack.c.h.b16 %v238
      %v584 = vunpack.c.l.b16 %v239
      %v585 = vunpack.c.h.b16 %v239
      %v586 = vunpack.c.l.b16 %v240
      %v587 = vunpack.c.h.b16 %v240
      %v588 = vunpack.c.l.b16 %v241
      %v589 = vunpack.c.h.b16 %v241
      %v590 = vunpack.c.l.b16 %v242
      %v591 = vunpack.c.h.b16 %v242
      %v592 = vunpack.c.l.b16 %v243
      %v593 = vunpack.c.h.b16 %v243
      %v594 = vunpack.c.l.b16 %v244
      %v595 = vunpack.c.h.b16 %v244
      %v596 = vunpack.c.l.b16 %v245
      %v597 = vunpack.c.h.b16 %v245
      %v598 = vunpack.c.l.b16 %v246
      %v599 = vunpack.c.h.b16 %v246
      %v600 = vunpack.c.l.b16 %v247
      %v601 = vunpack.c.h.b16 %v247
      %v602 = vunpack.c.l.b16 %v248
      %v603 = vunpack.c.h.b16 %v248
      %v604 = vunpack.c.l.b16 %v249
      %v605 = vunpack.c.h.b16 %v249
      %v606 = vunpack.c.l.b16 %v250
      %v607 = vunpack.c.h.b16 %v250
      %v608 = vunpack.c.l.b16 %v251
      %v609 = vunpack.c.h.b16 %v251
      %v610 = vunpack.c.l.b16 %v252
      %v611 = vunpack.c.h.b16 %v252
      %v612 = vunpack.c.l.b16 %v253
      %v613 = vunpack.c.h.b16 %v253
      %v614 = vunpack.c.l.b16 %v254
      %v615 = vunpack.c.h.b16 %v254
      %v616 = vunpack.c.l.b16 %v255
      %v617 = vunpack.c.h.b16 %v255
      %v618 = vunpack.c.l.b16 %v256
      %v619 = vunpack.c.h.b16 %v256
      %v620 = vunpack.c.l.b16 %v257
      %v621 = vunpack.c.h.b16 %v257
      %v622 = vunpack.c.l.b16 %v258
      %v623 = vunpack.c.h.b16 %v258
      %v624 = vunpack.c.l.b16 %v259
      %v625 = vunpack.c.h.b16 %v259
      %v626 = vunpack.c.l.b16 %v260
      %v627 = vunpack.c.h.b16 %v260
      %v628 = vunpack.c.l.b16 %v261
      %v629 = vunpack.c.h.b16 %v261
      %v630 = vunpack.c.l.b16 %v262
      %v631 = vunpack.c.h.b16 %v262
      %v632 = vunpack.c.l.b16 %v263
      %v633 = vunpack.c.h.b16 %v263
      %v634 = vunpack.c.l.b16 %v264
      %v635 = vunpack.c.h.b16 %v264
      %v636 = vunpack.c.l.b16 %v265
      %v637 = vunpack.c.h.b16 %v265
      %v638 = vunpack.c.l.b16 %v266
      %v639 = vunpack.c.h.b16 %v266
      %v640 = vunpack.c.l.b16 %v267
      %v641 = vunpack.c.h.b16 %v267
      %v642 = vunpack.c.l.b16 %v268
      %v643 = vunpack.c.h.b16 %v268
      %v644 = vunpack.c.l.b16 %v269
      %v645 = vunpack.c.h.b16 %v269
      %v646 = vunpack.c.l.b16 %v270
      %v647 = vunpack.c.h.b16 %v270
      %v648 = vunpack.c.l.b16 %v271
      %v649 = vunpack.c.h.b16 %v271
      %v650 = vunpack.c.l.b16 %v272
      %v651 = vunpack.c.h.b16 %v272
      %v652 = vunpack.c.l.b16 %v273
      %v653 = vunpack.c.h.b16 %v273
      %v654 = vunpack.c.l.b16 %v274
      %v655 = vunpack.c.h.b16 %v274
      %v656 = vunpack.c.l.b16 %v275
      %v657 = vunpack.c.h.b16 %v275
      %v658 = vunpack.c.l.b16 %v276
      %v659 = vunpack.c.h.b16 %v276
      %v660 = vunpack.c.l.b16 %v277
      %v661 = vunpack.c.h.b16 %v277
      %v662 = vunpack.c.l.b16 %v278
      %v663 = vunpack.c.h.b16 %v278
      %v664 = vunpack.c.l.b16 %v279
      %v665 = vunpack.c.h.b16 %v279
      %v666 = vunpack.c.l.b16 %v280
      %v667 = vunpack.c.h.b16 %v280
      %v668 = vunpack.c.l.b16 %v281
      %v669 = vunpack.c.h.b16 %v281
      %v670 = vunpack.c.l.b16 %v282
      %v671 = vunpack.c.h.b16 %v282
      %v672 = vunpack.c.l.b16 %v283
      %v673 = vunpack.c.h.b16 %v283
      %v674 = vunpack.c.l.b16 %v284
      %v675 = vunpack.c.h.b16 %v284
      %v676 = vpack.c.b16 %v578, %v564
      %v677 = vpack.c.b16 %v579, %v565
      %v678 = vpack.c.b16 %v580, %v566
      %v679 = vpack.c.b16 %v581, %v567
      %v680 = vpack.c.b16 %v582, %v568
      %v681 = vpack.c.b16 %v583, %v569
      %v682 = vpack.c.b16 %v584, %v570
      %v683 = vpack.c.b16 %v585, %v571
      %v684 = vpack.c.b16 %v586, %v572
      %v685 = vpack.c.b16 %v587, %v573
      %v686 = vpack.c.b16 %v588, %v574
      %v687 = vpack.c.b16 %v589, %v575
      %v688 = vpack.c.b16 %v590, %v576
      %v689 = vpack.c.b16 %v591, %v577
      %v690 = vpack.c.b16 %v606, %v592
      %v691 = vpack.c.b16 %v607, %v593
      %v692 = vpack.c.b16 %v608, %v594
      %v693 = vpack.c.b16 %v609, %v595
      %v694 = vpack.c.b16 %v610, %v596
      %v695 = vpack.c.b16 %v611, %v597
      %v696 = vpack.c.b16 %v612, %v598
      %v697 = vpack.c.b16 %v613, %v599
      %v698 = vpack.c.b16 %v614, %v600
      %v699 = vpack.c.b16 %v615, %v601
      %v700 = vpack.c.b16 %v616, %v602
      %v701 = vpack.c.b16 %v617, %v603
      %v702 = vpack.c.b16 %v618, %v604
      %v703 = vpack.c.b16 %v619, %v605
      %v704 = vpack.c.b16 %v634, %v620
      %v705 = vpack.c.b16 %v635, %v621
      %v706 = vpack.c.b16 %v636, %v622
      %v707 = vpack.c.b16 %v637, %v623
      %v708 = vpack.c.b16 %v638, %v624
      %v709 = vpack.c.b16 %v639, %v625
      %v710 = vpack.c.b16 %v640, %v626
      %v711 = vpack.c.b16 %v641, %v627
      %v712 = vpack.c.b16 %v642, %v628
      %v713 = vpack.c.b16 %v643, %v629
      %v714 = vpack.c.b16 %v644, %v630
      %v715 = vpack.c.b16 %v645, %v631
      %v716 = vpack.c.b16 %v646, %v632
      %v717 = vpack.c.b16 %v647, %v633
      %v718 = vpack.c.b16 %v662, %v648
      %v719 = vpack.c.b16 %v663, %v649
      %v720 = vpack.c.b16 %v664, %v650
      %v721 = vpack.c.b16 %v665, %v651
      %v722 = vpack.c.b16 %v666, %v652
      %v723 = vpack.c.b16 %v667, %v653
      %v724 = vpack.c.b16 %v668, %v654
      %v725 = vpack.c.b16 %v669, %v655
      %v726 = vpack.c.b16 %v670, %v656
      %v727 = vpack.c.b16 %v671, %v657
      %v728 = vpack.c.b16 %v672, %v658
      %v729 = vpack.c.b16 %v673, %v659
      %v730 = vpack.c.b16 %v674, %v660
      %v731 = vpack.c.b16 %v675, %v661
      %v1000 = vunpack.c.l.b16 %v285
      %v1001 = vunpack.c.l.b16 %v286
      %v1002 = vunpack.c.l.b16 %v287
      %v1003 = vunpack.c.l.b16 %v288
      %v1004 = vunpack.c.l.b16 %v289
      %v1005 = vunpack.c.l.b16 %v290
      %v1006 = vunpack.c.l.b16 %v291
      %v1007 = vunpack.c.l.b16 %v292
      %v1008 = vunpack.c.l.b16 %v293
      %v1009 = vunpack.c.l.b16 %v294
      %v1010 = vunpack.c.l.b16 %v295
      %v1011 = vunpack.c.l.b16 %v296
      %v1012 = vunpack.c.l.b16 %v297
      %v1013 = vunpack.c.l.b16 %v298
      %v1014 = vunpack.c.l.b16 %v299
      %v1015 = vunpack.c.l.b16 %v300
      %v1016 = vunpack.c.l.b16 %v301
      %v1017 = vunpack.c.l.b16 %v302
      %v1018 = vunpack.c.l.b16 %v303
      %v1019 = vunpack.c.l.b16 %v304
      %v1020 = vunpack.c.l.b16 %v305
      %v1021 = vunpack.c.l.b16 %v306
      %v1022 = vunpack.c.l.b16 %v307
      %v1023 = vunpack.c.l.b16 %v308
      %v1024 = vunpack.c.l.b16 %v309
      %v1025 = vunpack.c.l.b16 %v310
      %v1026 = vunpack.c.l.b16 %v311
      %v1027 = vunpack.c.l.b16 %v312
      %v1028 = vunpack.c.l.b16 %v313
      %v1029 = vunpack.c.l.b16 %v314
      %v1030 = vunpack.c.l.b16 %v315
      %v1031 = vunpack.c.l.b16 %v316
      %v1032 = vunpack.c.l.b16 %v317
      %v1033 = vunpack.c.l.b16 %v318
      %v1034 = vunpack.c.l.b16 %v319
      %v1035 = vunpack.c.l.b16 %v320
      %v1036 = vunpack.c.l.b16 %v321
      %v1037 = vunpack.c.l.b16 %v322
      %v1038 = vunpack.c.l.b16 %v323
      %v1039 = vunpack.c.l.b16 %v324
      %v1040 = vunpack.c.l.b16 %v325
      %v1041 = vunpack.c.l.b16 %v326
      %v1042 = vunpack.c.l.b16 %v327
      %v1043 = vunpack.c.l.b16 %v328
      %v1044 = vunpack.c.l.b16 %v329
      %v1045 = vunpack.c.l.b16 %v330
      %v1046 = vunpack.c.l.b16 %v331
      %v1047 = vunpack.c.l.b16 %v332
      %v1048 = vunpack.c.l.b16 %v333
      %v1049 = vunpack.c.l.b16 %v334
      %v1050 = vunpack.c.l.b16 %v335
      %v1051 = vunpack.c.l.b16 %v336
      %v1052 = vunpack.c.l.b16 %v337
      %v1053 = vunpack.c.l.b16 %v338
      %v1054 = vunpack.c.l.b16 %v339
      %v1055 = vunpack.c.l.b16 %v340
      %v1056 = vunpack.c.l.b16 %v341
      %v1057 = vunpack.c.l.b16 %v342
      %v1058 = vunpack.c.l.b16 %v343
      %v1059 = vunpack.c.l.b16 %v344
      %v1060 = vunpack.c.l.b16 %v345
      %v1061 = vunpack.c.l.b16 %v346
      %v1062 = vunpack.c.l.b16 %v347
      %v1063 = vunpack.c.l.b16 %v348
      %v1064 = vunpack.c.l.b16 %v349
      %v1065 = vunpack.c.l.b16 %v350
      %v1066 = vunpack.c.l.b16 %v351
      %v1067 = vunpack.c.l.b16 %v352
      %v1068 = vunpack.c.l.b16 %v353
      %v1069 = vunpack.c.l.b16 %v354
      %v1070 = vunpack.c.l.b16 %v355
      %v1071 = vunpack.c.l.b16 %v356
      %v1072 = vunpack.c.l.b16 %v357
      %v1073 = vunpack.c.l.b16 %v358
      %v1074 = vunpack.c.l.b16 %v359
      %v1075 = vunpack.c.l.b16 %v360
      %v1076 = vunpack.c.l.b16 %v361
      %v1077 = vunpack.c.l.b16 %v362
      %v1078 = vunpack.c.l.b16 %v363
      %v1079 = vunpack.c.l.b16 %v364
      %v1080 = vunpack.c.l.b16 %v365
      %v1081 = vunpack.c.l.b16 %v366
      %v1082 = vunpack.c.l.b16 %v367
      %v1083 = vunpack.c.l.b16 %v368
      %v1084 = vunpack.c.l.b16 %v369
      %v1085 = vunpack.c.l.b16 %v370
      %v1086 = vunpack.c.l.b16 %v371
      %v1087 = vunpack.c.l.b16 %v372
      %v1088 = vunpack.c.l.b16 %v373
      %v1089 = vunpack.c.l.b16 %v374
      %v1090 = vunpack.c.l.b16 %v375
      %v1091 = vunpack.c.l.b16 %v376
      %v1092 = vunpack.c.l.b16 %v377
      %v1093 = vunpack.c.l.b16 %v378
      %v1094 = vunpack.c.l.b16 %v379
      %v1095 = vunpack.c.l.b16 %v380
      %v1096 = vunpack.c.l.b16 %v381
      %v1097 = vunpack.c.l.b16 %v382
      %v1098 = vunpack.c.l.b16 %v383
      %v1099 = vunpack.c.l.b16 %v384
      %v1100 = vunpack.c.l.b16 %v385
      %v1101 = vunpack.c.l.b16 %v386
      %v1102 = vunpack.c.l.b16 %v387
      %v1103 = vunpack.c.l.b16 %v388
      %v1104 = vunpack.c.l.b16 %v389
      %v1105 = vunpack.c.l.b16 %v390
      %v1106 = vunpack.c.l.b16 %v391
      %v1107 = vunpack.c.l.b16 %v392
      %v1108 = vunpack.c.l.b16 %v393
      %v1109 = vunpack.c.l.b16 %v394
      %v1110 = vunpack.c.l.b16 %v395
      %v1111 = vunpack.c.l.b16 %v396
      %v1112 = vunpack.c.l.b16 %v397
      %v1113 = vunpack.c.l.b16 %v398
      %v1114 = vunpack.c.l.b16 %v399
      %v1115 = vunpack.c.l.b16 %v400
      %v1116 = vunpack.c.l.b16 %v401
      %v1117 = vunpack.c.l.b16 %v402
      %v1118 = vunpack.c.l.b16 %v403
      %v1119 = vunpack.c.l.b16 %v404
      %v1120 = vunpack.c.l.b16 %v405
      %v1121 = vunpack.c.l.b16 %v406
      %v1122 = vunpack.c.l.b16 %v407
      %v1123 = vunpack.c.l.b16 %v408
      %v1124 = vunpack.c.l.b16 %v409
      %v1125 = vunpack.c.l.b16 %v410
      %v1126 = vunpack.c.l.b16 %v411
      %v1127 = vunpack.c.l.b16 %v412
      %v1128 = vunpack.c.l.b16 %v413
      %v1129 = vunpack.c.l.b16 %v414
      %v1130 = vunpack.c.l.b16 %v415
      %v1131 = vunpack.c.l.b16 %v416
      %v1132 = vunpack.c.l.b16 %v417
      %v1133 = vunpack.c.l.b16 %v418
      %v1134 = vunpack.c.l.b16 %v419
      %v1135 = vunpack.c.l.b16 %v420
      %v1136 = vunpack.c.l.b16 %v421
      %v1137 = vunpack.c.l.b16 %v422
      %v1138 = vunpack.c.l.b16 %v423
      %v1139 = vunpack.c.l.b16 %v424
      %v1140 = vunpack.c.l.b16 %v425
      %v1141 = vunpack.c.l.b16 %v426
      %v1142 = vunpack.c.l.b16 %v427
      %v1143 = vunpack.c.l.b16 %v428
      %v1144 = vunpack.c.l.b16 %v429
      %v1145 = vunpack.c.l.b16 %v430
      %v1146 = vunpack.c.l.b16 %v431
      %v1147 = vunpack.c.l.b16 %v432
      %v1148 = vunpack.c.l.b16 %v433
      %v1149 = vunpack.c.l.b16 %v434
      %v1150 = vunpack.c.l.b16 %v435
      %v1151 = vunpack.c.l.b16 %v436
      %v1152 = vunpack.c.l.b16 %v437
      %v1153 = vunpack.c.l.b16 %v438
      %v1154 = vunpack.c.l.b16 %v439
      %v1155 = vunpack.c.l.b16 %v440
      %v1156 = vunpack.c.l.b16 %v441
      %v1157 = vunpack.c.l.b16 %v442
      %v1158 = vunpack.c.l.b16 %v443
      %v1159 = vunpack.c.l.b16 %v444
      %v1160 = vunpack.c.l.b16 %v445
      %v1161 = vunpack.c.l.b16 %v446
      %v1162 = vunpack.c.l.b16 %v447
      %v1163 = vunpack.c.l.b16 %v448
      %v1164 = vunpack.c.l.b16 %v449
      %v1165 = vunpack.c.l.b16 %v450
      %v1166 = vunpack.c.l.b16 %v451
      %v1167 = vunpack.c.l.b16 %v452
      %v1168 = vunpack.c.l.b16 %v453
      %v1169 = vunpack.c.l.b16 %v454
      %v1170 = vunpack.c.l.b16 %v455
      %v1171 = vunpack.c.l.b16 %v456
      %v1172 = vunpack.c.l.b16 %v457
      %v1173 = vunpack.c.l.b16 %v458
      %v1174 = vunpack.c.l.b16 %v459
      %v1175 = vunpack.c.l.b16 %v460
      %v1176 = vunpack.c.l.b16 %v461
      %v1177 = vunpack.c.l.b16 %v462
      %v1178 = vunpack.c.l.b16 %v463
      %v1179 = vunpack.c.l.b16 %v464
      %v1180 = vunpack.c.l.b16 %v465
      %v1181 = vunpack.c.l.b16 %v466
      %v1182 = vunpack.c.l.b16 %v467
      %v1183 = vunpack.c.l.b16 %v468
      %v1184 = vunpack.c.l.b16 %v469
      %v1185 = vunpack.c.l.b16 %v470
      %v1186 = vunpack.c.l.b16 %v471
      %v1187 = vunpack.c.l.b16 %v472
      %v1188 = vunpack.c.l.b16 %v473
      %v1189 = vunpack.c.l.b16 %v474
      %v1190 = vunpack.c.l.b16 %v475
      %v1191 = vunpack.c.l.b16 %v476
      %v1192 = vunpack.c.l.b16 %v477
      %v1193 = vunpack.c.l.b16 %v478
      %v1194 = vunpack.c.l.b16 %v479
      %v1195 = vunpack.c.l.b16 %v480
      %v1196 = vunpack.c.l.b16 %v481
      %v1197 = vunpack.c.l.b16 %v482
      %v1198 = vunpack.c.l.b16 %v483
      %v1199 = vunpack.c.l.b16 %v484
      %v1200 = vunpack.c.l.b16 %v485
      %v1201 = vunpack.c.l.b16 %v486
      %v1202 = vunpack.c.l.b16 %v487
      %v1203 = vunpack.c.l.b16 %v488
      %v1204 = vunpack.c.l.b16 %v489
      %v1205 = vunpack.c.l.b16 %v490
      %v1206 = vunpack.c.l.b16 %v491
      %v1207 = vunpack.c.l.b16 %v492
      %v1208 = vunpack.c.l.b16 %v493
      %v1209 = vunpack.c.l.b16 %v494
      %v1210 = vunpack.c.l.b16 %v495
      %v1211 = vunpack.c.l.b16 %v496
      %v1212 = vunpack.c.l.b16 %v497
      %v1213 = vunpack.c.l.b16 %v498
      %v1214 = vunpack.c.l.b16 %v499
      %v1215 = vunpack.c.l.b16 %v500
      %v1216 = vpack.c.b16 %v1001, %v1000
      %v1217 = vpack.c.b16 %v1003, %v1002
      %v1218 = vpack.c.b16 %v1005, %v1004
      %v1219 = vpack.c.b16 %v1007, %v1006
      %v1220 = vpack.c.b16 %v1009, %v1008
      %v1221 = vpack.c.b16 %v1011, %v1010
      %v1222 = vpack.c.b16 %v1013, %v1012
      %v1223 = vpack.c.b16 %v1015, %v1014
      %v1224 = vpack.c.b16 %v1017, %v1016
      %v1225 = vpack.c.b16 %v1019, %v1018
      %v1226 = vpack.c.b16 %v1021, %v1020
      %v1227 = vpack.c.b16 %v1023, %v1022
      %v1228 = vpack.c.b16 %v1025, %v1024
      %v1229 = vpack.c.b16 %v1027, %v1026
      %v1230 = vpack.c.b16 %v1029, %v1028
      %v1231 = vpack.c.b16 %v1031, %v1030
      %v1232 = vpack.c.b16 %v1033, %v1032
      %v1233 = vpack.c.b16 %v1035, %v1034
      %v1234 = vpack.c.b16 %v1037, %v1036
      %v1235 = vpack.c.b16 %v1039, %v1038
      %v1236 = vpack.c.b16 %v1041, %v1040
      %v1237 = vpack.c.b16 %v1043, %v1042
      %v1238 = vpack.c.b16 %v1045, %v1044
      %v1239 = vpack.c.b16 %v1047, %v1046
      %v1240 = vpack.c.b16 %v1049, %v1048
      %v1241 = vpack.c.b16 %v1051, %v1050
      %v1242 = vpack.c.b16 %v1053, %v1052
      %v1243 = vpack.c.b16 %v1055, %v1054
      %v1244 = vpack.c.b16 %v1057, %v1056
      %v1245 = vpack.c.b16 %v1059, %v1058
      %v1246 = vpack.c.b16 %v1061, %v1060
      %v1247 = vpack.c.b16 %v1063, %v1062
      %v1248 = vpack.c.b16 %v1065, %v1064
      %v1249 = vpack.c.b16 %v1067, %v1066
      %v1250 = vpack.c.b16 %v1069, %v1068
      %v1251 = vpack.c.b16 %v1071, %v1070
      %v1252 = vpack.c.b16 %v1073, %v1072
      %v1253 = vpack.c.b16 %v1075, %v1074
      %v1254 = vpack.c.b16 %v1077, %v1076
      %v1255 = vpack.c.b16 %v1079, %v1078
      %v1256 = vpack.c.b16 %v1081, %v1080
      %v1257 = vpack.c.b16 %v1083, %v1082
      %v1258 = vpack.c.b16 %v1085, %v1084
      %v1259 = vpack.c.b16 %v1087, %v1086
      %v1260 = vpack.c.b16 %v1089, %v1088
      %v1261 = vpack.c.b16 %v1091, %v1090
      %v1262 = vpack.c.b16 %v1093, %v1092
      %v1263 = vpack.c.b16 %v1095, %v1094
      %v1264 = vpack.c.b16 %v1097, %v1096
      %v1265 = vpack.c.b16 %v1099, %v1098
      %v1266 = vpack.c.b16 %v1101, %v1100
      %v1267 = vpack.c.b16 %v1103, %v1102
      %v1268 = vpack.c.b16 %v1105, %v1104
      %v1269 = vpack.c.b16 %v1107, %v1106
      %v1270 = vpack.c.b16 %v1109, %v1108
      %v1271 = vpack.c.b16 %v1111, %v1110
      %v1272 = vpack.c.b16 %v1113, %v1112
      %v1273 = vpack.c.b16 %v1115, %v1114
      %v1274 = vpack.c.b16 %v1117, %v1116
      %v1275 = vpack.c.b16 %v1119, %v1118
      %v1276 = vpack.c.b16 %v1121, %v1120
      %v1277 = vpack.c.b16 %v1123, %v1122
      %v1278 = vpack.c.b16 %v1125, %v1124
      %v1279 = vpack.c.b16 %v1127, %v1126
      %v1280 = vpack.c.b16 %v1129, %v1128
      %v1281 = vpack.c.b16 %v1131, %v1130
      %v1282 = vpack.c.b16 %v1133, %v1132
      %v1283 = vpack.c.b16 %v1135, %v1134
      %v1284 = vpack.c.b16 %v1137, %v1136
      %v1285 = vpack.c.b16 %v1139, %v1138
      %v1286 = vpack.c.b16 %v1141, %v1140
      %v1287 = vpack.c.b16 %v1143, %v1142
      %v1288 = vpack.c.b16 %v1145, %v1144
      %v1289 = vpack.c.b16 %v1147, %v1146
      %v1290 = vpack.c.b16 %v1149, %v1148
      %v1291 = vpack.c.b16 %v1151, %v1150
      %v1292 = vpack.c.b16 %v1153, %v1152
      %v1293 = vpack.c.b16 %v1155, %v1154
      %v1294 = vpack.c.b16 %v1157, %v1156
      %v1295 = vpack.c.b16 %v1159, %v1158
      %v1296 = vpack.c.b16 %v1161, %v1160
      %v1297 = vpack.c.b16 %v1163, %v1162
      %v1298 = vpack.c.b16 %v1165, %v1164
      %v1299 = vpack.c.b16 %v1167, %v1166
      %v1300 = vpack.c.b16 %v1169, %v1168
      %v1301 = vpack.c.b16 %v1171, %v1170
      %v1302 = vpack.c.b16 %v1173, %v1172
      %v1303 = vpack.c.b16 %v1175, %v1174
      %v1304 = vpack.c.b16 %v1177, %v1176
      %v1305 = vpack.c.b16 %v1179, %v1178
      %v1306 = vpack.c.b16 %v1181, %v1180
      %v1307 = vpack.c.b16 %v1183, %v1182
      %v1308 = vpack.c.b16 %v1185, %v1184
      %v1309 = vpack.c.b16 %v1187, %v1186
      %v1310 = vpack.c.b16 %v1189, %v1188
      %v1311 = vpack.c.b16 %v1191, %v1190
      %v1312 = vpack.c.b16 %v1193, %v1192
      %v1313 = vpack.c.b16 %v1195, %v1194
      %v1314 = vpack.c.b16 %v1197, %v1196
      %v1315 = vpack.c.b16 %v1199, %v1198
      %v1316 = vpack.c.b16 %v1201, %v1200
      %v1317 = vpack.c.b16 %v1203, %v1202
      %v1318 = vpack.c.b16 %v1205, %v1204
      %v1319 = vpack.c.b16 %v1207, %v1206
      %v1320 = vpack.c.b16 %v1209, %v1208
      %v1321 = vpack.c.b16 %v1211, %v1210
      %v1322 = vpack.c.b16 %v1213, %v1212
      %v1323 = vpack.c.b16 %v1215, %v1214
      %vm1432 = vcmask 523264
      %v1434 = vsel %vm1432, %v689, 0
      %v1437 = vsel %vm1432, %v703, 0
      %v1440 = vsel %vm1432, %v717, 0
      %v1443 = vsel %vm1432, %v731, 0
      %1445 = vmatprep.subr.bf16.mxu0 0
      %1446 = vmatpush1.bf16.msra.mxu0 %v1223
      %1447 = vmatprep.subr.bf16.mxu0 0
      %1448 = vmatpush1.bf16.msra.mxu0 %v1222
      %1449 = vmatprep.subr.bf16.mxu0 0
      %1450 = vmatpush1.bf16.msra.mxu0 %v1221
      %1451 = vmatprep.subr.bf16.mxu0 0
      %1452 = vmatpush1.bf16.msra.mxu0 %v1220
      %1453 = vmatprep.subr.bf16.mxu0 0
      %1454 = vmatpush1.bf16.msra.mxu0 %v1219
      %1455 = vmatprep.subr.bf16.mxu0 0
      %1456 = vmatpush1.bf16.msra.mxu0 %v1218
      %1457 = vmatprep.subr.bf16.mxu0 0
      %1458 = vmatpush1.bf16.msra.mxu0 %v1217
      %1459 = vmatprep.subr.bf16.mxu0 0
      %1460 = vmatpush1.bf16.msra.mxu0 %v1216
      %1461 = vmatprep.subr.bf16.mxu0 0
      %1462 = vmatpush2.bf16.msra.mxu0 %v1231
      %1463 = vmatprep.subr.bf16.mxu0 0
      %1464 = vmatpush2.bf16.msra.mxu0 %v1230
      %1465 = vmatprep.subr.bf16.mxu0 0
      %1466 = vmatpush2.bf16.msra.mxu0 %v1229
      %1467 = vmatprep.subr.bf16.mxu0 0
      %1468 = vmatpush2.bf16.msra.mxu0 %v1228
      %1469 = vmatprep.subr.bf16.mxu0 0
      %1470 = vmatpush2.bf16.msra.mxu0 %v1227
      %1471 = vmatprep.subr.bf16.mxu0 0
      %1472 = vmatpush2.bf16.msra.mxu0 %v1226
      %1473 = vmatprep.subr.bf16.mxu0 0
      %1474 = vmatpush2.bf16.msra.mxu0 %v1225
      %1475 = vmatprep.subr.bf16.mxu0 0
      %1476 = vmatpush2.bf16.msra.mxu0 %v1224
      %1477 = vmatprep.mubr.bf16.mxu0 %v677
      %1478 = vmatmul.mubr.bf16.gmra.mxu0 %v676
      %v1479 = vpop.f32.mrf.mxu0
      %v1480 = vadd.f32 %v506, %v1479
      %v1481 = vpop.f32.mrf.mxu0
      %v1482 = vpop.f32.mrf.mxu0
      %v1483 = vadd.f32 %v506, %v1482
      %v1484 = vpop.f32.mrf.mxu0
      %1485 = vmatprep.mubr.bf16.mxu0 %v691
      %1486 = vmatmul.mubr.bf16.gmra.mxu0 %v690
      %v1487 = vpop.f32.mrf.mxu0
      %v1488 = vadd.f32 %v506, %v1487
      %v1489 = vpop.f32.mrf.mxu0
      %v1490 = vpop.f32.mrf.mxu0
      %v1491 = vadd.f32 %v506, %v1490
      %v1492 = vpop.f32.mrf.mxu0
      %1493 = vmatprep.mubr.bf16.mxu0 %v705
      %1494 = vmatmul.mubr.bf16.gmra.mxu0 %v704
      %v1495 = vpop.f32.mrf.mxu0
      %v1496 = vadd.f32 %v506, %v1495
      %v1497 = vpop.f32.mrf.mxu0
      %v1498 = vpop.f32.mrf.mxu0
      %v1499 = vadd.f32 %v506, %v1498
      %v1500 = vpop.f32.mrf.mxu0
      %1501 = vmatprep.mubr.bf16.mxu0 %v719
      %1502 = vmatmul.mubr.bf16.gmra.mxu0 %v718
      %v1503 = vpop.f32.mrf.mxu0
      %v1504 = vadd.f32 %v506, %v1503
      %v1505 = vpop.f32.mrf.mxu0
      %v1506 = vpop.f32.mrf.mxu0
      %v1507 = vadd.f32 %v506, %v1506
      %v1508 = vpop.f32.mrf.mxu0
      %1509 = vdwg.mxu0
      %1510 = vmatprep.subr.bf16.mxu0 0
      %1511 = vmatpush1.bf16.msra.mxu0 %v1239
      %1512 = vmatprep.subr.bf16.mxu0 0
      %1513 = vmatpush1.bf16.msra.mxu0 %v1238
      %1514 = vmatprep.subr.bf16.mxu0 0
      %1515 = vmatpush1.bf16.msra.mxu0 %v1237
      %1516 = vmatprep.subr.bf16.mxu0 0
      %1517 = vmatpush1.bf16.msra.mxu0 %v1236
      %1518 = vmatprep.subr.bf16.mxu0 0
      %1519 = vmatpush1.bf16.msra.mxu0 %v1235
      %1520 = vmatprep.subr.bf16.mxu0 0
      %1521 = vmatpush1.bf16.msra.mxu0 %v1234
      %1522 = vmatprep.subr.bf16.mxu0 0
      %1523 = vmatpush1.bf16.msra.mxu0 %v1233
      %1524 = vmatprep.subr.bf16.mxu0 0
      %1525 = vmatpush1.bf16.msra.mxu0 %v1232
      %1526 = vmatprep.subr.bf16.mxu0 0
      %1527 = vmatpush2.bf16.msra.mxu0 %v1247
      %1528 = vmatprep.subr.bf16.mxu0 0
      %1529 = vmatpush2.bf16.msra.mxu0 %v1246
      %1530 = vmatprep.subr.bf16.mxu0 0
      %1531 = vmatpush2.bf16.msra.mxu0 %v1245
      %1532 = vmatprep.subr.bf16.mxu0 0
      %1533 = vmatpush2.bf16.msra.mxu0 %v1244
      %1534 = vmatprep.subr.bf16.mxu0 0
      %1535 = vmatpush2.bf16.msra.mxu0 %v1243
      %1536 = vmatprep.subr.bf16.mxu0 0
      %1537 = vmatpush2.bf16.msra.mxu0 %v1242
      %1538 = vmatprep.subr.bf16.mxu0 0
      %1539 = vmatpush2.bf16.msra.mxu0 %v1241
      %1540 = vmatprep.subr.bf16.mxu0 0
      %1541 = vmatpush2.bf16.msra.mxu0 %v1240
      %1542 = vmatprep.mubr.bf16.mxu0 %v679
      %1543 = vmatmul.mubr.bf16.gmra.mxu0 %v678
      %v1544 = vpop.f32.mrf.mxu0
      %v1545 = vadd.f32 %v1480, %v1544
      %v1546 = vpop.f32.mrf.mxu0
      %v1547 = vpop.f32.mrf.mxu0
      %v1548 = vadd.f32 %v1483, %v1547
      %v1549 = vpop.f32.mrf.mxu0
      %1550 = vmatprep.mubr.bf16.mxu0 %v693
      %1551 = vmatmul.mubr.bf16.gmra.mxu0 %v692
      %v1552 = vpop.f32.mrf.mxu0
      %v1553 = vadd.f32 %v1488, %v1552
      %v1554 = vpop.f32.mrf.mxu0
      %v1555 = vpop.f32.mrf.mxu0
      %v1556 = vadd.f32 %v1491, %v1555
      %v1557 = vpop.f32.mrf.mxu0
      %1558 = vmatprep.mubr.bf16.mxu0 %v707
      %1559 = vmatmul.mubr.bf16.gmra.mxu0 %v706
      %v1560 = vpop.f32.mrf.mxu0
      %v1561 = vadd.f32 %v1496, %v1560
      %v1562 = vpop.f32.mrf.mxu0
      %v1563 = vpop.f32.mrf.mxu0
      %v1564 = vadd.f32 %v1499, %v1563
      %v1565 = vpop.f32.mrf.mxu0
      %1566 = vmatprep.mubr.bf16.mxu0 %v721
      %1567 = vmatmul.mubr.bf16.gmra.mxu0 %v720
      %v1568 = vpop.f32.mrf.mxu0
      %v1569 = vadd.f32 %v1504, %v1568
      %v1570 = vpop.f32.mrf.mxu0
      %v1571 = vpop.f32.mrf.mxu0
      %v1572 = vadd.f32 %v1507, %v1571
      %v1573 = vpop.f32.mrf.mxu0
      %1574 = vdwg.mxu0
      %1575 = vmatprep.subr.bf16.mxu0 0
      %1576 = vmatpush1.bf16.msra.mxu0 %v1255
      %1577 = vmatprep.subr.bf16.mxu0 0
      %1578 = vmatpush1.bf16.msra.mxu0 %v1254
      %1579 = vmatprep.subr.bf16.mxu0 0
      %1580 = vmatpush1.bf16.msra.mxu0 %v1253
      %1581 = vmatprep.subr.bf16.mxu0 0
      %1582 = vmatpush1.bf16.msra.mxu0 %v1252
      %1583 = vmatprep.subr.bf16.mxu0 0
      %1584 = vmatpush1.bf16.msra.mxu0 %v1251
      %1585 = vmatprep.subr.bf16.mxu0 0
      %1586 = vmatpush1.bf16.msra.mxu0 %v1250
      %1587 = vmatprep.subr.bf16.mxu0 0
      %1588 = vmatpush1.bf16.msra.mxu0 %v1249
      %1589 = vmatprep.subr.bf16.mxu0 0
      %1590 = vmatpush1.bf16.msra.mxu0 %v1248
      %1591 = vmatprep.subr.bf16.mxu0 0
      %1592 = vmatpush2.bf16.msra.mxu0 %v1263
      %1593 = vmatprep.subr.bf16.mxu0 0
      %1594 = vmatpush2.bf16.msra.mxu0 %v1262
      %1595 = vmatprep.subr.bf16.mxu0 0
      %1596 = vmatpush2.bf16.msra.mxu0 %v1261
      %1597 = vmatprep.subr.bf16.mxu0 0
      %1598 = vmatpush2.bf16.msra.mxu0 %v1260
      %1599 = vmatprep.subr.bf16.mxu0 0
      %1600 = vmatpush2.bf16.msra.mxu0 %v1259
      %1601 = vmatprep.subr.bf16.mxu0 0
      %1602 = vmatpush2.bf16.msra.mxu0 %v1258
      %1603 = vmatprep.subr.bf16.mxu0 0
      %1604 = vmatpush2.bf16.msra.mxu0 %v1257
      %1605 = vmatprep.subr.bf16.mxu0 0
      %1606 = vmatpush2.bf16.msra.mxu0 %v1256
      %1607 = vmatprep.mubr.bf16.mxu0 %v681
      %1608 = vmatmul.mubr.bf16.gmra.mxu0 %v680
      %v1609 = vpop.f32.mrf.mxu0
      %v1610 = vadd.f32 %v1545, %v1609
      %v1611 = vpop.f32.mrf.mxu0
      %v1612 = vpop.f32.mrf.mxu0
      %v1613 = vadd.f32 %v1548, %v1612
      %v1614 = vpop.f32.mrf.mxu0
      %1615 = vmatprep.mubr.bf16.mxu0 %v695
      %1616 = vmatmul.mubr.bf16.gmra.mxu0 %v694
      %v1617 = vpop.f32.mrf.mxu0
      %v1618 = vadd.f32 %v1553, %v1617
      %v1619 = vpop.f32.mrf.mxu0
      %v1620 = vpop.f32.mrf.mxu0
      %v1621 = vadd.f32 %v1556, %v1620
      %v1622 = vpop.f32.mrf.mxu0
      %1623 = vmatprep.mubr.bf16.mxu0 %v709
      %1624 = vmatmul.mubr.bf16.gmra.mxu0 %v708
      %v1625 = vpop.f32.mrf.mxu0
      %v1626 = vadd.f32 %v1561, %v1625
      %v1627 = vpop.f32.mrf.mxu0
      %v1628 = vpop.f32.mrf.mxu0
      %v1629 = vadd.f32 %v1564, %v1628
      %v1630 = vpop.f32.mrf.mxu0
      %1631 = vmatprep.mubr.bf16.mxu0 %v723
      %1632 = vmatmul.mubr.bf16.gmra.mxu0 %v722
      %v1633 = vpop.f32.mrf.mxu0
      %v1634 = vadd.f32 %v1569, %v1633
      %v1635 = vpop.f32.mrf.mxu0
      %v1636 = vpop.f32.mrf.mxu0
      %v1637 = vadd.f32 %v1572, %v1636
      %v1638 = vpop.f32.mrf.mxu0
      %1639 = vdwg.mxu0
      %1640 = vmatprep.subr.bf16.mxu0 0
      %1641 = vmatpush1.bf16.msra.mxu0 %v1271
      %1642 = vmatprep.subr.bf16.mxu0 0
      %1643 = vmatpush1.bf16.msra.mxu0 %v1270
      %1644 = vmatprep.subr.bf16.mxu0 0
      %1645 = vmatpush1.bf16.msra.mxu0 %v1269
      %1646 = vmatprep.subr.bf16.mxu0 0
      %1647 = vmatpush1.bf16.msra.mxu0 %v1268
      %1648 = vmatprep.subr.bf16.mxu0 0
      %1649 = vmatpush1.bf16.msra.mxu0 %v1267
      %1650 = vmatprep.subr.bf16.mxu0 0
      %1651 = vmatpush1.bf16.msra.mxu0 %v1266
      %1652 = vmatprep.subr.bf16.mxu0 0
      %1653 = vmatpush1.bf16.msra.mxu0 %v1265
      %1654 = vmatprep.subr.bf16.mxu0 0
      %1655 = vmatpush1.bf16.msra.mxu0 %v1264
      %1656 = vmatprep.subr.bf16.mxu0 0
      %1657 = vmatpush2.bf16.msra.mxu0 %v1279
      %1658 = vmatprep.subr.bf16.mxu0 0
      %1659 = vmatpush2.bf16.msra.mxu0 %v1278
      %1660 = vmatprep.subr.bf16.mxu0 0
      %1661 = vmatpush2.bf16.msra.mxu0 %v1277
      %1662 = vmatprep.subr.bf16.mxu0 0
      %1663 = vmatpush2.bf16.msra.mxu0 %v1276
      %1664 = vmatprep.subr.bf16.mxu0 0
      %1665 = vmatpush2.bf16.msra.mxu0 %v1275
      %1666 = vmatprep.subr.bf16.mxu0 0
      %1667 = vmatpush2.bf16.msra.mxu0 %v1274
      %1668 = vmatprep.subr.bf16.mxu0 0
      %1669 = vmatpush2.bf16.msra.mxu0 %v1273
      %1670 = vmatprep.subr.bf16.mxu0 0
      %1671 = vmatpush2.bf16.msra.mxu0 %v1272
      %1672 = vmatprep.mubr.bf16.mxu0 %v683
      %1673 = vmatmul.mubr.bf16.gmra.mxu0 %v682
      %v1674 = vpop.f32.mrf.mxu0
      %v1675 = vadd.f32 %v1610, %v1674
      %v1676 = vpop.f32.mrf.mxu0
      %v1677 = vpop.f32.mrf.mxu0
      %v1678 = vadd.f32 %v1613, %v1677
      %v1679 = vpop.f32.mrf.mxu0
      %1680 = vmatprep.mubr.bf16.mxu0 %v697
      %1681 = vmatmul.mubr.bf16.gmra.mxu0 %v696
      %v1682 = vpop.f32.mrf.mxu0
      %v1683 = vadd.f32 %v1618, %v1682
      %v1684 = vpop.f32.mrf.mxu0
      %v1685 = vpop.f32.mrf.mxu0
      %v1686 = vadd.f32 %v1621, %v1685
      %v1687 = vpop.f32.mrf.mxu0
      %1688 = vmatprep.mubr.bf16.mxu0 %v711
      %1689 = vmatmul.mubr.bf16.gmra.mxu0 %v710
      %v1690 = vpop.f32.mrf.mxu0
      %v1691 = vadd.f32 %v1626, %v1690
      %v1692 = vpop.f32.mrf.mxu0
      %v1693 = vpop.f32.mrf.mxu0
      %v1694 = vadd.f32 %v1629, %v1693
      %v1695 = vpop.f32.mrf.mxu0
      %1696 = vmatprep.mubr.bf16.mxu0 %v725
      %1697 = vmatmul.mubr.bf16.gmra.mxu0 %v724
      %v1698 = vpop.f32.mrf.mxu0
      %v1699 = vadd.f32 %v1634, %v1698
      %v1700 = vpop.f32.mrf.mxu0
      %v1701 = vpop.f32.mrf.mxu0
      %v1702 = vadd.f32 %v1637, %v1701
      %v1703 = vpop.f32.mrf.mxu0
      %1704 = vdwg.mxu0
      %1705 = vmatprep.subr.bf16.mxu0 0
      %1706 = vmatpush1.bf16.msra.mxu0 %v1287
      %1707 = vmatprep.subr.bf16.mxu0 0
      %1708 = vmatpush1.bf16.msra.mxu0 %v1286
      %1709 = vmatprep.subr.bf16.mxu0 0
      %1710 = vmatpush1.bf16.msra.mxu0 %v1285
      %1711 = vmatprep.subr.bf16.mxu0 0
      %1712 = vmatpush1.bf16.msra.mxu0 %v1284
      %1713 = vmatprep.subr.bf16.mxu0 0
      %1714 = vmatpush1.bf16.msra.mxu0 %v1283
      %1715 = vmatprep.subr.bf16.mxu0 0
      %1716 = vmatpush1.bf16.msra.mxu0 %v1282
      %1717 = vmatprep.subr.bf16.mxu0 0
      %1718 = vmatpush1.bf16.msra.mxu0 %v1281
      %1719 = vmatprep.subr.bf16.mxu0 0
      %1720 = vmatpush1.bf16.msra.mxu0 %v1280
      %1721 = vmatprep.subr.bf16.mxu0 0
      %1722 = vmatpush2.bf16.msra.mxu0 %v1295
      %1723 = vmatprep.subr.bf16.mxu0 0
      %1724 = vmatpush2.bf16.msra.mxu0 %v1294
      %1725 = vmatprep.subr.bf16.mxu0 0
      %1726 = vmatpush2.bf16.msra.mxu0 %v1293
      %1727 = vmatprep.subr.bf16.mxu0 0
      %1728 = vmatpush2.bf16.msra.mxu0 %v1292
      %1729 = vmatprep.subr.bf16.mxu0 0
      %1730 = vmatpush2.bf16.msra.mxu0 %v1291
      %1731 = vmatprep.subr.bf16.mxu0 0
      %1732 = vmatpush2.bf16.msra.mxu0 %v1290
      %1733 = vmatprep.subr.bf16.mxu0 0
      %1734 = vmatpush2.bf16.msra.mxu0 %v1289
      %1735 = vmatprep.subr.bf16.mxu0 0
      %1736 = vmatpush2.bf16.msra.mxu0 %v1288
      %1737 = vmatprep.mubr.bf16.mxu0 %v685
      %1738 = vmatmul.mubr.bf16.gmra.mxu0 %v684
      %v1739 = vpop.f32.mrf.mxu0
      %v1740 = vadd.f32 %v1675, %v1739
      %v1741 = vpop.f32.mrf.mxu0
      %v1742 = vpop.f32.mrf.mxu0
      %v1743 = vadd.f32 %v1678, %v1742
      %v1744 = vpop.f32.mrf.mxu0
      %1745 = vmatprep.mubr.bf16.mxu0 %v699
      %1746 = vmatmul.mubr.bf16.gmra.mxu0 %v698
      %v1747 = vpop.f32.mrf.mxu0
      %v1748 = vadd.f32 %v1683, %v1747
      %v1749 = vpop.f32.mrf.mxu0
      %v1750 = vpop.f32.mrf.mxu0
      %v1751 = vadd.f32 %v1686, %v1750
      %v1752 = vpop.f32.mrf.mxu0
      %1753 = vmatprep.mubr.bf16.mxu0 %v713
      %1754 = vmatmul.mubr.bf16.gmra.mxu0 %v712
      %v1755 = vpop.f32.mrf.mxu0
      %v1756 = vadd.f32 %v1691, %v1755
      %v1757 = vpop.f32.mrf.mxu0
      %v1758 = vpop.f32.mrf.mxu0
      %v1759 = vadd.f32 %v1694, %v1758
      %v1760 = vpop.f32.mrf.mxu0
      %1761 = vmatprep.mubr.bf16.mxu0 %v727
      %1762 = vmatmul.mubr.bf16.gmra.mxu0 %v726
      %v1763 = vpop.f32.mrf.mxu0
      %v1764 = vadd.f32 %v1699, %v1763
      %v1765 = vpop.f32.mrf.mxu0
      %v1766 = vpop.f32.mrf.mxu0
      %v1767 = vadd.f32 %v1702, %v1766
      %v1768 = vpop.f32.mrf.mxu0
      %1769 = vdwg.mxu0
      %1770 = vmatprep.subr.bf16.mxu0 0
      %1771 = vmatpush1.bf16.msra.mxu0 %v1303
      %1772 = vmatprep.subr.bf16.mxu0 0
      %1773 = vmatpush1.bf16.msra.mxu0 %v1302
      %1774 = vmatprep.subr.bf16.mxu0 0
      %1775 = vmatpush1.bf16.msra.mxu0 %v1301
      %1776 = vmatprep.subr.bf16.mxu0 0
      %1777 = vmatpush1.bf16.msra.mxu0 %v1300
      %1778 = vmatprep.subr.bf16.mxu0 0
      %1779 = vmatpush1.bf16.msra.mxu0 %v1299
      %1780 = vmatprep.subr.bf16.mxu0 0
      %1781 = vmatpush1.bf16.msra.mxu0 %v1298
      %1782 = vmatprep.subr.bf16.mxu0 0
      %1783 = vmatpush1.bf16.msra.mxu0 %v1297
      %1784 = vmatprep.subr.bf16.mxu0 0
      %1785 = vmatpush1.bf16.msra.mxu0 %v1296
      %1786 = vmatprep.subr.bf16.mxu0 0
      %1787 = vmatpush2.bf16.msra.mxu0 %v1311
      %1788 = vmatprep.subr.bf16.mxu0 0
      %1789 = vmatpush2.bf16.msra.mxu0 %v1310
      %1790 = vmatprep.subr.bf16.mxu0 0
      %1791 = vmatpush2.bf16.msra.mxu0 %v1309
      %1792 = vmatprep.subr.bf16.mxu0 0
      %1793 = vmatpush2.bf16.msra.mxu0 %v1308
      %1794 = vmatprep.subr.bf16.mxu0 0
      %1795 = vmatpush2.bf16.msra.mxu0 %v1307
      %1796 = vmatprep.subr.bf16.mxu0 0
      %1797 = vmatpush2.bf16.msra.mxu0 %v1306
      %1798 = vmatprep.subr.bf16.mxu0 0
      %1799 = vmatpush2.bf16.msra.mxu0 %v1305
      %1800 = vmatprep.subr.bf16.mxu0 0
      %1801 = vmatpush2.bf16.msra.mxu0 %v1304
      %1802 = vmatprep.mubr.bf16.mxu0 %v687
      %1803 = vmatmul.mubr.bf16.gmra.mxu0 %v686
      %v1804 = vpop.f32.mrf.mxu0
      %v1805 = vadd.f32 %v1740, %v1804
      %v1806 = vpop.f32.mrf.mxu0
      %v1807 = vpop.f32.mrf.mxu0
      %v1808 = vadd.f32 %v1743, %v1807
      %v1809 = vpop.f32.mrf.mxu0
      %1810 = vmatprep.mubr.bf16.mxu0 %v701
      %1811 = vmatmul.mubr.bf16.gmra.mxu0 %v700
      %v1812 = vpop.f32.mrf.mxu0
      %v1813 = vadd.f32 %v1748, %v1812
      %v1814 = vpop.f32.mrf.mxu0
      %v1815 = vpop.f32.mrf.mxu0
      %v1816 = vadd.f32 %v1751, %v1815
      %v1817 = vpop.f32.mrf.mxu0
      %1818 = vmatprep.mubr.bf16.mxu0 %v715
      %1819 = vmatmul.mubr.bf16.gmra.mxu0 %v714
      %v1820 = vpop.f32.mrf.mxu0
      %v1821 = vadd.f32 %v1756, %v1820
      %v1822 = vpop.f32.mrf.mxu0
      %v1823 = vpop.f32.mrf.mxu0
      %v1824 = vadd.f32 %v1759, %v1823
      %v1825 = vpop.f32.mrf.mxu0
      %1826 = vmatprep.mubr.bf16.mxu0 %v729
      %1827 = vmatmul.mubr.bf16.gmra.mxu0 %v728
      %v1828 = vpop.f32.mrf.mxu0
      %v1829 = vadd.f32 %v1764, %v1828
      %v1830 = vpop.f32.mrf.mxu0
      %v1831 = vpop.f32.mrf.mxu0
      %v1832 = vadd.f32 %v1767, %v1831
      %v1833 = vpop.f32.mrf.mxu0
      %1834 = vdwg.mxu0
      %1835 = vmatprep.subr.bf16.mxu0 0
      %1836 = vmatpush1.bf16.msra.mxu0 %v1319
      %1837 = vmatprep.subr.bf16.mxu0 0
      %1838 = vmatpush1.bf16.msra.mxu0 %v1318
      %1839 = vmatprep.subr.bf16.mxu0 0
      %1840 = vmatpush1.bf16.msra.mxu0 %v1317
      %1841 = vmatprep.subr.bf16.mxu0 0
      %1842 = vmatpush1.bf16.msra.mxu0 %v1316
      %1843 = vmatprep.subr.bf16.mxu0 0
      %1844 = vmatpush1.bf16.msra.mxu0 %v1315
      %1845 = vmatprep.subr.bf16.mxu0 0
      %1846 = vmatpush1.bf16.msra.mxu0 %v1314
      %1847 = vmatprep.subr.bf16.mxu0 0
      %1848 = vmatpush1.bf16.msra.mxu0 %v1313
      %1849 = vmatprep.subr.bf16.mxu0 0
      %1850 = vmatpush1.bf16.msra.mxu0 %v1312
      %1851 = vmatprep.subr.bf16.mxu0 0
      %1852 = vmatpush2.bf16.msra.mxu0 0
      %1853 = vmatprep.subr.bf16.mxu0 0
      %1854 = vmatpush2.bf16.msra.mxu0 0
      %1855 = vmatprep.subr.bf16.mxu0 0
      %1856 = vmatpush2.bf16.msra.mxu0 0
      %1857 = vmatprep.subr.bf16.mxu0 0
      %1858 = vmatpush2.bf16.msra.mxu0 0
      %1859 = vmatprep.subr.bf16.mxu0 0
      %1860 = vmatpush2.bf16.msra.mxu0 %v1323
      %1861 = vmatprep.subr.bf16.mxu0 0
      %1862 = vmatpush2.bf16.msra.mxu0 %v1322
      %1863 = vmatprep.subr.bf16.mxu0 0
      %1864 = vmatpush2.bf16.msra.mxu0 %v1321
      %1865 = vmatprep.subr.bf16.mxu0 0
      %1866 = vmatpush2.bf16.msra.mxu0 %v1320
      %1867 = vmatprep.mubr.bf16.mxu0 %v1434
      %1868 = vmatmul.mubr.bf16.gmra.mxu0 %v688
      %v1869 = vpop.f32.mrf.mxu0
      %v1870 = vadd.f32 %v1805, %v1869
      %v1871 = vpop.f32.mrf.mxu0
      %v1872 = vpop.f32.mrf.mxu0
      %v1873 = vadd.f32 %v1808, %v1872
      %v1874 = vpop.f32.mrf.mxu0
      %1875 = vmatprep.mubr.bf16.mxu0 %v1437
      %1876 = vmatmul.mubr.bf16.gmra.mxu0 %v702
      %v1877 = vpop.f32.mrf.mxu0
      %v1878 = vadd.f32 %v1813, %v1877
      %v1879 = vpop.f32.mrf.mxu0
      %v1880 = vpop.f32.mrf.mxu0
      %v1881 = vadd.f32 %v1816, %v1880
      %v1882 = vpop.f32.mrf.mxu0
      %1883 = vmatprep.mubr.bf16.mxu0 %v1440
      %1884 = vmatmul.mubr.bf16.gmra.mxu0 %v716
      %v1885 = vpop.f32.mrf.mxu0
      %v1886 = vadd.f32 %v1821, %v1885
      %v1887 = vpop.f32.mrf.mxu0
      %v1888 = vpop.f32.mrf.mxu0
      %v1889 = vadd.f32 %v1824, %v1888
      %v1890 = vpop.f32.mrf.mxu0
      %1891 = vmatprep.mubr.bf16.mxu0 %v1443
      %1892 = vmatmul.mubr.bf16.gmra.mxu0 %v730
      %v1893 = vpop.f32.mrf.mxu0
      %v1894 = vadd.f32 %v1829, %v1893
      %v1895 = vpop.f32.mrf.mxu0
      %v1896 = vpop.f32.mrf.mxu0
      %v1897 = vadd.f32 %v1832, %v1896
      %v1898 = vpop.f32.mrf.mxu0
      %1899 = vdwg.mxu0
      %vm1900 = vcmp.ge.f32.partialorder %v1870, 0.0
      %vm1901 = vcmp.ge.f32.partialorder %v1873, 0.0
      %vm1902 = vcmp.ge.f32.partialorder %v1878, 0.0
      %vm1903 = vcmp.ge.f32.partialorder %v1881, 0.0
      %vm1904 = vcmp.ge.f32.partialorder %v1886, 0.0
      %vm1905 = vcmp.ge.f32.partialorder %v1889, 0.0
      %vm1906 = vcmp.ge.f32.partialorder %v1894, 0.0
      %vm1907 = vcmp.ge.f32.partialorder %v1897, 0.0
      %v1908 = vmul.f32 %v1870, 0.2
      %v1909 = vmul.f32 %v1873, 0.2
      %v1910 = vmul.f32 %v1878, 0.2
      %v1911 = vmul.f32 %v1881, 0.2
      %v1912 = vmul.f32 %v1886, 0.2
      %v1913 = vmul.f32 %v1889, 0.2
      %v1914 = vmul.f32 %v1894, 0.2
      %v1915 = vmul.f32 %v1897, 0.2
      %v1916 = vsel %vm1900, %v1870, %v1908
      %v1917 = vsel %vm1901, %v1873, %v1909
      %v1918 = vsel %vm1902, %v1878, %v1910
      %v1919 = vsel %vm1903, %v1881, %v1911
      %v1920 = vsel %vm1904, %v1886, %v1912
      %v1921 = vsel %vm1905, %v1889, %v1913
      %v1922 = vsel %vm1906, %v1894, %v1914
      %v1923 = vsel %vm1907, %v1897, %v1915
      %v1924 = vpack.c.bf16 %v1917, %v1916
      %v1925 = vpack.c.bf16 %v1919, %v1918
      %v1926 = vpack.c.bf16 %v1921, %v1920
      %v1927 = vpack.c.bf16 %v1923, %v1922
      %v1932 = vunpack.c.l.b16 %v1924
      %v1933 = vunpack.c.h.b16 %v1924
      %v1934 = vunpack.c.l.b16 %v1925
      %v1935 = vunpack.c.h.b16 %v1925
      %v1936 = vunpack.c.l.b16 %v1926
      %v1937 = vunpack.c.h.b16 %v1926
      %v1938 = vunpack.c.l.b16 %v1927
      %v1939 = vunpack.c.h.b16 %v1927
      %v1940 = vpack.c.b16 %v1932, %v1932
      %v1941 = vpack.c.b16 %v1933, %v1933
      %v1942 = vpack.c.b16 %v1934, %v1934
      %v1943 = vpack.c.b16 %v1935, %v1935
      %v1944 = vpack.c.b16 %v1936, %v1936
      %v1945 = vpack.c.b16 %v1937, %v1937
      %v1946 = vpack.c.b16 %v1938, %v1938
      %v1947 = vpack.c.b16 %v1939, %v1939
      %1956 = vst [vmem:[%s226] sm:$0xf] %v1940
      %1957 = vst [vmem:[%s226 + $0x4] sm:$0xf] %v1941
      %1958 = vst [vmem:[%s226 + $0x8] sm:$0xf] %v1942
      %1959 = vst [vmem:[%s226 + $0xc] sm:$0xf] %v1943
      %1960 = vst [vmem:[%s226 + $0x10] sm:$0xf] %v1944
      %1961 = vst [vmem:[%s226 + $0x14] sm:$0xf] %v1945
      %1962 = vst [vmem:[%s226 + $0x18] sm:$0xf] %v1946
      %1963 = vst [vmem:[%s226 + $0x1c] sm:$0xf] %v1947
      %s1964 = smul.u32 8, %s18
      %p1965 = scmp.lt.s32.totalorder %s1964, 15
      %s1966 = scalar_select %p1965, %s1964, 15
      %p1967 = scmp.lt.s32.totalorder %s19, 0
      %s1968 = scalar_select %p1967, %s19, 0
      %s1969 = sadd.s32 %s1968, %s1966
      %s1970 = smul.addr %s1969, 4
      %s1971 = scalar_lea.vmem %s3, %s1970
      // Predicated region
      $region33: #{discriminator_forward.5} parent=31 // pred_check
        %p1972 = pneg %p124
      $region34: #{discriminator_forward.5} parent=31 // pred_check_branch
        %1974 = sbr.rel (%p1972) target = $region36
      $region35: #{discriminator_forward.5} parent=31 // pred_region
        %s1975 = smul.u32 8, %s18
      $region36: #{discriminator_forward.5} parent=31 // pred_fallthru
        _
    $region32: #{discriminator_forward.5} parent=5 // pred_fallthru
      _
    %p1976 = scmp.le.s32.totalorder 2, %s9
    // Predicated region
    $region37: #{discriminator_forward.5} parent=5 // pred_check
      %p1977 = pneg %p1976
    $region38: #{discriminator_forward.5} parent=5 // pred_check_branch
      %1979 = sbr.rel (%p1977) target = $region40
    $region39: #{discriminator_forward.5} parent=5 // pred_region
      %s1980 = ssub.s32 %s9, 2
      // Predicated region
      $region41: #{discriminator_forward.5} parent=39 // pred_check
        %p1981 = pneg %p130
      $region42: #{discriminator_forward.5} parent=39 // pred_check_branch
        %1983 = sbr.rel (%p1981) target = $region44
      $region43: #{discriminator_forward.5} parent=39 // pred_region
        %s1984 = smul.u32 8, %s20
        %p1985 = scmp.lt.s32.totalorder %s1984, 15
        %s1986 = scalar_select %p1985, %s1984, 15
        %p1987 = scmp.lt.s32.totalorder %s21, 0
        %s1988 = scalar_select %p1987, %s21, 0
        %s1989 = sadd.s32 %s1988, %s1986
        %s1990 = smul.addr %s1989, 4
        %s1991 = scalar_lea.vmem %s3, %s1990
      $region44: #{discriminator_forward.5} parent=39 // pred_fallthru
        _
    $region40: #{discriminator_forward.5} parent=5 // pred_fallthru
      _
  $region6: #{discriminator_forward.5} parent=0 // loop_footer
    %s13 = sadd.s32 1, %s9
  $region7: #{discriminator_forward.5} parent=0 // loop_footer_branch
    %8 = sbr.rel target = $region3
  $region8: #{discriminator_forward.5} parent=0 // loop_exit
    _

// kernel: discriminator_forward.6
$region0: #{discriminator_forward.6}
  #allocation0 [shape = 'u32[]', space=smem, size = 0x4, offset = 0x4, fixed_abs, tag = 'smem constant byte address 0x4 - core index']
  #allocation1 [shape = 'u32[144,128]{1,0:T(1,128)}', space=vmem, size = 0x12000, scoped, tag = 'internal scratch']
  %s0 = inlined_call_operand.vmem [shape: bf16[16,3456], index: 0, kind: input, shape index: {}]
  %s1 = inlined_call_operand.vmem [shape: bf16[3456,256], index: 1, kind: input, shape index: {}]
  %s2 = inlined_call_operand.vmem [shape: f32[1,256], index: 2, kind: input, shape index: {}]
  %s3 = inlined_call_operand.vmem [shape: bf16[16,256], index: 3, kind: output, shape index: {}]
  %s4 = sld [smem:[#allocation0]]
  $region123: #{discriminator_forward.6} parent=0
    _
  %s6 = ssub.s32 1, %s4
  %s7 = scalar_select 0, %s6, %s4
  $region1: #{discriminator_forward.6} parent=0
    #allocation2 [shape = 'u8[1769472]{0}', space=vmem, size = 0x1b0000, scoped, tag = 'input window, operand 1']
    #allocation3 [shape = 'u8[8192]{0}', space=vmem, size = 0x2000, scoped, tag = 'output window, operand 0']
    loop: start=0, step=1, limit=4
    $region2: #{discriminator_forward.6} parent=1 // loop_pre_header
      _
    $region3: #{discriminator_forward.6} parent=1 // loop_header
      %s9 = sphi 0, %s13
      %p10 = scmp.ge.s32.totalorder %s9, 4
      %s16 = sphi 0, %s28
      %s17 = sphi 0, %s24
      %s18 = sphi 0, %s16
      %s19 = sphi 0, %s17
      %s20 = sphi 0, %s18
      %s21 = sphi 0, %s19
      %s31 = sphi 0, %s33
      %s34 = sphi 0, %s31
      %s35 = sphi 0, %s34
      %s51 = sphi 0, %s35
      %s57 = sphi 0, %s59
      %s60 = sphi 0, %s57
      %s61 = sphi 0, %s60
      %s77 = sphi 0, %s61
      %s83 = sphi 0, %s85
      %s86 = sphi 0, %s83
      %s87 = sphi 0, %s86
      %s103 = sphi 0, %s87
      %s111 = sphi 0, %s113
      %s114 = sphi 0, %s111
      %s115 = sphi 0, %s114
      %s131 = sphi 0, %s115
    $region4: #{discriminator_forward.6} parent=1 // loop_header_branch
      %12 = sbr.rel (%p10) target = $region8
    $region5: #{discriminator_forward.6} parent=1 // loop_body
      %s14 = ssub.s32 %s9, 1
      %s15 = ssub.s32 %s9, 2
      %s22 = sadd.s32 1, %s17
      %p23 = scmp.ge.s32.totalorder %s22, 2
      %s24 = scalar_select %p23, 0, %s22
      %s25 = sadd.s32 1, %s16
      %s26 = scalar_select %p23, %s25, %s16
      %p27 = scmp.ge.s32.totalorder %s26, 1
      %s28 = scalar_select %p27, 0, %s26
      %s29 = ssub.s32 %s16, %s28
      %p30 = scmp.eq.s32.totalorder %s29, 0
      %s32 = sadd.s32 %s31, 1
      %s33 = scalar_select %p30, %s31, %s32
      %p36 = pneg %p30
      %p37 = scmp.eq.s32.totalorder %s9, 1
      %p38 = por %p36, %p37
      %p39 = scmp.ne.s32.totalorder %s31, %s34
      %p40 = scmp.eq.s32.totalorder %s9, 0
      %p41 = por %p39, %p40
      %p42 = scmp.ne.s32.totalorder %s31, %s34
      %p43 = scmp.eq.s32.totalorder %s14, 1
      %p44 = por %p42, %p43
      %p45 = scmp.ne.s32.totalorder %s34, %s35
      %p46 = scmp.eq.s32.totalorder %s14, 0
      %p47 = por %p45, %p46
      %p48 = scmp.ne.s32.totalorder %s34, %s35
      %p49 = scmp.eq.s32.totalorder %s15, 1
      %p50 = por %p48, %p49
      %p52 = scmp.ne.s32.totalorder %s35, %s51
      %p53 = scmp.eq.s32.totalorder %s15, 0
      %p54 = por %p52, %p53
      %s55 = ssub.s32 %s17, %s24
      %p56 = scmp.eq.s32.totalorder %s55, 0
      %s58 = sadd.s32 %s57, 1
      %s59 = scalar_select %p56, %s57, %s58
      %p62 = pneg %p56
      %p63 = scmp.eq.s32.totalorder %s9, 1
      %p64 = por %p62, %p63
      %p65 = scmp.ne.s32.totalorder %s57, %s60
      %p66 = scmp.eq.s32.totalorder %s9, 0
      %p67 = por %p65, %p66
      %p68 = scmp.ne.s32.totalorder %s57, %s60
      %p69 = scmp.eq.s32.totalorder %s14, 1
      %p70 = por %p68, %p69
      %p71 = scmp.ne.s32.totalorder %s60, %s61
      %p72 = scmp.eq.s32.totalorder %s14, 0
      %p73 = por %p71, %p72
      %p74 = scmp.ne.s32.totalorder %s60, %s61
      %p75 = scmp.eq.s32.totalorder %s15, 1
      %p76 = por %p74, %p75
      %p78 = scmp.ne.s32.totalorder %s61, %s77
      %p79 = scmp.eq.s32.totalorder %s15, 0
      %p80 = por %p78, %p79
      %s81 = ssub.s32 %s17, %s24
      %p82 = scmp.eq.s32.totalorder %s81, 0
      %s84 = sadd.s32 %s83, 1
      %s85 = scalar_select %p82, %s83, %s84
      %p88 = pneg %p82
      %p89 = scmp.eq.s32.totalorder %s9, 1
      %p90 = por %p88, %p89
      %p91 = scmp.ne.s32.totalorder %s83, %s86
      %p92 = scmp.eq.s32.totalorder %s9, 0
      %p93 = por %p91, %p92
      %p94 = scmp.ne.s32.totalorder %s83, %s86
      %p95 = scmp.eq.s32.totalorder %s14, 1
      %p96 = por %p94, %p95
      %p97 = scmp.ne.s32.totalorder %s86, %s87
      %p98 = scmp.eq.s32.totalorder %s14, 0
      %p99 = por %p97, %p98
      %p100 = scmp.ne.s32.totalorder %s86, %s87
      %p101 = scmp.eq.s32.totalorder %s15, 1
      %p102 = por %p100, %p101
      %p104 = scmp.ne.s32.totalorder %s87, %s103
      %p105 = scmp.eq.s32.totalorder %s15, 0
      %p106 = por %p104, %p105
      %s107 = ssub.s32 %s16, %s28
      %s108 = ssub.s32 %s17, %s24
      %s109 = sor.u32 %s107, %s108
      %p110 = scmp.eq.s32.totalorder %s109, 0
      %s112 = sadd.s32 %s111, 1
      %s113 = scalar_select %p110, %s111, %s112
      %p116 = pneg %p110
      %p117 = scmp.eq.s32.totalorder %s9, 1
      %p118 = por %p116, %p117
      %p119 = scmp.ne.s32.totalorder %s111, %s114
      %p120 = scmp.eq.s32.totalorder %s9, 0
      %p121 = por %p119, %p120
      %p122 = scmp.ne.s32.totalorder %s111, %s114
      %p123 = scmp.eq.s32.totalorder %s14, 1
      %p124 = por %p122, %p123
      %p125 = scmp.ne.s32.totalorder %s114, %s115
      %p126 = scmp.eq.s32.totalorder %s14, 0
      %p127 = por %p125, %p126
      %p128 = scmp.ne.s32.totalorder %s114, %s115
      %p129 = scmp.eq.s32.totalorder %s15, 1
      %p130 = por %p128, %p129
      %p132 = scmp.ne.s32.totalorder %s115, %s131
      %p133 = scmp.eq.s32.totalorder %s15, 0
      %p134 = por %p132, %p133
      %p135 = scmp.le.s32.totalorder 1, %s9
      %p136 = scmp.lt.s32.totalorder %s9, 3
      %p137 = pnand %p135, %p136
      %p138 = pneg %p137
      // Predicated region
      $region9: #{discriminator_forward.6} parent=5 // pred_check
        _
      $region10: #{discriminator_forward.6} parent=5 // pred_check_branch
        %140 = sbr.rel (%p137) target = $region12
      $region11: #{discriminator_forward.6} parent=5 // pred_region
        %s141 = ssub.s32 %s9, 1
        // Predicated region
        $region13: #{discriminator_forward.6} parent=11 // pred_check
          %p142 = pneg %p47
        $region14: #{discriminator_forward.6} parent=11 // pred_check_branch
          %144 = sbr.rel (%p142) target = $region16
        $region15: #{discriminator_forward.6} parent=11 // pred_region
          %s145 = smul.u32 2, %s18
          %p146 = scmp.lt.s32.totalorder %s145, 1
          %s147 = scalar_select %p146, %s145, 1
          %s148 = smul.addr %s147, 27
          %s149 = smul.addr %s148, 4
          %s150 = scalar_lea.vmem %s0, %s149
          %s151 = smul.u32 2, %s18
        $region16: #{discriminator_forward.6} parent=11 // pred_fallthru
          _
      $region12: #{discriminator_forward.6} parent=5 // pred_fallthru
        _
      %p152 = scmp.lt.s32.totalorder %s9, 2
      // Predicated region
      $region17: #{discriminator_forward.6} parent=5 // pred_check
        %p153 = pneg %p152
      $region18: #{discriminator_forward.6} parent=5 // pred_check_branch
        %155 = sbr.rel (%p153) target = $region20
      $region19: #{discriminator_forward.6} parent=5 // pred_region
        // Predicated region
        $region21: #{discriminator_forward.6} parent=19 // pred_check
          %p156 = pneg %p67
        $region22: #{discriminator_forward.6} parent=19 // pred_check_branch
          %158 = sbr.rel (%p156) target = $region24
        $region23: #{discriminator_forward.6} parent=19 // pred_region
          %s159 = sand.u32 %s57, 1
          %s160 = sand.u32 %s57, 1
          %s161 = smul.addr %s160, 1728
          %s162 = scalar_lea.vmem [#allocation2], %s161
          %s163 = smul.addr %s17, 4
          %s164 = scalar_lea.vmem %s1, %s163
          // Predicated region
          $region25: #{discriminator_forward.6} parent=23 // pred_check
            _
          $region26: #{discriminator_forward.6} parent=23 // pred_check_branch
            %166 = sbr.rel (0) target = $region28
          $region27: #{discriminator_forward.6} parent=23 // pred_region
            // Predicated region
            $region29: #{discriminator_forward.6} parent=27 // pred_check
              _
            $region30: #{discriminator_forward.6} parent=27 // pred_check_branch
              %168 = sbr.rel target = $region32
            $region31: #{discriminator_forward.6} parent=27 // pred_region
              // Predicated region
              $region44: #{discriminator_forward.6} parent=31 // pred_check
                _
              $region45: #{discriminator_forward.6} parent=31 // pred_check_branch
                %1046 = sbr.rel (0) target = $region47
              $region46: #{discriminator_forward.6} parent=31 // pred_region
                loop: start=0, step=1, limit=1
                $region48: #{discriminator_forward.6} parent=46 // loop_pre_header
                  _
                $region49: #{discriminator_forward.6} parent=46 // loop_header
                  %s1048 = sphi 0, %s1052
                  %p1049 = scmp.ge.s32.totalorder %s1048, 1
                  %s1053 = sphi %s164, %s164
                  %s1054 = sphi %s162, %s162
                $region50: #{discriminator_forward.6} parent=46 // loop_header_branch
                  %1051 = sbr.rel (%p1049) target = $region54
                $region51: #{discriminator_forward.6} parent=46 // loop_body
                  _
                $region52: #{discriminator_forward.6} parent=46 // loop_footer
                  %s1052 = sadd.s32 1, %s1048
                $region53: #{discriminator_forward.6} parent=46 // loop_footer_branch
                  %1047 = sbr.rel target = $region49
                $region54: #{discriminator_forward.6} parent=46 // loop_exit
                  _
                %s1056 = ssub.s32 16, 1
                loop: start=0, step=1, limit=1
                $region55: #{discriminator_forward.6} parent=46 // loop_pre_header
                  _
                $region56: #{discriminator_forward.6} parent=46 // loop_header
                  %s1058 = sphi 0, %s1062
                  %p1059 = scmp.ge.s32.totalorder %s1058, 1
                  %s1063 = sphi %s164, %s164
                  %s1064 = sphi %s162, %s162
                $region57: #{discriminator_forward.6} parent=46 // loop_header_branch
                  %1061 = sbr.rel (%p1059) target = $region61
                $region58: #{discriminator_forward.6} parent=46 // loop_body
                  %v1065 = vld [vmem:[%s1063] sm:%s1056]
                  %1066 = vst [vmem:[%s1064] sm:%s1056] %v1065
                  %v1067 = vld [vmem:[%s1063 + $0x8] sm:%s1056]
                  %1068 = vst [vmem:[%s1064 + $0x4] sm:%s1056] %v1067
                  %v1069 = vld [vmem:[%s1063 + $0x10] sm:%s1056]
                  %1070 = vst [vmem:[%s1064 + $0x8] sm:%s1056] %v1069
                  %v1071 = vld [vmem:[%s1063 + $0x18] sm:%s1056]
                  %1072 = vst [vmem:[%s1064 + $0xc] sm:%s1056] %v1071
                  %v1073 = vld [vmem:[%s1063 + $0x20] sm:%s1056]
                  %1074 = vst [vmem:[%s1064 + $0x10] sm:%s1056] %v1073
                  %v1075 = vld [vmem:[%s1063 + $0x28] sm:%s1056]
                  %1076 = vst [vmem:[%s1064 + $0x14] sm:%s1056] %v1075
                  %v1077 = vld [vmem:[%s1063 + $0x30] sm:%s1056]
                  %1078 = vst [vmem:[%s1064 + $0x18] sm:%s1056] %v1077
                  %v1079 = vld [vmem:[%s1063 + $0x38] sm:%s1056]
                  %1080 = vst [vmem:[%s1064 + $0x1c] sm:%s1056] %v1079
                  %v1081 = vld [vmem:[%s1063 + $0x40] sm:%s1056]
                  %1082 = vst [vmem:[%s1064 + $0x20] sm:%s1056] %v1081
                  %v1083 = vld [vmem:[%s1063 + $0x48] sm:%s1056]
                  %1084 = vst [vmem:[%s1064 + $0x24] sm:%s1056] %v1083
                  %v1085 = vld [vmem:[%s1063 + $0x50] sm:%s1056]
                  %1086 = vst [vmem:[%s1064 + $0x28] sm:%s1056] %v1085
                  %v1087 = vld [vmem:[%s1063 + $0x58] sm:%s1056]
                  %1088 = vst [vmem:[%s1064 + $0x2c] sm:%s1056] %v1087
                  %v1089 = vld [vmem:[%s1063 + $0x60] sm:%s1056]
                  %1090 = vst [vmem:[%s1064 + $0x30] sm:%s1056] %v1089
                  %v1091 = vld [vmem:[%s1063 + $0x68] sm:%s1056]
                  %1092 = vst [vmem:[%s1064 + $0x34] sm:%s1056] %v1091
                  %v1093 = vld [vmem:[%s1063 + $0x70] sm:%s1056]
                  %1094 = vst [vmem:[%s1064 + $0x38] sm:%s1056] %v1093
                  %v1095 = vld [vmem:[%s1063 + $0x78] sm:%s1056]
                  %1096 = vst [vmem:[%s1064 + $0x3c] sm:%s1056] %v1095
                  %v1097 = vld [vmem:[%s1063 + $0x80] sm:%s1056]
                  %1098 = vst [vmem:[%s1064 + $0x40] sm:%s1056] %v1097
                  %v1099 = vld [vmem:[%s1063 + $0x88] sm:%s1056]
                  %1100 = vst [vmem:[%s1064 + $0x44] sm:%s1056] %v1099
                  %v1101 = vld [vmem:[%s1063 + $0x90] sm:%s1056]
                  %1102 = vst [vmem:[%s1064 + $0x48] sm:%s1056] %v1101
                  %v1103 = vld [vmem:[%s1063 + $0x98] sm:%s1056]
                  %1104 = vst [vmem:[%s1064 + $0x4c] sm:%s1056] %v1103
                  %v1105 = vld [vmem:[%s1063 + $0xa0] sm:%s1056]
                  %1106 = vst [vmem:[%s1064 + $0x50] sm:%s1056] %v1105
                  %v1107 = vld [vmem:[%s1063 + $0xa8] sm:%s1056]
                  %1108 = vst [vmem:[%s1064 + $0x54] sm:%s1056] %v1107
                  %v1109 = vld [vmem:[%s1063 + $0xb0] sm:%s1056]
                  %1110 = vst [vmem:[%s1064 + $0x58] sm:%s1056] %v1109
                  %v1111 = vld [vmem:[%s1063 + $0xb8] sm:%s1056]
                  %1112 = vst [vmem:[%s1064 + $0x5c] sm:%s1056] %v1111
                  %v1113 = vld [vmem:[%s1063 + $0xc0] sm:%s1056]
                  %1114 = vst [vmem:[%s1064 + $0x60] sm:%s1056] %v1113
                  %v1115 = vld [vmem:[%s1063 + $0xc8] sm:%s1056]
                  %1116 = vst [vmem:[%s1064 + $0x64] sm:%s1056] %v1115
                  %v1117 = vld [vmem:[%s1063 + $0xd0] sm:%s1056]
                  %1118 = vst [vmem:[%s1064 + $0x68] sm:%s1056] %v1117
                  %v1119 = vld [vmem:[%s1063 + $0xd8] sm:%s1056]
                  %1120 = vst [vmem:[%s1064 + $0x6c] sm:%s1056] %v1119
                  %v1121 = vld [vmem:[%s1063 + $0xe0] sm:%s1056]
                  %1122 = vst [vmem:[%s1064 + $0x70] sm:%s1056] %v1121
                  %v1123 = vld [vmem:[%s1063 + $0xe8] sm:%s1056]
                  %1124 = vst [vmem:[%s1064 + $0x74] sm:%s1056] %v1123
                  %v1125 = vld [vmem:[%s1063 + $0xf0] sm:%s1056]
                  %1126 = vst [vmem:[%s1064 + $0x78] sm:%s1056] %v1125
                  %v1127 = vld [vmem:[%s1063 + $0xf8] sm:%s1056]
                  %1128 = vst [vmem:[%s1064 + $0x7c] sm:%s1056] %v1127
                  %v1129 = vld [vmem:[%s1063 + $0x100] sm:%s1056]
                  %1130 = vst [vmem:[%s1064 + $0x80] sm:%s1056] %v1129
                  %v1131 = vld [vmem:[%s1063 + $0x108] sm:%s1056]
                  %1132 = vst [vmem:[%s1064 + $0x84] sm:%s1056] %v1131
                  %v1133 = vld [vmem:[%s1063 + $0x110] sm:%s1056]
                  %1134 = vst [vmem:[%s1064 + $0x88] sm:%s1056] %v1133
                  %v1135 = vld [vmem:[%s1063 + $0x118] sm:%s1056]
                  %1136 = vst [vmem:[%s1064 + $0x8c] sm:%s1056] %v1135
                  %v1137 = vld [vmem:[%s1063 + $0x120] sm:%s1056]
                  %1138 = vst [vmem:[%s1064 + $0x90] sm:%s1056] %v1137
                  %v1139 = vld [vmem:[%s1063 + $0x128] sm:%s1056]
                  %1140 = vst [vmem:[%s1064 + $0x94] sm:%s1056] %v1139
                  %v1141 = vld [vmem:[%s1063 + $0x130] sm:%s1056]
                  %1142 = vst [vmem:[%s1064 + $0x98] sm:%s1056] %v1141
                  %v1143 = vld [vmem:[%s1063 + $0x138] sm:%s1056]
                  %1144 = vst [vmem:[%s1064 + $0x9c] sm:%s1056] %v1143
                  %v1145 = vld [vmem:[%s1063 + $0x140] sm:%s1056]
                  %1146 = vst [vmem:[%s1064 + $0xa0] sm:%s1056] %v1145
                  %v1147 = vld [vmem:[%s1063 + $0x148] sm:%s1056]
                  %1148 = vst [vmem:[%s1064 + $0xa4] sm:%s1056] %v1147
                  %v1149 = vld [vmem:[%s1063 + $0x150] sm:%s1056]
                  %1150 = vst [vmem:[%s1064 + $0xa8] sm:%s1056] %v1149
                  %v1151 = vld [vmem:[%s1063 + $0x158] sm:%s1056]
                  %1152 = vst [vmem:[%s1064 + $0xac] sm:%s1056] %v1151
                  %v1153 = vld [vmem:[%s1063 + $0x160] sm:%s1056]
                  %1154 = vst [vmem:[%s1064 + $0xb0] sm:%s1056] %v1153
                  %v1155 = vld [vmem:[%s1063 + $0x168] sm:%s1056]
                  %1156 = vst [vmem:[%s1064 + $0xb4] sm:%s1056] %v1155
                  %v1157 = vld [vmem:[%s1063 + $0x170] sm:%s1056]
                  %1158 = vst [vmem:[%s1064 + $0xb8] sm:%s1056] %v1157
                  %v1159 = vld [vmem:[%s1063 + $0x178] sm:%s1056]
                  %1160 = vst [vmem:[%s1064 + $0xbc] sm:%s1056] %v1159
                  %v1161 = vld [vmem:[%s1063 + $0x180] sm:%s1056]
                  %1162 = vst [vmem:[%s1064 + $0xc0] sm:%s1056] %v1161
                  %v1163 = vld [vmem:[%s1063 + $0x188] sm:%s1056]
                  %1164 = vst [vmem:[%s1064 + $0xc4] sm:%s1056] %v1163
                  %v1165 = vld [vmem:[%s1063 + $0x190] sm:%s1056]
                  %1166 = vst [vmem:[%s1064 + $0xc8] sm:%s1056] %v1165
                  %v1167 = vld [vmem:[%s1063 + $0x198] sm:%s1056]
                  %1168 = vst [vmem:[%s1064 + $0xcc] sm:%s1056] %v1167
                  %v1169 = vld [vmem:[%s1063 + $0x1a0] sm:%s1056]
                  %1170 = vst [vmem:[%s1064 + $0xd0] sm:%s1056] %v1169
                  %v1171 = vld [vmem:[%s1063 + $0x1a8] sm:%s1056]
                  %1172 = vst [vmem:[%s1064 + $0xd4] sm:%s1056] %v1171
                  %v1173 = vld [vmem:[%s1063 + $0x1b0] sm:%s1056]
                  %1174 = vst [vmem:[%s1064 + $0xd8] sm:%s1056] %v1173
                  %v1175 = vld [vmem:[%s1063 + $0x1b8] sm:%s1056]
                  %1176 = vst [vmem:[%s1064 + $0xdc] sm:%s1056] %v1175
                  %v1177 = vld [vmem:[%s1063 + $0x1c0] sm:%s1056]
                  %1178 = vst [vmem:[%s1064 + $0xe0] sm:%s1056] %v1177
                  %v1179 = vld [vmem:[%s1063 + $0x1c8] sm:%s1056]
                  %1180 = vst [vmem:[%s1064 + $0xe4] sm:%s1056] %v1179
                  %v1181 = vld [vmem:[%s1063 + $0x1d0] sm:%s1056]
                  %1182 = vst [vmem:[%s1064 + $0xe8] sm:%s1056] %v1181
                  %v1183 = vld [vmem:[%s1063 + $0x1d8] sm:%s1056]
                  %1184 = vst [vmem:[%s1064 + $0xec] sm:%s1056] %v1183
                  %v1185 = vld [vmem:[%s1063 + $0x1e0] sm:%s1056]
                  %1186 = vst [vmem:[%s1064 + $0xf0] sm:%s1056] %v1185
                  %v1187 = vld [vmem:[%s1063 + $0x1e8] sm:%s1056]
                  %1188 = vst [vmem:[%s1064 + $0xf4] sm:%s1056] %v1187
                  %v1189 = vld [vmem:[%s1063 + $0x1f0] sm:%s1056]
                  %1190 = vst [vmem:[%s1064 + $0xf8] sm:%s1056] %v1189
                  %v1191 = vld [vmem:[%s1063 + $0x1f8] sm:%s1056]
                  %1192 = vst [vmem:[%s1064 + $0xfc] sm:%s1056] %v1191
                  %v1193 = vld [vmem:[%s1063 + $0x200] sm:%s1056]
                  %1194 = vst [vmem:[%s1064 + $0x100] sm:%s1056] %v1193
                  %v1195 = vld [vmem:[%s1063 + $0x208] sm:%s1056]
                  %1196 = vst [vmem:[%s1064 + $0x104] sm:%s1056] %v1195
                  %v1197 = vld [vmem:[%s1063 + $0x210] sm:%s1056]
                  %1198 = vst [vmem:[%s1064 + $0x108] sm:%s1056] %v1197
                  %v1199 = vld [vmem:[%s1063 + $0x218] sm:%s1056]
                  %1200 = vst [vmem:[%s1064 + $0x10c] sm:%s1056] %v1199
                  %v1201 = vld [vmem:[%s1063 + $0x220] sm:%s1056]
                  %1202 = vst [vmem:[%s1064 + $0x110] sm:%s1056] %v1201
                  %v1203 = vld [vmem:[%s1063 + $0x228] sm:%s1056]
                  %1204 = vst [vmem:[%s1064 + $0x114] sm:%s1056] %v1203
                  %v1205 = vld [vmem:[%s1063 + $0x230] sm:%s1056]
                  %1206 = vst [vmem:[%s1064 + $0x118] sm:%s1056] %v1205
                  %v1207 = vld [vmem:[%s1063 + $0x238] sm:%s1056]
                  %1208 = vst [vmem:[%s1064 + $0x11c] sm:%s1056] %v1207
                  %v1209 = vld [vmem:[%s1063 + $0x240] sm:%s1056]
                  %1210 = vst [vmem:[%s1064 + $0x120] sm:%s1056] %v1209
                  %v1211 = vld [vmem:[%s1063 + $0x248] sm:%s1056]
                  %1212 = vst [vmem:[%s1064 + $0x124] sm:%s1056] %v1211
                  %v1213 = vld [vmem:[%s1063 + $0x250] sm:%s1056]
                  %1214 = vst [vmem:[%s1064 + $0x128] sm:%s1056] %v1213
                  %v1215 = vld [vmem:[%s1063 + $0x258] sm:%s1056]
                  %1216 = vst [vmem:[%s1064 + $0x12c] sm:%s1056] %v1215
                  %v1217 = vld [vmem:[%s1063 + $0x260] sm:%s1056]
                  %1218 = vst [vmem:[%s1064 + $0x130] sm:%s1056] %v1217
                  %v1219 = vld [vmem:[%s1063 + $0x268] sm:%s1056]
                  %1220 = vst [vmem:[%s1064 + $0x134] sm:%s1056] %v1219
                  %v1221 = vld [vmem:[%s1063 + $0x270] sm:%s1056]
                  %1222 = vst [vmem:[%s1064 + $0x138] sm:%s1056] %v1221
                  %v1223 = vld [vmem:[%s1063 + $0x278] sm:%s1056]
                  %1224 = vst [vmem:[%s1064 + $0x13c] sm:%s1056] %v1223
                  %v1225 = vld [vmem:[%s1063 + $0x280] sm:%s1056]
                  %1226 = vst [vmem:[%s1064 + $0x140] sm:%s1056] %v1225
                  %v1227 = vld [vmem:[%s1063 + $0x288] sm:%s1056]
                  %1228 = vst [vmem:[%s1064 + $0x144] sm:%s1056] %v1227
                  %v1229 = vld [vmem:[%s1063 + $0x290] sm:%s1056]
                  %1230 = vst [vmem:[%s1064 + $0x148] sm:%s1056] %v1229
                  %v1231 = vld [vmem:[%s1063 + $0x298] sm:%s1056]
                  %1232 = vst [vmem:[%s1064 + $0x14c] sm:%s1056] %v1231
                  %v1233 = vld [vmem:[%s1063 + $0x2a0] sm:%s1056]
                  %1234 = vst [vmem:[%s1064 + $0x150] sm:%s1056] %v1233
                  %v1235 = vld [vmem:[%s1063 + $0x2a8] sm:%s1056]
                  %1236 = vst [vmem:[%s1064 + $0x154] sm:%s1056] %v1235
                  %v1237 = vld [vmem:[%s1063 + $0x2b0] sm:%s1056]
                  %1238 = vst [vmem:[%s1064 + $0x158] sm:%s1056] %v1237
                  %v1239 = vld [vmem:[%s1063 + $0x2b8] sm:%s1056]
                  %1240 = vst [vmem:[%s1064 + $0x15c] sm:%s1056] %v1239
                  %v1241 = vld [vmem:[%s1063 + $0x2c0] sm:%s1056]
                  %1242 = vst [vmem:[%s1064 + $0x160] sm:%s1056] %v1241
                  %v1243 = vld [vmem:[%s1063 + $0x2c8] sm:%s1056]
                  %1244 = vst [vmem:[%s1064 + $0x164] sm:%s1056] %v1243
                  %v1245 = vld [vmem:[%s1063 + $0x2d0] sm:%s1056]
                  %1246 = vst [vmem:[%s1064 + $0x168] sm:%s1056] %v1245
                  %v1247 = vld [vmem:[%s1063 + $0x2d8] sm:%s1056]
                  %1248 = vst [vmem:[%s1064 + $0x16c] sm:%s1056] %v1247
                  %v1249 = vld [vmem:[%s1063 + $0x2e0] sm:%s1056]
                  %1250 = vst [vmem:[%s1064 + $0x170] sm:%s1056] %v1249
                  %v1251 = vld [vmem:[%s1063 + $0x2e8] sm:%s1056]
                  %1252 = vst [vmem:[%s1064 + $0x174] sm:%s1056] %v1251
                  %v1253 = vld [vmem:[%s1063 + $0x2f0] sm:%s1056]
                  %1254 = vst [vmem:[%s1064 + $0x178] sm:%s1056] %v1253
                  %v1255 = vld [vmem:[%s1063 + $0x2f8] sm:%s1056]
                  %1256 = vst [vmem:[%s1064 + $0x17c] sm:%s1056] %v1255
                  %v1257 = vld [vmem:[%s1063 + $0x300] sm:%s1056]
                  %1258 = vst [vmem:[%s1064 + $0x180] sm:%s1056] %v1257
                  %v1259 = vld [vmem:[%s1063 + $0x308] sm:%s1056]
                  %1260 = vst [vmem:[%s1064 + $0x184] sm:%s1056] %v1259
                  %v1261 = vld [vmem:[%s1063 + $0x310] sm:%s1056]
                  %1262 = vst [vmem:[%s1064 + $0x188] sm:%s1056] %v1261
                  %v1263 = vld [vmem:[%s1063 + $0x318] sm:%s1056]
                  %1264 = vst [vmem:[%s1064 + $0x18c] sm:%s1056] %v1263
                  %v1265 = vld [vmem:[%s1063 + $0x320] sm:%s1056]
                  %1266 = vst [vmem:[%s1064 + $0x190] sm:%s1056] %v1265
                  %v1267 = vld [vmem:[%s1063 + $0x328] sm:%s1056]
                  %1268 = vst [vmem:[%s1064 + $0x194] sm:%s1056] %v1267
                  %v1269 = vld [vmem:[%s1063 + $0x330] sm:%s1056]
                  %1270 = vst [vmem:[%s1064 + $0x198] sm:%s1056] %v1269
                  %v1271 = vld [vmem:[%s1063 + $0x338] sm:%s1056]
                  %1272 = vst [vmem:[%s1064 + $0x19c] sm:%s1056] %v1271
                  %v1273 = vld [vmem:[%s1063 + $0x340] sm:%s1056]
                  %1274 = vst [vmem:[%s1064 + $0x1a0] sm:%s1056] %v1273
                  %v1275 = vld [vmem:[%s1063 + $0x348] sm:%s1056]
                  %1276 = vst [vmem:[%s1064 + $0x1a4] sm:%s1056] %v1275
                  %v1277 = vld [vmem:[%s1063 + $0x350] sm:%s1056]
                  %1278 = vst [vmem:[%s1064 + $0x1a8] sm:%s1056] %v1277
                  %v1279 = vld [vmem:[%s1063 + $0x358] sm:%s1056]
                  %1280 = vst [vmem:[%s1064 + $0x1ac] sm:%s1056] %v1279
                  %v1281 = vld [vmem:[%s1063 + $0x360] sm:%s1056]
                  %1282 = vst [vmem:[%s1064 + $0x1b0] sm:%s1056] %v1281
                  %v1283 = vld [vmem:[%s1063 + $0x368] sm:%s1056]
                  %1284 = vst [vmem:[%s1064 + $0x1b4] sm:%s1056] %v1283
                  %v1285 = vld [vmem:[%s1063 + $0x370] sm:%s1056]
                  %1286 = vst [vmem:[%s1064 + $0x1b8] sm:%s1056] %v1285
                  %v1287 = vld [vmem:[%s1063 + $0x378] sm:%s1056]
                  %1288 = vst [vmem:[%s1064 + $0x1bc] sm:%s1056] %v1287
                  %v1289 = vld [vmem:[%s1063 + $0x380] sm:%s1056]
                  %1290 = vst [vmem:[%s1064 + $0x1c0] sm:%s1056] %v1289
                  %v1291 = vld [vmem:[%s1063 + $0x388] sm:%s1056]
                  %1292 = vst [vmem:[%s1064 + $0x1c4] sm:%s1056] %v1291
                  %v1293 = vld [vmem:[%s1063 + $0x390] sm:%s1056]
                  %1294 = vst [vmem:[%s1064 + $0x1c8] sm:%s1056] %v1293
                  %v1295 = vld [vmem:[%s1063 + $0x398] sm:%s1056]
                  %1296 = vst [vmem:[%s1064 + $0x1cc] sm:%s1056] %v1295
                  %v1297 = vld [vmem:[%s1063 + $0x3a0] sm:%s1056]
                  %1298 = vst [vmem:[%s1064 + $0x1d0] sm:%s1056] %v1297
                  %v1299 = vld [vmem:[%s1063 + $0x3a8] sm:%s1056]
                  %1300 = vst [vmem:[%s1064 + $0x1d4] sm:%s1056] %v1299
                  %v1301 = vld [vmem:[%s1063 + $0x3b0] sm:%s1056]
                  %1302 = vst [vmem:[%s1064 + $0x1d8] sm:%s1056] %v1301
                  %v1303 = vld [vmem:[%s1063 + $0x3b8] sm:%s1056]
                  %1304 = vst [vmem:[%s1064 + $0x1dc] sm:%s1056] %v1303
                  %v1305 = vld [vmem:[%s1063 + $0x3c0] sm:%s1056]
                  %1306 = vst [vmem:[%s1064 + $0x1e0] sm:%s1056] %v1305
                  %v1307 = vld [vmem:[%s1063 + $0x3c8] sm:%s1056]
                  %1308 = vst [vmem:[%s1064 + $0x1e4] sm:%s1056] %v1307
                  %v1309 = vld [vmem:[%s1063 + $0x3d0] sm:%s1056]
                  %1310 = vst [vmem:[%s1064 + $0x1e8] sm:%s1056] %v1309
                  %v1311 = vld [vmem:[%s1063 + $0x3d8] sm:%s1056]
                  %1312 = vst [vmem:[%s1064 + $0x1ec] sm:%s1056] %v1311
                  %v1313 = vld [vmem:[%s1063 + $0x3e0] sm:%s1056]
                  %1314 = vst [vmem:[%s1064 + $0x1f0] sm:%s1056] %v1313
                  %v1315 = vld [vmem:[%s1063 + $0x3e8] sm:%s1056]
                  %1316 = vst [vmem:[%s1064 + $0x1f4] sm:%s1056] %v1315
                  %v1317 = vld [vmem:[%s1063 + $0x3f0] sm:%s1056]
                  %1318 = vst [vmem:[%s1064 + $0x1f8] sm:%s1056] %v1317
                  %v1319 = vld [vmem:[%s1063 + $0x3f8] sm:%s1056]
                  %1320 = vst [vmem:[%s1064 + $0x1fc] sm:%s1056] %v1319
                  %v1321 = vld [vmem:[%s1063 + $0x400] sm:%s1056]
                  %1322 = vst [vmem:[%s1064 + $0x200] sm:%s1056] %v1321
                  %v1323 = vld [vmem:[%s1063 + $0x408] sm:%s1056]
                  %1324 = vst [vmem:[%s1064 + $0x204] sm:%s1056] %v1323
                  %v1325 = vld [vmem:[%s1063 + $0x410] sm:%s1056]
                  %1326 = vst [vmem:[%s1064 + $0x208] sm:%s1056] %v1325
                  %v1327 = vld [vmem:[%s1063 + $0x418] sm:%s1056]
                  %1328 = vst [vmem:[%s1064 + $0x20c] sm:%s1056] %v1327
                  %v1329 = vld [vmem:[%s1063 + $0x420] sm:%s1056]
                  %1330 = vst [vmem:[%s1064 + $0x210] sm:%s1056] %v1329
                  %v1331 = vld [vmem:[%s1063 + $0x428] sm:%s1056]
                  %1332 = vst [vmem:[%s1064 + $0x214] sm:%s1056] %v1331
                  %v1333 = vld [vmem:[%s1063 + $0x430] sm:%s1056]
                  %1334 = vst [vmem:[%s1064 + $0x218] sm:%s1056] %v1333
                  %v1335 = vld [vmem:[%s1063 + $0x438] sm:%s1056]
                  %1336 = vst [vmem:[%s1064 + $0x21c] sm:%s1056] %v1335
                  %v1337 = vld [vmem:[%s1063 + $0x440] sm:%s1056]
                  %1338 = vst [vmem:[%s1064 + $0x220] sm:%s1056] %v1337
                  %v1339 = vld [vmem:[%s1063 + $0x448] sm:%s1056]
                  %1340 = vst [vmem:[%s1064 + $0x224] sm:%s1056] %v1339
                  %v1341 = vld [vmem:[%s1063 + $0x450] sm:%s1056]
                  %1342 = vst [vmem:[%s1064 + $0x228] sm:%s1056] %v1341
                  %v1343 = vld [vmem:[%s1063 + $0x458] sm:%s1056]
                  %1344 = vst [vmem:[%s1064 + $0x22c] sm:%s1056] %v1343
                  %v1345 = vld [vmem:[%s1063 + $0x460] sm:%s1056]
                  %1346 = vst [vmem:[%s1064 + $0x230] sm:%s1056] %v1345
                  %v1347 = vld [vmem:[%s1063 + $0x468] sm:%s1056]
                  %1348 = vst [vmem:[%s1064 + $0x234] sm:%s1056] %v1347
                  %v1349 = vld [vmem:[%s1063 + $0x470] sm:%s1056]
                  %1350 = vst [vmem:[%s1064 + $0x238] sm:%s1056] %v1349
                  %v1351 = vld [vmem:[%s1063 + $0x478] sm:%s1056]
                  %1352 = vst [vmem:[%s1064 + $0x23c] sm:%s1056] %v1351
                  %v1353 = vld [vmem:[%s1063 + $0x480] sm:%s1056]
                  %1354 = vst [vmem:[%s1064 + $0x240] sm:%s1056] %v1353
                  %v1355 = vld [vmem:[%s1063 + $0x488] sm:%s1056]
                  %1356 = vst [vmem:[%s1064 + $0x244] sm:%s1056] %v1355
                  %v1357 = vld [vmem:[%s1063 + $0x490] sm:%s1056]
                  %1358 = vst [vmem:[%s1064 + $0x248] sm:%s1056] %v1357
                  %v1359 = vld [vmem:[%s1063 + $0x498] sm:%s1056]
                  %1360 = vst [vmem:[%s1064 + $0x24c] sm:%s1056] %v1359
                  %v1361 = vld [vmem:[%s1063 + $0x4a0] sm:%s1056]
                  %1362 = vst [vmem:[%s1064 + $0x250] sm:%s1056] %v1361
                  %v1363 = vld [vmem:[%s1063 + $0x4a8] sm:%s1056]
                  %1364 = vst [vmem:[%s1064 + $0x254] sm:%s1056] %v1363
                  %v1365 = vld [vmem:[%s1063 + $0x4b0] sm:%s1056]
                  %1366 = vst [vmem:[%s1064 + $0x258] sm:%s1056] %v1365
                  %v1367 = vld [vmem:[%s1063 + $0x4b8] sm:%s1056]
                  %1368 = vst [vmem:[%s1064 + $0x25c] sm:%s1056] %v1367
                  %v1369 = vld [vmem:[%s1063 + $0x4c0] sm:%s1056]
                  %1370 = vst [vmem:[%s1064 + $0x260] sm:%s1056] %v1369
                  %v1371 = vld [vmem:[%s1063 + $0x4c8] sm:%s1056]
                  %1372 = vst [vmem:[%s1064 + $0x264] sm:%s1056] %v1371
                  %v1373 = vld [vmem:[%s1063 + $0x4d0] sm:%s1056]
                  %1374 = vst [vmem:[%s1064 + $0x268] sm:%s1056] %v1373
                  %v1375 = vld [vmem:[%s1063 + $0x4d8] sm:%s1056]
                  %1376 = vst [vmem:[%s1064 + $0x26c] sm:%s1056] %v1375
                  %v1377 = vld [vmem:[%s1063 + $0x4e0] sm:%s1056]
                  %1378 = vst [vmem:[%s1064 + $0x270] sm:%s1056] %v1377
                  %v1379 = vld [vmem:[%s1063 + $0x4e8] sm:%s1056]
                  %1380 = vst [vmem:[%s1064 + $0x274] sm:%s1056] %v1379
                  %v1381 = vld [vmem:[%s1063 + $0x4f0] sm:%s1056]
                  %1382 = vst [vmem:[%s1064 + $0x278] sm:%s1056] %v1381
                  %v1383 = vld [vmem:[%s1063 + $0x4f8] sm:%s1056]
                  %1384 = vst [vmem:[%s1064 + $0x27c] sm:%s1056] %v1383
                  %v1385 = vld [vmem:[%s1063 + $0x500] sm:%s1056]
                  %1386 = vst [vmem:[%s1064 + $0x280] sm:%s1056] %v1385
                  %v1387 = vld [vmem:[%s1063 + $0x508] sm:%s1056]
                  %1388 = vst [vmem:[%s1064 + $0x284] sm:%s1056] %v1387
                  %v1389 = vld [vmem:[%s1063 + $0x510] sm:%s1056]
                  %1390 = vst [vmem:[%s1064 + $0x288] sm:%s1056] %v1389
                  %v1391 = vld [vmem:[%s1063 + $0x518] sm:%s1056]
                  %1392 = vst [vmem:[%s1064 + $0x28c] sm:%s1056] %v1391
                  %v1393 = vld [vmem:[%s1063 + $0x520] sm:%s1056]
                  %1394 = vst [vmem:[%s1064 + $0x290] sm:%s1056] %v1393
                  %v1395 = vld [vmem:[%s1063 + $0x528] sm:%s1056]
                  %1396 = vst [vmem:[%s1064 + $0x294] sm:%s1056] %v1395
                  %v1397 = vld [vmem:[%s1063 + $0x530] sm:%s1056]
                  %1398 = vst [vmem:[%s1064 + $0x298] sm:%s1056] %v1397
                  %v1399 = vld [vmem:[%s1063 + $0x538] sm:%s1056]
                  %1400 = vst [vmem:[%s1064 + $0x29c] sm:%s1056] %v1399
                  %v1401 = vld [vmem:[%s1063 + $0x540] sm:%s1056]
                  %1402 = vst [vmem:[%s1064 + $0x2a0] sm:%s1056] %v1401
                  %v1403 = vld [vmem:[%s1063 + $0x548] sm:%s1056]
                  %1404 = vst [vmem:[%s1064 + $0x2a4] sm:%s1056] %v1403
                  %v1405 = vld [vmem:[%s1063 + $0x550] sm:%s1056]
                  %1406 = vst [vmem:[%s1064 + $0x2a8] sm:%s1056] %v1405
                  %v1407 = vld [vmem:[%s1063 + $0x558] sm:%s1056]
                  %1408 = vst [vmem:[%s1064 + $0x2ac] sm:%s1056] %v1407
                  %v1409 = vld [vmem:[%s1063 + $0x560] sm:%s1056]
                  %1410 = vst [vmem:[%s1064 + $0x2b0] sm:%s1056] %v1409
                  %v1411 = vld [vmem:[%s1063 + $0x568] sm:%s1056]
                  %1412 = vst [vmem:[%s1064 + $0x2b4] sm:%s1056] %v1411
                  %v1413 = vld [vmem:[%s1063 + $0x570] sm:%s1056]
                  %1414 = vst [vmem:[%s1064 + $0x2b8] sm:%s1056] %v1413
                  %v1415 = vld [vmem:[%s1063 + $0x578] sm:%s1056]
                  %1416 = vst [vmem:[%s1064 + $0x2bc] sm:%s1056] %v1415
                  %v1417 = vld [vmem:[%s1063 + $0x580] sm:%s1056]
                  %1418 = vst [vmem:[%s1064 + $0x2c0] sm:%s1056] %v1417
                  %v1419 = vld [vmem:[%s1063 + $0x588] sm:%s1056]
                  %1420 = vst [vmem:[%s1064 + $0x2c4] sm:%s1056] %v1419
                  %v1421 = vld [vmem:[%s1063 + $0x590] sm:%s1056]
                  %1422 = vst [vmem:[%s1064 + $0x2c8] sm:%s1056] %v1421
                  %v1423 = vld [vmem:[%s1063 + $0x598] sm:%s1056]
                  %1424 = vst [vmem:[%s1064 + $0x2cc] sm:%s1056] %v1423
                  %v1425 = vld [vmem:[%s1063 + $0x5a0] sm:%s1056]
                  %1426 = vst [vmem:[%s1064 + $0x2d0] sm:%s1056] %v1425
                  %v1427 = vld [vmem:[%s1063 + $0x5a8] sm:%s1056]
                  %1428 = vst [vmem:[%s1064 + $0x2d4] sm:%s1056] %v1427
                  %v1429 = vld [vmem:[%s1063 + $0x5b0] sm:%s1056]
                  %1430 = vst [vmem:[%s1064 + $0x2d8] sm:%s1056] %v1429
                  %v1431 = vld [vmem:[%s1063 + $0x5b8] sm:%s1056]
                  %1432 = vst [vmem:[%s1064 + $0x2dc] sm:%s1056] %v1431
                  %v1433 = vld [vmem:[%s1063 + $0x5c0] sm:%s1056]
                  %1434 = vst [vmem:[%s1064 + $0x2e0] sm:%s1056] %v1433
                  %v1435 = vld [vmem:[%s1063 + $0x5c8] sm:%s1056]
                  %1436 = vst [vmem:[%s1064 + $0x2e4] sm:%s1056] %v1435
                  %v1437 = vld [vmem:[%s1063 + $0x5d0] sm:%s1056]
                  %1438 = vst [vmem:[%s1064 + $0x2e8] sm:%s1056] %v1437
                  %v1439 = vld [vmem:[%s1063 + $0x5d8] sm:%s1056]
                  %1440 = vst [vmem:[%s1064 + $0x2ec] sm:%s1056] %v1439
                  %v1441 = vld [vmem:[%s1063 + $0x5e0] sm:%s1056]
                  %1442 = vst [vmem:[%s1064 + $0x2f0] sm:%s1056] %v1441
                  %v1443 = vld [vmem:[%s1063 + $0x5e8] sm:%s1056]
                  %1444 = vst [vmem:[%s1064 + $0x2f4] sm:%s1056] %v1443
                  %v1445 = vld [vmem:[%s1063 + $0x5f0] sm:%s1056]
                  %1446 = vst [vmem:[%s1064 + $0x2f8] sm:%s1056] %v1445
                  %v1447 = vld [vmem:[%s1063 + $0x5f8] sm:%s1056]
                  %1448 = vst [vmem:[%s1064 + $0x2fc] sm:%s1056] %v1447
                  %v1449 = vld [vmem:[%s1063 + $0x600] sm:%s1056]
                  %1450 = vst [vmem:[%s1064 + $0x300] sm:%s1056] %v1449
                  %v1451 = vld [vmem:[%s1063 + $0x608] sm:%s1056]
                  %1452 = vst [vmem:[%s1064 + $0x304] sm:%s1056] %v1451
                  %v1453 = vld [vmem:[%s1063 + $0x610] sm:%s1056]
                  %1454 = vst [vmem:[%s1064 + $0x308] sm:%s1056] %v1453
                  %v1455 = vld [vmem:[%s1063 + $0x618] sm:%s1056]
                  %1456 = vst [vmem:[%s1064 + $0x30c] sm:%s1056] %v1455
                  %v1457 = vld [vmem:[%s1063 + $0x620] sm:%s1056]
                  %1458 = vst [vmem:[%s1064 + $0x310] sm:%s1056] %v1457
                  %v1459 = vld [vmem:[%s1063 + $0x628] sm:%s1056]
                  %1460 = vst [vmem:[%s1064 + $0x314] sm:%s1056] %v1459
                  %v1461 = vld [vmem:[%s1063 + $0x630] sm:%s1056]
                  %1462 = vst [vmem:[%s1064 + $0x318] sm:%s1056] %v1461
                  %v1463 = vld [vmem:[%s1063 + $0x638] sm:%s1056]
                  %1464 = vst [vmem:[%s1064 + $0x31c] sm:%s1056] %v1463
                  %v1465 = vld [vmem:[%s1063 + $0x640] sm:%s1056]
                  %1466 = vst [vmem:[%s1064 + $0x320] sm:%s1056] %v1465
                  %v1467 = vld [vmem:[%s1063 + $0x648] sm:%s1056]
                  %1468 = vst [vmem:[%s1064 + $0x324] sm:%s1056] %v1467
                  %v1469 = vld [vmem:[%s1063 + $0x650] sm:%s1056]
                  %1470 = vst [vmem:[%s1064 + $0x328] sm:%s1056] %v1469
                  %v1471 = vld [vmem:[%s1063 + $0x658] sm:%s1056]
                  %1472 = vst [vmem:[%s1064 + $0x32c] sm:%s1056] %v1471
                  %v1473 = vld [vmem:[%s1063 + $0x660] sm:%s1056]
                  %1474 = vst [vmem:[%s1064 + $0x330] sm:%s1056] %v1473
                  %v1475 = vld [vmem:[%s1063 + $0x668] sm:%s1056]
                  %1476 = vst [vmem:[%s1064 + $0x334] sm:%s1056] %v1475
                  %v1477 = vld [vmem:[%s1063 + $0x670] sm:%s1056]
                  %1478 = vst [vmem:[%s1064 + $0x338] sm:%s1056] %v1477
                  %v1479 = vld [vmem:[%s1063 + $0x678] sm:%s1056]
                  %1480 = vst [vmem:[%s1064 + $0x33c] sm:%s1056] %v1479
                  %v1481 = vld [vmem:[%s1063 + $0x680] sm:%s1056]
                  %1482 = vst [vmem:[%s1064 + $0x340] sm:%s1056] %v1481
                  %v1483 = vld [vmem:[%s1063 + $0x688] sm:%s1056]
                  %1484 = vst [vmem:[%s1064 + $0x344] sm:%s1056] %v1483
                  %v1485 = vld [vmem:[%s1063 + $0x690] sm:%s1056]
                  %1486 = vst [vmem:[%s1064 + $0x348] sm:%s1056] %v1485
                  %v1487 = vld [vmem:[%s1063 + $0x698] sm:%s1056]
                  %1488 = vst [vmem:[%s1064 + $0x34c] sm:%s1056] %v1487
                  %v1489 = vld [vmem:[%s1063 + $0x6a0] sm:%s1056]
                  %1490 = vst [vmem:[%s1064 + $0x350] sm:%s1056] %v1489
                  %v1491 = vld [vmem:[%s1063 + $0x6a8] sm:%s1056]
                  %1492 = vst [vmem:[%s1064 + $0x354] sm:%s1056] %v1491
                  %v1493 = vld [vmem:[%s1063 + $0x6b0] sm:%s1056]
                  %1494 = vst [vmem:[%s1064 + $0x358] sm:%s1056] %v1493
                  %v1495 = vld [vmem:[%s1063 + $0x6b8] sm:%s1056]
                  %1496 = vst [vmem:[%s1064 + $0x35c] sm:%s1056] %v1495
                  %v1497 = vld [vmem:[%s1063 + $0x6c0] sm:%s1056]
                  %1498 = vst [vmem:[%s1064 + $0x360] sm:%s1056] %v1497
                  %v1499 = vld [vmem:[%s1063 + $0x6c8] sm:%s1056]
                  %1500 = vst [vmem:[%s1064 + $0x364] sm:%s1056] %v1499
                  %v1501 = vld [vmem:[%s1063 + $0x6d0] sm:%s1056]
                  %1502 = vst [vmem:[%s1064 + $0x368] sm:%s1056] %v1501
                  %v1503 = vld [vmem:[%s1063 + $0x6d8] sm:%s1056]
                  %1504 = vst [vmem:[%s1064 + $0x36c] sm:%s1056] %v1503
                  %v1505 = vld [vmem:[%s1063 + $0x6e0] sm:%s1056]
                  %1506 = vst [vmem:[%s1064 + $0x370] sm:%s1056] %v1505
                  %v1507 = vld [vmem:[%s1063 + $0x6e8] sm:%s1056]
                  %1508 = vst [vmem:[%s1064 + $0x374] sm:%s1056] %v1507
                  %v1509 = vld [vmem:[%s1063 + $0x6f0] sm:%s1056]
                  %1510 = vst [vmem:[%s1064 + $0x378] sm:%s1056] %v1509
                  %v1511 = vld [vmem:[%s1063 + $0x6f8] sm:%s1056]
                  %1512 = vst [vmem:[%s1064 + $0x37c] sm:%s1056] %v1511
                  %v1513 = vld [vmem:[%s1063 + $0x700] sm:%s1056]
                  %1514 = vst [vmem:[%s1064 + $0x380] sm:%s1056] %v1513
                  %v1515 = vld [vmem:[%s1063 + $0x708] sm:%s1056]
                  %1516 = vst [vmem:[%s1064 + $0x384] sm:%s1056] %v1515
                  %v1517 = vld [vmem:[%s1063 + $0x710] sm:%s1056]
                  %1518 = vst [vmem:[%s1064 + $0x388] sm:%s1056] %v1517
                  %v1519 = vld [vmem:[%s1063 + $0x718] sm:%s1056]
                  %1520 = vst [vmem:[%s1064 + $0x38c] sm:%s1056] %v1519
                  %v1521 = vld [vmem:[%s1063 + $0x720] sm:%s1056]
                  %1522 = vst [vmem:[%s1064 + $0x390] sm:%s1056] %v1521
                  %v1523 = vld [vmem:[%s1063 + $0x728] sm:%s1056]
                  %1524 = vst [vmem:[%s1064 + $0x394] sm:%s1056] %v1523
                  %v1525 = vld [vmem:[%s1063 + $0x730] sm:%s1056]
                  %1526 = vst [vmem:[%s1064 + $0x398] sm:%s1056] %v1525
                  %v1527 = vld [vmem:[%s1063 + $0x738] sm:%s1056]
                  %1528 = vst [vmem:[%s1064 + $0x39c] sm:%s1056] %v1527
                  %v1529 = vld [vmem:[%s1063 + $0x740] sm:%s1056]
                  %1530 = vst [vmem:[%s1064 + $0x3a0] sm:%s1056] %v1529
                  %v1531 = vld [vmem:[%s1063 + $0x748] sm:%s1056]
                  %1532 = vst [vmem:[%s1064 + $0x3a4] sm:%s1056] %v1531
                  %v1533 = vld [vmem:[%s1063 + $0x750] sm:%s1056]
                  %1534 = vst [vmem:[%s1064 + $0x3a8] sm:%s1056] %v1533
                  %v1535 = vld [vmem:[%s1063 + $0x758] sm:%s1056]
                  %1536 = vst [vmem:[%s1064 + $0x3ac] sm:%s1056] %v1535
                  %v1537 = vld [vmem:[%s1063 + $0x760] sm:%s1056]
                  %1538 = vst [vmem:[%s1064 + $0x3b0] sm:%s1056] %v1537
                  %v1539 = vld [vmem:[%s1063 + $0x768] sm:%s1056]
                  %1540 = vst [vmem:[%s1064 + $0x3b4] sm:%s1056] %v1539
                  %v1541 = vld [vmem:[%s1063 + $0x770] sm:%s1056]
                  %1542 = vst [vmem:[%s1064 + $0x3b8] sm:%s1056] %v1541
                  %v1543 = vld [vmem:[%s1063 + $0x778] sm:%s1056]
                  %1544 = vst [vmem:[%s1064 + $0x3bc] sm:%s1056] %v1543
                  %v1545 = vld [vmem:[%s1063 + $0x780] sm:%s1056]
                  %1546 = vst [vmem:[%s1064 + $0x3c0] sm:%s1056] %v1545
                  %v1547 = vld [vmem:[%s1063 + $0x788] sm:%s1056]
                  %1548 = vst [vmem:[%s1064 + $0x3c4] sm:%s1056] %v1547
                  %v1549 = vld [vmem:[%s1063 + $0x790] sm:%s1056]
                  %1550 = vst [vmem:[%s1064 + $0x3c8] sm:%s1056] %v1549
                  %v1551 = vld [vmem:[%s1063 + $0x798] sm:%s1056]
                  %1552 = vst [vmem:[%s1064 + $0x3cc] sm:%s1056] %v1551
                  %v1553 = vld [vmem:[%s1063 + $0x7a0] sm:%s1056]
                  %1554 = vst [vmem:[%s1064 + $0x3d0] sm:%s1056] %v1553
                  %v1555 = vld [vmem:[%s1063 + $0x7a8] sm:%s1056]
                  %1556 = vst [vmem:[%s1064 + $0x3d4] sm:%s1056] %v1555
                  %v1557 = vld [vmem:[%s1063 + $0x7b0] sm:%s1056]
                  %1558 = vst [vmem:[%s1064 + $0x3d8] sm:%s1056] %v1557
                  %v1559 = vld [vmem:[%s1063 + $0x7b8] sm:%s1056]
                  %1560 = vst [vmem:[%s1064 + $0x3dc] sm:%s1056] %v1559
                  %v1561 = vld [vmem:[%s1063 + $0x7c0] sm:%s1056]
                  %1562 = vst [vmem:[%s1064 + $0x3e0] sm:%s1056] %v1561
                  %v1563 = vld [vmem:[%s1063 + $0x7c8] sm:%s1056]
                  %1564 = vst [vmem:[%s1064 + $0x3e4] sm:%s1056] %v1563
                  %v1565 = vld [vmem:[%s1063 + $0x7d0] sm:%s1056]
                  %1566 = vst [vmem:[%s1064 + $0x3e8] sm:%s1056] %v1565
                  %v1567 = vld [vmem:[%s1063 + $0x7d8] sm:%s1056]
                  %1568 = vst [vmem:[%s1064 + $0x3ec] sm:%s1056] %v1567
                  %v1569 = vld [vmem:[%s1063 + $0x7e0] sm:%s1056]
                  %1570 = vst [vmem:[%s1064 + $0x3f0] sm:%s1056] %v1569
                  %v1571 = vld [vmem:[%s1063 + $0x7e8] sm:%s1056]
                  %1572 = vst [vmem:[%s1064 + $0x3f4] sm:%s1056] %v1571
                  %v1573 = vld [vmem:[%s1063 + $0x7f0] sm:%s1056]
                  %1574 = vst [vmem:[%s1064 + $0x3f8] sm:%s1056] %v1573
                  %v1575 = vld [vmem:[%s1063 + $0x7f8] sm:%s1056]
                  %1576 = vst [vmem:[%s1064 + $0x3fc] sm:%s1056] %v1575
                  %v1577 = vld [vmem:[%s1063 + $0x800] sm:%s1056]
                  %1578 = vst [vmem:[%s1064 + $0x400] sm:%s1056] %v1577
                  %v1579 = vld [vmem:[%s1063 + $0x808] sm:%s1056]
                  %1580 = vst [vmem:[%s1064 + $0x404] sm:%s1056] %v1579
                  %v1581 = vld [vmem:[%s1063 + $0x810] sm:%s1056]
                  %1582 = vst [vmem:[%s1064 + $0x408] sm:%s1056] %v1581
                  %v1583 = vld [vmem:[%s1063 + $0x818] sm:%s1056]
                  %1584 = vst [vmem:[%s1064 + $0x40c] sm:%s1056] %v1583
                  %v1585 = vld [vmem:[%s1063 + $0x820] sm:%s1056]
                  %1586 = vst [vmem:[%s1064 + $0x410] sm:%s1056] %v1585
                  %v1587 = vld [vmem:[%s1063 + $0x828] sm:%s1056]
                  %1588 = vst [vmem:[%s1064 + $0x414] sm:%s1056] %v1587
                  %v1589 = vld [vmem:[%s1063 + $0x830] sm:%s1056]
                  %1590 = vst [vmem:[%s1064 + $0x418] sm:%s1056] %v1589
                  %v1591 = vld [vmem:[%s1063 + $0x838] sm:%s1056]
                  %1592 = vst [vmem:[%s1064 + $0x41c] sm:%s1056] %v1591
                  %v1593 = vld [vmem:[%s1063 + $0x840] sm:%s1056]
                  %1594 = vst [vmem:[%s1064 + $0x420] sm:%s1056] %v1593
                  %v1595 = vld [vmem:[%s1063 + $0x848] sm:%s1056]
                  %1596 = vst [vmem:[%s1064 + $0x424] sm:%s1056] %v1595
                  %v1597 = vld [vmem:[%s1063 + $0x850] sm:%s1056]
                  %1598 = vst [vmem:[%s1064 + $0x428] sm:%s1056] %v1597
                  %v1599 = vld [vmem:[%s1063 + $0x858] sm:%s1056]
                  %1600 = vst [vmem:[%s1064 + $0x42c] sm:%s1056] %v1599
                  %v1601 = vld [vmem:[%s1063 + $0x860] sm:%s1056]
                  %1602 = vst [vmem:[%s1064 + $0x430] sm:%s1056] %v1601
                  %v1603 = vld [vmem:[%s1063 + $0x868] sm:%s1056]
                  %1604 = vst [vmem:[%s1064 + $0x434] sm:%s1056] %v1603
                  %v1605 = vld [vmem:[%s1063 + $0x870] sm:%s1056]
                  %1606 = vst [vmem:[%s1064 + $0x438] sm:%s1056] %v1605
                  %v1607 = vld [vmem:[%s1063 + $0x878] sm:%s1056]
                  %1608 = vst [vmem:[%s1064 + $0x43c] sm:%s1056] %v1607
                  %v1609 = vld [vmem:[%s1063 + $0x880] sm:%s1056]
                  %1610 = vst [vmem:[%s1064 + $0x440] sm:%s1056] %v1609
                  %v1611 = vld [vmem:[%s1063 + $0x888] sm:%s1056]
                  %1612 = vst [vmem:[%s1064 + $0x444] sm:%s1056] %v1611
                  %v1613 = vld [vmem:[%s1063 + $0x890] sm:%s1056]
                  %1614 = vst [vmem:[%s1064 + $0x448] sm:%s1056] %v1613
                  %v1615 = vld [vmem:[%s1063 + $0x898] sm:%s1056]
                  %1616 = vst [vmem:[%s1064 + $0x44c] sm:%s1056] %v1615
                  %v1617 = vld [vmem:[%s1063 + $0x8a0] sm:%s1056]
                  %1618 = vst [vmem:[%s1064 + $0x450] sm:%s1056] %v1617
                  %v1619 = vld [vmem:[%s1063 + $0x8a8] sm:%s1056]
                  %1620 = vst [vmem:[%s1064 + $0x454] sm:%s1056] %v1619
                  %v1621 = vld [vmem:[%s1063 + $0x8b0] sm:%s1056]
                  %1622 = vst [vmem:[%s1064 + $0x458] sm:%s1056] %v1621
                  %v1623 = vld [vmem:[%s1063 + $0x8b8] sm:%s1056]
                  %1624 = vst [vmem:[%s1064 + $0x45c] sm:%s1056] %v1623
                  %v1625 = vld [vmem:[%s1063 + $0x8c0] sm:%s1056]
                  %1626 = vst [vmem:[%s1064 + $0x460] sm:%s1056] %v1625
                  %v1627 = vld [vmem:[%s1063 + $0x8c8] sm:%s1056]
                  %1628 = vst [vmem:[%s1064 + $0x464] sm:%s1056] %v1627
                  %v1629 = vld [vmem:[%s1063 + $0x8d0] sm:%s1056]
                  %1630 = vst [vmem:[%s1064 + $0x468] sm:%s1056] %v1629
                  %v1631 = vld [vmem:[%s1063 + $0x8d8] sm:%s1056]
                  %1632 = vst [vmem:[%s1064 + $0x46c] sm:%s1056] %v1631
                  %v1633 = vld [vmem:[%s1063 + $0x8e0] sm:%s1056]
                  %1634 = vst [vmem:[%s1064 + $0x470] sm:%s1056] %v1633
                  %v1635 = vld [vmem:[%s1063 + $0x8e8] sm:%s1056]
                  %1636 = vst [vmem:[%s1064 + $0x474] sm:%s1056] %v1635
                  %v1637 = vld [vmem:[%s1063 + $0x8f0] sm:%s1056]
                  %1638 = vst [vmem:[%s1064 + $0x478] sm:%s1056] %v1637
                  %v1639 = vld [vmem:[%s1063 + $0x8f8] sm:%s1056]
                  %1640 = vst [vmem:[%s1064 + $0x47c] sm:%s1056] %v1639
                  %v1641 = vld [vmem:[%s1063 + $0x900] sm:%s1056]
                  %1642 = vst [vmem:[%s1064 + $0x480] sm:%s1056] %v1641
                  %v1643 = vld [vmem:[%s1063 + $0x908] sm:%s1056]
                  %1644 = vst [vmem:[%s1064 + $0x484] sm:%s1056] %v1643
                  %v1645 = vld [vmem:[%s1063 + $0x910] sm:%s1056]
                  %1646 = vst [vmem:[%s1064 + $0x488] sm:%s1056] %v1645
                  %v1647 = vld [vmem:[%s1063 + $0x918] sm:%s1056]
                  %1648 = vst [vmem:[%s1064 + $0x48c] sm:%s1056] %v1647
                  %v1649 = vld [vmem:[%s1063 + $0x920] sm:%s1056]
                  %1650 = vst [vmem:[%s1064 + $0x490] sm:%s1056] %v1649
                  %v1651 = vld [vmem:[%s1063 + $0x928] sm:%s1056]
                  %1652 = vst [vmem:[%s1064 + $0x494] sm:%s1056] %v1651
                  %v1653 = vld [vmem:[%s1063 + $0x930] sm:%s1056]
                  %1654 = vst [vmem:[%s1064 + $0x498] sm:%s1056] %v1653
                  %v1655 = vld [vmem:[%s1063 + $0x938] sm:%s1056]
                  %1656 = vst [vmem:[%s1064 + $0x49c] sm:%s1056] %v1655
                  %v1657 = vld [vmem:[%s1063 + $0x940] sm:%s1056]
                  %1658 = vst [vmem:[%s1064 + $0x4a0] sm:%s1056] %v1657
                  %v1659 = vld [vmem:[%s1063 + $0x948] sm:%s1056]
                  %1660 = vst [vmem:[%s1064 + $0x4a4] sm:%s1056] %v1659
                  %v1661 = vld [vmem:[%s1063 + $0x950] sm:%s1056]
                  %1662 = vst [vmem:[%s1064 + $0x4a8] sm:%s1056] %v1661
                  %v1663 = vld [vmem:[%s1063 + $0x958] sm:%s1056]
                  %1664 = vst [vmem:[%s1064 + $0x4ac] sm:%s1056] %v1663
                  %v1665 = vld [vmem:[%s1063 + $0x960] sm:%s1056]
                  %1666 = vst [vmem:[%s1064 + $0x4b0] sm:%s1056] %v1665
                  %v1667 = vld [vmem:[%s1063 + $0x968] sm:%s1056]
                  %1668 = vst [vmem:[%s1064 + $0x4b4] sm:%s1056] %v1667
                  %v1669 = vld [vmem:[%s1063 + $0x970] sm:%s1056]
                  %1670 = vst [vmem:[%s1064 + $0x4b8] sm:%s1056] %v1669
                  %v1671 = vld [vmem:[%s1063 + $0x978] sm:%s1056]
                  %1672 = vst [vmem:[%s1064 + $0x4bc] sm:%s1056] %v1671
                  %v1673 = vld [vmem:[%s1063 + $0x980] sm:%s1056]
                  %1674 = vst [vmem:[%s1064 + $0x4c0] sm:%s1056] %v1673
                  %v1675 = vld [vmem:[%s1063 + $0x988] sm:%s1056]
                  %1676 = vst [vmem:[%s1064 + $0x4c4] sm:%s1056] %v1675
                  %v1677 = vld [vmem:[%s1063 + $0x990] sm:%s1056]
                  %1678 = vst [vmem:[%s1064 + $0x4c8] sm:%s1056] %v1677
                  %v1679 = vld [vmem:[%s1063 + $0x998] sm:%s1056]
                  %1680 = vst [vmem:[%s1064 + $0x4cc] sm:%s1056] %v1679
                  %v1681 = vld [vmem:[%s1063 + $0x9a0] sm:%s1056]
                  %1682 = vst [vmem:[%s1064 + $0x4d0] sm:%s1056] %v1681
                  %v1683 = vld [vmem:[%s1063 + $0x9a8] sm:%s1056]
                  %1684 = vst [vmem:[%s1064 + $0x4d4] sm:%s1056] %v1683
                  %v1685 = vld [vmem:[%s1063 + $0x9b0] sm:%s1056]
                  %1686 = vst [vmem:[%s1064 + $0x4d8] sm:%s1056] %v1685
                  %v1687 = vld [vmem:[%s1063 + $0x9b8] sm:%s1056]
                  %1688 = vst [vmem:[%s1064 + $0x4dc] sm:%s1056] %v1687
                  %v1689 = vld [vmem:[%s1063 + $0x9c0] sm:%s1056]
                  %1690 = vst [vmem:[%s1064 + $0x4e0] sm:%s1056] %v1689
                  %v1691 = vld [vmem:[%s1063 + $0x9c8] sm:%s1056]
                  %1692 = vst [vmem:[%s1064 + $0x4e4] sm:%s1056] %v1691
                  %v1693 = vld [vmem:[%s1063 + $0x9d0] sm:%s1056]
                  %1694 = vst [vmem:[%s1064 + $0x4e8] sm:%s1056] %v1693
                  %v1695 = vld [vmem:[%s1063 + $0x9d8] sm:%s1056]
                  %1696 = vst [vmem:[%s1064 + $0x4ec] sm:%s1056] %v1695
                  %v1697 = vld [vmem:[%s1063 + $0x9e0] sm:%s1056]
                  %1698 = vst [vmem:[%s1064 + $0x4f0] sm:%s1056] %v1697
                  %v1699 = vld [vmem:[%s1063 + $0x9e8] sm:%s1056]
                  %1700 = vst [vmem:[%s1064 + $0x4f4] sm:%s1056] %v1699
                  %v1701 = vld [vmem:[%s1063 + $0x9f0] sm:%s1056]
                  %1702 = vst [vmem:[%s1064 + $0x4f8] sm:%s1056] %v1701
                  %v1703 = vld [vmem:[%s1063 + $0x9f8] sm:%s1056]
                  %1704 = vst [vmem:[%s1064 + $0x4fc] sm:%s1056] %v1703
                  %v1705 = vld [vmem:[%s1063 + $0xa00] sm:%s1056]
                  %1706 = vst [vmem:[%s1064 + $0x500] sm:%s1056] %v1705
                  %v1707 = vld [vmem:[%s1063 + $0xa08] sm:%s1056]
                  %1708 = vst [vmem:[%s1064 + $0x504] sm:%s1056] %v1707
                  %v1709 = vld [vmem:[%s1063 + $0xa10] sm:%s1056]
                  %1710 = vst [vmem:[%s1064 + $0x508] sm:%s1056] %v1709
                  %v1711 = vld [vmem:[%s1063 + $0xa18] sm:%s1056]
                  %1712 = vst [vmem:[%s1064 + $0x50c] sm:%s1056] %v1711
                  %v1713 = vld [vmem:[%s1063 + $0xa20] sm:%s1056]
                  %1714 = vst [vmem:[%s1064 + $0x510] sm:%s1056] %v1713
                  %v1715 = vld [vmem:[%s1063 + $0xa28] sm:%s1056]
                  %1716 = vst [vmem:[%s1064 + $0x514] sm:%s1056] %v1715
                  %v1717 = vld [vmem:[%s1063 + $0xa30] sm:%s1056]
                  %1718 = vst [vmem:[%s1064 + $0x518] sm:%s1056] %v1717
                  %v1719 = vld [vmem:[%s1063 + $0xa38] sm:%s1056]
                  %1720 = vst [vmem:[%s1064 + $0x51c] sm:%s1056] %v1719
                  %v1721 = vld [vmem:[%s1063 + $0xa40] sm:%s1056]
                  %1722 = vst [vmem:[%s1064 + $0x520] sm:%s1056] %v1721
                  %v1723 = vld [vmem:[%s1063 + $0xa48] sm:%s1056]
                  %1724 = vst [vmem:[%s1064 + $0x524] sm:%s1056] %v1723
                  %v1725 = vld [vmem:[%s1063 + $0xa50] sm:%s1056]
                  %1726 = vst [vmem:[%s1064 + $0x528] sm:%s1056] %v1725
                  %v1727 = vld [vmem:[%s1063 + $0xa58] sm:%s1056]
                  %1728 = vst [vmem:[%s1064 + $0x52c] sm:%s1056] %v1727
                  %v1729 = vld [vmem:[%s1063 + $0xa60] sm:%s1056]
                  %1730 = vst [vmem:[%s1064 + $0x530] sm:%s1056] %v1729
                  %v1731 = vld [vmem:[%s1063 + $0xa68] sm:%s1056]
                  %1732 = vst [vmem:[%s1064 + $0x534] sm:%s1056] %v1731
                  %v1733 = vld [vmem:[%s1063 + $0xa70] sm:%s1056]
                  %1734 = vst [vmem:[%s1064 + $0x538] sm:%s1056] %v1733
                  %v1735 = vld [vmem:[%s1063 + $0xa78] sm:%s1056]
                  %1736 = vst [vmem:[%s1064 + $0x53c] sm:%s1056] %v1735
                  %v1737 = vld [vmem:[%s1063 + $0xa80] sm:%s1056]
                  %1738 = vst [vmem:[%s1064 + $0x540] sm:%s1056] %v1737
                  %v1739 = vld [vmem:[%s1063 + $0xa88] sm:%s1056]
                  %1740 = vst [vmem:[%s1064 + $0x544] sm:%s1056] %v1739
                  %v1741 = vld [vmem:[%s1063 + $0xa90] sm:%s1056]
                  %1742 = vst [vmem:[%s1064 + $0x548] sm:%s1056] %v1741
                  %v1743 = vld [vmem:[%s1063 + $0xa98] sm:%s1056]
                  %1744 = vst [vmem:[%s1064 + $0x54c] sm:%s1056] %v1743
                  %v1745 = vld [vmem:[%s1063 + $0xaa0] sm:%s1056]
                  %1746 = vst [vmem:[%s1064 + $0x550] sm:%s1056] %v1745
                  %v1747 = vld [vmem:[%s1063 + $0xaa8] sm:%s1056]
                  %1748 = vst [vmem:[%s1064 + $0x554] sm:%s1056] %v1747
                  %v1749 = vld [vmem:[%s1063 + $0xab0] sm:%s1056]
                  %1750 = vst [vmem:[%s1064 + $0x558] sm:%s1056] %v1749
                  %v1751 = vld [vmem:[%s1063 + $0xab8] sm:%s1056]
                  %1752 = vst [vmem:[%s1064 + $0x55c] sm:%s1056] %v1751
                  %v1753 = vld [vmem:[%s1063 + $0xac0] sm:%s1056]
                  %1754 = vst [vmem:[%s1064 + $0x560] sm:%s1056] %v1753
                  %v1755 = vld [vmem:[%s1063 + $0xac8] sm:%s1056]
                  %1756 = vst [vmem:[%s1064 + $0x564] sm:%s1056] %v1755
                  %v1757 = vld [vmem:[%s1063 + $0xad0] sm:%s1056]
                  %1758 = vst [vmem:[%s1064 + $0x568] sm:%s1056] %v1757
                  %v1759 = vld [vmem:[%s1063 + $0xad8] sm:%s1056]
                  %1760 = vst [vmem:[%s1064 + $0x56c] sm:%s1056] %v1759
                  %v1761 = vld [vmem:[%s1063 + $0xae0] sm:%s1056]
                  %1762 = vst [vmem:[%s1064 + $0x570] sm:%s1056] %v1761
                  %v1763 = vld [vmem:[%s1063 + $0xae8] sm:%s1056]
                  %1764 = vst [vmem:[%s1064 + $0x574] sm:%s1056] %v1763
                  %v1765 = vld [vmem:[%s1063 + $0xaf0] sm:%s1056]
                  %1766 = vst [vmem:[%s1064 + $0x578] sm:%s1056] %v1765
                  %v1767 = vld [vmem:[%s1063 + $0xaf8] sm:%s1056]
                  %1768 = vst [vmem:[%s1064 + $0x57c] sm:%s1056] %v1767
                  %v1769 = vld [vmem:[%s1063 + $0xb00] sm:%s1056]
                  %1770 = vst [vmem:[%s1064 + $0x580] sm:%s1056] %v1769
                  %v1771 = vld [vmem:[%s1063 + $0xb08] sm:%s1056]
                  %1772 = vst [vmem:[%s1064 + $0x584] sm:%s1056] %v1771
                  %v1773 = vld [vmem:[%s1063 + $0xb10] sm:%s1056]
                  %1774 = vst [vmem:[%s1064 + $0x588] sm:%s1056] %v1773
                  %v1775 = vld [vmem:[%s1063 + $0xb18] sm:%s1056]
                  %1776 = vst [vmem:[%s1064 + $0x58c] sm:%s1056] %v1775
                  %v1777 = vld [vmem:[%s1063 + $0xb20] sm:%s1056]
                  %1778 = vst [vmem:[%s1064 + $0x590] sm:%s1056] %v1777
                  %v1779 = vld [vmem:[%s1063 + $0xb28] sm:%s1056]
                  %1780 = vst [vmem:[%s1064 + $0x594] sm:%s1056] %v1779
                  %v1781 = vld [vmem:[%s1063 + $0xb30] sm:%s1056]
                  %1782 = vst [vmem:[%s1064 + $0x598] sm:%s1056] %v1781
                  %v1783 = vld [vmem:[%s1063 + $0xb38] sm:%s1056]
                  %1784 = vst [vmem:[%s1064 + $0x59c] sm:%s1056] %v1783
                  %v1785 = vld [vmem:[%s1063 + $0xb40] sm:%s1056]
                  %1786 = vst [vmem:[%s1064 + $0x5a0] sm:%s1056] %v1785
                  %v1787 = vld [vmem:[%s1063 + $0xb48] sm:%s1056]
                  %1788 = vst [vmem:[%s1064 + $0x5a4] sm:%s1056] %v1787
                  %v1789 = vld [vmem:[%s1063 + $0xb50] sm:%s1056]
                  %1790 = vst [vmem:[%s1064 + $0x5a8] sm:%s1056] %v1789
                  %v1791 = vld [vmem:[%s1063 + $0xb58] sm:%s1056]
                  %1792 = vst [vmem:[%s1064 + $0x5ac] sm:%s1056] %v1791
                  %v1793 = vld [vmem:[%s1063 + $0xb60] sm:%s1056]
                  %1794 = vst [vmem:[%s1064 + $0x5b0] sm:%s1056] %v1793
                  %v1795 = vld [vmem:[%s1063 + $0xb68] sm:%s1056]
                  %1796 = vst [vmem:[%s1064 + $0x5b4] sm:%s1056] %v1795
                  %v1797 = vld [vmem:[%s1063 + $0xb70] sm:%s1056]
                  %1798 = vst [vmem:[%s1064 + $0x5b8] sm:%s1056] %v1797
                  %v1799 = vld [vmem:[%s1063 + $0xb78] sm:%s1056]
                  %1800 = vst [vmem:[%s1064 + $0x5bc] sm:%s1056] %v1799
                  %v1801 = vld [vmem:[%s1063 + $0xb80] sm:%s1056]
                  %1802 = vst [vmem:[%s1064 + $0x5c0] sm:%s1056] %v1801
                  %v1803 = vld [vmem:[%s1063 + $0xb88] sm:%s1056]
                  %1804 = vst [vmem:[%s1064 + $0x5c4] sm:%s1056] %v1803
                  %v1805 = vld [vmem:[%s1063 + $0xb90] sm:%s1056]
                  %1806 = vst [vmem:[%s1064 + $0x5c8] sm:%s1056] %v1805
                  %v1807 = vld [vmem:[%s1063 + $0xb98] sm:%s1056]
                  %1808 = vst [vmem:[%s1064 + $0x5cc] sm:%s1056] %v1807
                  %v1809 = vld [vmem:[%s1063 + $0xba0] sm:%s1056]
                  %1810 = vst [vmem:[%s1064 + $0x5d0] sm:%s1056] %v1809
                  %v1811 = vld [vmem:[%s1063 + $0xba8] sm:%s1056]
                  %1812 = vst [vmem:[%s1064 + $0x5d4] sm:%s1056] %v1811
                  %v1813 = vld [vmem:[%s1063 + $0xbb0] sm:%s1056]
                  %1814 = vst [vmem:[%s1064 + $0x5d8] sm:%s1056] %v1813
                  %v1815 = vld [vmem:[%s1063 + $0xbb8] sm:%s1056]
                  %1816 = vst [vmem:[%s1064 + $0x5dc] sm:%s1056] %v1815
                  %v1817 = vld [vmem:[%s1063 + $0xbc0] sm:%s1056]
                  %1818 = vst [vmem:[%s1064 + $0x5e0] sm:%s1056] %v1817
                  %v1819 = vld [vmem:[%s1063 + $0xbc8] sm:%s1056]
                  %1820 = vst [vmem:[%s1064 + $0x5e4] sm:%s1056] %v1819
                  %v1821 = vld [vmem:[%s1063 + $0xbd0] sm:%s1056]
                  %1822 = vst [vmem:[%s1064 + $0x5e8] sm:%s1056] %v1821
                  %v1823 = vld [vmem:[%s1063 + $0xbd8] sm:%s1056]
                  %1824 = vst [vmem:[%s1064 + $0x5ec] sm:%s1056] %v1823
                  %v1825 = vld [vmem:[%s1063 + $0xbe0] sm:%s1056]
                  %1826 = vst [vmem:[%s1064 + $0x5f0] sm:%s1056] %v1825
                  %v1827 = vld [vmem:[%s1063 + $0xbe8] sm:%s1056]
                  %1828 = vst [vmem:[%s1064 + $0x5f4] sm:%s1056] %v1827
                  %v1829 = vld [vmem:[%s1063 + $0xbf0] sm:%s1056]
                  %1830 = vst [vmem:[%s1064 + $0x5f8] sm:%s1056] %v1829
                  %v1831 = vld [vmem:[%s1063 + $0xbf8] sm:%s1056]
                  %1832 = vst [vmem:[%s1064 + $0x5fc] sm:%s1056] %v1831
                  %v1833 = vld [vmem:[%s1063 + $0xc00] sm:%s1056]
                  %1834 = vst [vmem:[%s1064 + $0x600] sm:%s1056] %v1833
                  %v1835 = vld [vmem:[%s1063 + $0xc08] sm:%s1056]
                  %1836 = vst [vmem:[%s1064 + $0x604] sm:%s1056] %v1835
                  %v1837 = vld [vmem:[%s1063 + $0xc10] sm:%s1056]
                  %1838 = vst [vmem:[%s1064 + $0x608] sm:%s1056] %v1837
                  %v1839 = vld [vmem:[%s1063 + $0xc18] sm:%s1056]
                  %1840 = vst [vmem:[%s1064 + $0x60c] sm:%s1056] %v1839
                  %v1841 = vld [vmem:[%s1063 + $0xc20] sm:%s1056]
                  %1842 = vst [vmem:[%s1064 + $0x610] sm:%s1056] %v1841
                  %v1843 = vld [vmem:[%s1063 + $0xc28] sm:%s1056]
                  %1844 = vst [vmem:[%s1064 + $0x614] sm:%s1056] %v1843
                  %v1845 = vld [vmem:[%s1063 + $0xc30] sm:%s1056]
                  %1846 = vst [vmem:[%s1064 + $0x618] sm:%s1056] %v1845
                  %v1847 = vld [vmem:[%s1063 + $0xc38] sm:%s1056]
                  %1848 = vst [vmem:[%s1064 + $0x61c] sm:%s1056] %v1847
                  %v1849 = vld [vmem:[%s1063 + $0xc40] sm:%s1056]
                  %1850 = vst [vmem:[%s1064 + $0x620] sm:%s1056] %v1849
                  %v1851 = vld [vmem:[%s1063 + $0xc48] sm:%s1056]
                  %1852 = vst [vmem:[%s1064 + $0x624] sm:%s1056] %v1851
                  %v1853 = vld [vmem:[%s1063 + $0xc50] sm:%s1056]
                  %1854 = vst [vmem:[%s1064 + $0x628] sm:%s1056] %v1853
                  %v1855 = vld [vmem:[%s1063 + $0xc58] sm:%s1056]
                  %1856 = vst [vmem:[%s1064 + $0x62c] sm:%s1056] %v1855
                  %v1857 = vld [vmem:[%s1063 + $0xc60] sm:%s1056]
                  %1858 = vst [vmem:[%s1064 + $0x630] sm:%s1056] %v1857
                  %v1859 = vld [vmem:[%s1063 + $0xc68] sm:%s1056]
                  %1860 = vst [vmem:[%s1064 + $0x634] sm:%s1056] %v1859
                  %v1861 = vld [vmem:[%s1063 + $0xc70] sm:%s1056]
                  %1862 = vst [vmem:[%s1064 + $0x638] sm:%s1056] %v1861
                  %v1863 = vld [vmem:[%s1063 + $0xc78] sm:%s1056]
                  %1864 = vst [vmem:[%s1064 + $0x63c] sm:%s1056] %v1863
                  %v1865 = vld [vmem:[%s1063 + $0xc80] sm:%s1056]
                  %1866 = vst [vmem:[%s1064 + $0x640] sm:%s1056] %v1865
                  %v1867 = vld [vmem:[%s1063 + $0xc88] sm:%s1056]
                  %1868 = vst [vmem:[%s1064 + $0x644] sm:%s1056] %v1867
                  %v1869 = vld [vmem:[%s1063 + $0xc90] sm:%s1056]
                  %1870 = vst [vmem:[%s1064 + $0x648] sm:%s1056] %v1869
                  %v1871 = vld [vmem:[%s1063 + $0xc98] sm:%s1056]
                  %1872 = vst [vmem:[%s1064 + $0x64c] sm:%s1056] %v1871
                  %v1873 = vld [vmem:[%s1063 + $0xca0] sm:%s1056]
                  %1874 = vst [vmem:[%s1064 + $0x650] sm:%s1056] %v1873
                  %v1875 = vld [vmem:[%s1063 + $0xca8] sm:%s1056]
                  %1876 = vst [vmem:[%s1064 + $0x654] sm:%s1056] %v1875
                  %v1877 = vld [vmem:[%s1063 + $0xcb0] sm:%s1056]
                  %1878 = vst [vmem:[%s1064 + $0x658] sm:%s1056] %v1877
                  %v1879 = vld [vmem:[%s1063 + $0xcb8] sm:%s1056]
                  %1880 = vst [vmem:[%s1064 + $0x65c] sm:%s1056] %v1879
                  %v1881 = vld [vmem:[%s1063 + $0xcc0] sm:%s1056]
                  %1882 = vst [vmem:[%s1064 + $0x660] sm:%s1056] %v1881
                  %v1883 = vld [vmem:[%s1063 + $0xcc8] sm:%s1056]
                  %1884 = vst [vmem:[%s1064 + $0x664] sm:%s1056] %v1883
                  %v1885 = vld [vmem:[%s1063 + $0xcd0] sm:%s1056]
                  %1886 = vst [vmem:[%s1064 + $0x668] sm:%s1056] %v1885
                  %v1887 = vld [vmem:[%s1063 + $0xcd8] sm:%s1056]
                  %1888 = vst [vmem:[%s1064 + $0x66c] sm:%s1056] %v1887
                  %v1889 = vld [vmem:[%s1063 + $0xce0] sm:%s1056]
                  %1890 = vst [vmem:[%s1064 + $0x670] sm:%s1056] %v1889
                  %v1891 = vld [vmem:[%s1063 + $0xce8] sm:%s1056]
                  %1892 = vst [vmem:[%s1064 + $0x674] sm:%s1056] %v1891
                  %v1893 = vld [vmem:[%s1063 + $0xcf0] sm:%s1056]
                  %1894 = vst [vmem:[%s1064 + $0x678] sm:%s1056] %v1893
                  %v1895 = vld [vmem:[%s1063 + $0xcf8] sm:%s1056]
                  %1896 = vst [vmem:[%s1064 + $0x67c] sm:%s1056] %v1895
                  %v1897 = vld [vmem:[%s1063 + $0xd00] sm:%s1056]
                  %1898 = vst [vmem:[%s1064 + $0x680] sm:%s1056] %v1897
                  %v1899 = vld [vmem:[%s1063 + $0xd08] sm:%s1056]
                  %1900 = vst [vmem:[%s1064 + $0x684] sm:%s1056] %v1899
                  %v1901 = vld [vmem:[%s1063 + $0xd10] sm:%s1056]
                  %1902 = vst [vmem:[%s1064 + $0x688] sm:%s1056] %v1901
                  %v1903 = vld [vmem:[%s1063 + $0xd18] sm:%s1056]
                  %1904 = vst [vmem:[%s1064 + $0x68c] sm:%s1056] %v1903
                  %v1905 = vld [vmem:[%s1063 + $0xd20] sm:%s1056]
                  %1906 = vst [vmem:[%s1064 + $0x690] sm:%s1056] %v1905
                  %v1907 = vld [vmem:[%s1063 + $0xd28] sm:%s1056]
                  %1908 = vst [vmem:[%s1064 + $0x694] sm:%s1056] %v1907
                  %v1909 = vld [vmem:[%s1063 + $0xd30] sm:%s1056]
                  %1910 = vst [vmem:[%s1064 + $0x698] sm:%s1056] %v1909
                  %v1911 = vld [vmem:[%s1063 + $0xd38] sm:%s1056]
                  %1912 = vst [vmem:[%s1064 + $0x69c] sm:%s1056] %v1911
                  %v1913 = vld [vmem:[%s1063 + $0xd40] sm:%s1056]
                  %1914 = vst [vmem:[%s1064 + $0x6a0] sm:%s1056] %v1913
                  %v1915 = vld [vmem:[%s1063 + $0xd48] sm:%s1056]
                  %1916 = vst [vmem:[%s1064 + $0x6a4] sm:%s1056] %v1915
                  %v1917 = vld [vmem:[%s1063 + $0xd50] sm:%s1056]
                  %1918 = vst [vmem:[%s1064 + $0x6a8] sm:%s1056] %v1917
                  %v1919 = vld [vmem:[%s1063 + $0xd58] sm:%s1056]
                  %1920 = vst [vmem:[%s1064 + $0x6ac] sm:%s1056] %v1919
                  %v1921 = vld [vmem:[%s1063 + $0xd60] sm:%s1056]
                  %1922 = vst [vmem:[%s1064 + $0x6b0] sm:%s1056] %v1921
                  %v1923 = vld [vmem:[%s1063 + $0xd68] sm:%s1056]
                  %1924 = vst [vmem:[%s1064 + $0x6b4] sm:%s1056] %v1923
                  %v1925 = vld [vmem:[%s1063 + $0xd70] sm:%s1056]
                  %1926 = vst [vmem:[%s1064 + $0x6b8] sm:%s1056] %v1925
                  %v1927 = vld [vmem:[%s1063 + $0xd78] sm:%s1056]
                  %1928 = vst [vmem:[%s1064 + $0x6bc] sm:%s1056] %v1927
                $region59: #{discriminator_forward.6} parent=46 // loop_footer
                  %s1062 = sadd.s32 1, %s1058
                $region60: #{discriminator_forward.6} parent=46 // loop_footer_branch
                  %1057 = sbr.rel target = $region56
                $region61: #{discriminator_forward.6} parent=46 // loop_exit
                  _
              $region47: #{discriminator_forward.6} parent=31 // pred_fallthru
                _
            $region32: #{discriminator_forward.6} parent=27 // pred_fallthru
              _
            // Predicated region
            $region33: #{discriminator_forward.6} parent=27 // pred_check
              _
            $region34: #{discriminator_forward.6} parent=27 // pred_check_branch
              %170 = sbr.rel (0) target = $region36
            $region35: #{discriminator_forward.6} parent=27 // pred_region
              %s172 = ssub.s32 16, 1
              loop: start=0, step=1, limit=1
              $region37: #{discriminator_forward.6} parent=35 // loop_pre_header
                _
              $region38: #{discriminator_forward.6} parent=35 // loop_header
                %s174 = sphi 0, %s178
                %p175 = scmp.ge.s32.totalorder %s174, 1
                %s179 = sphi %s164, %s164
                %s180 = sphi %s162, %s162
              $region39: #{discriminator_forward.6} parent=35 // loop_header_branch
                %177 = sbr.rel (%p175) target = $region43
              $region40: #{discriminator_forward.6} parent=35 // loop_body
                %v181 = vld [vmem:[%s179] sm:%s172]
                %182 = vst [vmem:[%s180] sm:%s172] %v181
                %v183 = vld [vmem:[%s179 + $0x8] sm:%s172]
                %184 = vst [vmem:[%s180 + $0x4] sm:%s172] %v183
                %v185 = vld [vmem:[%s179 + $0x10] sm:%s172]
                %186 = vst [vmem:[%s180 + $0x8] sm:%s172] %v185
                %v187 = vld [vmem:[%s179 + $0x18] sm:%s172]
                %188 = vst [vmem:[%s180 + $0xc] sm:%s172] %v187
                %v189 = vld [vmem:[%s179 + $0x20] sm:%s172]
                %190 = vst [vmem:[%s180 + $0x10] sm:%s172] %v189
                %v191 = vld [vmem:[%s179 + $0x28] sm:%s172]
                %192 = vst [vmem:[%s180 + $0x14] sm:%s172] %v191
                %v193 = vld [vmem:[%s179 + $0x30] sm:%s172]
                %194 = vst [vmem:[%s180 + $0x18] sm:%s172] %v193
                %v195 = vld [vmem:[%s179 + $0x38] sm:%s172]
                %196 = vst [vmem:[%s180 + $0x1c] sm:%s172] %v195
                %v197 = vld [vmem:[%s179 + $0x40] sm:%s172]
                %198 = vst [vmem:[%s180 + $0x20] sm:%s172] %v197
                %v199 = vld [vmem:[%s179 + $0x48] sm:%s172]
                %200 = vst [vmem:[%s180 + $0x24] sm:%s172] %v199
                %v201 = vld [vmem:[%s179 + $0x50] sm:%s172]
                %202 = vst [vmem:[%s180 + $0x28] sm:%s172] %v201
                %v203 = vld [vmem:[%s179 + $0x58] sm:%s172]
                %204 = vst [vmem:[%s180 + $0x2c] sm:%s172] %v203
                %v205 = vld [vmem:[%s179 + $0x60] sm:%s172]
                %206 = vst [vmem:[%s180 + $0x30] sm:%s172] %v205
                %v207 = vld [vmem:[%s179 + $0x68] sm:%s172]
                %208 = vst [vmem:[%s180 + $0x34] sm:%s172] %v207
                %v209 = vld [vmem:[%s179 + $0x70] sm:%s172]
                %210 = vst [vmem:[%s180 + $0x38] sm:%s172] %v209
                %v211 = vld [vmem:[%s179 + $0x78] sm:%s172]
                %212 = vst [vmem:[%s180 + $0x3c] sm:%s172] %v211
                %v213 = vld [vmem:[%s179 + $0x80] sm:%s172]
                %214 = vst [vmem:[%s180 + $0x40] sm:%s172] %v213
                %v215 = vld [vmem:[%s179 + $0x88] sm:%s172]
                %216 = vst [vmem:[%s180 + $0x44] sm:%s172] %v215
                %v217 = vld [vmem:[%s179 + $0x90] sm:%s172]
                %218 = vst [vmem:[%s180 + $0x48] sm:%s172] %v217
                %v219 = vld [vmem:[%s179 + $0x98] sm:%s172]
                %220 = vst [vmem:[%s180 + $0x4c] sm:%s172] %v219
                %v221 = vld [vmem:[%s179 + $0xa0] sm:%s172]
                %222 = vst [vmem:[%s180 + $0x50] sm:%s172] %v221
                %v223 = vld [vmem:[%s179 + $0xa8] sm:%s172]
                %224 = vst [vmem:[%s180 + $0x54] sm:%s172] %v223
                %v225 = vld [vmem:[%s179 + $0xb0] sm:%s172]
                %226 = vst [vmem:[%s180 + $0x58] sm:%s172] %v225
                %v227 = vld [vmem:[%s179 + $0xb8] sm:%s172]
                %228 = vst [vmem:[%s180 + $0x5c] sm:%s172] %v227
                %v229 = vld [vmem:[%s179 + $0xc0] sm:%s172]
                %230 = vst [vmem:[%s180 + $0x60] sm:%s172] %v229
                %v231 = vld [vmem:[%s179 + $0xc8] sm:%s172]
                %232 = vst [vmem:[%s180 + $0x64] sm:%s172] %v231
                %v233 = vld [vmem:[%s179 + $0xd0] sm:%s172]
                %234 = vst [vmem:[%s180 + $0x68] sm:%s172] %v233
                %v235 = vld [vmem:[%s179 + $0xd8] sm:%s172]
                %236 = vst [vmem:[%s180 + $0x6c] sm:%s172] %v235
                %v237 = vld [vmem:[%s179 + $0xe0] sm:%s172]
                %238 = vst [vmem:[%s180 + $0x70] sm:%s172] %v237
                %v239 = vld [vmem:[%s179 + $0xe8] sm:%s172]
                %240 = vst [vmem:[%s180 + $0x74] sm:%s172] %v239
                %v241 = vld [vmem:[%s179 + $0xf0] sm:%s172]
                %242 = vst [vmem:[%s180 + $0x78] sm:%s172] %v241
                %v243 = vld [vmem:[%s179 + $0xf8] sm:%s172]
                %244 = vst [vmem:[%s180 + $0x7c] sm:%s172] %v243
                %v245 = vld [vmem:[%s179 + $0x100] sm:%s172]
                %246 = vst [vmem:[%s180 + $0x80] sm:%s172] %v245
                %v247 = vld [vmem:[%s179 + $0x108] sm:%s172]
                %248 = vst [vmem:[%s180 + $0x84] sm:%s172] %v247
                %v249 = vld [vmem:[%s179 + $0x110] sm:%s172]
                %250 = vst [vmem:[%s180 + $0x88] sm:%s172] %v249
                %v251 = vld [vmem:[%s179 + $0x118] sm:%s172]
                %252 = vst [vmem:[%s180 + $0x8c] sm:%s172] %v251
                %v253 = vld [vmem:[%s179 + $0x120] sm:%s172]
                %254 = vst [vmem:[%s180 + $0x90] sm:%s172] %v253
                %v255 = vld [vmem:[%s179 + $0x128] sm:%s172]
                %256 = vst [vmem:[%s180 + $0x94] sm:%s172] %v255
                %v257 = vld [vmem:[%s179 + $0x130] sm:%s172]
                %258 = vst [vmem:[%s180 + $0x98] sm:%s172] %v257
                %v259 = vld [vmem:[%s179 + $0x138] sm:%s172]
                %260 = vst [vmem:[%s180 + $0x9c] sm:%s172] %v259
                %v261 = vld [vmem:[%s179 + $0x140] sm:%s172]
                %262 = vst [vmem:[%s180 + $0xa0] sm:%s172] %v261
                %v263 = vld [vmem:[%s179 + $0x148] sm:%s172]
                %264 = vst [vmem:[%s180 + $0xa4] sm:%s172] %v263
                %v265 = vld [vmem:[%s179 + $0x150] sm:%s172]
                %266 = vst [vmem:[%s180 + $0xa8] sm:%s172] %v265
                %v267 = vld [vmem:[%s179 + $0x158] sm:%s172]
                %268 = vst [vmem:[%s180 + $0xac] sm:%s172] %v267
                %v269 = vld [vmem:[%s179 + $0x160] sm:%s172]
                %270 = vst [vmem:[%s180 + $0xb0] sm:%s172] %v269
                %v271 = vld [vmem:[%s179 + $0x168] sm:%s172]
                %272 = vst [vmem:[%s180 + $0xb4] sm:%s172] %v271
                %v273 = vld [vmem:[%s179 + $0x170] sm:%s172]
                %274 = vst [vmem:[%s180 + $0xb8] sm:%s172] %v273
                %v275 = vld [vmem:[%s179 + $0x178] sm:%s172]
                %276 = vst [vmem:[%s180 + $0xbc] sm:%s172] %v275
                %v277 = vld [vmem:[%s179 + $0x180] sm:%s172]
                %278 = vst [vmem:[%s180 + $0xc0] sm:%s172] %v277
                %v279 = vld [vmem:[%s179 + $0x188] sm:%s172]
                %280 = vst [vmem:[%s180 + $0xc4] sm:%s172] %v279
                %v281 = vld [vmem:[%s179 + $0x190] sm:%s172]
                %282 = vst [vmem:[%s180 + $0xc8] sm:%s172] %v281
                %v283 = vld [vmem:[%s179 + $0x198] sm:%s172]
                %284 = vst [vmem:[%s180 + $0xcc] sm:%s172] %v283
                %v285 = vld [vmem:[%s179 + $0x1a0] sm:%s172]
                %286 = vst [vmem:[%s180 + $0xd0] sm:%s172] %v285
                %v287 = vld [vmem:[%s179 + $0x1a8] sm:%s172]
                %288 = vst [vmem:[%s180 + $0xd4] sm:%s172] %v287
                %v289 = vld [vmem:[%s179 + $0x1b0] sm:%s172]
                %290 = vst [vmem:[%s180 + $0xd8] sm:%s172] %v289
                %v291 = vld [vmem:[%s179 + $0x1b8] sm:%s172]
                %292 = vst [vmem:[%s180 + $0xdc] sm:%s172] %v291
                %v293 = vld [vmem:[%s179 + $0x1c0] sm:%s172]
                %294 = vst [vmem:[%s180 + $0xe0] sm:%s172] %v293
                %v295 = vld [vmem:[%s179 + $0x1c8] sm:%s172]
                %296 = vst [vmem:[%s180 + $0xe4] sm:%s172] %v295
                %v297 = vld [vmem:[%s179 + $0x1d0] sm:%s172]
                %298 = vst [vmem:[%s180 + $0xe8] sm:%s172] %v297
                %v299 = vld [vmem:[%s179 + $0x1d8] sm:%s172]
                %300 = vst [vmem:[%s180 + $0xec] sm:%s172] %v299
                %v301 = vld [vmem:[%s179 + $0x1e0] sm:%s172]
                %302 = vst [vmem:[%s180 + $0xf0] sm:%s172] %v301
                %v303 = vld [vmem:[%s179 + $0x1e8] sm:%s172]
                %304 = vst [vmem:[%s180 + $0xf4] sm:%s172] %v303
                %v305 = vld [vmem:[%s179 + $0x1f0] sm:%s172]
                %306 = vst [vmem:[%s180 + $0xf8] sm:%s172] %v305
                %v307 = vld [vmem:[%s179 + $0x1f8] sm:%s172]
                %308 = vst [vmem:[%s180 + $0xfc] sm:%s172] %v307
                %v309 = vld [vmem:[%s179 + $0x200] sm:%s172]
                %310 = vst [vmem:[%s180 + $0x100] sm:%s172] %v309
                %v311 = vld [vmem:[%s179 + $0x208] sm:%s172]
                %312 = vst [vmem:[%s180 + $0x104] sm:%s172] %v311
                %v313 = vld [vmem:[%s179 + $0x210] sm:%s172]
                %314 = vst [vmem:[%s180 + $0x108] sm:%s172] %v313
                %v315 = vld [vmem:[%s179 + $0x218] sm:%s172]
                %316 = vst [vmem:[%s180 + $0x10c] sm:%s172] %v315
                %v317 = vld [vmem:[%s179 + $0x220] sm:%s172]
                %318 = vst [vmem:[%s180 + $0x110] sm:%s172] %v317
                %v319 = vld [vmem:[%s179 + $0x228] sm:%s172]
                %320 = vst [vmem:[%s180 + $0x114] sm:%s172] %v319
                %v321 = vld [vmem:[%s179 + $0x230] sm:%s172]
                %322 = vst [vmem:[%s180 + $0x118] sm:%s172] %v321
                %v323 = vld [vmem:[%s179 + $0x238] sm:%s172]
                %324 = vst [vmem:[%s180 + $0x11c] sm:%s172] %v323
                %v325 = vld [vmem:[%s179 + $0x240] sm:%s172]
                %326 = vst [vmem:[%s180 + $0x120] sm:%s172] %v325
                %v327 = vld [vmem:[%s179 + $0x248] sm:%s172]
                %328 = vst [vmem:[%s180 + $0x124] sm:%s172] %v327
                %v329 = vld [vmem:[%s179 + $0x250] sm:%s172]
                %330 = vst [vmem:[%s180 + $0x128] sm:%s172] %v329
                %v331 = vld [vmem:[%s179 + $0x258] sm:%s172]
                %332 = vst [vmem:[%s180 + $0x12c] sm:%s172] %v331
                %v333 = vld [vmem:[%s179 + $0x260] sm:%s172]
                %334 = vst [vmem:[%s180 + $0x130] sm:%s172] %v333
                %v335 = vld [vmem:[%s179 + $0x268] sm:%s172]
                %336 = vst [vmem:[%s180 + $0x134] sm:%s172] %v335
                %v337 = vld [vmem:[%s179 + $0x270] sm:%s172]
                %338 = vst [vmem:[%s180 + $0x138] sm:%s172] %v337
                %v339 = vld [vmem:[%s179 + $0x278] sm:%s172]
                %340 = vst [vmem:[%s180 + $0x13c] sm:%s172] %v339
                %v341 = vld [vmem:[%s179 + $0x280] sm:%s172]
                %342 = vst [vmem:[%s180 + $0x140] sm:%s172] %v341
                %v343 = vld [vmem:[%s179 + $0x288] sm:%s172]
                %344 = vst [vmem:[%s180 + $0x144] sm:%s172] %v343
                %v345 = vld [vmem:[%s179 + $0x290] sm:%s172]
                %346 = vst [vmem:[%s180 + $0x148] sm:%s172] %v345
                %v347 = vld [vmem:[%s179 + $0x298] sm:%s172]
                %348 = vst [vmem:[%s180 + $0x14c] sm:%s172] %v347
                %v349 = vld [vmem:[%s179 + $0x2a0] sm:%s172]
                %350 = vst [vmem:[%s180 + $0x150] sm:%s172] %v349
                %v351 = vld [vmem:[%s179 + $0x2a8] sm:%s172]
                %352 = vst [vmem:[%s180 + $0x154] sm:%s172] %v351
                %v353 = vld [vmem:[%s179 + $0x2b0] sm:%s172]
                %354 = vst [vmem:[%s180 + $0x158] sm:%s172] %v353
                %v355 = vld [vmem:[%s179 + $0x2b8] sm:%s172]
                %356 = vst [vmem:[%s180 + $0x15c] sm:%s172] %v355
                %v357 = vld [vmem:[%s179 + $0x2c0] sm:%s172]
                %358 = vst [vmem:[%s180 + $0x160] sm:%s172] %v357
                %v359 = vld [vmem:[%s179 + $0x2c8] sm:%s172]
                %360 = vst [vmem:[%s180 + $0x164] sm:%s172] %v359
                %v361 = vld [vmem:[%s179 + $0x2d0] sm:%s172]
                %362 = vst [vmem:[%s180 + $0x168] sm:%s172] %v361
                %v363 = vld [vmem:[%s179 + $0x2d8] sm:%s172]
                %364 = vst [vmem:[%s180 + $0x16c] sm:%s172] %v363
                %v365 = vld [vmem:[%s179 + $0x2e0] sm:%s172]
                %366 = vst [vmem:[%s180 + $0x170] sm:%s172] %v365
                %v367 = vld [vmem:[%s179 + $0x2e8] sm:%s172]
                %368 = vst [vmem:[%s180 + $0x174] sm:%s172] %v367
                %v369 = vld [vmem:[%s179 + $0x2f0] sm:%s172]
                %370 = vst [vmem:[%s180 + $0x178] sm:%s172] %v369
                %v371 = vld [vmem:[%s179 + $0x2f8] sm:%s172]
                %372 = vst [vmem:[%s180 + $0x17c] sm:%s172] %v371
                %v373 = vld [vmem:[%s179 + $0x300] sm:%s172]
                %374 = vst [vmem:[%s180 + $0x180] sm:%s172] %v373
                %v375 = vld [vmem:[%s179 + $0x308] sm:%s172]
                %376 = vst [vmem:[%s180 + $0x184] sm:%s172] %v375
                %v377 = vld [vmem:[%s179 + $0x310] sm:%s172]
                %378 = vst [vmem:[%s180 + $0x188] sm:%s172] %v377
                %v379 = vld [vmem:[%s179 + $0x318] sm:%s172]
                %380 = vst [vmem:[%s180 + $0x18c] sm:%s172] %v379
                %v381 = vld [vmem:[%s179 + $0x320] sm:%s172]
                %382 = vst [vmem:[%s180 + $0x190] sm:%s172] %v381
                %v383 = vld [vmem:[%s179 + $0x328] sm:%s172]
                %384 = vst [vmem:[%s180 + $0x194] sm:%s172] %v383
                %v385 = vld [vmem:[%s179 + $0x330] sm:%s172]
                %386 = vst [vmem:[%s180 + $0x198] sm:%s172] %v385
                %v387 = vld [vmem:[%s179 + $0x338] sm:%s172]
                %388 = vst [vmem:[%s180 + $0x19c] sm:%s172] %v387
                %v389 = vld [vmem:[%s179 + $0x340] sm:%s172]
                %390 = vst [vmem:[%s180 + $0x1a0] sm:%s172] %v389
                %v391 = vld [vmem:[%s179 + $0x348] sm:%s172]
                %392 = vst [vmem:[%s180 + $0x1a4] sm:%s172] %v391
                %v393 = vld [vmem:[%s179 + $0x350] sm:%s172]
                %394 = vst [vmem:[%s180 + $0x1a8] sm:%s172] %v393
                %v395 = vld [vmem:[%s179 + $0x358] sm:%s172]
                %396 = vst [vmem:[%s180 + $0x1ac] sm:%s172] %v395
                %v397 = vld [vmem:[%s179 + $0x360] sm:%s172]
                %398 = vst [vmem:[%s180 + $0x1b0] sm:%s172] %v397
                %v399 = vld [vmem:[%s179 + $0x368] sm:%s172]
                %400 = vst [vmem:[%s180 + $0x1b4] sm:%s172] %v399
                %v401 = vld [vmem:[%s179 + $0x370] sm:%s172]
                %402 = vst [vmem:[%s180 + $0x1b8] sm:%s172] %v401
                %v403 = vld [vmem:[%s179 + $0x378] sm:%s172]
                %404 = vst [vmem:[%s180 + $0x1bc] sm:%s172] %v403
                %v405 = vld [vmem:[%s179 + $0x380] sm:%s172]
                %406 = vst [vmem:[%s180 + $0x1c0] sm:%s172] %v405
                %v407 = vld [vmem:[%s179 + $0x388] sm:%s172]
                %408 = vst [vmem:[%s180 + $0x1c4] sm:%s172] %v407
                %v409 = vld [vmem:[%s179 + $0x390] sm:%s172]
                %410 = vst [vmem:[%s180 + $0x1c8] sm:%s172] %v409
                %v411 = vld [vmem:[%s179 + $0x398] sm:%s172]
                %412 = vst [vmem:[%s180 + $0x1cc] sm:%s172] %v411
                %v413 = vld [vmem:[%s179 + $0x3a0] sm:%s172]
                %414 = vst [vmem:[%s180 + $0x1d0] sm:%s172] %v413
                %v415 = vld [vmem:[%s179 + $0x3a8] sm:%s172]
                %416 = vst [vmem:[%s180 + $0x1d4] sm:%s172] %v415
                %v417 = vld [vmem:[%s179 + $0x3b0] sm:%s172]
                %418 = vst [vmem:[%s180 + $0x1d8] sm:%s172] %v417
                %v419 = vld [vmem:[%s179 + $0x3b8] sm:%s172]
                %420 = vst [vmem:[%s180 + $0x1dc] sm:%s172] %v419
                %v421 = vld [vmem:[%s179 + $0x3c0] sm:%s172]
                %422 = vst [vmem:[%s180 + $0x1e0] sm:%s172] %v421
                %v423 = vld [vmem:[%s179 + $0x3c8] sm:%s172]
                %424 = vst [vmem:[%s180 + $0x1e4] sm:%s172] %v423
                %v425 = vld [vmem:[%s179 + $0x3d0] sm:%s172]
                %426 = vst [vmem:[%s180 + $0x1e8] sm:%s172] %v425
                %v427 = vld [vmem:[%s179 + $0x3d8] sm:%s172]
                %428 = vst [vmem:[%s180 + $0x1ec] sm:%s172] %v427
                %v429 = vld [vmem:[%s179 + $0x3e0] sm:%s172]
                %430 = vst [vmem:[%s180 + $0x1f0] sm:%s172] %v429
                %v431 = vld [vmem:[%s179 + $0x3e8] sm:%s172]
                %432 = vst [vmem:[%s180 + $0x1f4] sm:%s172] %v431
                %v433 = vld [vmem:[%s179 + $0x3f0] sm:%s172]
                %434 = vst [vmem:[%s180 + $0x1f8] sm:%s172] %v433
                %v435 = vld [vmem:[%s179 + $0x3f8] sm:%s172]
                %436 = vst [vmem:[%s180 + $0x1fc] sm:%s172] %v435
                %v437 = vld [vmem:[%s179 + $0x400] sm:%s172]
                %438 = vst [vmem:[%s180 + $0x200] sm:%s172] %v437
                %v439 = vld [vmem:[%s179 + $0x408] sm:%s172]
                %440 = vst [vmem:[%s180 + $0x204] sm:%s172] %v439
                %v441 = vld [vmem:[%s179 + $0x410] sm:%s172]
                %442 = vst [vmem:[%s180 + $0x208] sm:%s172] %v441
                %v443 = vld [vmem:[%s179 + $0x418] sm:%s172]
                %444 = vst [vmem:[%s180 + $0x20c] sm:%s172] %v443
                %v445 = vld [vmem:[%s179 + $0x420] sm:%s172]
                %446 = vst [vmem:[%s180 + $0x210] sm:%s172] %v445
                %v447 = vld [vmem:[%s179 + $0x428] sm:%s172]
                %448 = vst [vmem:[%s180 + $0x214] sm:%s172] %v447
                %v449 = vld [vmem:[%s179 + $0x430] sm:%s172]
                %450 = vst [vmem:[%s180 + $0x218] sm:%s172] %v449
                %v451 = vld [vmem:[%s179 + $0x438] sm:%s172]
                %452 = vst [vmem:[%s180 + $0x21c] sm:%s172] %v451
                %v453 = vld [vmem:[%s179 + $0x440] sm:%s172]
                %454 = vst [vmem:[%s180 + $0x220] sm:%s172] %v453
                %v455 = vld [vmem:[%s179 + $0x448] sm:%s172]
                %456 = vst [vmem:[%s180 + $0x224] sm:%s172] %v455
                %v457 = vld [vmem:[%s179 + $0x450] sm:%s172]
                %458 = vst [vmem:[%s180 + $0x228] sm:%s172] %v457
                %v459 = vld [vmem:[%s179 + $0x458] sm:%s172]
                %460 = vst [vmem:[%s180 + $0x22c] sm:%s172] %v459
                %v461 = vld [vmem:[%s179 + $0x460] sm:%s172]
                %462 = vst [vmem:[%s180 + $0x230] sm:%s172] %v461
                %v463 = vld [vmem:[%s179 + $0x468] sm:%s172]
                %464 = vst [vmem:[%s180 + $0x234] sm:%s172] %v463
                %v465 = vld [vmem:[%s179 + $0x470] sm:%s172]
                %466 = vst [vmem:[%s180 + $0x238] sm:%s172] %v465
                %v467 = vld [vmem:[%s179 + $0x478] sm:%s172]
                %468 = vst [vmem:[%s180 + $0x23c] sm:%s172] %v467
                %v469 = vld [vmem:[%s179 + $0x480] sm:%s172]
                %470 = vst [vmem:[%s180 + $0x240] sm:%s172] %v469
                %v471 = vld [vmem:[%s179 + $0x488] sm:%s172]
                %472 = vst [vmem:[%s180 + $0x244] sm:%s172] %v471
                %v473 = vld [vmem:[%s179 + $0x490] sm:%s172]
                %474 = vst [vmem:[%s180 + $0x248] sm:%s172] %v473
                %v475 = vld [vmem:[%s179 + $0x498] sm:%s172]
                %476 = vst [vmem:[%s180 + $0x24c] sm:%s172] %v475
                %v477 = vld [vmem:[%s179 + $0x4a0] sm:%s172]
                %478 = vst [vmem:[%s180 + $0x250] sm:%s172] %v477
                %v479 = vld [vmem:[%s179 + $0x4a8] sm:%s172]
                %480 = vst [vmem:[%s180 + $0x254] sm:%s172] %v479
                %v481 = vld [vmem:[%s179 + $0x4b0] sm:%s172]
                %482 = vst [vmem:[%s180 + $0x258] sm:%s172] %v481
                %v483 = vld [vmem:[%s179 + $0x4b8] sm:%s172]
                %484 = vst [vmem:[%s180 + $0x25c] sm:%s172] %v483
                %v485 = vld [vmem:[%s179 + $0x4c0] sm:%s172]
                %486 = vst [vmem:[%s180 + $0x260] sm:%s172] %v485
                %v487 = vld [vmem:[%s179 + $0x4c8] sm:%s172]
                %488 = vst [vmem:[%s180 + $0x264] sm:%s172] %v487
                %v489 = vld [vmem:[%s179 + $0x4d0] sm:%s172]
                %490 = vst [vmem:[%s180 + $0x268] sm:%s172] %v489
                %v491 = vld [vmem:[%s179 + $0x4d8] sm:%s172]
                %492 = vst [vmem:[%s180 + $0x26c] sm:%s172] %v491
                %v493 = vld [vmem:[%s179 + $0x4e0] sm:%s172]
                %494 = vst [vmem:[%s180 + $0x270] sm:%s172] %v493
                %v495 = vld [vmem:[%s179 + $0x4e8] sm:%s172]
                %496 = vst [vmem:[%s180 + $0x274] sm:%s172] %v495
                %v497 = vld [vmem:[%s179 + $0x4f0] sm:%s172]
                %498 = vst [vmem:[%s180 + $0x278] sm:%s172] %v497
                %v499 = vld [vmem:[%s179 + $0x4f8] sm:%s172]
                %500 = vst [vmem:[%s180 + $0x27c] sm:%s172] %v499
                %v501 = vld [vmem:[%s179 + $0x500] sm:%s172]
                %502 = vst [vmem:[%s180 + $0x280] sm:%s172] %v501
                %v503 = vld [vmem:[%s179 + $0x508] sm:%s172]
                %504 = vst [vmem:[%s180 + $0x284] sm:%s172] %v503
                %v505 = vld [vmem:[%s179 + $0x510] sm:%s172]
                %506 = vst [vmem:[%s180 + $0x288] sm:%s172] %v505
                %v507 = vld [vmem:[%s179 + $0x518] sm:%s172]
                %508 = vst [vmem:[%s180 + $0x28c] sm:%s172] %v507
                %v509 = vld [vmem:[%s179 + $0x520] sm:%s172]
                %510 = vst [vmem:[%s180 + $0x290] sm:%s172] %v509
                %v511 = vld [vmem:[%s179 + $0x528] sm:%s172]
                %512 = vst [vmem:[%s180 + $0x294] sm:%s172] %v511
                %v513 = vld [vmem:[%s179 + $0x530] sm:%s172]
                %514 = vst [vmem:[%s180 + $0x298] sm:%s172] %v513
                %v515 = vld [vmem:[%s179 + $0x538] sm:%s172]
                %516 = vst [vmem:[%s180 + $0x29c] sm:%s172] %v515
                %v517 = vld [vmem:[%s179 + $0x540] sm:%s172]
                %518 = vst [vmem:[%s180 + $0x2a0] sm:%s172] %v517
                %v519 = vld [vmem:[%s179 + $0x548] sm:%s172]
                %520 = vst [vmem:[%s180 + $0x2a4] sm:%s172] %v519
                %v521 = vld [vmem:[%s179 + $0x550] sm:%s172]
                %522 = vst [vmem:[%s180 + $0x2a8] sm:%s172] %v521
                %v523 = vld [vmem:[%s179 + $0x558] sm:%s172]
                %524 = vst [vmem:[%s180 + $0x2ac] sm:%s172] %v523
                %v525 = vld [vmem:[%s179 + $0x560] sm:%s172]
                %526 = vst [vmem:[%s180 + $0x2b0] sm:%s172] %v525
                %v527 = vld [vmem:[%s179 + $0x568] sm:%s172]
                %528 = vst [vmem:[%s180 + $0x2b4] sm:%s172] %v527
                %v529 = vld [vmem:[%s179 + $0x570] sm:%s172]
                %530 = vst [vmem:[%s180 + $0x2b8] sm:%s172] %v529
                %v531 = vld [vmem:[%s179 + $0x578] sm:%s172]
                %532 = vst [vmem:[%s180 + $0x2bc] sm:%s172] %v531
                %v533 = vld [vmem:[%s179 + $0x580] sm:%s172]
                %534 = vst [vmem:[%s180 + $0x2c0] sm:%s172] %v533
                %v535 = vld [vmem:[%s179 + $0x588] sm:%s172]
                %536 = vst [vmem:[%s180 + $0x2c4] sm:%s172] %v535
                %v537 = vld [vmem:[%s179 + $0x590] sm:%s172]
                %538 = vst [vmem:[%s180 + $0x2c8] sm:%s172] %v537
                %v539 = vld [vmem:[%s179 + $0x598] sm:%s172]
                %540 = vst [vmem:[%s180 + $0x2cc] sm:%s172] %v539
                %v541 = vld [vmem:[%s179 + $0x5a0] sm:%s172]
                %542 = vst [vmem:[%s180 + $0x2d0] sm:%s172] %v541
                %v543 = vld [vmem:[%s179 + $0x5a8] sm:%s172]
                %544 = vst [vmem:[%s180 + $0x2d4] sm:%s172] %v543
                %v545 = vld [vmem:[%s179 + $0x5b0] sm:%s172]
                %546 = vst [vmem:[%s180 + $0x2d8] sm:%s172] %v545
                %v547 = vld [vmem:[%s179 + $0x5b8] sm:%s172]
                %548 = vst [vmem:[%s180 + $0x2dc] sm:%s172] %v547
                %v549 = vld [vmem:[%s179 + $0x5c0] sm:%s172]
                %550 = vst [vmem:[%s180 + $0x2e0] sm:%s172] %v549
                %v551 = vld [vmem:[%s179 + $0x5c8] sm:%s172]
                %552 = vst [vmem:[%s180 + $0x2e4] sm:%s172] %v551
                %v553 = vld [vmem:[%s179 + $0x5d0] sm:%s172]
                %554 = vst [vmem:[%s180 + $0x2e8] sm:%s172] %v553
                %v555 = vld [vmem:[%s179 + $0x5d8] sm:%s172]
                %556 = vst [vmem:[%s180 + $0x2ec] sm:%s172] %v555
                %v557 = vld [vmem:[%s179 + $0x5e0] sm:%s172]
                %558 = vst [vmem:[%s180 + $0x2f0] sm:%s172] %v557
                %v559 = vld [vmem:[%s179 + $0x5e8] sm:%s172]
                %560 = vst [vmem:[%s180 + $0x2f4] sm:%s172] %v559
                %v561 = vld [vmem:[%s179 + $0x5f0] sm:%s172]
                %562 = vst [vmem:[%s180 + $0x2f8] sm:%s172] %v561
                %v563 = vld [vmem:[%s179 + $0x5f8] sm:%s172]
                %564 = vst [vmem:[%s180 + $0x2fc] sm:%s172] %v563
                %v565 = vld [vmem:[%s179 + $0x600] sm:%s172]
                %566 = vst [vmem:[%s180 + $0x300] sm:%s172] %v565
                %v567 = vld [vmem:[%s179 + $0x608] sm:%s172]
                %568 = vst [vmem:[%s180 + $0x304] sm:%s172] %v567
                %v569 = vld [vmem:[%s179 + $0x610] sm:%s172]
                %570 = vst [vmem:[%s180 + $0x308] sm:%s172] %v569
                %v571 = vld [vmem:[%s179 + $0x618] sm:%s172]
                %572 = vst [vmem:[%s180 + $0x30c] sm:%s172] %v571
                %v573 = vld [vmem:[%s179 + $0x620] sm:%s172]
                %574 = vst [vmem:[%s180 + $0x310] sm:%s172] %v573
                %v575 = vld [vmem:[%s179 + $0x628] sm:%s172]
                %576 = vst [vmem:[%s180 + $0x314] sm:%s172] %v575
                %v577 = vld [vmem:[%s179 + $0x630] sm:%s172]
                %578 = vst [vmem:[%s180 + $0x318] sm:%s172] %v577
                %v579 = vld [vmem:[%s179 + $0x638] sm:%s172]
                %580 = vst [vmem:[%s180 + $0x31c] sm:%s172] %v579
                %v581 = vld [vmem:[%s179 + $0x640] sm:%s172]
                %582 = vst [vmem:[%s180 + $0x320] sm:%s172] %v581
                %v583 = vld [vmem:[%s179 + $0x648] sm:%s172]
                %584 = vst [vmem:[%s180 + $0x324] sm:%s172] %v583
                %v585 = vld [vmem:[%s179 + $0x650] sm:%s172]
                %586 = vst [vmem:[%s180 + $0x328] sm:%s172] %v585
                %v587 = vld [vmem:[%s179 + $0x658] sm:%s172]
                %588 = vst [vmem:[%s180 + $0x32c] sm:%s172] %v587
                %v589 = vld [vmem:[%s179 + $0x660] sm:%s172]
                %590 = vst [vmem:[%s180 + $0x330] sm:%s172] %v589
                %v591 = vld [vmem:[%s179 + $0x668] sm:%s172]
                %592 = vst [vmem:[%s180 + $0x334] sm:%s172] %v591
                %v593 = vld [vmem:[%s179 + $0x670] sm:%s172]
                %594 = vst [vmem:[%s180 + $0x338] sm:%s172] %v593
                %v595 = vld [vmem:[%s179 + $0x678] sm:%s172]
                %596 = vst [vmem:[%s180 + $0x33c] sm:%s172] %v595
                %v597 = vld [vmem:[%s179 + $0x680] sm:%s172]
                %598 = vst [vmem:[%s180 + $0x340] sm:%s172] %v597
                %v599 = vld [vmem:[%s179 + $0x688] sm:%s172]
                %600 = vst [vmem:[%s180 + $0x344] sm:%s172] %v599
                %v601 = vld [vmem:[%s179 + $0x690] sm:%s172]
                %602 = vst [vmem:[%s180 + $0x348] sm:%s172] %v601
                %v603 = vld [vmem:[%s179 + $0x698] sm:%s172]
                %604 = vst [vmem:[%s180 + $0x34c] sm:%s172] %v603
                %v605 = vld [vmem:[%s179 + $0x6a0] sm:%s172]
                %606 = vst [vmem:[%s180 + $0x350] sm:%s172] %v605
                %v607 = vld [vmem:[%s179 + $0x6a8] sm:%s172]
                %608 = vst [vmem:[%s180 + $0x354] sm:%s172] %v607
                %v609 = vld [vmem:[%s179 + $0x6b0] sm:%s172]
                %610 = vst [vmem:[%s180 + $0x358] sm:%s172] %v609
                %v611 = vld [vmem:[%s179 + $0x6b8] sm:%s172]
                %612 = vst [vmem:[%s180 + $0x35c] sm:%s172] %v611
                %v613 = vld [vmem:[%s179 + $0x6c0] sm:%s172]
                %614 = vst [vmem:[%s180 + $0x360] sm:%s172] %v613
                %v615 = vld [vmem:[%s179 + $0x6c8] sm:%s172]
                %616 = vst [vmem:[%s180 + $0x364] sm:%s172] %v615
                %v617 = vld [vmem:[%s179 + $0x6d0] sm:%s172]
                %618 = vst [vmem:[%s180 + $0x368] sm:%s172] %v617
                %v619 = vld [vmem:[%s179 + $0x6d8] sm:%s172]
                %620 = vst [vmem:[%s180 + $0x36c] sm:%s172] %v619
                %v621 = vld [vmem:[%s179 + $0x6e0] sm:%s172]
                %622 = vst [vmem:[%s180 + $0x370] sm:%s172] %v621
                %v623 = vld [vmem:[%s179 + $0x6e8] sm:%s172]
                %624 = vst [vmem:[%s180 + $0x374] sm:%s172] %v623
                %v625 = vld [vmem:[%s179 + $0x6f0] sm:%s172]
                %626 = vst [vmem:[%s180 + $0x378] sm:%s172] %v625
                %v627 = vld [vmem:[%s179 + $0x6f8] sm:%s172]
                %628 = vst [vmem:[%s180 + $0x37c] sm:%s172] %v627
                %v629 = vld [vmem:[%s179 + $0x700] sm:%s172]
                %630 = vst [vmem:[%s180 + $0x380] sm:%s172] %v629
                %v631 = vld [vmem:[%s179 + $0x708] sm:%s172]
                %632 = vst [vmem:[%s180 + $0x384] sm:%s172] %v631
                %v633 = vld [vmem:[%s179 + $0x710] sm:%s172]
                %634 = vst [vmem:[%s180 + $0x388] sm:%s172] %v633
                %v635 = vld [vmem:[%s179 + $0x718] sm:%s172]
                %636 = vst [vmem:[%s180 + $0x38c] sm:%s172] %v635
                %v637 = vld [vmem:[%s179 + $0x720] sm:%s172]
                %638 = vst [vmem:[%s180 + $0x390] sm:%s172] %v637
                %v639 = vld [vmem:[%s179 + $0x728] sm:%s172]
                %640 = vst [vmem:[%s180 + $0x394] sm:%s172] %v639
                %v641 = vld [vmem:[%s179 + $0x730] sm:%s172]
                %642 = vst [vmem:[%s180 + $0x398] sm:%s172] %v641
                %v643 = vld [vmem:[%s179 + $0x738] sm:%s172]
                %644 = vst [vmem:[%s180 + $0x39c] sm:%s172] %v643
                %v645 = vld [vmem:[%s179 + $0x740] sm:%s172]
                %646 = vst [vmem:[%s180 + $0x3a0] sm:%s172] %v645
                %v647 = vld [vmem:[%s179 + $0x748] sm:%s172]
                %648 = vst [vmem:[%s180 + $0x3a4] sm:%s172] %v647
                %v649 = vld [vmem:[%s179 + $0x750] sm:%s172]
                %650 = vst [vmem:[%s180 + $0x3a8] sm:%s172] %v649
                %v651 = vld [vmem:[%s179 + $0x758] sm:%s172]
                %652 = vst [vmem:[%s180 + $0x3ac] sm:%s172] %v651
                %v653 = vld [vmem:[%s179 + $0x760] sm:%s172]
                %654 = vst [vmem:[%s180 + $0x3b0] sm:%s172] %v653
                %v655 = vld [vmem:[%s179 + $0x768] sm:%s172]
                %656 = vst [vmem:[%s180 + $0x3b4] sm:%s172] %v655
                %v657 = vld [vmem:[%s179 + $0x770] sm:%s172]
                %658 = vst [vmem:[%s180 + $0x3b8] sm:%s172] %v657
                %v659 = vld [vmem:[%s179 + $0x778] sm:%s172]
                %660 = vst [vmem:[%s180 + $0x3bc] sm:%s172] %v659
                %v661 = vld [vmem:[%s179 + $0x780] sm:%s172]
                %662 = vst [vmem:[%s180 + $0x3c0] sm:%s172] %v661
                %v663 = vld [vmem:[%s179 + $0x788] sm:%s172]
                %664 = vst [vmem:[%s180 + $0x3c4] sm:%s172] %v663
                %v665 = vld [vmem:[%s179 + $0x790] sm:%s172]
                %666 = vst [vmem:[%s180 + $0x3c8] sm:%s172] %v665
                %v667 = vld [vmem:[%s179 + $0x798] sm:%s172]
                %668 = vst [vmem:[%s180 + $0x3cc] sm:%s172] %v667
                %v669 = vld [vmem:[%s179 + $0x7a0] sm:%s172]
                %670 = vst [vmem:[%s180 + $0x3d0] sm:%s172] %v669
                %v671 = vld [vmem:[%s179 + $0x7a8] sm:%s172]
                %672 = vst [vmem:[%s180 + $0x3d4] sm:%s172] %v671
                %v673 = vld [vmem:[%s179 + $0x7b0] sm:%s172]
                %674 = vst [vmem:[%s180 + $0x3d8] sm:%s172] %v673
                %v675 = vld [vmem:[%s179 + $0x7b8] sm:%s172]
                %676 = vst [vmem:[%s180 + $0x3dc] sm:%s172] %v675
                %v677 = vld [vmem:[%s179 + $0x7c0] sm:%s172]
                %678 = vst [vmem:[%s180 + $0x3e0] sm:%s172] %v677
                %v679 = vld [vmem:[%s179 + $0x7c8] sm:%s172]
                %680 = vst [vmem:[%s180 + $0x3e4] sm:%s172] %v679
                %v681 = vld [vmem:[%s179 + $0x7d0] sm:%s172]
                %682 = vst [vmem:[%s180 + $0x3e8] sm:%s172] %v681
                %v683 = vld [vmem:[%s179 + $0x7d8] sm:%s172]
                %684 = vst [vmem:[%s180 + $0x3ec] sm:%s172] %v683
                %v685 = vld [vmem:[%s179 + $0x7e0] sm:%s172]
                %686 = vst [vmem:[%s180 + $0x3f0] sm:%s172] %v685
                %v687 = vld [vmem:[%s179 + $0x7e8] sm:%s172]
                %688 = vst [vmem:[%s180 + $0x3f4] sm:%s172] %v687
                %v689 = vld [vmem:[%s179 + $0x7f0] sm:%s172]
                %690 = vst [vmem:[%s180 + $0x3f8] sm:%s172] %v689
                %v691 = vld [vmem:[%s179 + $0x7f8] sm:%s172]
                %692 = vst [vmem:[%s180 + $0x3fc] sm:%s172] %v691
                %v693 = vld [vmem:[%s179 + $0x800] sm:%s172]
                %694 = vst [vmem:[%s180 + $0x400] sm:%s172] %v693
                %v695 = vld [vmem:[%s179 + $0x808] sm:%s172]
                %696 = vst [vmem:[%s180 + $0x404] sm:%s172] %v695
                %v697 = vld [vmem:[%s179 + $0x810] sm:%s172]
                %698 = vst [vmem:[%s180 + $0x408] sm:%s172] %v697
                %v699 = vld [vmem:[%s179 + $0x818] sm:%s172]
                %700 = vst [vmem:[%s180 + $0x40c] sm:%s172] %v699
                %v701 = vld [vmem:[%s179 + $0x820] sm:%s172]
                %702 = vst [vmem:[%s180 + $0x410] sm:%s172] %v701
                %v703 = vld [vmem:[%s179 + $0x828] sm:%s172]
                %704 = vst [vmem:[%s180 + $0x414] sm:%s172] %v703
                %v705 = vld [vmem:[%s179 + $0x830] sm:%s172]
                %706 = vst [vmem:[%s180 + $0x418] sm:%s172] %v705
                %v707 = vld [vmem:[%s179 + $0x838] sm:%s172]
                %708 = vst [vmem:[%s180 + $0x41c] sm:%s172] %v707
                %v709 = vld [vmem:[%s179 + $0x840] sm:%s172]
                %710 = vst [vmem:[%s180 + $0x420] sm:%s172] %v709
                %v711 = vld [vmem:[%s179 + $0x848] sm:%s172]
                %712 = vst [vmem:[%s180 + $0x424] sm:%s172] %v711
                %v713 = vld [vmem:[%s179 + $0x850] sm:%s172]
                %714 = vst [vmem:[%s180 + $0x428] sm:%s172] %v713
                %v715 = vld [vmem:[%s179 + $0x858] sm:%s172]
                %716 = vst [vmem:[%s180 + $0x42c] sm:%s172] %v715
                %v717 = vld [vmem:[%s179 + $0x860] sm:%s172]
                %718 = vst [vmem:[%s180 + $0x430] sm:%s172] %v717
                %v719 = vld [vmem:[%s179 + $0x868] sm:%s172]
                %720 = vst [vmem:[%s180 + $0x434] sm:%s172] %v719
                %v721 = vld [vmem:[%s179 + $0x870] sm:%s172]
                %722 = vst [vmem:[%s180 + $0x438] sm:%s172] %v721
                %v723 = vld [vmem:[%s179 + $0x878] sm:%s172]
                %724 = vst [vmem:[%s180 + $0x43c] sm:%s172] %v723
                %v725 = vld [vmem:[%s179 + $0x880] sm:%s172]
                %726 = vst [vmem:[%s180 + $0x440] sm:%s172] %v725
                %v727 = vld [vmem:[%s179 + $0x888] sm:%s172]
                %728 = vst [vmem:[%s180 + $0x444] sm:%s172] %v727
                %v729 = vld [vmem:[%s179 + $0x890] sm:%s172]
                %730 = vst [vmem:[%s180 + $0x448] sm:%s172] %v729
                %v731 = vld [vmem:[%s179 + $0x898] sm:%s172]
                %732 = vst [vmem:[%s180 + $0x44c] sm:%s172] %v731
                %v733 = vld [vmem:[%s179 + $0x8a0] sm:%s172]
                %734 = vst [vmem:[%s180 + $0x450] sm:%s172] %v733
                %v735 = vld [vmem:[%s179 + $0x8a8] sm:%s172]
                %736 = vst [vmem:[%s180 + $0x454] sm:%s172] %v735
                %v737 = vld [vmem:[%s179 + $0x8b0] sm:%s172]
                %738 = vst [vmem:[%s180 + $0x458] sm:%s172] %v737
                %v739 = vld [vmem:[%s179 + $0x8b8] sm:%s172]
                %740 = vst [vmem:[%s180 + $0x45c] sm:%s172] %v739
                %v741 = vld [vmem:[%s179 + $0x8c0] sm:%s172]
                %742 = vst [vmem:[%s180 + $0x460] sm:%s172] %v741
                %v743 = vld [vmem:[%s179 + $0x8c8] sm:%s172]
                %744 = vst [vmem:[%s180 + $0x464] sm:%s172] %v743
                %v745 = vld [vmem:[%s179 + $0x8d0] sm:%s172]
                %746 = vst [vmem:[%s180 + $0x468] sm:%s172] %v745
                %v747 = vld [vmem:[%s179 + $0x8d8] sm:%s172]
                %748 = vst [vmem:[%s180 + $0x46c] sm:%s172] %v747
                %v749 = vld [vmem:[%s179 + $0x8e0] sm:%s172]
                %750 = vst [vmem:[%s180 + $0x470] sm:%s172] %v749
                %v751 = vld [vmem:[%s179 + $0x8e8] sm:%s172]
                %752 = vst [vmem:[%s180 + $0x474] sm:%s172] %v751
                %v753 = vld [vmem:[%s179 + $0x8f0] sm:%s172]
                %754 = vst [vmem:[%s180 + $0x478] sm:%s172] %v753
                %v755 = vld [vmem:[%s179 + $0x8f8] sm:%s172]
                %756 = vst [vmem:[%s180 + $0x47c] sm:%s172] %v755
                %v757 = vld [vmem:[%s179 + $0x900] sm:%s172]
                %758 = vst [vmem:[%s180 + $0x480] sm:%s172] %v757
                %v759 = vld [vmem:[%s179 + $0x908] sm:%s172]
                %760 = vst [vmem:[%s180 + $0x484] sm:%s172] %v759
                %v761 = vld [vmem:[%s179 + $0x910] sm:%s172]
                %762 = vst [vmem:[%s180 + $0x488] sm:%s172] %v761
                %v763 = vld [vmem:[%s179 + $0x918] sm:%s172]
                %764 = vst [vmem:[%s180 + $0x48c] sm:%s172] %v763
                %v765 = vld [vmem:[%s179 + $0x920] sm:%s172]
                %766 = vst [vmem:[%s180 + $0x490] sm:%s172] %v765
                %v767 = vld [vmem:[%s179 + $0x928] sm:%s172]
                %768 = vst [vmem:[%s180 + $0x494] sm:%s172] %v767
                %v769 = vld [vmem:[%s179 + $0x930] sm:%s172]
                %770 = vst [vmem:[%s180 + $0x498] sm:%s172] %v769
                %v771 = vld [vmem:[%s179 + $0x938] sm:%s172]
                %772 = vst [vmem:[%s180 + $0x49c] sm:%s172] %v771
                %v773 = vld [vmem:[%s179 + $0x940] sm:%s172]
                %774 = vst [vmem:[%s180 + $0x4a0] sm:%s172] %v773
                %v775 = vld [vmem:[%s179 + $0x948] sm:%s172]
                %776 = vst [vmem:[%s180 + $0x4a4] sm:%s172] %v775
                %v777 = vld [vmem:[%s179 + $0x950] sm:%s172]
                %778 = vst [vmem:[%s180 + $0x4a8] sm:%s172] %v777
                %v779 = vld [vmem:[%s179 + $0x958] sm:%s172]
                %780 = vst [vmem:[%s180 + $0x4ac] sm:%s172] %v779
                %v781 = vld [vmem:[%s179 + $0x960] sm:%s172]
                %782 = vst [vmem:[%s180 + $0x4b0] sm:%s172] %v781
                %v783 = vld [vmem:[%s179 + $0x968] sm:%s172]
                %784 = vst [vmem:[%s180 + $0x4b4] sm:%s172] %v783
                %v785 = vld [vmem:[%s179 + $0x970] sm:%s172]
                %786 = vst [vmem:[%s180 + $0x4b8] sm:%s172] %v785
                %v787 = vld [vmem:[%s179 + $0x978] sm:%s172]
                %788 = vst [vmem:[%s180 + $0x4bc] sm:%s172] %v787
                %v789 = vld [vmem:[%s179 + $0x980] sm:%s172]
                %790 = vst [vmem:[%s180 + $0x4c0] sm:%s172] %v789
                %v791 = vld [vmem:[%s179 + $0x988] sm:%s172]
                %792 = vst [vmem:[%s180 + $0x4c4] sm:%s172] %v791
                %v793 = vld [vmem:[%s179 + $0x990] sm:%s172]
                %794 = vst [vmem:[%s180 + $0x4c8] sm:%s172] %v793
                %v795 = vld [vmem:[%s179 + $0x998] sm:%s172]
                %796 = vst [vmem:[%s180 + $0x4cc] sm:%s172] %v795
                %v797 = vld [vmem:[%s179 + $0x9a0] sm:%s172]
                %798 = vst [vmem:[%s180 + $0x4d0] sm:%s172] %v797
                %v799 = vld [vmem:[%s179 + $0x9a8] sm:%s172]
                %800 = vst [vmem:[%s180 + $0x4d4] sm:%s172] %v799
                %v801 = vld [vmem:[%s179 + $0x9b0] sm:%s172]
                %802 = vst [vmem:[%s180 + $0x4d8] sm:%s172] %v801
                %v803 = vld [vmem:[%s179 + $0x9b8] sm:%s172]
                %804 = vst [vmem:[%s180 + $0x4dc] sm:%s172] %v803
                %v805 = vld [vmem:[%s179 + $0x9c0] sm:%s172]
                %806 = vst [vmem:[%s180 + $0x4e0] sm:%s172] %v805
                %v807 = vld [vmem:[%s179 + $0x9c8] sm:%s172]
                %808 = vst [vmem:[%s180 + $0x4e4] sm:%s172] %v807
                %v809 = vld [vmem:[%s179 + $0x9d0] sm:%s172]
                %810 = vst [vmem:[%s180 + $0x4e8] sm:%s172] %v809
                %v811 = vld [vmem:[%s179 + $0x9d8] sm:%s172]
                %812 = vst [vmem:[%s180 + $0x4ec] sm:%s172] %v811
                %v813 = vld [vmem:[%s179 + $0x9e0] sm:%s172]
                %814 = vst [vmem:[%s180 + $0x4f0] sm:%s172] %v813
                %v815 = vld [vmem:[%s179 + $0x9e8] sm:%s172]
                %816 = vst [vmem:[%s180 + $0x4f4] sm:%s172] %v815
                %v817 = vld [vmem:[%s179 + $0x9f0] sm:%s172]
                %818 = vst [vmem:[%s180 + $0x4f8] sm:%s172] %v817
                %v819 = vld [vmem:[%s179 + $0x9f8] sm:%s172]
                %820 = vst [vmem:[%s180 + $0x4fc] sm:%s172] %v819
                %v821 = vld [vmem:[%s179 + $0xa00] sm:%s172]
                %822 = vst [vmem:[%s180 + $0x500] sm:%s172] %v821
                %v823 = vld [vmem:[%s179 + $0xa08] sm:%s172]
                %824 = vst [vmem:[%s180 + $0x504] sm:%s172] %v823
                %v825 = vld [vmem:[%s179 + $0xa10] sm:%s172]
                %826 = vst [vmem:[%s180 + $0x508] sm:%s172] %v825
                %v827 = vld [vmem:[%s179 + $0xa18] sm:%s172]
                %828 = vst [vmem:[%s180 + $0x50c] sm:%s172] %v827
                %v829 = vld [vmem:[%s179 + $0xa20] sm:%s172]
                %830 = vst [vmem:[%s180 + $0x510] sm:%s172] %v829
                %v831 = vld [vmem:[%s179 + $0xa28] sm:%s172]
                %832 = vst [vmem:[%s180 + $0x514] sm:%s172] %v831
                %v833 = vld [vmem:[%s179 + $0xa30] sm:%s172]
                %834 = vst [vmem:[%s180 + $0x518] sm:%s172] %v833
                %v835 = vld [vmem:[%s179 + $0xa38] sm:%s172]
                %836 = vst [vmem:[%s180 + $0x51c] sm:%s172] %v835
                %v837 = vld [vmem:[%s179 + $0xa40] sm:%s172]
                %838 = vst [vmem:[%s180 + $0x520] sm:%s172] %v837
                %v839 = vld [vmem:[%s179 + $0xa48] sm:%s172]
                %840 = vst [vmem:[%s180 + $0x524] sm:%s172] %v839
                %v841 = vld [vmem:[%s179 + $0xa50] sm:%s172]
                %842 = vst [vmem:[%s180 + $0x528] sm:%s172] %v841
                %v843 = vld [vmem:[%s179 + $0xa58] sm:%s172]
                %844 = vst [vmem:[%s180 + $0x52c] sm:%s172] %v843
                %v845 = vld [vmem:[%s179 + $0xa60] sm:%s172]
                %846 = vst [vmem:[%s180 + $0x530] sm:%s172] %v845
                %v847 = vld [vmem:[%s179 + $0xa68] sm:%s172]
                %848 = vst [vmem:[%s180 + $0x534] sm:%s172] %v847
                %v849 = vld [vmem:[%s179 + $0xa70] sm:%s172]
                %850 = vst [vmem:[%s180 + $0x538] sm:%s172] %v849
                %v851 = vld [vmem:[%s179 + $0xa78] sm:%s172]
                %852 = vst [vmem:[%s180 + $0x53c] sm:%s172] %v851
                %v853 = vld [vmem:[%s179 + $0xa80] sm:%s172]
                %854 = vst [vmem:[%s180 + $0x540] sm:%s172] %v853
                %v855 = vld [vmem:[%s179 + $0xa88] sm:%s172]
                %856 = vst [vmem:[%s180 + $0x544] sm:%s172] %v855
                %v857 = vld [vmem:[%s179 + $0xa90] sm:%s172]
                %858 = vst [vmem:[%s180 + $0x548] sm:%s172] %v857
                %v859 = vld [vmem:[%s179 + $0xa98] sm:%s172]
                %860 = vst [vmem:[%s180 + $0x54c] sm:%s172] %v859
                %v861 = vld [vmem:[%s179 + $0xaa0] sm:%s172]
                %862 = vst [vmem:[%s180 + $0x550] sm:%s172] %v861
                %v863 = vld [vmem:[%s179 + $0xaa8] sm:%s172]
                %864 = vst [vmem:[%s180 + $0x554] sm:%s172] %v863
                %v865 = vld [vmem:[%s179 + $0xab0] sm:%s172]
                %866 = vst [vmem:[%s180 + $0x558] sm:%s172] %v865
                %v867 = vld [vmem:[%s179 + $0xab8] sm:%s172]
                %868 = vst [vmem:[%s180 + $0x55c] sm:%s172] %v867
                %v869 = vld [vmem:[%s179 + $0xac0] sm:%s172]
                %870 = vst [vmem:[%s180 + $0x560] sm:%s172] %v869
                %v871 = vld [vmem:[%s179 + $0xac8] sm:%s172]
                %872 = vst [vmem:[%s180 + $0x564] sm:%s172] %v871
                %v873 = vld [vmem:[%s179 + $0xad0] sm:%s172]
                %874 = vst [vmem:[%s180 + $0x568] sm:%s172] %v873
                %v875 = vld [vmem:[%s179 + $0xad8] sm:%s172]
                %876 = vst [vmem:[%s180 + $0x56c] sm:%s172] %v875
                %v877 = vld [vmem:[%s179 + $0xae0] sm:%s172]
                %878 = vst [vmem:[%s180 + $0x570] sm:%s172] %v877
                %v879 = vld [vmem:[%s179 + $0xae8] sm:%s172]
                %880 = vst [vmem:[%s180 + $0x574] sm:%s172] %v879
                %v881 = vld [vmem:[%s179 + $0xaf0] sm:%s172]
                %882 = vst [vmem:[%s180 + $0x578] sm:%s172] %v881
                %v883 = vld [vmem:[%s179 + $0xaf8] sm:%s172]
                %884 = vst [vmem:[%s180 + $0x57c] sm:%s172] %v883
                %v885 = vld [vmem:[%s179 + $0xb00] sm:%s172]
                %886 = vst [vmem:[%s180 + $0x580] sm:%s172] %v885
                %v887 = vld [vmem:[%s179 + $0xb08] sm:%s172]
                %888 = vst [vmem:[%s180 + $0x584] sm:%s172] %v887
                %v889 = vld [vmem:[%s179 + $0xb10] sm:%s172]
                %890 = vst [vmem:[%s180 + $0x588] sm:%s172] %v889
                %v891 = vld [vmem:[%s179 + $0xb18] sm:%s172]
                %892 = vst [vmem:[%s180 + $0x58c] sm:%s172] %v891
                %v893 = vld [vmem:[%s179 + $0xb20] sm:%s172]
                %894 = vst [vmem:[%s180 + $0x590] sm:%s172] %v893
                %v895 = vld [vmem:[%s179 + $0xb28] sm:%s172]
                %896 = vst [vmem:[%s180 + $0x594] sm:%s172] %v895
                %v897 = vld [vmem:[%s179 + $0xb30] sm:%s172]
                %898 = vst [vmem:[%s180 + $0x598] sm:%s172] %v897
                %v899 = vld [vmem:[%s179 + $0xb38] sm:%s172]
                %900 = vst [vmem:[%s180 + $0x59c] sm:%s172] %v899
                %v901 = vld [vmem:[%s179 + $0xb40] sm:%s172]
                %902 = vst [vmem:[%s180 + $0x5a0] sm:%s172] %v901
                %v903 = vld [vmem:[%s179 + $0xb48] sm:%s172]
                %904 = vst [vmem:[%s180 + $0x5a4] sm:%s172] %v903
                %v905 = vld [vmem:[%s179 + $0xb50] sm:%s172]
                %906 = vst [vmem:[%s180 + $0x5a8] sm:%s172] %v905
                %v907 = vld [vmem:[%s179 + $0xb58] sm:%s172]
                %908 = vst [vmem:[%s180 + $0x5ac] sm:%s172] %v907
                %v909 = vld [vmem:[%s179 + $0xb60] sm:%s172]
                %910 = vst [vmem:[%s180 + $0x5b0] sm:%s172] %v909
                %v911 = vld [vmem:[%s179 + $0xb68] sm:%s172]
                %912 = vst [vmem:[%s180 + $0x5b4] sm:%s172] %v911
                %v913 = vld [vmem:[%s179 + $0xb70] sm:%s172]
                %914 = vst [vmem:[%s180 + $0x5b8] sm:%s172] %v913
                %v915 = vld [vmem:[%s179 + $0xb78] sm:%s172]
                %916 = vst [vmem:[%s180 + $0x5bc] sm:%s172] %v915
                %v917 = vld [vmem:[%s179 + $0xb80] sm:%s172]
                %918 = vst [vmem:[%s180 + $0x5c0] sm:%s172] %v917
                %v919 = vld [vmem:[%s179 + $0xb88] sm:%s172]
                %920 = vst [vmem:[%s180 + $0x5c4] sm:%s172] %v919
                %v921 = vld [vmem:[%s179 + $0xb90] sm:%s172]
                %922 = vst [vmem:[%s180 + $0x5c8] sm:%s172] %v921
                %v923 = vld [vmem:[%s179 + $0xb98] sm:%s172]
                %924 = vst [vmem:[%s180 + $0x5cc] sm:%s172] %v923
                %v925 = vld [vmem:[%s179 + $0xba0] sm:%s172]
                %926 = vst [vmem:[%s180 + $0x5d0] sm:%s172] %v925
                %v927 = vld [vmem:[%s179 + $0xba8] sm:%s172]
                %928 = vst [vmem:[%s180 + $0x5d4] sm:%s172] %v927
                %v929 = vld [vmem:[%s179 + $0xbb0] sm:%s172]
                %930 = vst [vmem:[%s180 + $0x5d8] sm:%s172] %v929
                %v931 = vld [vmem:[%s179 + $0xbb8] sm:%s172]
                %932 = vst [vmem:[%s180 + $0x5dc] sm:%s172] %v931
                %v933 = vld [vmem:[%s179 + $0xbc0] sm:%s172]
                %934 = vst [vmem:[%s180 + $0x5e0] sm:%s172] %v933
                %v935 = vld [vmem:[%s179 + $0xbc8] sm:%s172]
                %936 = vst [vmem:[%s180 + $0x5e4] sm:%s172] %v935
                %v937 = vld [vmem:[%s179 + $0xbd0] sm:%s172]
                %938 = vst [vmem:[%s180 + $0x5e8] sm:%s172] %v937
                %v939 = vld [vmem:[%s179 + $0xbd8] sm:%s172]
                %940 = vst [vmem:[%s180 + $0x5ec] sm:%s172] %v939
                %v941 = vld [vmem:[%s179 + $0xbe0] sm:%s172]
                %942 = vst [vmem:[%s180 + $0x5f0] sm:%s172] %v941
                %v943 = vld [vmem:[%s179 + $0xbe8] sm:%s172]
                %944 = vst [vmem:[%s180 + $0x5f4] sm:%s172] %v943
                %v945 = vld [vmem:[%s179 + $0xbf0] sm:%s172]
                %946 = vst [vmem:[%s180 + $0x5f8] sm:%s172] %v945
                %v947 = vld [vmem:[%s179 + $0xbf8] sm:%s172]
                %948 = vst [vmem:[%s180 + $0x5fc] sm:%s172] %v947
                %v949 = vld [vmem:[%s179 + $0xc00] sm:%s172]
                %950 = vst [vmem:[%s180 + $0x600] sm:%s172] %v949
                %v951 = vld [vmem:[%s179 + $0xc08] sm:%s172]
                %952 = vst [vmem:[%s180 + $0x604] sm:%s172] %v951
                %v953 = vld [vmem:[%s179 + $0xc10] sm:%s172]
                %954 = vst [vmem:[%s180 + $0x608] sm:%s172] %v953
                %v955 = vld [vmem:[%s179 + $0xc18] sm:%s172]
                %956 = vst [vmem:[%s180 + $0x60c] sm:%s172] %v955
                %v957 = vld [vmem:[%s179 + $0xc20] sm:%s172]
                %958 = vst [vmem:[%s180 + $0x610] sm:%s172] %v957
                %v959 = vld [vmem:[%s179 + $0xc28] sm:%s172]
                %960 = vst [vmem:[%s180 + $0x614] sm:%s172] %v959
                %v961 = vld [vmem:[%s179 + $0xc30] sm:%s172]
                %962 = vst [vmem:[%s180 + $0x618] sm:%s172] %v961
                %v963 = vld [vmem:[%s179 + $0xc38] sm:%s172]
                %964 = vst [vmem:[%s180 + $0x61c] sm:%s172] %v963
                %v965 = vld [vmem:[%s179 + $0xc40] sm:%s172]
                %966 = vst [vmem:[%s180 + $0x620] sm:%s172] %v965
                %v967 = vld [vmem:[%s179 + $0xc48] sm:%s172]
                %968 = vst [vmem:[%s180 + $0x624] sm:%s172] %v967
                %v969 = vld [vmem:[%s179 + $0xc50] sm:%s172]
                %970 = vst [vmem:[%s180 + $0x628] sm:%s172] %v969
                %v971 = vld [vmem:[%s179 + $0xc58] sm:%s172]
                %972 = vst [vmem:[%s180 + $0x62c] sm:%s172] %v971
                %v973 = vld [vmem:[%s179 + $0xc60] sm:%s172]
                %974 = vst [vmem:[%s180 + $0x630] sm:%s172] %v973
                %v975 = vld [vmem:[%s179 + $0xc68] sm:%s172]
                %976 = vst [vmem:[%s180 + $0x634] sm:%s172] %v975
                %v977 = vld [vmem:[%s179 + $0xc70] sm:%s172]
                %978 = vst [vmem:[%s180 + $0x638] sm:%s172] %v977
                %v979 = vld [vmem:[%s179 + $0xc78] sm:%s172]
                %980 = vst [vmem:[%s180 + $0x63c] sm:%s172] %v979
                %v981 = vld [vmem:[%s179 + $0xc80] sm:%s172]
                %982 = vst [vmem:[%s180 + $0x640] sm:%s172] %v981
                %v983 = vld [vmem:[%s179 + $0xc88] sm:%s172]
                %984 = vst [vmem:[%s180 + $0x644] sm:%s172] %v983
                %v985 = vld [vmem:[%s179 + $0xc90] sm:%s172]
                %986 = vst [vmem:[%s180 + $0x648] sm:%s172] %v985
                %v987 = vld [vmem:[%s179 + $0xc98] sm:%s172]
                %988 = vst [vmem:[%s180 + $0x64c] sm:%s172] %v987
                %v989 = vld [vmem:[%s179 + $0xca0] sm:%s172]
                %990 = vst [vmem:[%s180 + $0x650] sm:%s172] %v989
                %v991 = vld [vmem:[%s179 + $0xca8] sm:%s172]
                %992 = vst [vmem:[%s180 + $0x654] sm:%s172] %v991
                %v993 = vld [vmem:[%s179 + $0xcb0] sm:%s172]
                %994 = vst [vmem:[%s180 + $0x658] sm:%s172] %v993
                %v995 = vld [vmem:[%s179 + $0xcb8] sm:%s172]
                %996 = vst [vmem:[%s180 + $0x65c] sm:%s172] %v995
                %v997 = vld [vmem:[%s179 + $0xcc0] sm:%s172]
                %998 = vst [vmem:[%s180 + $0x660] sm:%s172] %v997
                %v999 = vld [vmem:[%s179 + $0xcc8] sm:%s172]
                %1000 = vst [vmem:[%s180 + $0x664] sm:%s172] %v999
                %v1001 = vld [vmem:[%s179 + $0xcd0] sm:%s172]
                %1002 = vst [vmem:[%s180 + $0x668] sm:%s172] %v1001
                %v1003 = vld [vmem:[%s179 + $0xcd8] sm:%s172]
                %1004 = vst [vmem:[%s180 + $0x66c] sm:%s172] %v1003
                %v1005 = vld [vmem:[%s179 + $0xce0] sm:%s172]
                %1006 = vst [vmem:[%s180 + $0x670] sm:%s172] %v1005
                %v1007 = vld [vmem:[%s179 + $0xce8] sm:%s172]
                %1008 = vst [vmem:[%s180 + $0x674] sm:%s172] %v1007
                %v1009 = vld [vmem:[%s179 + $0xcf0] sm:%s172]
                %1010 = vst [vmem:[%s180 + $0x678] sm:%s172] %v1009
                %v1011 = vld [vmem:[%s179 + $0xcf8] sm:%s172]
                %1012 = vst [vmem:[%s180 + $0x67c] sm:%s172] %v1011
                %v1013 = vld [vmem:[%s179 + $0xd00] sm:%s172]
                %1014 = vst [vmem:[%s180 + $0x680] sm:%s172] %v1013
                %v1015 = vld [vmem:[%s179 + $0xd08] sm:%s172]
                %1016 = vst [vmem:[%s180 + $0x684] sm:%s172] %v1015
                %v1017 = vld [vmem:[%s179 + $0xd10] sm:%s172]
                %1018 = vst [vmem:[%s180 + $0x688] sm:%s172] %v1017
                %v1019 = vld [vmem:[%s179 + $0xd18] sm:%s172]
                %1020 = vst [vmem:[%s180 + $0x68c] sm:%s172] %v1019
                %v1021 = vld [vmem:[%s179 + $0xd20] sm:%s172]
                %1022 = vst [vmem:[%s180 + $0x690] sm:%s172] %v1021
                %v1023 = vld [vmem:[%s179 + $0xd28] sm:%s172]
                %1024 = vst [vmem:[%s180 + $0x694] sm:%s172] %v1023
                %v1025 = vld [vmem:[%s179 + $0xd30] sm:%s172]
                %1026 = vst [vmem:[%s180 + $0x698] sm:%s172] %v1025
                %v1027 = vld [vmem:[%s179 + $0xd38] sm:%s172]
                %1028 = vst [vmem:[%s180 + $0x69c] sm:%s172] %v1027
                %v1029 = vld [vmem:[%s179 + $0xd40] sm:%s172]
                %1030 = vst [vmem:[%s180 + $0x6a0] sm:%s172] %v1029
                %v1031 = vld [vmem:[%s179 + $0xd48] sm:%s172]
                %1032 = vst [vmem:[%s180 + $0x6a4] sm:%s172] %v1031
                %v1033 = vld [vmem:[%s179 + $0xd50] sm:%s172]
                %1034 = vst [vmem:[%s180 + $0x6a8] sm:%s172] %v1033
                %v1035 = vld [vmem:[%s179 + $0xd58] sm:%s172]
                %1036 = vst [vmem:[%s180 + $0x6ac] sm:%s172] %v1035
                %v1037 = vld [vmem:[%s179 + $0xd60] sm:%s172]
                %1038 = vst [vmem:[%s180 + $0x6b0] sm:%s172] %v1037
                %v1039 = vld [vmem:[%s179 + $0xd68] sm:%s172]
                %1040 = vst [vmem:[%s180 + $0x6b4] sm:%s172] %v1039
                %v1041 = vld [vmem:[%s179 + $0xd70] sm:%s172]
                %1042 = vst [vmem:[%s180 + $0x6b8] sm:%s172] %v1041
                %v1043 = vld [vmem:[%s179 + $0xd78] sm:%s172]
                %1044 = vst [vmem:[%s180 + $0x6bc] sm:%s172] %v1043
              $region41: #{discriminator_forward.6} parent=35 // loop_footer
                %s178 = sadd.s32 1, %s174
              $region42: #{discriminator_forward.6} parent=35 // loop_footer_branch
                %173 = sbr.rel target = $region38
              $region43: #{discriminator_forward.6} parent=35 // loop_exit
                _
            $region36: #{discriminator_forward.6} parent=27 // pred_fallthru
              _
          $region28: #{discriminator_forward.6} parent=23 // pred_fallthru
            _
          %1929 = vnop
        $region24: #{discriminator_forward.6} parent=19 // pred_fallthru
          _
        // Predicated region
        $region62: #{discriminator_forward.6} parent=19 // pred_check
          %p1930 = pneg %p93
        $region63: #{discriminator_forward.6} parent=19 // pred_check_branch
          %1932 = sbr.rel (%p1930) target = $region65
        $region64: #{discriminator_forward.6} parent=19 // pred_region
          %p1933 = scmp.lt.s32.totalorder %s17, 1
          %s1934 = scalar_select %p1933, %s17, 1
          %s1935 = scalar_lea.vmem %s2, %s1934
        $region65: #{discriminator_forward.6} parent=19 // pred_fallthru
          _
      $region20: #{discriminator_forward.6} parent=5 // pred_fallthru
        _
      %p1936 = scmp.le.s32.totalorder 1, %s9
      %p1937 = scmp.lt.s32.totalorder %s9, 3
      %p1938 = pnand %p1936, %p1937
      %p1939 = pneg %p1938
      // Predicated region
      $region66: #{discriminator_forward.6} parent=5 // pred_check
        _
      $region67: #{discriminator_forward.6} parent=5 // pred_check_branch
        %1941 = sbr.rel (%p1938) target = $region69
      $region68: #{discriminator_forward.6} parent=5 // pred_region
        %s1942 = ssub.s32 %s9, 1
        %s1943 = sand.u32 %s60, 1
        %s1944 = sand.u32 %s60, 1
        %s1945 = smul.addr %s1944, 1728
        %s1946 = scalar_lea.vmem [#allocation2], %s1945
        // Predicated region
        $region70: #{discriminator_forward.6} parent=68 // pred_check
          %p1947 = pneg %p73
        $region71: #{discriminator_forward.6} parent=68 // pred_check_branch
          %1949 = sbr.rel (%p1947) target = $region73
        $region72: #{discriminator_forward.6} parent=68 // pred_region
          _
        $region73: #{discriminator_forward.6} parent=68 // pred_fallthru
          _
        %s1950 = smul.u32 2, %s18
        %p1951 = scmp.lt.s32.totalorder %s1950, 1
        %s1952 = scalar_select %p1951, %s1950, 1
        %s1953 = smul.addr %s1952, 27
        %s1954 = smul.addr %s1953, 4
        %s1955 = scalar_lea.vmem %s0, %s1954
        %p1956 = pneg %p47
        %p1957 = pneg %p44
        %s1958 = sand.u32 %s60, 1
        %s1959 = sand.u32 %s60, 1
        %s1960 = smul.addr %s1959, 1728
        %s1961 = scalar_lea.vmem [#allocation2], %s1960
        %p1962 = pneg %p73
        %p1963 = pneg %p70
        %p1964 = scmp.lt.s32.totalorder %s19, 1
        %s1965 = scalar_select %p1964, %s19, 1
        %s1966 = scalar_lea.vmem %s2, %s1965
        %p1967 = pneg %p99
        %p1968 = pneg %p96
        %p1969 = pneg %p127
        %p1970 = pneg %p124
        %s1971 = sand.u32 %s114, 1
        %s1972 = sand.u32 %s114, 1
        %s1973 = smul.addr %s1972, 8
        %s1974 = scalar_lea.vmem [#allocation3], %s1973
        %s1975 = smul.u32 2, %s18
        %p1976 = scmp.lt.s32.totalorder %s1975, 1
        %s1977 = scalar_select %p1976, %s1975, 1
        %s1978 = smul.addr %s1977, 27
        %s1979 = smul.addr %s1978, 4
        %s1980 = scalar_lea.vmem %s0, %s1979
        %s1981 = smul.u32 2, %s18
        %p1982 = scmp.lt.s32.totalorder %s19, 1
        %s1983 = scalar_select %p1982, %s19, 1
        %s1984 = scalar_lea.vmem %s2, %s1983
        %s1985 = smul.u32 2, %s18
        %v1987 = vld [vmem:[%s1980] sm:$0xff]
        %v1988 = vld [vmem:[%s1980 + $0x8] sm:$0xff]
        %v1989 = vld [vmem:[%s1980 + $0x10] sm:$0xff]
        %v1990 = vld [vmem:[%s1980 + $0x18] sm:$0xff]
        %v1991 = vld [vmem:[%s1980 + $0x20] sm:$0xff]
        %v1992 = vld [vmem:[%s1980 + $0x28] sm:$0xff]
        %v1993 = vld [vmem:[%s1980 + $0x30] sm:$0xff]
        %v1994 = vld [vmem:[%s1980 + $0x38] sm:$0xff]
        %v1995 = vld [vmem:[%s1980 + $0x40] sm:$0xff]
        %v1996 = vld [vmem:[%s1980 + $0x48] sm:$0xff]
        %v1997 = vld [vmem:[%s1980 + $0x50] sm:$0xff]
        %v1998 = vld [vmem:[%s1980 + $0x58] sm:$0xff]
        %v1999 = vld [vmem:[%s1980 + $0x60] sm:$0xff]
        %v2000 = vld [vmem:[%s1980 + $0x68] sm:$0xf]
        %v2001 = vld [vmem:[%s1980 + $0x6c] sm:$0xff]
        %v2002 = vld [vmem:[%s1980 + $0x74] sm:$0xff]
        %v2003 = vld [vmem:[%s1980 + $0x7c] sm:$0xff]
        %v2004 = vld [vmem:[%s1980 + $0x84] sm:$0xff]
        %v2005 = vld [vmem:[%s1980 + $0x8c] sm:$0xff]
        %v2006 = vld [vmem:[%s1980 + $0x94] sm:$0xff]
        %v2007 = vld [vmem:[%s1980 + $0x9c] sm:$0xff]
        %v2008 = vld [vmem:[%s1980 + $0xa4] sm:$0xff]
        %v2009 = vld [vmem:[%s1980 + $0xac] sm:$0xff]
        %v2010 = vld [vmem:[%s1980 + $0xb4] sm:$0xff]
        %v2011 = vld [vmem:[%s1980 + $0xbc] sm:$0xff]
        %v2012 = vld [vmem:[%s1980 + $0xc4] sm:$0xff]
        %v2013 = vld [vmem:[%s1980 + $0xcc] sm:$0xff]
        %v2014 = vld [vmem:[%s1980 + $0xd4] sm:$0xf]
        %v2015 = vld [vmem:[%s1946] sm:$0xf]
        %v2016 = vld [vmem:[%s1946 + $0x4] sm:$0xf]
        %v2017 = vld [vmem:[%s1946 + $0x8] sm:$0xf]
        %v2018 = vld [vmem:[%s1946 + $0xc] sm:$0xf]
        %v2019 = vld [vmem:[%s1946 + $0x10] sm:$0xf]
        %v2020 = vld [vmem:[%s1946 + $0x14] sm:$0xf]
        %v2021 = vld [vmem:[%s1946 + $0x18] sm:$0xf]
        %v2022 = vld [vmem:[%s1946 + $0x1c] sm:$0xf]
        %v2023 = vld [vmem:[%s1946 + $0x20] sm:$0xf]
        %v2024 = vld [vmem:[%s1946 + $0x24] sm:$0xf]
        %v2025 = vld [vmem:[%s1946 + $0x28] sm:$0xf]
        %v2026 = vld [vmem:[%s1946 + $0x2c] sm:$0xf]
        %v2027 = vld [vmem:[%s1946 + $0x30] sm:$0xf]
        %v2028 = vld [vmem:[%s1946 + $0x34] sm:$0xf]
        %v2029 = vld [vmem:[%s1946 + $0x38] sm:$0xf]
        %v2030 = vld [vmem:[%s1946 + $0x3c] sm:$0xf]
        %v2031 = vld [vmem:[%s1946 + $0x40] sm:$0xf]
        %v2032 = vld [vmem:[%s1946 + $0x44] sm:$0xf]
        %v2033 = vld [vmem:[%s1946 + $0x48] sm:$0xf]
        %v2034 = vld [vmem:[%s1946 + $0x4c] sm:$0xf]
        %v2035 = vld [vmem:[%s1946 + $0x50] sm:$0xf]
        %v2036 = vld [vmem:[%s1946 + $0x54] sm:$0xf]
        %v2037 = vld [vmem:[%s1946 + $0x58] sm:$0xf]
        %v2038 = vld [vmem:[%s1946 + $0x5c] sm:$0xf]
        %v2039 = vld [vmem:[%s1946 + $0x60] sm:$0xf]
        %v2040 = vld [vmem:[%s1946 + $0x64] sm:$0xf]
        %v2041 = vld [vmem:[%s1946 + $0x68] sm:$0xf]
        %v2042 = vld [vmem:[%s1946 + $0x6c] sm:$0xf]
        %v2043 = vld [vmem:[%s1946 + $0x70] sm:$0xf]
        %v2044 = vld [vmem:[%s1946 + $0x74] sm:$0xf]
        %v2045 = vld [vmem:[%s1946 + $0x78] sm:$0xf]
        %v2046 = vld [vmem:[%s1946 + $0x7c] sm:$0xf]
        %v2047 = vld [vmem:[%s1946 + $0x80] sm:$0xf]
        %v2048 = vld [vmem:[%s1946 + $0x84] sm:$0xf]
        %v2049 = vld [vmem:[%s1946 + $0x88] sm:$0xf]
        %v2050 = vld [vmem:[%s1946 + $0x8c] sm:$0xf]
        %v2051 = vld [vmem:[%s1946 + $0x90] sm:$0xf]
        %v2052 = vld [vmem:[%s1946 + $0x94] sm:$0xf]
        %v2053 = vld [vmem:[%s1946 + $0x98] sm:$0xf]
        %v2054 = vld [vmem:[%s1946 + $0x9c] sm:$0xf]
        %v2055 = vld [vmem:[%s1946 + $0xa0] sm:$0xf]
        %v2056 = vld [vmem:[%s1946 + $0xa4] sm:$0xf]
        %v2057 = vld [vmem:[%s1946 + $0xa8] sm:$0xf]
        %v2058 = vld [vmem:[%s1946 + $0xac] sm:$0xf]
        %v2059 = vld [vmem:[%s1946 + $0xb0] sm:$0xf]
        %v2060 = vld [vmem:[%s1946 + $0xb4] sm:$0xf]
        %v2061 = vld [vmem:[%s1946 + $0xb8] sm:$0xf]
        %v2062 = vld [vmem:[%s1946 + $0xbc] sm:$0xf]
        %v2063 = vld [vmem:[%s1946 + $0xc0] sm:$0xf]
        %v2064 = vld [vmem:[%s1946 + $0xc4] sm:$0xf]
        %v2065 = vld [vmem:[%s1946 + $0xc8] sm:$0xf]
        %v2066 = vld [vmem:[%s1946 + $0xcc] sm:$0xf]
        %v2067 = vld [vmem:[%s1946 + $0xd0] sm:$0xf]
        %v2068 = vld [vmem:[%s1946 + $0xd4] sm:$0xf]
        %v2069 = vld [vmem:[%s1946 + $0xd8] sm:$0xf]
        %v2070 = vld [vmem:[%s1946 + $0xdc] sm:$0xf]
        %v2071 = vld [vmem:[%s1946 + $0xe0] sm:$0xf]
        %v2072 = vld [vmem:[%s1946 + $0xe4] sm:$0xf]
        %v2073 = vld [vmem:[%s1946 + $0xe8] sm:$0xf]
        %v2074 = vld [vmem:[%s1946 + $0xec] sm:$0xf]
        %v2075 = vld [vmem:[%s1946 + $0xf0] sm:$0xf]
        %v2076 = vld [vmem:[%s1946 + $0xf4] sm:$0xf]
        %v2077 = vld [vmem:[%s1946 + $0xf8] sm:$0xf]
        %v2078 = vld [vmem:[%s1946 + $0xfc] sm:$0xf]
        %v2079 = vld [vmem:[%s1946 + $0x100] sm:$0xf]
        %v2080 = vld [vmem:[%s1946 + $0x104] sm:$0xf]
        %v2081 = vld [vmem:[%s1946 + $0x108] sm:$0xf]
        %v2082 = vld [vmem:[%s1946 + $0x10c] sm:$0xf]
        %v2083 = vld [vmem:[%s1946 + $0x110] sm:$0xf]
        %v2084 = vld [vmem:[%s1946 + $0x114] sm:$0xf]
        %v2085 = vld [vmem:[%s1946 + $0x118] sm:$0xf]
        %v2086 = vld [vmem:[%s1946 + $0x11c] sm:$0xf]
        %v2087 = vld [vmem:[%s1946 + $0x120] sm:$0xf]
        %v2088 = vld [vmem:[%s1946 + $0x124] sm:$0xf]
        %v2089 = vld [vmem:[%s1946 + $0x128] sm:$0xf]
        %v2090 = vld [vmem:[%s1946 + $0x12c] sm:$0xf]
        %v2091 = vld [vmem:[%s1946 + $0x130] sm:$0xf]
        %v2092 = vld [vmem:[%s1946 + $0x134] sm:$0xf]
        %v2093 = vld [vmem:[%s1946 + $0x138] sm:$0xf]
        %v2094 = vld [vmem:[%s1946 + $0x13c] sm:$0xf]
        %v2095 = vld [vmem:[%s1946 + $0x140] sm:$0xf]
        %v2096 = vld [vmem:[%s1946 + $0x144] sm:$0xf]
        %v2097 = vld [vmem:[%s1946 + $0x148] sm:$0xf]
        %v2098 = vld [vmem:[%s1946 + $0x14c] sm:$0xf]
        %v2099 = vld [vmem:[%s1946 + $0x150] sm:$0xf]
        %v2100 = vld [vmem:[%s1946 + $0x154] sm:$0xf]
        %v2101 = vld [vmem:[%s1946 + $0x158] sm:$0xf]
        %v2102 = vld [vmem:[%s1946 + $0x15c] sm:$0xf]
        %v2103 = vld [vmem:[%s1946 + $0x160] sm:$0xf]
        %v2104 = vld [vmem:[%s1946 + $0x164] sm:$0xf]
        %v2105 = vld [vmem:[%s1946 + $0x168] sm:$0xf]
        %v2106 = vld [vmem:[%s1946 + $0x16c] sm:$0xf]
        %v2107 = vld [vmem:[%s1946 + $0x170] sm:$0xf]
        %v2108 = vld [vmem:[%s1946 + $0x174] sm:$0xf]
        %v2109 = vld [vmem:[%s1946 + $0x178] sm:$0xf]
        %v2110 = vld [vmem:[%s1946 + $0x17c] sm:$0xf]
        %v2111 = vld [vmem:[%s1946 + $0x180] sm:$0xf]
        %v2112 = vld [vmem:[%s1946 + $0x184] sm:$0xf]
        %v2113 = vld [vmem:[%s1946 + $0x188] sm:$0xf]
        %v2114 = vld [vmem:[%s1946 + $0x18c] sm:$0xf]
        %v2115 = vld [vmem:[%s1946 + $0x190] sm:$0xf]
        %v2116 = vld [vmem:[%s1946 + $0x194] sm:$0xf]
        %v2117 = vld [vmem:[%s1946 + $0x198] sm:$0xf]
        %v2118 = vld [vmem:[%s1946 + $0x19c] sm:$0xf]
        %v2119 = vld [vmem:[%s1946 + $0x1a0] sm:$0xf]
        %v2120 = vld [vmem:[%s1946 + $0x1a4] sm:$0xf]
        %v2121 = vld [vmem:[%s1946 + $0x1a8] sm:$0xf]
        %v2122 = vld [vmem:[%s1946 + $0x1ac] sm:$0xf]
        %v2123 = vld [vmem:[%s1946 + $0x1b0] sm:$0xf]
        %v2124 = vld [vmem:[%s1946 + $0x1b4] sm:$0xf]
        %v2125 = vld [vmem:[%s1946 + $0x1b8] sm:$0xf]
        %v2126 = vld [vmem:[%s1946 + $0x1bc] sm:$0xf]
        %v2127 = vld [vmem:[%s1946 + $0x1c0] sm:$0xf]
        %v2128 = vld [vmem:[%s1946 + $0x1c4] sm:$0xf]
        %v2129 = vld [vmem:[%s1946 + $0x1c8] sm:$0xf]
        %v2130 = vld [vmem:[%s1946 + $0x1cc] sm:$0xf]
        %v2131 = vld [vmem:[%s1946 + $0x1d0] sm:$0xf]
        %v2132 = vld [vmem:[%s1946 + $0x1d4] sm:$0xf]
        %v2133 = vld [vmem:[%s1946 + $0x1d8] sm:$0xf]
        %v2134 = vld [vmem:[%s1946 + $0x1dc] sm:$0xf]
        %v2135 = vld [vmem:[%s1946 + $0x1e0] sm:$0xf]
        %v2136 = vld [vmem:[%s1946 + $0x1e4] sm:$0xf]
        %v2137 = vld [vmem:[%s1946 + $0x1e8] sm:$0xf]
        %v2138 = vld [vmem:[%s1946 + $0x1ec] sm:$0xf]
        %v2139 = vld [vmem:[%s1946 + $0x1f0] sm:$0xf]
        %v2140 = vld [vmem:[%s1946 + $0x1f4] sm:$0xf]
        %v2141 = vld [vmem:[%s1946 + $0x1f8] sm:$0xf]
        %v2142 = vld [vmem:[%s1946 + $0x1fc] sm:$0xf]
        %v2143 = vld [vmem:[%s1946 + $0x200] sm:$0xf]
        %v2144 = vld [vmem:[%s1946 + $0x204] sm:$0xf]
        %v2145 = vld [vmem:[%s1946 + $0x208] sm:$0xf]
        %v2146 = vld [vmem:[%s1946 + $0x20c] sm:$0xf]
        %v2147 = vld [vmem:[%s1946 + $0x210] sm:$0xf]
        %v2148 = vld [vmem:[%s1946 + $0x214] sm:$0xf]
        %v2149 = vld [vmem:[%s1946 + $0x218] sm:$0xf]
        %v2150 = vld [vmem:[%s1946 + $0x21c] sm:$0xf]
        %v2151 = vld [vmem:[%s1946 + $0x220] sm:$0xf]
        %v2152 = vld [vmem:[%s1946 + $0x224] sm:$0xf]
        %v2153 = vld [vmem:[%s1946 + $0x228] sm:$0xf]
        %v2154 = vld [vmem:[%s1946 + $0x22c] sm:$0xf]
        %v2155 = vld [vmem:[%s1946 + $0x230] sm:$0xf]
        %v2156 = vld [vmem:[%s1946 + $0x234] sm:$0xf]
        %v2157 = vld [vmem:[%s1946 + $0x238] sm:$0xf]
        %v2158 = vld [vmem:[%s1946 + $0x23c] sm:$0xf]
        %v2159 = vld [vmem:[%s1946 + $0x240] sm:$0xf]
        %v2160 = vld [vmem:[%s1946 + $0x244] sm:$0xf]
        %v2161 = vld [vmem:[%s1946 + $0x248] sm:$0xf]
        %v2162 = vld [vmem:[%s1946 + $0x24c] sm:$0xf]
        %v2163 = vld [vmem:[%s1946 + $0x250] sm:$0xf]
        %v2164 = vld [vmem:[%s1946 + $0x254] sm:$0xf]
        %v2165 = vld [vmem:[%s1946 + $0x258] sm:$0xf]
        %v2166 = vld [vmem:[%s1946 + $0x25c] sm:$0xf]
        %v2167 = vld [vmem:[%s1946 + $0x260] sm:$0xf]
        %v2168 = vld [vmem:[%s1946 + $0x264] sm:$0xf]
        %v2169 = vld [vmem:[%s1946 + $0x268] sm:$0xf]
        %v2170 = vld [vmem:[%s1946 + $0x26c] sm:$0xf]
        %v2171 = vld [vmem:[%s1946 + $0x270] sm:$0xf]
        %v2172 = vld [vmem:[%s1946 + $0x274] sm:$0xf]
        %v2173 = vld [vmem:[%s1946 + $0x278] sm:$0xf]
        %v2174 = vld [vmem:[%s1946 + $0x27c] sm:$0xf]
        %v2175 = vld [vmem:[%s1946 + $0x280] sm:$0xf]
        %v2176 = vld [vmem:[%s1946 + $0x284] sm:$0xf]
        %v2177 = vld [vmem:[%s1946 + $0x288] sm:$0xf]
        %v2178 = vld [vmem:[%s1946 + $0x28c] sm:$0xf]
        %v2179 = vld [vmem:[%s1946 + $0x290] sm:$0xf]
        %v2180 = vld [vmem:[%s1946 + $0x294] sm:$0xf]
        %v2181 = vld [vmem:[%s1946 + $0x298] sm:$0xf]
        %v2182 = vld [vmem:[%s1946 + $0x29c] sm:$0xf]
        %v2183 = vld [vmem:[%s1946 + $0x2a0] sm:$0xf]
        %v2184 = vld [vmem:[%s1946 + $0x2a4] sm:$0xf]
        %v2185 = vld [vmem:[%s1946 + $0x2a8] sm:$0xf]
        %v2186 = vld [vmem:[%s1946 + $0x2ac] sm:$0xf]
        %v2187 = vld [vmem:[%s1946 + $0x2b0] sm:$0xf]
        %v2188 = vld [vmem:[%s1946 + $0x2b4] sm:$0xf]
        %v2189 = vld [vmem:[%s1946 + $0x2b8] sm:$0xf]
        %v2190 = vld [vmem:[%s1946 + $0x2bc] sm:$0xf]
        %v2191 = vld [vmem:[%s1946 + $0x2c0] sm:$0xf]
        %v2192 = vld [vmem:[%s1946 + $0x2c4] sm:$0xf]
        %v2193 = vld [vmem:[%s1946 + $0x2c8] sm:$0xf]
        %v2194 = vld [vmem:[%s1946 + $0x2cc] sm:$0xf]
        %v2195 = vld [vmem:[%s1946 + $0x2d0] sm:$0xf]
        %v2196 = vld [vmem:[%s1946 + $0x2d4] sm:$0xf]
        %v2197 = vld [vmem:[%s1946 + $0x2d8] sm:$0xf]
        %v2198 = vld [vmem:[%s1946 + $0x2dc] sm:$0xf]
        %v2199 = vld [vmem:[%s1946 + $0x2e0] sm:$0xf]
        %v2200 = vld [vmem:[%s1946 + $0x2e4] sm:$0xf]
        %v2201 = vld [vmem:[%s1946 + $0x2e8] sm:$0xf]
        %v2202 = vld [vmem:[%s1946 + $0x2ec] sm:$0xf]
        %v2203 = vld [vmem:[%s1946 + $0x2f0] sm:$0xf]
        %v2204 = vld [vmem:[%s1946 + $0x2f4] sm:$0xf]
        %v2205 = vld [vmem:[%s1946 + $0x2f8] sm:$0xf]
        %v2206 = vld [vmem:[%s1946 + $0x2fc] sm:$0xf]
        %v2207 = vld [vmem:[%s1946 + $0x300] sm:$0xf]
        %v2208 = vld [vmem:[%s1946 + $0x304] sm:$0xf]
        %v2209 = vld [vmem:[%s1946 + $0x308] sm:$0xf]
        %v2210 = vld [vmem:[%s1946 + $0x30c] sm:$0xf]
        %v2211 = vld [vmem:[%s1946 + $0x310] sm:$0xf]
        %v2212 = vld [vmem:[%s1946 + $0x314] sm:$0xf]
        %v2213 = vld [vmem:[%s1946 + $0x318] sm:$0xf]
        %v2214 = vld [vmem:[%s1946 + $0x31c] sm:$0xf]
        %v2215 = vld [vmem:[%s1946 + $0x320] sm:$0xf]
        %v2216 = vld [vmem:[%s1946 + $0x324] sm:$0xf]
        %v2217 = vld [vmem:[%s1946 + $0x328] sm:$0xf]
        %v2218 = vld [vmem:[%s1946 + $0x32c] sm:$0xf]
        %v2219 = vld [vmem:[%s1946 + $0x330] sm:$0xf]
        %v2220 = vld [vmem:[%s1946 + $0x334] sm:$0xf]
        %v2221 = vld [vmem:[%s1946 + $0x338] sm:$0xf]
        %v2222 = vld [vmem:[%s1946 + $0x33c] sm:$0xf]
        %v2223 = vld [vmem:[%s1946 + $0x340] sm:$0xf]
        %v2224 = vld [vmem:[%s1946 + $0x344] sm:$0xf]
        %v2225 = vld [vmem:[%s1946 + $0x348] sm:$0xf]
        %v2226 = vld [vmem:[%s1946 + $0x34c] sm:$0xf]
        %v2227 = vld [vmem:[%s1946 + $0x350] sm:$0xf]
        %v2228 = vld [vmem:[%s1946 + $0x354] sm:$0xf]
        %v2229 = vld [vmem:[%s1946 + $0x358] sm:$0xf]
        %v2230 = vld [vmem:[%s1946 + $0x35c] sm:$0xf]
        %v2231 = vld [vmem:[%s1946 + $0x360] sm:$0xf]
        %v2232 = vld [vmem:[%s1946 + $0x364] sm:$0xf]
        %v2233 = vld [vmem:[%s1946 + $0x368] sm:$0xf]
        %v2234 = vld [vmem:[%s1946 + $0x36c] sm:$0xf]
        %v2235 = vld [vmem:[%s1946 + $0x370] sm:$0xf]
        %v2236 = vld [vmem:[%s1946 + $0x374] sm:$0xf]
        %v2237 = vld [vmem:[%s1946 + $0x378] sm:$0xf]
        %v2238 = vld [vmem:[%s1946 + $0x37c] sm:$0xf]
        %v2239 = vld [vmem:[%s1946 + $0x380] sm:$0xf]
        %v2240 = vld [vmem:[%s1946 + $0x384] sm:$0xf]
        %v2241 = vld [vmem:[%s1946 + $0x388] sm:$0xf]
        %v2242 = vld [vmem:[%s1946 + $0x38c] sm:$0xf]
        %v2243 = vld [vmem:[%s1946 + $0x390] sm:$0xf]
        %v2244 = vld [vmem:[%s1946 + $0x394] sm:$0xf]
        %v2245 = vld [vmem:[%s1946 + $0x398] sm:$0xf]
        %v2246 = vld [vmem:[%s1946 + $0x39c] sm:$0xf]
        %v2247 = vld [vmem:[%s1946 + $0x3a0] sm:$0xf]
        %v2248 = vld [vmem:[%s1946 + $0x3a4] sm:$0xf]
        %v2249 = vld [vmem:[%s1946 + $0x3a8] sm:$0xf]
        %v2250 = vld [vmem:[%s1946 + $0x3ac] sm:$0xf]
        %v2251 = vld [vmem:[%s1946 + $0x3b0] sm:$0xf]
        %v2252 = vld [vmem:[%s1946 + $0x3b4] sm:$0xf]
        %v2253 = vld [vmem:[%s1946 + $0x3b8] sm:$0xf]
        %v2254 = vld [vmem:[%s1946 + $0x3bc] sm:$0xf]
        %v2255 = vld [vmem:[%s1946 + $0x3c0] sm:$0xf]
        %v2256 = vld [vmem:[%s1946 + $0x3c4] sm:$0xf]
        %v2257 = vld [vmem:[%s1946 + $0x3c8] sm:$0xf]
        %v2258 = vld [vmem:[%s1946 + $0x3cc] sm:$0xf]
        %v2259 = vld [vmem:[%s1946 + $0x3d0] sm:$0xf]
        %v2260 = vld [vmem:[%s1946 + $0x3d4] sm:$0xf]
        %v2261 = vld [vmem:[%s1946 + $0x3d8] sm:$0xf]
        %v2262 = vld [vmem:[%s1946 + $0x3dc] sm:$0xf]
        %v2263 = vld [vmem:[%s1946 + $0x3e0] sm:$0xf]
        %v2264 = vld [vmem:[%s1946 + $0x3e4] sm:$0xf]
        %v2265 = vld [vmem:[%s1946 + $0x3e8] sm:$0xf]
        %v2266 = vld [vmem:[%s1946 + $0x3ec] sm:$0xf]
        %v2267 = vld [vmem:[%s1946 + $0x3f0] sm:$0xf]
        %v2268 = vld [vmem:[%s1946 + $0x3f4] sm:$0xf]
        %v2269 = vld [vmem:[%s1946 + $0x3f8] sm:$0xf]
        %v2270 = vld [vmem:[%s1946 + $0x3fc] sm:$0xf]
        %v2271 = vld [vmem:[%s1946 + $0x400] sm:$0xf]
        %v2272 = vld [vmem:[%s1946 + $0x404] sm:$0xf]
        %v2273 = vld [vmem:[%s1946 + $0x408] sm:$0xf]
        %v2274 = vld [vmem:[%s1946 + $0x40c] sm:$0xf]
        %v2275 = vld [vmem:[%s1946 + $0x410] sm:$0xf]
        %v2276 = vld [vmem:[%s1946 + $0x414] sm:$0xf]
        %v2277 = vld [vmem:[%s1946 + $0x418] sm:$0xf]
        %v2278 = vld [vmem:[%s1946 + $0x41c] sm:$0xf]
        %v2279 = vld [vmem:[%s1946 + $0x420] sm:$0xf]
        %v2280 = vld [vmem:[%s1946 + $0x424] sm:$0xf]
        %v2281 = vld [vmem:[%s1946 + $0x428] sm:$0xf]
        %v2282 = vld [vmem:[%s1946 + $0x42c] sm:$0xf]
        %v2283 = vld [vmem:[%s1946 + $0x430] sm:$0xf]
        %v2284 = vld [vmem:[%s1946 + $0x434] sm:$0xf]
        %v2285 = vld [vmem:[%s1946 + $0x438] sm:$0xf]
        %v2286 = vld [vmem:[%s1946 + $0x43c] sm:$0xf]
        %v2287 = vld [vmem:[%s1946 + $0x440] sm:$0xf]
        %v2288 = vld [vmem:[%s1946 + $0x444] sm:$0xf]
        %v2289 = vld [vmem:[%s1946 + $0x448] sm:$0xf]
        %v2290 = vld [vmem:[%s1946 + $0x44c] sm:$0xf]
        %v2291 = vld [vmem:[%s1946 + $0x450] sm:$0xf]
        %v2292 = vld [vmem:[%s1946 + $0x454] sm:$0xf]
        %v2293 = vld [vmem:[%s1946 + $0x458] sm:$0xf]
        %v2294 = vld [vmem:[%s1946 + $0x45c] sm:$0xf]
        %v2295 = vld [vmem:[%s1946 + $0x460] sm:$0xf]
        %v2296 = vld [vmem:[%s1946 + $0x464] sm:$0xf]
        %v2297 = vld [vmem:[%s1946 + $0x468] sm:$0xf]
        %v2298 = vld [vmem:[%s1946 + $0x46c] sm:$0xf]
        %v2299 = vld [vmem:[%s1946 + $0x470] sm:$0xf]
        %v2300 = vld [vmem:[%s1946 + $0x474] sm:$0xf]
        %v2301 = vld [vmem:[%s1946 + $0x478] sm:$0xf]
        %v2302 = vld [vmem:[%s1946 + $0x47c] sm:$0xf]
        %v2303 = vld [vmem:[%s1946 + $0x480] sm:$0xf]
        %v2304 = vld [vmem:[%s1946 + $0x484] sm:$0xf]
        %v2305 = vld [vmem:[%s1946 + $0x488] sm:$0xf]
        %v2306 = vld [vmem:[%s1946 + $0x48c] sm:$0xf]
        %v2307 = vld [vmem:[%s1946 + $0x490] sm:$0xf]
        %v2308 = vld [vmem:[%s1946 + $0x494] sm:$0xf]
        %v2309 = vld [vmem:[%s1946 + $0x498] sm:$0xf]
        %v2310 = vld [vmem:[%s1946 + $0x49c] sm:$0xf]
        %v2311 = vld [vmem:[%s1946 + $0x4a0] sm:$0xf]
        %v2312 = vld [vmem:[%s1946 + $0x4a4] sm:$0xf]
        %v2313 = vld [vmem:[%s1946 + $0x4a8] sm:$0xf]
        %v2314 = vld [vmem:[%s1946 + $0x4ac] sm:$0xf]
        %v2315 = vld [vmem:[%s1946 + $0x4b0] sm:$0xf]
        %v2316 = vld [vmem:[%s1946 + $0x4b4] sm:$0xf]
        %v2317 = vld [vmem:[%s1946 + $0x4b8] sm:$0xf]
        %v2318 = vld [vmem:[%s1946 + $0x4bc] sm:$0xf]
        %v2319 = vld [vmem:[%s1946 + $0x4c0] sm:$0xf]
        %v2320 = vld [vmem:[%s1946 + $0x4c4] sm:$0xf]
        %v2321 = vld [vmem:[%s1946 + $0x4c8] sm:$0xf]
        %v2322 = vld [vmem:[%s1946 + $0x4cc] sm:$0xf]
        %v2323 = vld [vmem:[%s1946 + $0x4d0] sm:$0xf]
        %v2324 = vld [vmem:[%s1946 + $0x4d4] sm:$0xf]
        %v2325 = vld [vmem:[%s1946 + $0x4d8] sm:$0xf]
        %v2326 = vld [vmem:[%s1946 + $0x4dc] sm:$0xf]
        %v2327 = vld [vmem:[%s1946 + $0x4e0] sm:$0xf]
        %v2328 = vld [vmem:[%s1946 + $0x4e4] sm:$0xf]
        %v2329 = vld [vmem:[%s1946 + $0x4e8] sm:$0xf]
        %v2330 = vld [vmem:[%s1946 + $0x4ec] sm:$0xf]
        %v2331 = vld [vmem:[%s1946 + $0x4f0] sm:$0xf]
        %v2332 = vld [vmem:[%s1946 + $0x4f4] sm:$0xf]
        %v2333 = vld [vmem:[%s1946 + $0x4f8] sm:$0xf]
        %v2334 = vld [vmem:[%s1946 + $0x4fc] sm:$0xf]
        %v2335 = vld [vmem:[%s1946 + $0x500] sm:$0xf]
        %v2336 = vld [vmem:[%s1946 + $0x504] sm:$0xf]
        %v2337 = vld [vmem:[%s1946 + $0x508] sm:$0xf]
        %v2338 = vld [vmem:[%s1946 + $0x50c] sm:$0xf]
        %v2339 = vld [vmem:[%s1946 + $0x510] sm:$0xf]
        %v2340 = vld [vmem:[%s1946 + $0x514] sm:$0xf]
        %v2341 = vld [vmem:[%s1946 + $0x518] sm:$0xf]
        %v2342 = vld [vmem:[%s1946 + $0x51c] sm:$0xf]
        %v2343 = vld [vmem:[%s1946 + $0x520] sm:$0xf]
        %v2344 = vld [vmem:[%s1946 + $0x524] sm:$0xf]
        %v2345 = vld [vmem:[%s1946 + $0x528] sm:$0xf]
        %v2346 = vld [vmem:[%s1946 + $0x52c] sm:$0xf]
        %v2347 = vld [vmem:[%s1946 + $0x530] sm:$0xf]
        %v2348 = vld [vmem:[%s1946 + $0x534] sm:$0xf]
        %v2349 = vld [vmem:[%s1946 + $0x538] sm:$0xf]
        %v2350 = vld [vmem:[%s1946 + $0x53c] sm:$0xf]
        %v2351 = vld [vmem:[%s1946 + $0x540] sm:$0xf]
        %v2352 = vld [vmem:[%s1946 + $0x544] sm:$0xf]
        %v2353 = vld [vmem:[%s1946 + $0x548] sm:$0xf]
        %v2354 = vld [vmem:[%s1946 + $0x54c] sm:$0xf]
        %v2355 = vld [vmem:[%s1946 + $0x550] sm:$0xf]
        %v2356 = vld [vmem:[%s1946 + $0x554] sm:$0xf]
        %v2357 = vld [vmem:[%s1946 + $0x558] sm:$0xf]
        %v2358 = vld [vmem:[%s1946 + $0x55c] sm:$0xf]
        %v2359 = vld [vmem:[%s1946 + $0x560] sm:$0xf]
        %v2360 = vld [vmem:[%s1946 + $0x564] sm:$0xf]
        %v2361 = vld [vmem:[%s1946 + $0x568] sm:$0xf]
        %v2362 = vld [vmem:[%s1946 + $0x56c] sm:$0xf]
        %v2363 = vld [vmem:[%s1946 + $0x570] sm:$0xf]
        %v2364 = vld [vmem:[%s1946 + $0x574] sm:$0xf]
        %v2365 = vld [vmem:[%s1946 + $0x578] sm:$0xf]
        %v2366 = vld [vmem:[%s1946 + $0x57c] sm:$0xf]
        %v2367 = vld [vmem:[%s1946 + $0x580] sm:$0xf]
        %v2368 = vld [vmem:[%s1946 + $0x584] sm:$0xf]
        %v2369 = vld [vmem:[%s1946 + $0x588] sm:$0xf]
        %v2370 = vld [vmem:[%s1946 + $0x58c] sm:$0xf]
        %v2371 = vld [vmem:[%s1946 + $0x590] sm:$0xf]
        %v2372 = vld [vmem:[%s1946 + $0x594] sm:$0xf]
        %v2373 = vld [vmem:[%s1946 + $0x598] sm:$0xf]
        %v2374 = vld [vmem:[%s1946 + $0x59c] sm:$0xf]
        %v2375 = vld [vmem:[%s1946 + $0x5a0] sm:$0xf]
        %v2376 = vld [vmem:[%s1946 + $0x5a4] sm:$0xf]
        %v2377 = vld [vmem:[%s1946 + $0x5a8] sm:$0xf]
        %v2378 = vld [vmem:[%s1946 + $0x5ac] sm:$0xf]
        %v2379 = vld [vmem:[%s1946 + $0x5b0] sm:$0xf]
        %v2380 = vld [vmem:[%s1946 + $0x5b4] sm:$0xf]
        %v2381 = vld [vmem:[%s1946 + $0x5b8] sm:$0xf]
        %v2382 = vld [vmem:[%s1946 + $0x5bc] sm:$0xf]
        %v2383 = vld [vmem:[%s1946 + $0x5c0] sm:$0xf]
        %v2384 = vld [vmem:[%s1946 + $0x5c4] sm:$0xf]
        %v2385 = vld [vmem:[%s1946 + $0x5c8] sm:$0xf]
        %v2386 = vld [vmem:[%s1946 + $0x5cc] sm:$0xf]
        %v2387 = vld [vmem:[%s1946 + $0x5d0] sm:$0xf]
        %v2388 = vld [vmem:[%s1946 + $0x5d4] sm:$0xf]
        %v2389 = vld [vmem:[%s1946 + $0x5d8] sm:$0xf]
        %v2390 = vld [vmem:[%s1946 + $0x5dc] sm:$0xf]
        %v2391 = vld [vmem:[%s1946 + $0x5e0] sm:$0xf]
        %v2392 = vld [vmem:[%s1946 + $0x5e4] sm:$0xf]
        %v2393 = vld [vmem:[%s1946 + $0x5e8] sm:$0xf]
        %v2394 = vld [vmem:[%s1946 + $0x5ec] sm:$0xf]
        %v2395 = vld [vmem:[%s1946 + $0x5f0] sm:$0xf]
        %v2396 = vld [vmem:[%s1946 + $0x5f4] sm:$0xf]
        %v2397 = vld [vmem:[%s1946 + $0x5f8] sm:$0xf]
        %v2398 = vld [vmem:[%s1946 + $0x5fc] sm:$0xf]
        %v2399 = vld [vmem:[%s1946 + $0x600] sm:$0xf]
        %v2400 = vld [vmem:[%s1946 + $0x604] sm:$0xf]
        %v2401 = vld [vmem:[%s1946 + $0x608] sm:$0xf]
        %v2402 = vld [vmem:[%s1946 + $0x60c] sm:$0xf]
        %v2403 = vld [vmem:[%s1946 + $0x610] sm:$0xf]
        %v2404 = vld [vmem:[%s1946 + $0x614] sm:$0xf]
        %v2405 = vld [vmem:[%s1946 + $0x618] sm:$0xf]
        %v2406 = vld [vmem:[%s1946 + $0x61c] sm:$0xf]
        %v2407 = vld [vmem:[%s1946 + $0x620] sm:$0xf]
        %v2408 = vld [vmem:[%s1946 + $0x624] sm:$0xf]
        %v2409 = vld [vmem:[%s1946 + $0x628] sm:$0xf]
        %v2410 = vld [vmem:[%s1946 + $0x62c] sm:$0xf]
        %v2411 = vld [vmem:[%s1946 + $0x630] sm:$0xf]
        %v2412 = vld [vmem:[%s1946 + $0x634] sm:$0xf]
        %v2413 = vld [vmem:[%s1946 + $0x638] sm:$0xf]
        %v2414 = vld [vmem:[%s1946 + $0x63c] sm:$0xf]
        %v2415 = vld [vmem:[%s1946 + $0x640] sm:$0xf]
        %v2416 = vld [vmem:[%s1946 + $0x644] sm:$0xf]
        %v2417 = vld [vmem:[%s1946 + $0x648] sm:$0xf]
        %v2418 = vld [vmem:[%s1946 + $0x64c] sm:$0xf]
        %v2419 = vld [vmem:[%s1946 + $0x650] sm:$0xf]
        %v2420 = vld [vmem:[%s1946 + $0x654] sm:$0xf]
        %v2421 = vld [vmem:[%s1946 + $0x658] sm:$0xf]
        %v2422 = vld [vmem:[%s1946 + $0x65c] sm:$0xf]
        %v2423 = vld [vmem:[%s1946 + $0x660] sm:$0xf]
        %v2424 = vld [vmem:[%s1946 + $0x664] sm:$0xf]
        %v2425 = vld [vmem:[%s1946 + $0x668] sm:$0xf]
        %v2426 = vld [vmem:[%s1946 + $0x66c] sm:$0xf]
        %v2427 = vld [vmem:[%s1946 + $0x670] sm:$0xf]
        %v2428 = vld [vmem:[%s1946 + $0x674] sm:$0xf]
        %v2429 = vld [vmem:[%s1946 + $0x678] sm:$0xf]
        %v2430 = vld [vmem:[%s1946 + $0x67c] sm:$0xf]
        %v2431 = vld [vmem:[%s1946 + $0x680] sm:$0xf]
        %v2432 = vld [vmem:[%s1946 + $0x684] sm:$0xf]
        %v2433 = vld [vmem:[%s1946 + $0x688] sm:$0xf]
        %v2434 = vld [vmem:[%s1946 + $0x68c] sm:$0xf]
        %v2435 = vld [vmem:[%s1946 + $0x690] sm:$0xf]
        %v2436 = vld [vmem:[%s1946 + $0x694] sm:$0xf]
        %v2437 = vld [vmem:[%s1946 + $0x698] sm:$0xf]
        %v2438 = vld [vmem:[%s1946 + $0x69c] sm:$0xf]
        %v2439 = vld [vmem:[%s1946 + $0x6a0] sm:$0xf]
        %v2440 = vld [vmem:[%s1946 + $0x6a4] sm:$0xf]
        %v2441 = vld [vmem:[%s1946 + $0x6a8] sm:$0xf]
        %v2442 = vld [vmem:[%s1946 + $0x6ac] sm:$0xf]
        %v2443 = vld [vmem:[%s1946 + $0x6b0] sm:$0xf]
        %v2444 = vld [vmem:[%s1946 + $0x6b4] sm:$0xf]
        %v2445 = vld [vmem:[%s1946 + $0x6b8] sm:$0xf]
        %v2446 = vld [vmem:[%s1946 + $0x6bc] sm:$0xf]
        %v2447 = vld [vmem:[%s1984] sm:$0x1]
        %v2449 = vlaneseq
        %v2450 = vshrl.u32 %v2449, 7
        %v2451 = vsub.s32 0, %v2450
        %v2452 = vrot.slane %v2447, %v2451
        %v2482 = vunpack.c.l.b16 %v1987
        %v2483 = vunpack.c.h.b16 %v1987
        %v2484 = vunpack.c.l.b16 %v1988
        %v2485 = vunpack.c.h.b16 %v1988
        %v2486 = vunpack.c.l.b16 %v1989
        %v2487 = vunpack.c.h.b16 %v1989
        %v2488 = vunpack.c.l.b16 %v1990
        %v2489 = vunpack.c.h.b16 %v1990
        %v2490 = vunpack.c.l.b16 %v1991
        %v2491 = vunpack.c.h.b16 %v1991
        %v2492 = vunpack.c.l.b16 %v1992
        %v2493 = vunpack.c.h.b16 %v1992
        %v2494 = vunpack.c.l.b16 %v1993
        %v2495 = vunpack.c.h.b16 %v1993
        %v2496 = vunpack.c.l.b16 %v1994
        %v2497 = vunpack.c.h.b16 %v1994
        %v2498 = vunpack.c.l.b16 %v1995
        %v2499 = vunpack.c.h.b16 %v1995
        %v2500 = vunpack.c.l.b16 %v1996
        %v2501 = vunpack.c.h.b16 %v1996
        %v2502 = vunpack.c.l.b16 %v1997
        %v2503 = vunpack.c.h.b16 %v1997
        %v2504 = vunpack.c.l.b16 %v1998
        %v2505 = vunpack.c.h.b16 %v1998
        %v2506 = vunpack.c.l.b16 %v1999
        %v2507 = vunpack.c.h.b16 %v1999
        %v2508 = vunpack.c.l.b16 %v2000
        %v2509 = vunpack.c.l.b16 %v2001
        %v2510 = vunpack.c.h.b16 %v2001
        %v2511 = vunpack.c.l.b16 %v2002
        %v2512 = vunpack.c.h.b16 %v2002
        %v2513 = vunpack.c.l.b16 %v2003
        %v2514 = vunpack.c.h.b16 %v2003
        %v2515 = vunpack.c.l.b16 %v2004
        %v2516 = vunpack.c.h.b16 %v2004
        %v2517 = vunpack.c.l.b16 %v2005
        %v2518 = vunpack.c.h.b16 %v2005
        %v2519 = vunpack.c.l.b16 %v2006
        %v2520 = vunpack.c.h.b16 %v2006
        %v2521 = vunpack.c.l.b16 %v2007
        %v2522 = vunpack.c.h.b16 %v2007
        %v2523 = vunpack.c.l.b16 %v2008
        %v2524 = vunpack.c.h.b16 %v2008
        %v2525 = vunpack.c.l.b16 %v2009
        %v2526 = vunpack.c.h.b16 %v2009
        %v2527 = vunpack.c.l.b16 %v2010
        %v2528 = vunpack.c.h.b16 %v2010
        %v2529 = vunpack.c.l.b16 %v2011
        %v2530 = vunpack.c.h.b16 %v2011
        %v2531 = vunpack.c.l.b16 %v2012
        %v2532 = vunpack.c.h.b16 %v2012
        %v2533 = vunpack.c.l.b16 %v2013
        %v2534 = vunpack.c.h.b16 %v2013
        %v2535 = vunpack.c.l.b16 %v2014
        %v2536 = vpack.c.b16 %v2509, %v2482
        %v2537 = vpack.c.b16 %v2510, %v2483
        %v2538 = vpack.c.b16 %v2511, %v2484
        %v2539 = vpack.c.b16 %v2512, %v2485
        %v2540 = vpack.c.b16 %v2513, %v2486
        %v2541 = vpack.c.b16 %v2514, %v2487
        %v2542 = vpack.c.b16 %v2515, %v2488
        %v2543 = vpack.c.b16 %v2516, %v2489
        %v2544 = vpack.c.b16 %v2517, %v2490
        %v2545 = vpack.c.b16 %v2518, %v2491
        %v2546 = vpack.c.b16 %v2519, %v2492
        %v2547 = vpack.c.b16 %v2520, %v2493
        %v2548 = vpack.c.b16 %v2521, %v2494
        %v2549 = vpack.c.b16 %v2522, %v2495
        %v2550 = vpack.c.b16 %v2523, %v2496
        %v2551 = vpack.c.b16 %v2524, %v2497
        %v2552 = vpack.c.b16 %v2525, %v2498
        %v2553 = vpack.c.b16 %v2526, %v2499
        %v2554 = vpack.c.b16 %v2527, %v2500
        %v2555 = vpack.c.b16 %v2528, %v2501
        %v2556 = vpack.c.b16 %v2529, %v2502
        %v2557 = vpack.c.b16 %v2530, %v2503
        %v2558 = vpack.c.b16 %v2531, %v2504
        %v2559 = vpack.c.b16 %v2532, %v2505
        %v2560 = vpack.c.b16 %v2533, %v2506
        %v2561 = vpack.c.b16 %v2534, %v2507
        %v2562 = vpack.c.b16 %v2535, %v2508
        %v3022 = vunpack.c.l.b16 %v2015
        %v3023 = vunpack.c.l.b16 %v2016
        %v3024 = vunpack.c.l.b16 %v2017
        %v3025 = vunpack.c.l.b16 %v2018
        %v3026 = vunpack.c.l.b16 %v2019
        %v3027 = vunpack.c.l.b16 %v2020
        %v3028 = vunpack.c.l.b16 %v2021
        %v3029 = vunpack.c.l.b16 %v2022
        %v3030 = vunpack.c.l.b16 %v2023
        %v3031 = vunpack.c.l.b16 %v2024
        %v3032 = vunpack.c.l.b16 %v2025
        %v3033 = vunpack.c.l.b16 %v2026
        %v3034 = vunpack.c.l.b16 %v2027
        %v3035 = vunpack.c.l.b16 %v2028
        %v3036 = vunpack.c.l.b16 %v2029
        %v3037 = vunpack.c.l.b16 %v2030
        %v3038 = vunpack.c.l.b16 %v2031
        %v3039 = vunpack.c.l.b16 %v2032
        %v3040 = vunpack.c.l.b16 %v2033
        %v3041 = vunpack.c.l.b16 %v2034
        %v3042 = vunpack.c.l.b16 %v2035
        %v3043 = vunpack.c.l.b16 %v2036
        %v3044 = vunpack.c.l.b16 %v2037
        %v3045 = vunpack.c.l.b16 %v2038
        %v3046 = vunpack.c.l.b16 %v2039
        %v3047 = vunpack.c.l.b16 %v2040
        %v3048 = vunpack.c.l.b16 %v2041
        %v3049 = vunpack.c.l.b16 %v2042
        %v3050 = vunpack.c.l.b16 %v2043
        %v3051 = vunpack.c.l.b16 %v2044
        %v3052 = vunpack.c.l.b16 %v2045
        %v3053 = vunpack.c.l.b16 %v2046
        %v3054 = vunpack.c.l.b16 %v2047
        %v3055 = vunpack.c.l.b16 %v2048
        %v3056 = vunpack.c.l.b16 %v2049
        %v3057 = vunpack.c.l.b16 %v2050
        %v3058 = vunpack.c.l.b16 %v2051
        %v3059 = vunpack.c.l.b16 %v2052
        %v3060 = vunpack.c.l.b16 %v2053
        %v3061 = vunpack.c.l.b16 %v2054
        %v3062 = vunpack.c.l.b16 %v2055
        %v3063 = vunpack.c.l.b16 %v2056
        %v3064 = vunpack.c.l.b16 %v2057
        %v3065 = vunpack.c.l.b16 %v2058
        %v3066 = vunpack.c.l.b16 %v2059
        %v3067 = vunpack.c.l.b16 %v2060
        %v3068 = vunpack.c.l.b16 %v2061
        %v3069 = vunpack.c.l.b16 %v2062
        %v3070 = vunpack.c.l.b16 %v2063
        %v3071 = vunpack.c.l.b16 %v2064
        %v3072 = vunpack.c.l.b16 %v2065
        %v3073 = vunpack.c.l.b16 %v2066
        %v3074 = vunpack.c.l.b16 %v2067
        %v3075 = vunpack.c.l.b16 %v2068
        %v3076 = vunpack.c.l.b16 %v2069
        %v3077 = vunpack.c.l.b16 %v2070
        %v3078 = vunpack.c.l.b16 %v2071
        %v3079 = vunpack.c.l.b16 %v2072
        %v3080 = vunpack.c.l.b16 %v2073
        %v3081 = vunpack.c.l.b16 %v2074
        %v3082 = vunpack.c.l.b16 %v2075
        %v3083 = vunpack.c.l.b16 %v2076
        %v3084 = vunpack.c.l.b16 %v2077
        %v3085 = vunpack.c.l.b16 %v2078
        %v3086 = vunpack.c.l.b16 %v2079
        %v3087 = vunpack.c.l.b16 %v2080
        %v3088 = vunpack.c.l.b16 %v2081
        %v3089 = vunpack.c.l.b16 %v2082
        %v3090 = vunpack.c.l.b16 %v2083
        %v3091 = vunpack.c.l.b16 %v2084
        %v3092 = vunpack.c.l.b16 %v2085
        %v3093 = vunpack.c.l.b16 %v2086
        %v3094 = vunpack.c.l.b16 %v2087
        %v3095 = vunpack.c.l.b16 %v2088
        %v3096 = vunpack.c.l.b16 %v2089
        %v3097 = vunpack.c.l.b16 %v2090
        %v3098 = vunpack.c.l.b16 %v2091
        %v3099 = vunpack.c.l.b16 %v2092
        %v3100 = vunpack.c.l.b16 %v2093
        %v3101 = vunpack.c.l.b16 %v2094
        %v3102 = vunpack.c.l.b16 %v2095
        %v3103 = vunpack.c.l.b16 %v2096
        %v3104 = vunpack.c.l.b16 %v2097
        %v3105 = vunpack.c.l.b16 %v2098
        %v3106 = vunpack.c.l.b16 %v2099
        %v3107 = vunpack.c.l.b16 %v2100
        %v3108 = vunpack.c.l.b16 %v2101
        %v3109 = vunpack.c.l.b16 %v2102
        %v3110 = vunpack.c.l.b16 %v2103
        %v3111 = vunpack.c.l.b16 %v2104
        %v3112 = vunpack.c.l.b16 %v2105
        %v3113 = vunpack.c.l.b16 %v2106
        %v3114 = vunpack.c.l.b16 %v2107
        %v3115 = vunpack.c.l.b16 %v2108
        %v3116 = vunpack.c.l.b16 %v2109
        %v3117 = vunpack.c.l.b16 %v2110
        %v3118 = vunpack.c.l.b16 %v2111
        %v3119 = vunpack.c.l.b16 %v2112
        %v3120 = vunpack.c.l.b16 %v2113
        %v3121 = vunpack.c.l.b16 %v2114
        %v3122 = vunpack.c.l.b16 %v2115
        %v3123 = vunpack.c.l.b16 %v2116
        %v3124 = vunpack.c.l.b16 %v2117
        %v3125 = vunpack.c.l.b16 %v2118
        %v3126 = vunpack.c.l.b16 %v2119
        %v3127 = vunpack.c.l.b16 %v2120
        %v3128 = vunpack.c.l.b16 %v2121
        %v3129 = vunpack.c.l.b16 %v2122
        %v3130 = vunpack.c.l.b16 %v2123
        %v3131 = vunpack.c.l.b16 %v2124
        %v3132 = vunpack.c.l.b16 %v2125
        %v3133 = vunpack.c.l.b16 %v2126
        %v3134 = vunpack.c.l.b16 %v2127
        %v3135 = vunpack.c.l.b16 %v2128
        %v3136 = vunpack.c.l.b16 %v2129
        %v3137 = vunpack.c.l.b16 %v2130
        %v3138 = vunpack.c.l.b16 %v2131
        %v3139 = vunpack.c.l.b16 %v2132
        %v3140 = vunpack.c.l.b16 %v2133
        %v3141 = vunpack.c.l.b16 %v2134
        %v3142 = vunpack.c.l.b16 %v2135
        %v3143 = vunpack.c.l.b16 %v2136
        %v3144 = vunpack.c.l.b16 %v2137
        %v3145 = vunpack.c.l.b16 %v2138
        %v3146 = vunpack.c.l.b16 %v2139
        %v3147 = vunpack.c.l.b16 %v2140
        %v3148 = vunpack.c.l.b16 %v2141
        %v3149 = vunpack.c.l.b16 %v2142
        %v3150 = vunpack.c.l.b16 %v2143
        %v3151 = vunpack.c.l.b16 %v2144
        %v3152 = vunpack.c.l.b16 %v2145
        %v3153 = vunpack.c.l.b16 %v2146
        %v3154 = vunpack.c.l.b16 %v2147
        %v3155 = vunpack.c.l.b16 %v2148
        %v3156 = vunpack.c.l.b16 %v2149
        %v3157 = vunpack.c.l.b16 %v2150
        %v3158 = vunpack.c.l.b16 %v2151
        %v3159 = vunpack.c.l.b16 %v2152
        %v3160 = vunpack.c.l.b16 %v2153
        %v3161 = vunpack.c.l.b16 %v2154
        %v3162 = vunpack.c.l.b16 %v2155
        %v3163 = vunpack.c.l.b16 %v2156
        %v3164 = vunpack.c.l.b16 %v2157
        %v3165 = vunpack.c.l.b16 %v2158
        %v3166 = vunpack.c.l.b16 %v2159
        %v3167 = vunpack.c.l.b16 %v2160
        %v3168 = vunpack.c.l.b16 %v2161
        %v3169 = vunpack.c.l.b16 %v2162
        %v3170 = vunpack.c.l.b16 %v2163
        %v3171 = vunpack.c.l.b16 %v2164
        %v3172 = vunpack.c.l.b16 %v2165
        %v3173 = vunpack.c.l.b16 %v2166
        %v3174 = vunpack.c.l.b16 %v2167
        %v3175 = vunpack.c.l.b16 %v2168
        %v3176 = vunpack.c.l.b16 %v2169
        %v3177 = vunpack.c.l.b16 %v2170
        %v3178 = vunpack.c.l.b16 %v2171
        %v3179 = vunpack.c.l.b16 %v2172
        %v3180 = vunpack.c.l.b16 %v2173
        %v3181 = vunpack.c.l.b16 %v2174
        %v3182 = vunpack.c.l.b16 %v2175
        %v3183 = vunpack.c.l.b16 %v2176
        %v3184 = vunpack.c.l.b16 %v2177
        %v3185 = vunpack.c.l.b16 %v2178
        %v3186 = vunpack.c.l.b16 %v2179
        %v3187 = vunpack.c.l.b16 %v2180
        %v3188 = vunpack.c.l.b16 %v2181
        %v3189 = vunpack.c.l.b16 %v2182
        %v3190 = vunpack.c.l.b16 %v2183
        %v3191 = vunpack.c.l.b16 %v2184
        %v3192 = vunpack.c.l.b16 %v2185
        %v3193 = vunpack.c.l.b16 %v2186
        %v3194 = vunpack.c.l.b16 %v2187
        %v3195 = vunpack.c.l.b16 %v2188
        %v3196 = vunpack.c.l.b16 %v2189
        %v3197 = vunpack.c.l.b16 %v2190
        %v3198 = vunpack.c.l.b16 %v2191
        %v3199 = vunpack.c.l.b16 %v2192
        %v3200 = vunpack.c.l.b16 %v2193
        %v3201 = vunpack.c.l.b16 %v2194
        %v3202 = vunpack.c.l.b16 %v2195
        %v3203 = vunpack.c.l.b16 %v2196
        %v3204 = vunpack.c.l.b16 %v2197
        %v3205 = vunpack.c.l.b16 %v2198
        %v3206 = vunpack.c.l.b16 %v2199
        %v3207 = vunpack.c.l.b16 %v2200
        %v3208 = vunpack.c.l.b16 %v2201
        %v3209 = vunpack.c.l.b16 %v2202
        %v3210 = vunpack.c.l.b16 %v2203
        %v3211 = vunpack.c.l.b16 %v2204
        %v3212 = vunpack.c.l.b16 %v2205
        %v3213 = vunpack.c.l.b16 %v2206
        %v3214 = vunpack.c.l.b16 %v2207
        %v3215 = vunpack.c.l.b16 %v2208
        %v3216 = vunpack.c.l.b16 %v2209
        %v3217 = vunpack.c.l.b16 %v2210
        %v3218 = vunpack.c.l.b16 %v2211
        %v3219 = vunpack.c.l.b16 %v2212
        %v3220 = vunpack.c.l.b16 %v2213
        %v3221 = vunpack.c.l.b16 %v2214
        %v3222 = vunpack.c.l.b16 %v2215
        %v3223 = vunpack.c.l.b16 %v2216
        %v3224 = vunpack.c.l.b16 %v2217
        %v3225 = vunpack.c.l.b16 %v2218
        %v3226 = vunpack.c.l.b16 %v2219
        %v3227 = vunpack.c.l.b16 %v2220
        %v3228 = vunpack.c.l.b16 %v2221
        %v3229 = vunpack.c.l.b16 %v2222
        %v3230 = vunpack.c.l.b16 %v2223
        %v3231 = vunpack.c.l.b16 %v2224
        %v3232 = vunpack.c.l.b16 %v2225
        %v3233 = vunpack.c.l.b16 %v2226
        %v3234 = vunpack.c.l.b16 %v2227
        %v3235 = vunpack.c.l.b16 %v2228
        %v3236 = vunpack.c.l.b16 %v2229
        %v3237 = vunpack.c.l.b16 %v2230
        %v3238 = vunpack.c.l.b16 %v2231
        %v3239 = vunpack.c.l.b16 %v2232
        %v3240 = vunpack.c.l.b16 %v2233
        %v3241 = vunpack.c.l.b16 %v2234
        %v3242 = vunpack.c.l.b16 %v2235
        %v3243 = vunpack.c.l.b16 %v2236
        %v3244 = vunpack.c.l.b16 %v2237
        %v3245 = vunpack.c.l.b16 %v2238
        %v3246 = vunpack.c.l.b16 %v2239
        %v3247 = vunpack.c.l.b16 %v2240
        %v3248 = vunpack.c.l.b16 %v2241
        %v3249 = vunpack.c.l.b16 %v2242
        %v3250 = vunpack.c.l.b16 %v2243
        %v3251 = vunpack.c.l.b16 %v2244
        %v3252 = vunpack.c.l.b16 %v2245
        %v3253 = vunpack.c.l.b16 %v2246
        %v3254 = vunpack.c.l.b16 %v2247
        %v3255 = vunpack.c.l.b16 %v2248
        %v3256 = vunpack.c.l.b16 %v2249
        %v3257 = vunpack.c.l.b16 %v2250
        %v3258 = vunpack.c.l.b16 %v2251
        %v3259 = vunpack.c.l.b16 %v2252
        %v3260 = vunpack.c.l.b16 %v2253
        %v3261 = vunpack.c.l.b16 %v2254
        %v3262 = vunpack.c.l.b16 %v2255
        %v3263 = vunpack.c.l.b16 %v2256
        %v3264 = vunpack.c.l.b16 %v2257
        %v3265 = vunpack.c.l.b16 %v2258
        %v3266 = vunpack.c.l.b16 %v2259
        %v3267 = vunpack.c.l.b16 %v2260
        %v3268 = vunpack.c.l.b16 %v2261
        %v3269 = vunpack.c.l.b16 %v2262
        %v3270 = vunpack.c.l.b16 %v2263
        %v3271 = vunpack.c.l.b16 %v2264
        %v3272 = vunpack.c.l.b16 %v2265
        %v3273 = vunpack.c.l.b16 %v2266
        %v3274 = vunpack.c.l.b16 %v2267
        %v3275 = vunpack.c.l.b16 %v2268
        %v3276 = vunpack.c.l.b16 %v2269
        %v3277 = vunpack.c.l.b16 %v2270
        %v3278 = vunpack.c.l.b16 %v2271
        %v3279 = vunpack.c.l.b16 %v2272
        %v3280 = vunpack.c.l.b16 %v2273
        %v3281 = vunpack.c.l.b16 %v2274
        %v3282 = vunpack.c.l.b16 %v2275
        %v3283 = vunpack.c.l.b16 %v2276
        %v3284 = vunpack.c.l.b16 %v2277
        %v3285 = vunpack.c.l.b16 %v2278
        %v3286 = vunpack.c.l.b16 %v2279
        %v3287 = vunpack.c.l.b16 %v2280
        %v3288 = vunpack.c.l.b16 %v2281
        %v3289 = vunpack.c.l.b16 %v2282
        %v3290 = vunpack.c.l.b16 %v2283
        %v3291 = vunpack.c.l.b16 %v2284
        %v3292 = vunpack.c.l.b16 %v2285
        %v3293 = vunpack.c.l.b16 %v2286
        %v3294 = vunpack.c.l.b16 %v2287
        %v3295 = vunpack.c.l.b16 %v2288
        %v3296 = vunpack.c.l.b16 %v2289
        %v3297 = vunpack.c.l.b16 %v2290
        %v3298 = vunpack.c.l.b16 %v2291
        %v3299 = vunpack.c.l.b16 %v2292
        %v3300 = vunpack.c.l.b16 %v2293
        %v3301 = vunpack.c.l.b16 %v2294
        %v3302 = vunpack.c.l.b16 %v2295
        %v3303 = vunpack.c.l.b16 %v2296
        %v3304 = vunpack.c.l.b16 %v2297
        %v3305 = vunpack.c.l.b16 %v2298
        %v3306 = vunpack.c.l.b16 %v2299
        %v3307 = vunpack.c.l.b16 %v2300
        %v3308 = vunpack.c.l.b16 %v2301
        %v3309 = vunpack.c.l.b16 %v2302
        %v3310 = vunpack.c.l.b16 %v2303
        %v3311 = vunpack.c.l.b16 %v2304
        %v3312 = vunpack.c.l.b16 %v2305
        %v3313 = vunpack.c.l.b16 %v2306
        %v3314 = vunpack.c.l.b16 %v2307
        %v3315 = vunpack.c.l.b16 %v2308
        %v3316 = vunpack.c.l.b16 %v2309
        %v3317 = vunpack.c.l.b16 %v2310
        %v3318 = vunpack.c.l.b16 %v2311
        %v3319 = vunpack.c.l.b16 %v2312
        %v3320 = vunpack.c.l.b16 %v2313
        %v3321 = vunpack.c.l.b16 %v2314
        %v3322 = vunpack.c.l.b16 %v2315
        %v3323 = vunpack.c.l.b16 %v2316
        %v3324 = vunpack.c.l.b16 %v2317
        %v3325 = vunpack.c.l.b16 %v2318
        %v3326 = vunpack.c.l.b16 %v2319
        %v3327 = vunpack.c.l.b16 %v2320
        %v3328 = vunpack.c.l.b16 %v2321
        %v3329 = vunpack.c.l.b16 %v2322
        %v3330 = vunpack.c.l.b16 %v2323
        %v3331 = vunpack.c.l.b16 %v2324
        %v3332 = vunpack.c.l.b16 %v2325
        %v3333 = vunpack.c.l.b16 %v2326
        %v3334 = vunpack.c.l.b16 %v2327
        %v3335 = vunpack.c.l.b16 %v2328
        %v3336 = vunpack.c.l.b16 %v2329
        %v3337 = vunpack.c.l.b16 %v2330
        %v3338 = vunpack.c.l.b16 %v2331
        %v3339 = vunpack.c.l.b16 %v2332
        %v3340 = vunpack.c.l.b16 %v2333
        %v3341 = vunpack.c.l.b16 %v2334
        %v3342 = vunpack.c.l.b16 %v2335
        %v3343 = vunpack.c.l.b16 %v2336
        %v3344 = vunpack.c.l.b16 %v2337
        %v3345 = vunpack.c.l.b16 %v2338
        %v3346 = vunpack.c.l.b16 %v2339
        %v3347 = vunpack.c.l.b16 %v2340
        %v3348 = vunpack.c.l.b16 %v2341
        %v3349 = vunpack.c.l.b16 %v2342
        %v3350 = vunpack.c.l.b16 %v2343
        %v3351 = vunpack.c.l.b16 %v2344
        %v3352 = vunpack.c.l.b16 %v2345
        %v3353 = vunpack.c.l.b16 %v2346
        %v3354 = vunpack.c.l.b16 %v2347
        %v3355 = vunpack.c.l.b16 %v2348
        %v3356 = vunpack.c.l.b16 %v2349
        %v3357 = vunpack.c.l.b16 %v2350
        %v3358 = vunpack.c.l.b16 %v2351
        %v3359 = vunpack.c.l.b16 %v2352
        %v3360 = vunpack.c.l.b16 %v2353
        %v3361 = vunpack.c.l.b16 %v2354
        %v3362 = vunpack.c.l.b16 %v2355
        %v3363 = vunpack.c.l.b16 %v2356
        %v3364 = vunpack.c.l.b16 %v2357
        %v3365 = vunpack.c.l.b16 %v2358
        %v3366 = vunpack.c.l.b16 %v2359
        %v3367 = vunpack.c.l.b16 %v2360
        %v3368 = vunpack.c.l.b16 %v2361
        %v3369 = vunpack.c.l.b16 %v2362
        %v3370 = vunpack.c.l.b16 %v2363
        %v3371 = vunpack.c.l.b16 %v2364
        %v3372 = vunpack.c.l.b16 %v2365
        %v3373 = vunpack.c.l.b16 %v2366
        %v3374 = vunpack.c.l.b16 %v2367
        %v3375 = vunpack.c.l.b16 %v2368
        %v3376 = vunpack.c.l.b16 %v2369
        %v3377 = vunpack.c.l.b16 %v2370
        %v3378 = vunpack.c.l.b16 %v2371
        %v3379 = vunpack.c.l.b16 %v2372
        %v3380 = vunpack.c.l.b16 %v2373
        %v3381 = vunpack.c.l.b16 %v2374
        %v3382 = vunpack.c.l.b16 %v2375
        %v3383 = vunpack.c.l.b16 %v2376
        %v3384 = vunpack.c.l.b16 %v2377
        %v3385 = vunpack.c.l.b16 %v2378
        %v3386 = vunpack.c.l.b16 %v2379
        %v3387 = vunpack.c.l.b16 %v2380
        %v3388 = vunpack.c.l.b16 %v2381
        %v3389 = vunpack.c.l.b16 %v2382
        %v3390 = vunpack.c.l.b16 %v2383
        %v3391 = vunpack.c.l.b16 %v2384
        %v3392 = vunpack.c.l.b16 %v2385
        %v3393 = vunpack.c.l.b16 %v2386
        %v3394 = vunpack.c.l.b16 %v2387
        %v3395 = vunpack.c.l.b16 %v2388
        %v3396 = vunpack.c.l.b16 %v2389
        %v3397 = vunpack.c.l.b16 %v2390
        %v3398 = vunpack.c.l.b16 %v2391
        %v3399 = vunpack.c.l.b16 %v2392
        %v3400 = vunpack.c.l.b16 %v2393
        %v3401 = vunpack.c.l.b16 %v2394
        %v3402 = vunpack.c.l.b16 %v2395
        %v3403 = vunpack.c.l.b16 %v2396
        %v3404 = vunpack.c.l.b16 %v2397
        %v3405 = vunpack.c.l.b16 %v2398
        %v3406 = vunpack.c.l.b16 %v2399
        %v3407 = vunpack.c.l.b16 %v2400
        %v3408 = vunpack.c.l.b16 %v2401
        %v3409 = vunpack.c.l.b16 %v2402
        %v3410 = vunpack.c.l.b16 %v2403
        %v3411 = vunpack.c.l.b16 %v2404
        %v3412 = vunpack.c.l.b16 %v2405
        %v3413 = vunpack.c.l.b16 %v2406
        %v3414 = vunpack.c.l.b16 %v2407
        %v3415 = vunpack.c.l.b16 %v2408
        %v3416 = vunpack.c.l.b16 %v2409
        %v3417 = vunpack.c.l.b16 %v2410
        %v3418 = vunpack.c.l.b16 %v2411
        %v3419 = vunpack.c.l.b16 %v2412
        %v3420 = vunpack.c.l.b16 %v2413
        %v3421 = vunpack.c.l.b16 %v2414
        %v3422 = vunpack.c.l.b16 %v2415
        %v3423 = vunpack.c.l.b16 %v2416
        %v3424 = vunpack.c.l.b16 %v2417
        %v3425 = vunpack.c.l.b16 %v2418
        %v3426 = vunpack.c.l.b16 %v2419
        %v3427 = vunpack.c.l.b16 %v2420
        %v3428 = vunpack.c.l.b16 %v2421
        %v3429 = vunpack.c.l.b16 %v2422
        %v3430 = vunpack.c.l.b16 %v2423
        %v3431 = vunpack.c.l.b16 %v2424
        %v3432 = vunpack.c.l.b16 %v2425
        %v3433 = vunpack.c.l.b16 %v2426
        %v3434 = vunpack.c.l.b16 %v2427
        %v3435 = vunpack.c.l.b16 %v2428
        %v3436 = vunpack.c.l.b16 %v2429
        %v3437 = vunpack.c.l.b16 %v2430
        %v3438 = vunpack.c.l.b16 %v2431
        %v3439 = vunpack.c.l.b16 %v2432
        %v3440 = vunpack.c.l.b16 %v2433
        %v3441 = vunpack.c.l.b16 %v2434
        %v3442 = vunpack.c.l.b16 %v2435
        %v3443 = vunpack.c.l.b16 %v2436
        %v3444 = vunpack.c.l.b16 %v2437
        %v3445 = vunpack.c.l.b16 %v2438
        %v3446 = vunpack.c.l.b16 %v2439
        %v3447 = vunpack.c.l.b16 %v2440
        %v3448 = vunpack.c.l.b16 %v2441
        %v3449 = vunpack.c.l.b16 %v2442
        %v3450 = vunpack.c.l.b16 %v2443
        %v3451 = vunpack.c.l.b16 %v2444
        %v3452 = vunpack.c.l.b16 %v2445
        %v3453 = vunpack.c.l.b16 %v2446
        %v3454 = vpack.c.b16 %v3023, %v3022
        %v3455 = vpack.c.b16 %v3025, %v3024
        %v3456 = vpack.c.b16 %v3027, %v3026
        %v3457 = vpack.c.b16 %v3029, %v3028
        %v3458 = vpack.c.b16 %v3031, %v3030
        %v3459 = vpack.c.b16 %v3033, %v3032
        %v3460 = vpack.c.b16 %v3035, %v3034
        %v3461 = vpack.c.b16 %v3037, %v3036
        %v3462 = vpack.c.b16 %v3039, %v3038
        %v3463 = vpack.c.b16 %v3041, %v3040
        %v3464 = vpack.c.b16 %v3043, %v3042
        %v3465 = vpack.c.b16 %v3045, %v3044
        %v3466 = vpack.c.b16 %v3047, %v3046
        %v3467 = vpack.c.b16 %v3049, %v3048
        %v3468 = vpack.c.b16 %v3051, %v3050
        %v3469 = vpack.c.b16 %v3053, %v3052
        %v3470 = vpack.c.b16 %v3055, %v3054
        %v3471 = vpack.c.b16 %v3057, %v3056
        %v3472 = vpack.c.b16 %v3059, %v3058
        %v3473 = vpack.c.b16 %v3061, %v3060
        %v3474 = vpack.c.b16 %v3063, %v3062
        %v3475 = vpack.c.b16 %v3065, %v3064
        %v3476 = vpack.c.b16 %v3067, %v3066
        %v3477 = vpack.c.b16 %v3069, %v3068
        %v3478 = vpack.c.b16 %v3071, %v3070
        %v3479 = vpack.c.b16 %v3073, %v3072
        %v3480 = vpack.c.b16 %v3075, %v3074
        %v3481 = vpack.c.b16 %v3077, %v3076
        %v3482 = vpack.c.b16 %v3079, %v3078
        %v3483 = vpack.c.b16 %v3081, %v3080
        %v3484 = vpack.c.b16 %v3083, %v3082
        %v3485 = vpack.c.b16 %v3085, %v3084
        %v3486 = vpack.c.b16 %v3087, %v3086
        %v3487 = vpack.c.b16 %v3089, %v3088
        %v3488 = vpack.c.b16 %v3091, %v3090
        %v3489 = vpack.c.b16 %v3093, %v3092
        %v3490 = vpack.c.b16 %v3095, %v3094
        %v3491 = vpack.c.b16 %v3097, %v3096
        %v3492 = vpack.c.b16 %v3099, %v3098
        %v3493 = vpack.c.b16 %v3101, %v3100
        %v3494 = vpack.c.b16 %v3103, %v3102
        %v3495 = vpack.c.b16 %v3105, %v3104
        %v3496 = vpack.c.b16 %v3107, %v3106
        %v3497 = vpack.c.b16 %v3109, %v3108
        %v3498 = vpack.c.b16 %v3111, %v3110
        %v3499 = vpack.c.b16 %v3113, %v3112
        %v3500 = vpack.c.b16 %v3115, %v3114
        %v3501 = vpack.c.b16 %v3117, %v3116
        %v3502 = vpack.c.b16 %v3119, %v3118
        %v3503 = vpack.c.b16 %v3121, %v3120
        %v3504 = vpack.c.b16 %v3123, %v3122
        %v3505 = vpack.c.b16 %v3125, %v3124
        %v3506 = vpack.c.b16 %v3127, %v3126
        %v3507 = vpack.c.b16 %v3129, %v3128
        %v3508 = vpack.c.b16 %v3131, %v3130
        %v3509 = vpack.c.b16 %v3133, %v3132
        %v3510 = vpack.c.b16 %v3135, %v3134
        %v3511 = vpack.c.b16 %v3137, %v3136
        %v3512 = vpack.c.b16 %v3139, %v3138
        %v3513 = vpack.c.b16 %v3141, %v3140
        %v3514 = vpack.c.b16 %v3143, %v3142
        %v3515 = vpack.c.b16 %v3145, %v3144
        %v3516 = vpack.c.b16 %v3147, %v3146
        %v3517 = vpack.c.b16 %v3149, %v3148
        %v3518 = vpack.c.b16 %v3151, %v3150
        %v3519 = vpack.c.b16 %v3153, %v3152
        %v3520 = vpack.c.b16 %v3155, %v3154
        %v3521 = vpack.c.b16 %v3157, %v3156
        %v3522 = vpack.c.b16 %v3159, %v3158
        %v3523 = vpack.c.b16 %v3161, %v3160
        %v3524 = vpack.c.b16 %v3163, %v3162
        %v3525 = vpack.c.b16 %v3165, %v3164
        %v3526 = vpack.c.b16 %v3167, %v3166
        %v3527 = vpack.c.b16 %v3169, %v3168
        %v3528 = vpack.c.b16 %v3171, %v3170
        %v3529 = vpack.c.b16 %v3173, %v3172
        %v3530 = vpack.c.b16 %v3175, %v3174
        %v3531 = vpack.c.b16 %v3177, %v3176
        %v3532 = vpack.c.b16 %v3179, %v3178
        %v3533 = vpack.c.b16 %v3181, %v3180
        %v3534 = vpack.c.b16 %v3183, %v3182
        %v3535 = vpack.c.b16 %v3185, %v3184
        %v3536 = vpack.c.b16 %v3187, %v3186
        %v3537 = vpack.c.b16 %v3189, %v3188
        %v3538 = vpack.c.b16 %v3191, %v3190
        %v3539 = vpack.c.b16 %v3193, %v3192
        %v3540 = vpack.c.b16 %v3195, %v3194
        %v3541 = vpack.c.b16 %v3197, %v3196
        %v3542 = vpack.c.b16 %v3199, %v3198
        %v3543 = vpack.c.b16 %v3201, %v3200
        %v3544 = vpack.c.b16 %v3203, %v3202
        %v3545 = vpack.c.b16 %v3205, %v3204
        %v3546 = vpack.c.b16 %v3207, %v3206
        %v3547 = vpack.c.b16 %v3209, %v3208
        %v3548 = vpack.c.b16 %v3211, %v3210
        %v3549 = vpack.c.b16 %v3213, %v3212
        %v3550 = vpack.c.b16 %v3215, %v3214
        %v3551 = vpack.c.b16 %v3217, %v3216
        %v3552 = vpack.c.b16 %v3219, %v3218
        %v3553 = vpack.c.b16 %v3221, %v3220
        %v3554 = vpack.c.b16 %v3223, %v3222
        %v3555 = vpack.c.b16 %v3225, %v3224
        %v3556 = vpack.c.b16 %v3227, %v3226
        %v3557 = vpack.c.b16 %v3229, %v3228
        %v3558 = vpack.c.b16 %v3231, %v3230
        %v3559 = vpack.c.b16 %v3233, %v3232
        %v3560 = vpack.c.b16 %v3235, %v3234
        %v3561 = vpack.c.b16 %v3237, %v3236
        %v3562 = vpack.c.b16 %v3239, %v3238
        %v3563 = vpack.c.b16 %v3241, %v3240
        %v3564 = vpack.c.b16 %v3243, %v3242
        %v3565 = vpack.c.b16 %v3245, %v3244
        %v3566 = vpack.c.b16 %v3247, %v3246
        %v3567 = vpack.c.b16 %v3249, %v3248
        %v3568 = vpack.c.b16 %v3251, %v3250
        %v3569 = vpack.c.b16 %v3253, %v3252
        %v3570 = vpack.c.b16 %v3255, %v3254
        %v3571 = vpack.c.b16 %v3257, %v3256
        %v3572 = vpack.c.b16 %v3259, %v3258
        %v3573 = vpack.c.b16 %v3261, %v3260
        %v3574 = vpack.c.b16 %v3263, %v3262
        %v3575 = vpack.c.b16 %v3265, %v3264
        %v3576 = vpack.c.b16 %v3267, %v3266
        %v3577 = vpack.c.b16 %v3269, %v3268
        %v3578 = vpack.c.b16 %v3271, %v3270
        %v3579 = vpack.c.b16 %v3273, %v3272
        %v3580 = vpack.c.b16 %v3275, %v3274
        %v3581 = vpack.c.b16 %v3277, %v3276
        %v3582 = vpack.c.b16 %v3279, %v3278
        %v3583 = vpack.c.b16 %v3281, %v3280
        %v3584 = vpack.c.b16 %v3283, %v3282
        %v3585 = vpack.c.b16 %v3285, %v3284
        %v3586 = vpack.c.b16 %v3287, %v3286
        %v3587 = vpack.c.b16 %v3289, %v3288
        %v3588 = vpack.c.b16 %v3291, %v3290
        %v3589 = vpack.c.b16 %v3293, %v3292
        %v3590 = vpack.c.b16 %v3295, %v3294
        %v3591 = vpack.c.b16 %v3297, %v3296
        %v3592 = vpack.c.b16 %v3299, %v3298
        %v3593 = vpack.c.b16 %v3301, %v3300
        %v3594 = vpack.c.b16 %v3303, %v3302
        %v3595 = vpack.c.b16 %v3305, %v3304
        %v3596 = vpack.c.b16 %v3307, %v3306
        %v3597 = vpack.c.b16 %v3309, %v3308
        %v3598 = vpack.c.b16 %v3311, %v3310
        %v3599 = vpack.c.b16 %v3313, %v3312
        %v3600 = vpack.c.b16 %v3315, %v3314
        %v3601 = vpack.c.b16 %v3317, %v3316
        %v3602 = vpack.c.b16 %v3319, %v3318
        %v3603 = vpack.c.b16 %v3321, %v3320
        %v3604 = vpack.c.b16 %v3323, %v3322
        %v3605 = vpack.c.b16 %v3325, %v3324
        %v3606 = vpack.c.b16 %v3327, %v3326
        %v3607 = vpack.c.b16 %v3329, %v3328
        %v3608 = vpack.c.b16 %v3331, %v3330
        %v3609 = vpack.c.b16 %v3333, %v3332
        %v3610 = vpack.c.b16 %v3335, %v3334
        %v3611 = vpack.c.b16 %v3337, %v3336
        %v3612 = vpack.c.b16 %v3339, %v3338
        %v3613 = vpack.c.b16 %v3341, %v3340
        %v3614 = vpack.c.b16 %v3343, %v3342
        %v3615 = vpack.c.b16 %v3345, %v3344
        %v3616 = vpack.c.b16 %v3347, %v3346
        %v3617 = vpack.c.b16 %v3349, %v3348
        %v3618 = vpack.c.b16 %v3351, %v3350
        %v3619 = vpack.c.b16 %v3353, %v3352
        %v3620 = vpack.c.b16 %v3355, %v3354
        %v3621 = vpack.c.b16 %v3357, %v3356
        %v3622 = vpack.c.b16 %v3359, %v3358
        %v3623 = vpack.c.b16 %v3361, %v3360
        %v3624 = vpack.c.b16 %v3363, %v3362
        %v3625 = vpack.c.b16 %v3365, %v3364
        %v3626 = vpack.c.b16 %v3367, %v3366
        %v3627 = vpack.c.b16 %v3369, %v3368
        %v3628 = vpack.c.b16 %v3371, %v3370
        %v3629 = vpack.c.b16 %v3373, %v3372
        %v3630 = vpack.c.b16 %v3375, %v3374
        %v3631 = vpack.c.b16 %v3377, %v3376
        %v3632 = vpack.c.b16 %v3379, %v3378
        %v3633 = vpack.c.b16 %v3381, %v3380
        %v3634 = vpack.c.b16 %v3383, %v3382
        %v3635 = vpack.c.b16 %v3385, %v3384
        %v3636 = vpack.c.b16 %v3387, %v3386
        %v3637 = vpack.c.b16 %v3389, %v3388
        %v3638 = vpack.c.b16 %v3391, %v3390
        %v3639 = vpack.c.b16 %v3393, %v3392
        %v3640 = vpack.c.b16 %v3395, %v3394
        %v3641 = vpack.c.b16 %v3397, %v3396
        %v3642 = vpack.c.b16 %v3399, %v3398
        %v3643 = vpack.c.b16 %v3401, %v3400
        %v3644 = vpack.c.b16 %v3403, %v3402
        %v3645 = vpack.c.b16 %v3405, %v3404
        %v3646 = vpack.c.b16 %v3407, %v3406
        %v3647 = vpack.c.b16 %v3409, %v3408
        %v3648 = vpack.c.b16 %v3411, %v3410
        %v3649 = vpack.c.b16 %v3413, %v3412
        %v3650 = vpack.c.b16 %v3415, %v3414
        %v3651 = vpack.c.b16 %v3417, %v3416
        %v3652 = vpack.c.b16 %v3419, %v3418
        %v3653 = vpack.c.b16 %v3421, %v3420
        %v3654 = vpack.c.b16 %v3423, %v3422
        %v3655 = vpack.c.b16 %v3425, %v3424
        %v3656 = vpack.c.b16 %v3427, %v3426
        %v3657 = vpack.c.b16 %v3429, %v3428
        %v3658 = vpack.c.b16 %v3431, %v3430
        %v3659 = vpack.c.b16 %v3433, %v3432
        %v3660 = vpack.c.b16 %v3435, %v3434
        %v3661 = vpack.c.b16 %v3437, %v3436
        %v3662 = vpack.c.b16 %v3439, %v3438
        %v3663 = vpack.c.b16 %v3441, %v3440
        %v3664 = vpack.c.b16 %v3443, %v3442
        %v3665 = vpack.c.b16 %v3445, %v3444
        %v3666 = vpack.c.b16 %v3447, %v3446
        %v3667 = vpack.c.b16 %v3449, %v3448
        %v3668 = vpack.c.b16 %v3451, %v3450
        %v3669 = vpack.c.b16 %v3453, %v3452
        %3886 = vmatprep.subr.bf16.mxu0 0
        %3887 = vmatpush1.bf16.msra.mxu0 %v3461
        %3888 = vmatprep.subr.bf16.mxu0 0
        %3889 = vmatpush1.bf16.msra.mxu0 %v3460
        %3890 = vmatprep.subr.bf16.mxu0 0
        %3891 = vmatpush1.bf16.msra.mxu0 %v3459
        %3892 = vmatprep.subr.bf16.mxu0 0
        %3893 = vmatpush1.bf16.msra.mxu0 %v3458
        %3894 = vmatprep.subr.bf16.mxu0 0
        %3895 = vmatpush1.bf16.msra.mxu0 %v3457
        %3896 = vmatprep.subr.bf16.mxu0 0
        %3897 = vmatpush1.bf16.msra.mxu0 %v3456
        %3898 = vmatprep.subr.bf16.mxu0 0
        %3899 = vmatpush1.bf16.msra.mxu0 %v3455
        %3900 = vmatprep.subr.bf16.mxu0 0
        %3901 = vmatpush1.bf16.msra.mxu0 %v3454
        %3902 = vmatprep.subr.bf16.mxu0 0
        %3903 = vmatpush2.bf16.msra.mxu0 %v3469
        %3904 = vmatprep.subr.bf16.mxu0 0
        %3905 = vmatpush2.bf16.msra.mxu0 %v3468
        %3906 = vmatprep.subr.bf16.mxu0 0
        %3907 = vmatpush2.bf16.msra.mxu0 %v3467
        %3908 = vmatprep.subr.bf16.mxu0 0
        %3909 = vmatpush2.bf16.msra.mxu0 %v3466
        %3910 = vmatprep.subr.bf16.mxu0 0
        %3911 = vmatpush2.bf16.msra.mxu0 %v3465
        %3912 = vmatprep.subr.bf16.mxu0 0
        %3913 = vmatpush2.bf16.msra.mxu0 %v3464
        %3914 = vmatprep.subr.bf16.mxu0 0
        %3915 = vmatpush2.bf16.msra.mxu0 %v3463
        %3916 = vmatprep.subr.bf16.mxu0 0
        %3917 = vmatpush2.bf16.msra.mxu0 %v3462
        %3918 = vmatprep.mubr.bf16.mxu0 %v2537
        %3919 = vmatmul.mubr.bf16.gmra.mxu0 %v2536
        %v3920 = vpop.f32.mrf.mxu0
        %v3921 = vadd.f32 %v2452, %v3920
        %v3922 = vpop.f32.mrf.mxu0
        %v3923 = vpop.f32.mrf.mxu0
        %v3924 = vadd.f32 %v2452, %v3923
        %v3925 = vpop.f32.mrf.mxu0
        %3926 = vdwg.mxu0
        %3927 = vmatprep.subr.bf16.mxu0 0
        %3928 = vmatpush1.bf16.msra.mxu0 %v3477
        %3929 = vmatprep.subr.bf16.mxu0 0
        %3930 = vmatpush1.bf16.msra.mxu0 %v3476
        %3931 = vmatprep.subr.bf16.mxu0 0
        %3932 = vmatpush1.bf16.msra.mxu0 %v3475
        %3933 = vmatprep.subr.bf16.mxu0 0
        %3934 = vmatpush1.bf16.msra.mxu0 %v3474
        %3935 = vmatprep.subr.bf16.mxu0 0
        %3936 = vmatpush1.bf16.msra.mxu0 %v3473
        %3937 = vmatprep.subr.bf16.mxu0 0
        %3938 = vmatpush1.bf16.msra.mxu0 %v3472
        %3939 = vmatprep.subr.bf16.mxu0 0
        %3940 = vmatpush1.bf16.msra.mxu0 %v3471
        %3941 = vmatprep.subr.bf16.mxu0 0
        %3942 = vmatpush1.bf16.msra.mxu0 %v3470
        %3943 = vmatprep.subr.bf16.mxu0 0
        %3944 = vmatpush2.bf16.msra.mxu0 %v3485
        %3945 = vmatprep.subr.bf16.mxu0 0
        %3946 = vmatpush2.bf16.msra.mxu0 %v3484
        %3947 = vmatprep.subr.bf16.mxu0 0
        %3948 = vmatpush2.bf16.msra.mxu0 %v3483
        %3949 = vmatprep.subr.bf16.mxu0 0
        %3950 = vmatpush2.bf16.msra.mxu0 %v3482
        %3951 = vmatprep.subr.bf16.mxu0 0
        %3952 = vmatpush2.bf16.msra.mxu0 %v3481
        %3953 = vmatprep.subr.bf16.mxu0 0
        %3954 = vmatpush2.bf16.msra.mxu0 %v3480
        %3955 = vmatprep.subr.bf16.mxu0 0
        %3956 = vmatpush2.bf16.msra.mxu0 %v3479
        %3957 = vmatprep.subr.bf16.mxu0 0
        %3958 = vmatpush2.bf16.msra.mxu0 %v3478
        %3959 = vmatprep.mubr.bf16.mxu0 %v2539
        %3960 = vmatmul.mubr.bf16.gmra.mxu0 %v2538
        %v3961 = vpop.f32.mrf.mxu0
        %v3962 = vadd.f32 %v3921, %v3961
        %v3963 = vpop.f32.mrf.mxu0
        %v3964 = vpop.f32.mrf.mxu0
        %v3965 = vadd.f32 %v3924, %v3964
        %v3966 = vpop.f32.mrf.mxu0
        %3967 = vdwg.mxu0
        %3968 = vmatprep.subr.bf16.mxu0 0
        %3969 = vmatpush1.bf16.msra.mxu0 %v3493
        %3970 = vmatprep.subr.bf16.mxu0 0
        %3971 = vmatpush1.bf16.msra.mxu0 %v3492
        %3972 = vmatprep.subr.bf16.mxu0 0
        %3973 = vmatpush1.bf16.msra.mxu0 %v3491
        %3974 = vmatprep.subr.bf16.mxu0 0
        %3975 = vmatpush1.bf16.msra.mxu0 %v3490
        %3976 = vmatprep.subr.bf16.mxu0 0
        %3977 = vmatpush1.bf16.msra.mxu0 %v3489
        %3978 = vmatprep.subr.bf16.mxu0 0
        %3979 = vmatpush1.bf16.msra.mxu0 %v3488
        %3980 = vmatprep.subr.bf16.mxu0 0
        %3981 = vmatpush1.bf16.msra.mxu0 %v3487
        %3982 = vmatprep.subr.bf16.mxu0 0
        %3983 = vmatpush1.bf16.msra.mxu0 %v3486
        %3984 = vmatprep.subr.bf16.mxu0 0
        %3985 = vmatpush2.bf16.msra.mxu0 %v3501
        %3986 = vmatprep.subr.bf16.mxu0 0
        %3987 = vmatpush2.bf16.msra.mxu0 %v3500
        %3988 = vmatprep.subr.bf16.mxu0 0
        %3989 = vmatpush2.bf16.msra.mxu0 %v3499
        %3990 = vmatprep.subr.bf16.mxu0 0
        %3991 = vmatpush2.bf16.msra.mxu0 %v3498
        %3992 = vmatprep.subr.bf16.mxu0 0
        %3993 = vmatpush2.bf16.msra.mxu0 %v3497
        %3994 = vmatprep.subr.bf16.mxu0 0
        %3995 = vmatpush2.bf16.msra.mxu0 %v3496
        %3996 = vmatprep.subr.bf16.mxu0 0
        %3997 = vmatpush2.bf16.msra.mxu0 %v3495
        %3998 = vmatprep.subr.bf16.mxu0 0
        %3999 = vmatpush2.bf16.msra.mxu0 %v3494
        %4000 = vmatprep.mubr.bf16.mxu0 %v2541
        %4001 = vmatmul.mubr.bf16.gmra.mxu0 %v2540
        %v4002 = vpop.f32.mrf.mxu0
        %v4003 = vadd.f32 %v3962, %v4002
        %v4004 = vpop.f32.mrf.mxu0
        %v4005 = vpop.f32.mrf.mxu0
        %v4006 = vadd.f32 %v3965, %v4005
        %v4007 = vpop.f32.mrf.mxu0
        %4008 = vdwg.mxu0
        %4009 = vmatprep.subr.bf16.mxu0 0
        %4010 = vmatpush1.bf16.msra.mxu0 %v3509
        %4011 = vmatprep.subr.bf16.mxu0 0
        %4012 = vmatpush1.bf16.msra.mxu0 %v3508
        %4013 = vmatprep.subr.bf16.mxu0 0
        %4014 = vmatpush1.bf16.msra.mxu0 %v3507
        %4015 = vmatprep.subr.bf16.mxu0 0
        %4016 = vmatpush1.bf16.msra.mxu0 %v3506
        %4017 = vmatprep.subr.bf16.mxu0 0
        %4018 = vmatpush1.bf16.msra.mxu0 %v3505
        %4019 = vmatprep.subr.bf16.mxu0 0
        %4020 = vmatpush1.bf16.msra.mxu0 %v3504
        %4021 = vmatprep.subr.bf16.mxu0 0
        %4022 = vmatpush1.bf16.msra.mxu0 %v3503
        %4023 = vmatprep.subr.bf16.mxu0 0
        %4024 = vmatpush1.bf16.msra.mxu0 %v3502
        %4025 = vmatprep.subr.bf16.mxu0 0
        %4026 = vmatpush2.bf16.msra.mxu0 %v3517
        %4027 = vmatprep.subr.bf16.mxu0 0
        %4028 = vmatpush2.bf16.msra.mxu0 %v3516
        %4029 = vmatprep.subr.bf16.mxu0 0
        %4030 = vmatpush2.bf16.msra.mxu0 %v3515
        %4031 = vmatprep.subr.bf16.mxu0 0
        %4032 = vmatpush2.bf16.msra.mxu0 %v3514
        %4033 = vmatprep.subr.bf16.mxu0 0
        %4034 = vmatpush2.bf16.msra.mxu0 %v3513
        %4035 = vmatprep.subr.bf16.mxu0 0
        %4036 = vmatpush2.bf16.msra.mxu0 %v3512
        %4037 = vmatprep.subr.bf16.mxu0 0
        %4038 = vmatpush2.bf16.msra.mxu0 %v3511
        %4039 = vmatprep.subr.bf16.mxu0 0
        %4040 = vmatpush2.bf16.msra.mxu0 %v3510
        %4041 = vmatprep.mubr.bf16.mxu0 %v2543
        %4042 = vmatmul.mubr.bf16.gmra.mxu0 %v2542
        %v4043 = vpop.f32.mrf.mxu0
        %v4044 = vadd.f32 %v4003, %v4043
        %v4045 = vpop.f32.mrf.mxu0
        %v4046 = vpop.f32.mrf.mxu0
        %v4047 = vadd.f32 %v4006, %v4046
        %v4048 = vpop.f32.mrf.mxu0
        %4049 = vdwg.mxu0
        %4050 = vmatprep.subr.bf16.mxu0 0
        %4051 = vmatpush1.bf16.msra.mxu0 %v3525
        %4052 = vmatprep.subr.bf16.mxu0 0
        %4053 = vmatpush1.bf16.msra.mxu0 %v3524
        %4054 = vmatprep.subr.bf16.mxu0 0
        %4055 = vmatpush1.bf16.msra.mxu0 %v3523
        %4056 = vmatprep.subr.bf16.mxu0 0
        %4057 = vmatpush1.bf16.msra.mxu0 %v3522
        %4058 = vmatprep.subr.bf16.mxu0 0
        %4059 = vmatpush1.bf16.msra.mxu0 %v3521
        %4060 = vmatprep.subr.bf16.mxu0 0
        %4061 = vmatpush1.bf16.msra.mxu0 %v3520
        %4062 = vmatprep.subr.bf16.mxu0 0
        %4063 = vmatpush1.bf16.msra.mxu0 %v3519
        %4064 = vmatprep.subr.bf16.mxu0 0
        %4065 = vmatpush1.bf16.msra.mxu0 %v3518
        %4066 = vmatprep.subr.bf16.mxu0 0
        %4067 = vmatpush2.bf16.msra.mxu0 %v3533
        %4068 = vmatprep.subr.bf16.mxu0 0
        %4069 = vmatpush2.bf16.msra.mxu0 %v3532
        %4070 = vmatprep.subr.bf16.mxu0 0
        %4071 = vmatpush2.bf16.msra.mxu0 %v3531
        %4072 = vmatprep.subr.bf16.mxu0 0
        %4073 = vmatpush2.bf16.msra.mxu0 %v3530
        %4074 = vmatprep.subr.bf16.mxu0 0
        %4075 = vmatpush2.bf16.msra.mxu0 %v3529
        %4076 = vmatprep.subr.bf16.mxu0 0
        %4077 = vmatpush2.bf16.msra.mxu0 %v3528
        %4078 = vmatprep.subr.bf16.mxu0 0
        %4079 = vmatpush2.bf16.msra.mxu0 %v3527
        %4080 = vmatprep.subr.bf16.mxu0 0
        %4081 = vmatpush2.bf16.msra.mxu0 %v3526
        %4082 = vmatprep.mubr.bf16.mxu0 %v2545
        %4083 = vmatmul.mubr.bf16.gmra.mxu0 %v2544
        %v4084 = vpop.f32.mrf.mxu0
        %v4085 = vadd.f32 %v4044, %v4084
        %v4086 = vpop.f32.mrf.mxu0
        %v4087 = vpop.f32.mrf.mxu0
        %v4088 = vadd.f32 %v4047, %v4087
        %v4089 = vpop.f32.mrf.mxu0
        %4090 = vdwg.mxu0
        %4091 = vmatprep.subr.bf16.mxu0 0
        %4092 = vmatpush1.bf16.msra.mxu0 %v3541
        %4093 = vmatprep.subr.bf16.mxu0 0
        %4094 = vmatpush1.bf16.msra.mxu0 %v3540
        %4095 = vmatprep.subr.bf16.mxu0 0
        %4096 = vmatpush1.bf16.msra.mxu0 %v3539
        %4097 = vmatprep.subr.bf16.mxu0 0
        %4098 = vmatpush1.bf16.msra.mxu0 %v3538
        %4099 = vmatprep.subr.bf16.mxu0 0
        %4100 = vmatpush1.bf16.msra.mxu0 %v3537
        %4101 = vmatprep.subr.bf16.mxu0 0
        %4102 = vmatpush1.bf16.msra.mxu0 %v3536
        %4103 = vmatprep.subr.bf16.mxu0 0
        %4104 = vmatpush1.bf16.msra.mxu0 %v3535
        %4105 = vmatprep.subr.bf16.mxu0 0
        %4106 = vmatpush1.bf16.msra.mxu0 %v3534
        %4107 = vmatprep.subr.bf16.mxu0 0
        %4108 = vmatpush2.bf16.msra.mxu0 %v3549
        %4109 = vmatprep.subr.bf16.mxu0 0
        %4110 = vmatpush2.bf16.msra.mxu0 %v3548
        %4111 = vmatprep.subr.bf16.mxu0 0
        %4112 = vmatpush2.bf16.msra.mxu0 %v3547
        %4113 = vmatprep.subr.bf16.mxu0 0
        %4114 = vmatpush2.bf16.msra.mxu0 %v3546
        %4115 = vmatprep.subr.bf16.mxu0 0
        %4116 = vmatpush2.bf16.msra.mxu0 %v3545
        %4117 = vmatprep.subr.bf16.mxu0 0
        %4118 = vmatpush2.bf16.msra.mxu0 %v3544
        %4119 = vmatprep.subr.bf16.mxu0 0
        %4120 = vmatpush2.bf16.msra.mxu0 %v3543
        %4121 = vmatprep.subr.bf16.mxu0 0
        %4122 = vmatpush2.bf16.msra.mxu0 %v3542
        %4123 = vmatprep.mubr.bf16.mxu0 %v2547
        %4124 = vmatmul.mubr.bf16.gmra.mxu0 %v2546
        %v4125 = vpop.f32.mrf.mxu0
        %v4126 = vadd.f32 %v4085, %v4125
        %v4127 = vpop.f32.mrf.mxu0
        %v4128 = vpop.f32.mrf.mxu0
        %v4129 = vadd.f32 %v4088, %v4128
        %v4130 = vpop.f32.mrf.mxu0
        %4131 = vdwg.mxu0
        %4132 = vmatprep.subr.bf16.mxu0 0
        %4133 = vmatpush1.bf16.msra.mxu0 %v3557
        %4134 = vmatprep.subr.bf16.mxu0 0
        %4135 = vmatpush1.bf16.msra.mxu0 %v3556
        %4136 = vmatprep.subr.bf16.mxu0 0
        %4137 = vmatpush1.bf16.msra.mxu0 %v3555
        %4138 = vmatprep.subr.bf16.mxu0 0
        %4139 = vmatpush1.bf16.msra.mxu0 %v3554
        %4140 = vmatprep.subr.bf16.mxu0 0
        %4141 = vmatpush1.bf16.msra.mxu0 %v3553
        %4142 = vmatprep.subr.bf16.mxu0 0
        %4143 = vmatpush1.bf16.msra.mxu0 %v3552
        %4144 = vmatprep.subr.bf16.mxu0 0
        %4145 = vmatpush1.bf16.msra.mxu0 %v3551
        %4146 = vmatprep.subr.bf16.mxu0 0
        %4147 = vmatpush1.bf16.msra.mxu0 %v3550
        %4148 = vmatprep.subr.bf16.mxu0 0
        %4149 = vmatpush2.bf16.msra.mxu0 %v3565
        %4150 = vmatprep.subr.bf16.mxu0 0
        %4151 = vmatpush2.bf16.msra.mxu0 %v3564
        %4152 = vmatprep.subr.bf16.mxu0 0
        %4153 = vmatpush2.bf16.msra.mxu0 %v3563
        %4154 = vmatprep.subr.bf16.mxu0 0
        %4155 = vmatpush2.bf16.msra.mxu0 %v3562
        %4156 = vmatprep.subr.bf16.mxu0 0
        %4157 = vmatpush2.bf16.msra.mxu0 %v3561
        %4158 = vmatprep.subr.bf16.mxu0 0
        %4159 = vmatpush2.bf16.msra.mxu0 %v3560
        %4160 = vmatprep.subr.bf16.mxu0 0
        %4161 = vmatpush2.bf16.msra.mxu0 %v3559
        %4162 = vmatprep.subr.bf16.mxu0 0
        %4163 = vmatpush2.bf16.msra.mxu0 %v3558
        %4164 = vmatprep.mubr.bf16.mxu0 %v2549
        %4165 = vmatmul.mubr.bf16.gmra.mxu0 %v2548
        %v4166 = vpop.f32.mrf.mxu0
        %v4167 = vadd.f32 %v4126, %v4166
        %v4168 = vpop.f32.mrf.mxu0
        %v4169 = vpop.f32.mrf.mxu0
        %v4170 = vadd.f32 %v4129, %v4169
        %v4171 = vpop.f32.mrf.mxu0
        %4172 = vdwg.mxu0
        %4173 = vmatprep.subr.bf16.mxu0 0
        %4174 = vmatpush1.bf16.msra.mxu0 %v3573
        %4175 = vmatprep.subr.bf16.mxu0 0
        %4176 = vmatpush1.bf16.msra.mxu0 %v3572
        %4177 = vmatprep.subr.bf16.mxu0 0
        %4178 = vmatpush1.bf16.msra.mxu0 %v3571
        %4179 = vmatprep.subr.bf16.mxu0 0
        %4180 = vmatpush1.bf16.msra.mxu0 %v3570
        %4181 = vmatprep.subr.bf16.mxu0 0
        %4182 = vmatpush1.bf16.msra.mxu0 %v3569
        %4183 = vmatprep.subr.bf16.mxu0 0
        %4184 = vmatpush1.bf16.msra.mxu0 %v3568
        %4185 = vmatprep.subr.bf16.mxu0 0
        %4186 = vmatpush1.bf16.msra.mxu0 %v3567
        %4187 = vmatprep.subr.bf16.mxu0 0
        %4188 = vmatpush1.bf16.msra.mxu0 %v3566
        %4189 = vmatprep.subr.bf16.mxu0 0
        %4190 = vmatpush2.bf16.msra.mxu0 %v3581
        %4191 = vmatprep.subr.bf16.mxu0 0
        %4192 = vmatpush2.bf16.msra.mxu0 %v3580
        %4193 = vmatprep.subr.bf16.mxu0 0
        %4194 = vmatpush2.bf16.msra.mxu0 %v3579
        %4195 = vmatprep.subr.bf16.mxu0 0
        %4196 = vmatpush2.bf16.msra.mxu0 %v3578
        %4197 = vmatprep.subr.bf16.mxu0 0
        %4198 = vmatpush2.bf16.msra.mxu0 %v3577
        %4199 = vmatprep.subr.bf16.mxu0 0
        %4200 = vmatpush2.bf16.msra.mxu0 %v3576
        %4201 = vmatprep.subr.bf16.mxu0 0
        %4202 = vmatpush2.bf16.msra.mxu0 %v3575
        %4203 = vmatprep.subr.bf16.mxu0 0
        %4204 = vmatpush2.bf16.msra.mxu0 %v3574
        %4205 = vmatprep.mubr.bf16.mxu0 %v2551
        %4206 = vmatmul.mubr.bf16.gmra.mxu0 %v2550
        %v4207 = vpop.f32.mrf.mxu0
        %v4208 = vadd.f32 %v4167, %v4207
        %v4209 = vpop.f32.mrf.mxu0
        %v4210 = vpop.f32.mrf.mxu0
        %v4211 = vadd.f32 %v4170, %v4210
        %v4212 = vpop.f32.mrf.mxu0
        %4213 = vdwg.mxu0
        %4214 = vmatprep.subr.bf16.mxu0 0
        %4215 = vmatpush1.bf16.msra.mxu0 %v3589
        %4216 = vmatprep.subr.bf16.mxu0 0
        %4217 = vmatpush1.bf16.msra.mxu0 %v3588
        %4218 = vmatprep.subr.bf16.mxu0 0
        %4219 = vmatpush1.bf16.msra.mxu0 %v3587
        %4220 = vmatprep.subr.bf16.mxu0 0
        %4221 = vmatpush1.bf16.msra.mxu0 %v3586
        %4222 = vmatprep.subr.bf16.mxu0 0
        %4223 = vmatpush1.bf16.msra.mxu0 %v3585
        %4224 = vmatprep.subr.bf16.mxu0 0
        %4225 = vmatpush1.bf16.msra.mxu0 %v3584
        %4226 = vmatprep.subr.bf16.mxu0 0
        %4227 = vmatpush1.bf16.msra.mxu0 %v3583
        %4228 = vmatprep.subr.bf16.mxu0 0
        %4229 = vmatpush1.bf16.msra.mxu0 %v3582
        %4230 = vmatprep.subr.bf16.mxu0 0
        %4231 = vmatpush2.bf16.msra.mxu0 %v3597
        %4232 = vmatprep.subr.bf16.mxu0 0
        %4233 = vmatpush2.bf16.msra.mxu0 %v3596
        %4234 = vmatprep.subr.bf16.mxu0 0
        %4235 = vmatpush2.bf16.msra.mxu0 %v3595
        %4236 = vmatprep.subr.bf16.mxu0 0
        %4237 = vmatpush2.bf16.msra.mxu0 %v3594
        %4238 = vmatprep.subr.bf16.mxu0 0
        %4239 = vmatpush2.bf16.msra.mxu0 %v3593
        %4240 = vmatprep.subr.bf16.mxu0 0
        %4241 = vmatpush2.bf16.msra.mxu0 %v3592
        %4242 = vmatprep.subr.bf16.mxu0 0
        %4243 = vmatpush2.bf16.msra.mxu0 %v3591
        %4244 = vmatprep.subr.bf16.mxu0 0
        %4245 = vmatpush2.bf16.msra.mxu0 %v3590
        %4246 = vmatprep.mubr.bf16.mxu0 %v2553
        %4247 = vmatmul.mubr.bf16.gmra.mxu0 %v2552
        %v4248 = vpop.f32.mrf.mxu0
        %v4249 = vadd.f32 %v4208, %v4248
        %v4250 = vpop.f32.mrf.mxu0
        %v4251 = vpop.f32.mrf.mxu0
        %v4252 = vadd.f32 %v4211, %v4251
        %v4253 = vpop.f32.mrf.mxu0
        %4254 = vdwg.mxu0
        %4255 = vmatprep.subr.bf16.mxu0 0
        %4256 = vmatpush1.bf16.msra.mxu0 %v3605
        %4257 = vmatprep.subr.bf16.mxu0 0
        %4258 = vmatpush1.bf16.msra.mxu0 %v3604
        %4259 = vmatprep.subr.bf16.mxu0 0
        %4260 = vmatpush1.bf16.msra.mxu0 %v3603
        %4261 = vmatprep.subr.bf16.mxu0 0
        %4262 = vmatpush1.bf16.msra.mxu0 %v3602
        %4263 = vmatprep.subr.bf16.mxu0 0
        %4264 = vmatpush1.bf16.msra.mxu0 %v3601
        %4265 = vmatprep.subr.bf16.mxu0 0
        %4266 = vmatpush1.bf16.msra.mxu0 %v3600
        %4267 = vmatprep.subr.bf16.mxu0 0
        %4268 = vmatpush1.bf16.msra.mxu0 %v3599
        %4269 = vmatprep.subr.bf16.mxu0 0
        %4270 = vmatpush1.bf16.msra.mxu0 %v3598
        %4271 = vmatprep.subr.bf16.mxu0 0
        %4272 = vmatpush2.bf16.msra.mxu0 %v3613
        %4273 = vmatprep.subr.bf16.mxu0 0
        %4274 = vmatpush2.bf16.msra.mxu0 %v3612
        %4275 = vmatprep.subr.bf16.mxu0 0
        %4276 = vmatpush2.bf16.msra.mxu0 %v3611
        %4277 = vmatprep.subr.bf16.mxu0 0
        %4278 = vmatpush2.bf16.msra.mxu0 %v3610
        %4279 = vmatprep.subr.bf16.mxu0 0
        %4280 = vmatpush2.bf16.msra.mxu0 %v3609
        %4281 = vmatprep.subr.bf16.mxu0 0
        %4282 = vmatpush2.bf16.msra.mxu0 %v3608
        %4283 = vmatprep.subr.bf16.mxu0 0
        %4284 = vmatpush2.bf16.msra.mxu0 %v3607
        %4285 = vmatprep.subr.bf16.mxu0 0
        %4286 = vmatpush2.bf16.msra.mxu0 %v3606
        %4287 = vmatprep.mubr.bf16.mxu0 %v2555
        %4288 = vmatmul.mubr.bf16.gmra.mxu0 %v2554
        %v4289 = vpop.f32.mrf.mxu0
        %v4290 = vadd.f32 %v4249, %v4289
        %v4291 = vpop.f32.mrf.mxu0
        %v4292 = vpop.f32.mrf.mxu0
        %v4293 = vadd.f32 %v4252, %v4292
        %v4294 = vpop.f32.mrf.mxu0
        %4295 = vdwg.mxu0
        %4296 = vmatprep.subr.bf16.mxu0 0
        %4297 = vmatpush1.bf16.msra.mxu0 %v3621
        %4298 = vmatprep.subr.bf16.mxu0 0
        %4299 = vmatpush1.bf16.msra.mxu0 %v3620
        %4300 = vmatprep.subr.bf16.mxu0 0
        %4301 = vmatpush1.bf16.msra.mxu0 %v3619
        %4302 = vmatprep.subr.bf16.mxu0 0
        %4303 = vmatpush1.bf16.msra.mxu0 %v3618
        %4304 = vmatprep.subr.bf16.mxu0 0
        %4305 = vmatpush1.bf16.msra.mxu0 %v3617
        %4306 = vmatprep.subr.bf16.mxu0 0
        %4307 = vmatpush1.bf16.msra.mxu0 %v3616
        %4308 = vmatprep.subr.bf16.mxu0 0
        %4309 = vmatpush1.bf16.msra.mxu0 %v3615
        %4310 = vmatprep.subr.bf16.mxu0 0
        %4311 = vmatpush1.bf16.msra.mxu0 %v3614
        %4312 = vmatprep.subr.bf16.mxu0 0
        %4313 = vmatpush2.bf16.msra.mxu0 %v3629
        %4314 = vmatprep.subr.bf16.mxu0 0
        %4315 = vmatpush2.bf16.msra.mxu0 %v3628
        %4316 = vmatprep.subr.bf16.mxu0 0
        %4317 = vmatpush2.bf16.msra.mxu0 %v3627
        %4318 = vmatprep.subr.bf16.mxu0 0
        %4319 = vmatpush2.bf16.msra.mxu0 %v3626
        %4320 = vmatprep.subr.bf16.mxu0 0
        %4321 = vmatpush2.bf16.msra.mxu0 %v3625
        %4322 = vmatprep.subr.bf16.mxu0 0
        %4323 = vmatpush2.bf16.msra.mxu0 %v3624
        %4324 = vmatprep.subr.bf16.mxu0 0
        %4325 = vmatpush2.bf16.msra.mxu0 %v3623
        %4326 = vmatprep.subr.bf16.mxu0 0
        %4327 = vmatpush2.bf16.msra.mxu0 %v3622
        %4328 = vmatprep.mubr.bf16.mxu0 %v2557
        %4329 = vmatmul.mubr.bf16.gmra.mxu0 %v2556
        %v4330 = vpop.f32.mrf.mxu0
        %v4331 = vadd.f32 %v4290, %v4330
        %v4332 = vpop.f32.mrf.mxu0
        %v4333 = vpop.f32.mrf.mxu0
        %v4334 = vadd.f32 %v4293, %v4333
        %v4335 = vpop.f32.mrf.mxu0
        %4336 = vdwg.mxu0
        %4337 = vmatprep.subr.bf16.mxu0 0
        %4338 = vmatpush1.bf16.msra.mxu0 %v3637
        %4339 = vmatprep.subr.bf16.mxu0 0
        %4340 = vmatpush1.bf16.msra.mxu0 %v3636
        %4341 = vmatprep.subr.bf16.mxu0 0
        %4342 = vmatpush1.bf16.msra.mxu0 %v3635
        %4343 = vmatprep.subr.bf16.mxu0 0
        %4344 = vmatpush1.bf16.msra.mxu0 %v3634
        %4345 = vmatprep.subr.bf16.mxu0 0
        %4346 = vmatpush1.bf16.msra.mxu0 %v3633
        %4347 = vmatprep.subr.bf16.mxu0 0
        %4348 = vmatpush1.bf16.msra.mxu0 %v3632
        %4349 = vmatprep.subr.bf16.mxu0 0
        %4350 = vmatpush1.bf16.msra.mxu0 %v3631
        %4351 = vmatprep.subr.bf16.mxu0 0
        %4352 = vmatpush1.bf16.msra.mxu0 %v3630
        %4353 = vmatprep.subr.bf16.mxu0 0
        %4354 = vmatpush2.bf16.msra.mxu0 %v3645
        %4355 = vmatprep.subr.bf16.mxu0 0
        %4356 = vmatpush2.bf16.msra.mxu0 %v3644
        %4357 = vmatprep.subr.bf16.mxu0 0
        %4358 = vmatpush2.bf16.msra.mxu0 %v3643
        %4359 = vmatprep.subr.bf16.mxu0 0
        %4360 = vmatpush2.bf16.msra.mxu0 %v3642
        %4361 = vmatprep.subr.bf16.mxu0 0
        %4362 = vmatpush2.bf16.msra.mxu0 %v3641
        %4363 = vmatprep.subr.bf16.mxu0 0
        %4364 = vmatpush2.bf16.msra.mxu0 %v3640
        %4365 = vmatprep.subr.bf16.mxu0 0
        %4366 = vmatpush2.bf16.msra.mxu0 %v3639
        %4367 = vmatprep.subr.bf16.mxu0 0
        %4368 = vmatpush2.bf16.msra.mxu0 %v3638
        %4369 = vmatprep.mubr.bf16.mxu0 %v2559
        %4370 = vmatmul.mubr.bf16.gmra.mxu0 %v2558
        %v4371 = vpop.f32.mrf.mxu0
        %v4372 = vadd.f32 %v4331, %v4371
        %v4373 = vpop.f32.mrf.mxu0
        %v4374 = vpop.f32.mrf.mxu0
        %v4375 = vadd.f32 %v4334, %v4374
        %v4376 = vpop.f32.mrf.mxu0
        %4377 = vdwg.mxu0
        %4378 = vmatprep.subr.bf16.mxu0 0
        %4379 = vmatpush1.bf16.msra.mxu0 %v3653
        %4380 = vmatprep.subr.bf16.mxu0 0
        %4381 = vmatpush1.bf16.msra.mxu0 %v3652
        %4382 = vmatprep.subr.bf16.mxu0 0
        %4383 = vmatpush1.bf16.msra.mxu0 %v3651
        %4384 = vmatprep.subr.bf16.mxu0 0
        %4385 = vmatpush1.bf16.msra.mxu0 %v3650
        %4386 = vmatprep.subr.bf16.mxu0 0
        %4387 = vmatpush1.bf16.msra.mxu0 %v3649
        %4388 = vmatprep.subr.bf16.mxu0 0
        %4389 = vmatpush1.bf16.msra.mxu0 %v3648
        %4390 = vmatprep.subr.bf16.mxu0 0
        %4391 = vmatpush1.bf16.msra.mxu0 %v3647
        %4392 = vmatprep.subr.bf16.mxu0 0
        %4393 = vmatpush1.bf16.msra.mxu0 %v3646
        %4394 = vmatprep.subr.bf16.mxu0 0
        %4395 = vmatpush2.bf16.msra.mxu0 %v3661
        %4396 = vmatprep.subr.bf16.mxu0 0
        %4397 = vmatpush2.bf16.msra.mxu0 %v3660
        %4398 = vmatprep.subr.bf16.mxu0 0
        %4399 = vmatpush2.bf16.msra.mxu0 %v3659
        %4400 = vmatprep.subr.bf16.mxu0 0
        %4401 = vmatpush2.bf16.msra.mxu0 %v3658
        %4402 = vmatprep.subr.bf16.mxu0 0
        %4403 = vmatpush2.bf16.msra.mxu0 %v3657
        %4404 = vmatprep.subr.bf16.mxu0 0
        %4405 = vmatpush2.bf16.msra.mxu0 %v3656
        %4406 = vmatprep.subr.bf16.mxu0 0
        %4407 = vmatpush2.bf16.msra.mxu0 %v3655
        %4408 = vmatprep.subr.bf16.mxu0 0
        %4409 = vmatpush2.bf16.msra.mxu0 %v3654
        %4410 = vmatprep.mubr.bf16.mxu0 %v2561
        %4411 = vmatmul.mubr.bf16.gmra.mxu0 %v2560
        %v4412 = vpop.f32.mrf.mxu0
        %v4413 = vadd.f32 %v4372, %v4412
        %v4414 = vpop.f32.mrf.mxu0
        %v4415 = vpop.f32.mrf.mxu0
        %v4416 = vadd.f32 %v4375, %v4415
        %v4417 = vpop.f32.mrf.mxu0
        %4418 = vdwg.mxu0
        %4419 = vmatprep.subr.bf16.mxu0 0
        %4420 = vmatpush1.bf16.msra.mxu0 %v3669
        %4421 = vmatprep.subr.bf16.mxu0 0
        %4422 = vmatpush1.bf16.msra.mxu0 %v3668
        %4423 = vmatprep.subr.bf16.mxu0 0
        %4424 = vmatpush1.bf16.msra.mxu0 %v3667
        %4425 = vmatprep.subr.bf16.mxu0 0
        %4426 = vmatpush1.bf16.msra.mxu0 %v3666
        %4427 = vmatprep.subr.bf16.mxu0 0
        %4428 = vmatpush1.bf16.msra.mxu0 %v3665
        %4429 = vmatprep.subr.bf16.mxu0 0
        %4430 = vmatpush1.bf16.msra.mxu0 %v3664
        %4431 = vmatprep.subr.bf16.mxu0 0
        %4432 = vmatpush1.bf16.msra.mxu0 %v3663
        %4433 = vmatprep.subr.bf16.mxu0 0
        %4434 = vmatpush1.bf16.msra.mxu0 %v3662
        %4435 = vmatprep.subr.bf16.mxu0 0
        %4436 = vmatpush2.bf16.msra.mxu0 0
        %4437 = vmatprep.subr.bf16.mxu0 0
        %4438 = vmatpush2.bf16.msra.mxu0 0
        %4439 = vmatprep.subr.bf16.mxu0 0
        %4440 = vmatpush2.bf16.msra.mxu0 0
        %4441 = vmatprep.subr.bf16.mxu0 0
        %4442 = vmatpush2.bf16.msra.mxu0 0
        %4443 = vmatprep.subr.bf16.mxu0 0
        %4444 = vmatpush2.bf16.msra.mxu0 0
        %4445 = vmatprep.subr.bf16.mxu0 0
        %4446 = vmatpush2.bf16.msra.mxu0 0
        %4447 = vmatprep.subr.bf16.mxu0 0
        %4448 = vmatpush2.bf16.msra.mxu0 0
        %4449 = vmatprep.subr.bf16.mxu0 0
        %4450 = vmatpush2.bf16.msra.mxu0 0
        %4451 = vmatprep.mubr.bf16.mxu0 0
        %4452 = vmatmul.mubr.bf16.gmra.mxu0 %v2562
        %v4453 = vpop.f32.mrf.mxu0
        %v4454 = vadd.f32 %v4413, %v4453
        %v4455 = vpop.f32.mrf.mxu0
        %v4456 = vpop.f32.mrf.mxu0
        %v4457 = vadd.f32 %v4416, %v4456
        %v4458 = vpop.f32.mrf.mxu0
        %4459 = vdwg.mxu0
        %vm4460 = vcmp.ge.f32.partialorder %v4454, 0.0
        %vm4461 = vcmp.ge.f32.partialorder %v4457, 0.0
        %v4462 = vmul.f32 %v4454, 0.2
        %v4463 = vmul.f32 %v4457, 0.2
        %v4464 = vsel %vm4460, %v4454, %v4462
        %v4465 = vsel %vm4461, %v4457, %v4463
        %v4466 = vpack.c.bf16 %v4465, %v4464
        %v4468 = vunpack.c.l.b16 %v4466
        %v4469 = vunpack.c.h.b16 %v4466
        %v4470 = vpack.c.b16 %v4468, %v4468
        %v4471 = vpack.c.b16 %v4469, %v4469
        %4474 = vst [vmem:[%s1974] sm:$0xf] %v4470
        %4475 = vst [vmem:[%s1974 + $0x4] sm:$0xf] %v4471
        %s4476 = sand.u32 %s114, 1
        %s4477 = sand.u32 %s114, 1
        %s4478 = smul.addr %s4477, 8
        %s4479 = scalar_lea.vmem [#allocation3], %s4478
        // Predicated region
        $region74: #{discriminator_forward.6} parent=68 // pred_check
          %p4480 = pneg %p124
        $region75: #{discriminator_forward.6} parent=68 // pred_check_branch
          %4482 = sbr.rel (%p4480) target = $region77
        $region76: #{discriminator_forward.6} parent=68 // pred_region
          %s4483 = smul.u32 2, %s18
          %s4484 = smul.addr %s4483, 2
          %s4485 = sadd.s32 %s19, %s4484
          %s4486 = smul.addr %s4485, 4
          %s4487 = scalar_lea.vmem %s3, %s4486
          // Predicated region
          $region78: #{discriminator_forward.6} parent=76 // pred_check
            _
          $region79: #{discriminator_forward.6} parent=76 // pred_check_branch
            %4489 = sbr.rel (0) target = $region81
          $region80: #{discriminator_forward.6} parent=76 // pred_region
            // Predicated region
            $region82: #{discriminator_forward.6} parent=80 // pred_check
              _
            $region83: #{discriminator_forward.6} parent=80 // pred_check_branch
              %4491 = sbr.rel target = $region85
            $region84: #{discriminator_forward.6} parent=80 // pred_region
              // Predicated region
              $region97: #{discriminator_forward.6} parent=84 // pred_check
                _
              $region98: #{discriminator_forward.6} parent=84 // pred_check_branch
                %4509 = sbr.rel (0) target = $region100
              $region99: #{discriminator_forward.6} parent=84 // pred_region
                loop: start=0, step=1, limit=1
                $region101: #{discriminator_forward.6} parent=99 // loop_pre_header
                  _
                $region102: #{discriminator_forward.6} parent=99 // loop_header
                  %s4511 = sphi 0, %s4515
                  %p4512 = scmp.ge.s32.totalorder %s4511, 1
                  %s4516 = sphi %s4479, %s4479
                  %s4517 = sphi %s4487, %s4487
                $region103: #{discriminator_forward.6} parent=99 // loop_header_branch
                  %4514 = sbr.rel (%p4512) target = $region107
                $region104: #{discriminator_forward.6} parent=99 // loop_body
                  _
                $region105: #{discriminator_forward.6} parent=99 // loop_footer
                  %s4515 = sadd.s32 1, %s4511
                $region106: #{discriminator_forward.6} parent=99 // loop_footer_branch
                  %4510 = sbr.rel target = $region102
                $region107: #{discriminator_forward.6} parent=99 // loop_exit
                  _
                %s4519 = ssub.s32 16, 1
                loop: start=0, step=1, limit=1
                $region108: #{discriminator_forward.6} parent=99 // loop_pre_header
                  _
                $region109: #{discriminator_forward.6} parent=99 // loop_header
                  %s4521 = sphi 0, %s4525
                  %p4522 = scmp.ge.s32.totalorder %s4521, 1
                  %s4526 = sphi %s4479, %s4479
                  %s4527 = sphi %s4487, %s4487
                $region110: #{discriminator_forward.6} parent=99 // loop_header_branch
                  %4524 = sbr.rel (%p4522) target = $region114
                $region111: #{discriminator_forward.6} parent=99 // loop_body
                  %v4528 = vld [vmem:[%s4526] sm:%s4519]
                  %4529 = vst [vmem:[%s4527] sm:%s4519] %v4528
                  %v4530 = vld [vmem:[%s4526 + $0x4] sm:%s4519]
                  %4531 = vst [vmem:[%s4527 + $0x8] sm:%s4519] %v4530
                $region112: #{discriminator_forward.6} parent=99 // loop_footer
                  %s4525 = sadd.s32 1, %s4521
                $region113: #{discriminator_forward.6} parent=99 // loop_footer_branch
                  %4520 = sbr.rel target = $region109
                $region114: #{discriminator_forward.6} parent=99 // loop_exit
                  _
              $region100: #{discriminator_forward.6} parent=84 // pred_fallthru
                _
            $region85: #{discriminator_forward.6} parent=80 // pred_fallthru
              _
            // Predicated region
            $region86: #{discriminator_forward.6} parent=80 // pred_check
              _
            $region87: #{discriminator_forward.6} parent=80 // pred_check_branch
              %4493 = sbr.rel (0) target = $region89
            $region88: #{discriminator_forward.6} parent=80 // pred_region
              %s4495 = ssub.s32 16, 1
              loop: start=0, step=1, limit=1
              $region90: #{discriminator_forward.6} parent=88 // loop_pre_header
                _
              $region91: #{discriminator_forward.6} parent=88 // loop_header
                %s4497 = sphi 0, %s4501
                %p4498 = scmp.ge.s32.totalorder %s4497, 1
                %s4502 = sphi %s4479, %s4479
                %s4503 = sphi %s4487, %s4487
              $region92: #{discriminator_forward.6} parent=88 // loop_header_branch
                %4500 = sbr.rel (%p4498) target = $region96
              $region93: #{discriminator_forward.6} parent=88 // loop_body
                %v4504 = vld [vmem:[%s4502] sm:%s4495]
                %4505 = vst [vmem:[%s4503] sm:%s4495] %v4504
                %v4506 = vld [vmem:[%s4502 + $0x4] sm:%s4495]
                %4507 = vst [vmem:[%s4503 + $0x8] sm:%s4495] %v4506
              $region94: #{discriminator_forward.6} parent=88 // loop_footer
                %s4501 = sadd.s32 1, %s4497
              $region95: #{discriminator_forward.6} parent=88 // loop_footer_branch
                %4496 = sbr.rel target = $region91
              $region96: #{discriminator_forward.6} parent=88 // loop_exit
                _
            $region89: #{discriminator_forward.6} parent=80 // pred_fallthru
              _
          $region81: #{discriminator_forward.6} parent=76 // pred_fallthru
            _
          %4532 = vnop
        $region77: #{discriminator_forward.6} parent=68 // pred_fallthru
          _
      $region69: #{discriminator_forward.6} parent=5 // pred_fallthru
        _
      %p4533 = scmp.le.s32.totalorder 2, %s9
      // Predicated region
      $region115: #{discriminator_forward.6} parent=5 // pred_check
        %p4534 = pneg %p4533
      $region116: #{discriminator_forward.6} parent=5 // pred_check_branch
        %4536 = sbr.rel (%p4534) target = $region118
      $region117: #{discriminator_forward.6} parent=5 // pred_region
        %s4537 = ssub.s32 %s9, 2
        // Predicated region
        $region119: #{discriminator_forward.6} parent=117 // pred_check
          %p4538 = pneg %p130
        $region120: #{discriminator_forward.6} parent=117 // pred_check_branch
          %4540 = sbr.rel (%p4538) target = $region122
        $region121: #{discriminator_forward.6} parent=117 // pred_region
          %s4541 = sand.u32 %s115, 1
          %s4542 = sand.u32 %s115, 1
          %s4543 = smul.addr %s4542, 8
          %s4544 = scalar_lea.vmem [#allocation3], %s4543
        $region122: #{discriminator_forward.6} parent=117 // pred_fallthru
          _
      $region118: #{discriminator_forward.6} parent=5 // pred_fallthru
        _
    $region6: #{discriminator_forward.6} parent=1 // loop_footer
      %s13 = sadd.s32 1, %s9
    $region7: #{discriminator_forward.6} parent=1 // loop_footer_branch
      %8 = sbr.rel target = $region3
    $region8: #{discriminator_forward.6} parent=1 // loop_exit
      _

// kernel: discriminator_forward.7
$region0: #{discriminator_forward.7}
  #allocation0 [shape = 'u32[]', space=smem, size = 0x4, offset = 0x4, fixed_abs, tag = 'smem constant byte address 0x4 - core index']
  #allocation1 [shape = 'u32[144,128]{1,0:T(1,128)}', space=vmem, size = 0x12000, scoped, tag = 'internal scratch']
  #allocation2 [shape = 'f32[1,1]{1,0:T(1,128)S(1)}', space=vmem, size = 0x200, scoped, tag = 'scoped memory for discriminator_forward.7']
  %s0 = inlined_call_operand.vmem [shape: bf16[16,6912], index: 0, kind: input, shape index: {}]
  %s1 = inlined_call_operand.vmem [shape: bf16[6912,1], index: 1, kind: input, shape index: {}]
  %s2 = inlined_call_operand.<no memory space> [shape: f32[1,1], index: 2, kind: input, shape index: {}]
  %s3 = inlined_call_operand.vmem [shape: f32[16,1], index: 3, kind: output, shape index: {}]
  %s4 = sld [smem:[#allocation0]]
  $region22: #{discriminator_forward.7} parent=0
    _
  %s6 = ssub.s32 1, %s4
  %s7 = scalar_select 0, %s6, %s4
  %v8 = vstv %s2
  %9 = vst [vmem:[#allocation2] sm:$0x1] %v8
  // Predicated region
  $region2: #{discriminator_forward.7} parent=0 // pred_check
    _
  $region3: #{discriminator_forward.7} parent=0 // pred_check_branch
    %11 = sbr.rel (0) target = $region5
  $region4: #{discriminator_forward.7} parent=0 // pred_region
    _
  $region5: #{discriminator_forward.7} parent=0 // pred_fallthru
    _
  // Predicated region
  $region6: #{discriminator_forward.7} parent=0 // pred_check
    _
  $region7: #{discriminator_forward.7} parent=0 // pred_check_branch
    %13 = sbr.rel (0) target = $region9
  $region8: #{discriminator_forward.7} parent=0 // pred_region
    _
  $region9: #{discriminator_forward.7} parent=0 // pred_fallthru
    _
  // Predicated region
  $region10: #{discriminator_forward.7} parent=0 // pred_check
    _
  $region11: #{discriminator_forward.7} parent=0 // pred_check_branch
    %15 = sbr.rel (0) target = $region13
  $region12: #{discriminator_forward.7} parent=0 // pred_region
    _
  $region13: #{discriminator_forward.7} parent=0 // pred_fallthru
    _
  %v17 = vld [vmem:[%s0] sm:$0xff]
  %v18 = vld [vmem:[%s0 + $0x8] sm:$0xff]
  %v19 = vld [vmem:[%s0 + $0x10] sm:$0xff]
  %v20 = vld [vmem:[%s0 + $0x18] sm:$0xff]
  %v21 = vld [vmem:[%s0 + $0x20] sm:$0xff]
  %v22 = vld [vmem:[%s0 + $0x28] sm:$0xff]
  %v23 = vld [vmem:[%s0 + $0x30] sm:$0xff]
  %v24 = vld [vmem:[%s0 + $0x38] sm:$0xff]
  %v25 = vld [vmem:[%s0 + $0x40] sm:$0xff]
  %v26 = vld [vmem:[%s0 + $0x48] sm:$0xff]
  %v27 = vld [vmem:[%s0 + $0x50] sm:$0xff]
  %v28 = vld [vmem:[%s0 + $0x58] sm:$0xff]
  %v29 = vld [vmem:[%s0 + $0x60] sm:$0xff]
  %v30 = vld [vmem:[%s0 + $0x68] sm:$0xff]
  %v31 = vld [vmem:[%s0 + $0x70] sm:$0xff]
  %v32 = vld [vmem:[%s0 + $0x78] sm:$0xff]
  %v33 = vld [vmem:[%s0 + $0x80] sm:$0xff]
  %v34 = vld [vmem:[%s0 + $0x88] sm:$0xff]
  %v35 = vld [vmem:[%s0 + $0x90] sm:$0xff]
  %v36 = vld [vmem:[%s0 + $0x98] sm:$0xff]
  %v37 = vld [vmem:[%s0 + $0xa0] sm:$0xff]
  %v38 = vld [vmem:[%s0 + $0xa8] sm:$0xff]
  %v39 = vld [vmem:[%s0 + $0xb0] sm:$0xff]
  %v40 = vld [vmem:[%s0 + $0xb8] sm:$0xff]
  %v41 = vld [vmem:[%s0 + $0xc0] sm:$0xff]
  %v42 = vld [vmem:[%s0 + $0xc8] sm:$0xff]
  %v43 = vld [vmem:[%s0 + $0xd0] sm:$0xff]
  %v44 = vld [vmem:[%s0 + $0xd8] sm:$0xff]
  %v45 = vld [vmem:[%s0 + $0xe0] sm:$0xff]
  %v46 = vld [vmem:[%s0 + $0xe8] sm:$0xff]
  %v47 = vld [vmem:[%s0 + $0xf0] sm:$0xff]
  %v48 = vld [vmem:[%s0 + $0xf8] sm:$0xff]
  %v49 = vld [vmem:[%s0 + $0x100] sm:$0xff]
  %v50 = vld [vmem:[%s0 + $0x108] sm:$0xff]
  %v51 = vld [vmem:[%s0 + $0x110] sm:$0xff]
  %v52 = vld [vmem:[%s0 + $0x118] sm:$0xff]
  %v53 = vld [vmem:[%s0 + $0x120] sm:$0xff]
  %v54 = vld [vmem:[%s0 + $0x128] sm:$0xff]
  %v55 = vld [vmem:[%s0 + $0x130] sm:$0xff]
  %v56 = vld [vmem:[%s0 + $0x138] sm:$0xff]
  %v57 = vld [vmem:[%s0 + $0x140] sm:$0xff]
  %v58 = vld [vmem:[%s0 + $0x148] sm:$0xff]
  %v59 = vld [vmem:[%s0 + $0x150] sm:$0xff]
  %v60 = vld [vmem:[%s0 + $0x158] sm:$0xff]
  %v61 = vld [vmem:[%s0 + $0x160] sm:$0xff]
  %v62 = vld [vmem:[%s0 + $0x168] sm:$0xff]
  %v63 = vld [vmem:[%s0 + $0x170] sm:$0xff]
  %v64 = vld [vmem:[%s0 + $0x178] sm:$0xff]
  %v65 = vld [vmem:[%s0 + $0x180] sm:$0xff]
  %v66 = vld [vmem:[%s0 + $0x188] sm:$0xff]
  %v67 = vld [vmem:[%s0 + $0x190] sm:$0xff]
  %v68 = vld [vmem:[%s0 + $0x198] sm:$0xff]
  %v69 = vld [vmem:[%s0 + $0x1a0] sm:$0xff]
  %v70 = vld [vmem:[%s0 + $0x1a8] sm:$0xff]
  %v71 = vld [vmem:[%s1] sm:$0xf]
  %v72 = vld [vmem:[%s1 + $0x4] sm:$0xf]
  %v73 = vld [vmem:[%s1 + $0x8] sm:$0xf]
  %v74 = vld [vmem:[%s1 + $0xc] sm:$0xf]
  %v75 = vld [vmem:[%s1 + $0x10] sm:$0xf]
  %v76 = vld [vmem:[%s1 + $0x14] sm:$0xf]
  %v77 = vld [vmem:[%s1 + $0x18] sm:$0xf]
  %v78 = vld [vmem:[%s1 + $0x1c] sm:$0xf]
  %v79 = vld [vmem:[%s1 + $0x20] sm:$0xf]
  %v80 = vld [vmem:[%s1 + $0x24] sm:$0xf]
  %v81 = vld [vmem:[%s1 + $0x28] sm:$0xf]
  %v82 = vld [vmem:[%s1 + $0x2c] sm:$0xf]
  %v83 = vld [vmem:[%s1 + $0x30] sm:$0xf]
  %v84 = vld [vmem:[%s1 + $0x34] sm:$0xf]
  %v85 = vld [vmem:[%s1 + $0x38] sm:$0xf]
  %v86 = vld [vmem:[%s1 + $0x3c] sm:$0xf]
  %v87 = vld [vmem:[%s1 + $0x40] sm:$0xf]
  %v88 = vld [vmem:[%s1 + $0x44] sm:$0xf]
  %v89 = vld [vmem:[%s1 + $0x48] sm:$0xf]
  %v90 = vld [vmem:[%s1 + $0x4c] sm:$0xf]
  %v91 = vld [vmem:[%s1 + $0x50] sm:$0xf]
  %v92 = vld [vmem:[%s1 + $0x54] sm:$0xf]
  %v93 = vld [vmem:[%s1 + $0x58] sm:$0xf]
  %v94 = vld [vmem:[%s1 + $0x5c] sm:$0xf]
  %v95 = vld [vmem:[%s1 + $0x60] sm:$0xf]
  %v96 = vld [vmem:[%s1 + $0x64] sm:$0xf]
  %v97 = vld [vmem:[%s1 + $0x68] sm:$0xf]
  %v98 = vld [vmem:[%s1 + $0x6c] sm:$0xf]
  %v99 = vld [vmem:[%s1 + $0x70] sm:$0xf]
  %v100 = vld [vmem:[%s1 + $0x74] sm:$0xf]
  %v101 = vld [vmem:[%s1 + $0x78] sm:$0xf]
  %v102 = vld [vmem:[%s1 + $0x7c] sm:$0xf]
  %v103 = vld [vmem:[%s1 + $0x80] sm:$0xf]
  %v104 = vld [vmem:[%s1 + $0x84] sm:$0xf]
  %v105 = vld [vmem:[%s1 + $0x88] sm:$0xf]
  %v106 = vld [vmem:[%s1 + $0x8c] sm:$0xf]
  %v107 = vld [vmem:[%s1 + $0x90] sm:$0xf]
  %v108 = vld [vmem:[%s1 + $0x94] sm:$0xf]
  %v109 = vld [vmem:[%s1 + $0x98] sm:$0xf]
  %v110 = vld [vmem:[%s1 + $0x9c] sm:$0xf]
  %v111 = vld [vmem:[%s1 + $0xa0] sm:$0xf]
  %v112 = vld [vmem:[%s1 + $0xa4] sm:$0xf]
  %v113 = vld [vmem:[%s1 + $0xa8] sm:$0xf]
  %v114 = vld [vmem:[%s1 + $0xac] sm:$0xf]
  %v115 = vld [vmem:[%s1 + $0xb0] sm:$0xf]
  %v116 = vld [vmem:[%s1 + $0xb4] sm:$0xf]
  %v117 = vld [vmem:[%s1 + $0xb8] sm:$0xf]
  %v118 = vld [vmem:[%s1 + $0xbc] sm:$0xf]
  %v119 = vld [vmem:[%s1 + $0xc0] sm:$0xf]
  %v120 = vld [vmem:[%s1 + $0xc4] sm:$0xf]
  %v121 = vld [vmem:[%s1 + $0xc8] sm:$0xf]
  %v122 = vld [vmem:[%s1 + $0xcc] sm:$0xf]
  %v123 = vld [vmem:[%s1 + $0xd0] sm:$0xf]
  %v124 = vld [vmem:[%s1 + $0xd4] sm:$0xf]
  %v125 = vld [vmem:[%s1 + $0xd8] sm:$0xf]
  %v126 = vld [vmem:[%s1 + $0xdc] sm:$0xf]
  %v127 = vld [vmem:[%s1 + $0xe0] sm:$0xf]
  %v128 = vld [vmem:[%s1 + $0xe4] sm:$0xf]
  %v129 = vld [vmem:[%s1 + $0xe8] sm:$0xf]
  %v130 = vld [vmem:[%s1 + $0xec] sm:$0xf]
  %v131 = vld [vmem:[%s1 + $0xf0] sm:$0xf]
  %v132 = vld [vmem:[%s1 + $0xf4] sm:$0xf]
  %v133 = vld [vmem:[%s1 + $0xf8] sm:$0xf]
  %v134 = vld [vmem:[%s1 + $0xfc] sm:$0xf]
  %v135 = vld [vmem:[%s1 + $0x100] sm:$0xf]
  %v136 = vld [vmem:[%s1 + $0x104] sm:$0xf]
  %v137 = vld [vmem:[%s1 + $0x108] sm:$0xf]
  %v138 = vld [vmem:[%s1 + $0x10c] sm:$0xf]
  %v139 = vld [vmem:[%s1 + $0x110] sm:$0xf]
  %v140 = vld [vmem:[%s1 + $0x114] sm:$0xf]
  %v141 = vld [vmem:[%s1 + $0x118] sm:$0xf]
  %v142 = vld [vmem:[%s1 + $0x11c] sm:$0xf]
  %v143 = vld [vmem:[%s1 + $0x120] sm:$0xf]
  %v144 = vld [vmem:[%s1 + $0x124] sm:$0xf]
  %v145 = vld [vmem:[%s1 + $0x128] sm:$0xf]
  %v146 = vld [vmem:[%s1 + $0x12c] sm:$0xf]
  %v147 = vld [vmem:[%s1 + $0x130] sm:$0xf]
  %v148 = vld [vmem:[%s1 + $0x134] sm:$0xf]
  %v149 = vld [vmem:[%s1 + $0x138] sm:$0xf]
  %v150 = vld [vmem:[%s1 + $0x13c] sm:$0xf]
  %v151 = vld [vmem:[%s1 + $0x140] sm:$0xf]
  %v152 = vld [vmem:[%s1 + $0x144] sm:$0xf]
  %v153 = vld [vmem:[%s1 + $0x148] sm:$0xf]
  %v154 = vld [vmem:[%s1 + $0x14c] sm:$0xf]
  %v155 = vld [vmem:[%s1 + $0x150] sm:$0xf]
  %v156 = vld [vmem:[%s1 + $0x154] sm:$0xf]
  %v157 = vld [vmem:[%s1 + $0x158] sm:$0xf]
  %v158 = vld [vmem:[%s1 + $0x15c] sm:$0xf]
  %v159 = vld [vmem:[%s1 + $0x160] sm:$0xf]
  %v160 = vld [vmem:[%s1 + $0x164] sm:$0xf]
  %v161 = vld [vmem:[%s1 + $0x168] sm:$0xf]
  %v162 = vld [vmem:[%s1 + $0x16c] sm:$0xf]
  %v163 = vld [vmem:[%s1 + $0x170] sm:$0xf]
  %v164 = vld [vmem:[%s1 + $0x174] sm:$0xf]
  %v165 = vld [vmem:[%s1 + $0x178] sm:$0xf]
  %v166 = vld [vmem:[%s1 + $0x17c] sm:$0xf]
  %v167 = vld [vmem:[%s1 + $0x180] sm:$0xf]
  %v168 = vld [vmem:[%s1 + $0x184] sm:$0xf]
  %v169 = vld [vmem:[%s1 + $0x188] sm:$0xf]
  %v170 = vld [vmem:[%s1 + $0x18c] sm:$0xf]
  %v171 = vld [vmem:[%s1 + $0x190] sm:$0xf]
  %v172 = vld [vmem:[%s1 + $0x194] sm:$0xf]
  %v173 = vld [vmem:[%s1 + $0x198] sm:$0xf]
  %v174 = vld [vmem:[%s1 + $0x19c] sm:$0xf]
  %v175 = vld [vmem:[%s1 + $0x1a0] sm:$0xf]
  %v176 = vld [vmem:[%s1 + $0x1a4] sm:$0xf]
  %v177 = vld [vmem:[%s1 + $0x1a8] sm:$0xf]
  %v178 = vld [vmem:[%s1 + $0x1ac] sm:$0xf]
  %v179 = vld [vmem:[%s1 + $0x1b0] sm:$0xf]
  %v180 = vld [vmem:[%s1 + $0x1b4] sm:$0xf]
  %v181 = vld [vmem:[%s1 + $0x1b8] sm:$0xf]
  %v182 = vld [vmem:[%s1 + $0x1bc] sm:$0xf]
  %v183 = vld [vmem:[%s1 + $0x1c0] sm:$0xf]
  %v184 = vld [vmem:[%s1 + $0x1c4] sm:$0xf]
  %v185 = vld [vmem:[%s1 + $0x1c8] sm:$0xf]
  %v186 = vld [vmem:[%s1 + $0x1cc] sm:$0xf]
  %v187 = vld [vmem:[%s1 + $0x1d0] sm:$0xf]
  %v188 = vld [vmem:[%s1 + $0x1d4] sm:$0xf]
  %v189 = vld [vmem:[%s1 + $0x1d8] sm:$0xf]
  %v190 = vld [vmem:[%s1 + $0x1dc] sm:$0xf]
  %v191 = vld [vmem:[%s1 + $0x1e0] sm:$0xf]
  %v192 = vld [vmem:[%s1 + $0x1e4] sm:$0xf]
  %v193 = vld [vmem:[%s1 + $0x1e8] sm:$0xf]
  %v194 = vld [vmem:[%s1 + $0x1ec] sm:$0xf]
  %v195 = vld [vmem:[%s1 + $0x1f0] sm:$0xf]
  %v196 = vld [vmem:[%s1 + $0x1f4] sm:$0xf]
  %v197 = vld [vmem:[%s1 + $0x1f8] sm:$0xf]
  %v198 = vld [vmem:[%s1 + $0x1fc] sm:$0xf]
  %v199 = vld [vmem:[%s1 + $0x200] sm:$0xf]
  %v200 = vld [vmem:[%s1 + $0x204] sm:$0xf]
  %v201 = vld [vmem:[%s1 + $0x208] sm:$0xf]
  %v202 = vld [vmem:[%s1 + $0x20c] sm:$0xf]
  %v203 = vld [vmem:[%s1 + $0x210] sm:$0xf]
  %v204 = vld [vmem:[%s1 + $0x214] sm:$0xf]
  %v205 = vld [vmem:[%s1 + $0x218] sm:$0xf]
  %v206 = vld [vmem:[%s1 + $0x21c] sm:$0xf]
  %v207 = vld [vmem:[%s1 + $0x220] sm:$0xf]
  %v208 = vld [vmem:[%s1 + $0x224] sm:$0xf]
  %v209 = vld [vmem:[%s1 + $0x228] sm:$0xf]
  %v210 = vld [vmem:[%s1 + $0x22c] sm:$0xf]
  %v211 = vld [vmem:[%s1 + $0x230] sm:$0xf]
  %v212 = vld [vmem:[%s1 + $0x234] sm:$0xf]
  %v213 = vld [vmem:[%s1 + $0x238] sm:$0xf]
  %v214 = vld [vmem:[%s1 + $0x23c] sm:$0xf]
  %v215 = vld [vmem:[%s1 + $0x240] sm:$0xf]
  %v216 = vld [vmem:[%s1 + $0x244] sm:$0xf]
  %v217 = vld [vmem:[%s1 + $0x248] sm:$0xf]
  %v218 = vld [vmem:[%s1 + $0x24c] sm:$0xf]
  %v219 = vld [vmem:[%s1 + $0x250] sm:$0xf]
  %v220 = vld [vmem:[%s1 + $0x254] sm:$0xf]
  %v221 = vld [vmem:[%s1 + $0x258] sm:$0xf]
  %v222 = vld [vmem:[%s1 + $0x25c] sm:$0xf]
  %v223 = vld [vmem:[%s1 + $0x260] sm:$0xf]
  %v224 = vld [vmem:[%s1 + $0x264] sm:$0xf]
  %v225 = vld [vmem:[%s1 + $0x268] sm:$0xf]
  %v226 = vld [vmem:[%s1 + $0x26c] sm:$0xf]
  %v227 = vld [vmem:[%s1 + $0x270] sm:$0xf]
  %v228 = vld [vmem:[%s1 + $0x274] sm:$0xf]
  %v229 = vld [vmem:[%s1 + $0x278] sm:$0xf]
  %v230 = vld [vmem:[%s1 + $0x27c] sm:$0xf]
  %v231 = vld [vmem:[%s1 + $0x280] sm:$0xf]
  %v232 = vld [vmem:[%s1 + $0x284] sm:$0xf]
  %v233 = vld [vmem:[%s1 + $0x288] sm:$0xf]
  %v234 = vld [vmem:[%s1 + $0x28c] sm:$0xf]
  %v235 = vld [vmem:[%s1 + $0x290] sm:$0xf]
  %v236 = vld [vmem:[%s1 + $0x294] sm:$0xf]
  %v237 = vld [vmem:[%s1 + $0x298] sm:$0xf]
  %v238 = vld [vmem:[%s1 + $0x29c] sm:$0xf]
  %v239 = vld [vmem:[%s1 + $0x2a0] sm:$0xf]
  %v240 = vld [vmem:[%s1 + $0x2a4] sm:$0xf]
  %v241 = vld [vmem:[%s1 + $0x2a8] sm:$0xf]
  %v242 = vld [vmem:[%s1 + $0x2ac] sm:$0xf]
  %v243 = vld [vmem:[%s1 + $0x2b0] sm:$0xf]
  %v244 = vld [vmem:[%s1 + $0x2b4] sm:$0xf]
  %v245 = vld [vmem:[%s1 + $0x2b8] sm:$0xf]
  %v246 = vld [vmem:[%s1 + $0x2bc] sm:$0xf]
  %v247 = vld [vmem:[%s1 + $0x2c0] sm:$0xf]
  %v248 = vld [vmem:[%s1 + $0x2c4] sm:$0xf]
  %v249 = vld [vmem:[%s1 + $0x2c8] sm:$0xf]
  %v250 = vld [vmem:[%s1 + $0x2cc] sm:$0xf]
  %v251 = vld [vmem:[%s1 + $0x2d0] sm:$0xf]
  %v252 = vld [vmem:[%s1 + $0x2d4] sm:$0xf]
  %v253 = vld [vmem:[%s1 + $0x2d8] sm:$0xf]
  %v254 = vld [vmem:[%s1 + $0x2dc] sm:$0xf]
  %v255 = vld [vmem:[%s1 + $0x2e0] sm:$0xf]
  %v256 = vld [vmem:[%s1 + $0x2e4] sm:$0xf]
  %v257 = vld [vmem:[%s1 + $0x2e8] sm:$0xf]
  %v258 = vld [vmem:[%s1 + $0x2ec] sm:$0xf]
  %v259 = vld [vmem:[%s1 + $0x2f0] sm:$0xf]
  %v260 = vld [vmem:[%s1 + $0x2f4] sm:$0xf]
  %v261 = vld [vmem:[%s1 + $0x2f8] sm:$0xf]
  %v262 = vld [vmem:[%s1 + $0x2fc] sm:$0xf]
  %v263 = vld [vmem:[%s1 + $0x300] sm:$0xf]
  %v264 = vld [vmem:[%s1 + $0x304] sm:$0xf]
  %v265 = vld [vmem:[%s1 + $0x308] sm:$0xf]
  %v266 = vld [vmem:[%s1 + $0x30c] sm:$0xf]
  %v267 = vld [vmem:[%s1 + $0x310] sm:$0xf]
  %v268 = vld [vmem:[%s1 + $0x314] sm:$0xf]
  %v269 = vld [vmem:[%s1 + $0x318] sm:$0xf]
  %v270 = vld [vmem:[%s1 + $0x31c] sm:$0xf]
  %v271 = vld [vmem:[%s1 + $0x320] sm:$0xf]
  %v272 = vld [vmem:[%s1 + $0x324] sm:$0xf]
  %v273 = vld [vmem:[%s1 + $0x328] sm:$0xf]
  %v274 = vld [vmem:[%s1 + $0x32c] sm:$0xf]
  %v275 = vld [vmem:[%s1 + $0x330] sm:$0xf]
  %v276 = vld [vmem:[%s1 + $0x334] sm:$0xf]
  %v277 = vld [vmem:[%s1 + $0x338] sm:$0xf]
  %v278 = vld [vmem:[%s1 + $0x33c] sm:$0xf]
  %v279 = vld [vmem:[%s1 + $0x340] sm:$0xf]
  %v280 = vld [vmem:[%s1 + $0x344] sm:$0xf]
  %v281 = vld [vmem:[%s1 + $0x348] sm:$0xf]
  %v282 = vld [vmem:[%s1 + $0x34c] sm:$0xf]
  %v283 = vld [vmem:[%s1 + $0x350] sm:$0xf]
  %v284 = vld [vmem:[%s1 + $0x354] sm:$0xf]
  %v285 = vld [vmem:[%s1 + $0x358] sm:$0xf]
  %v286 = vld [vmem:[%s1 + $0x35c] sm:$0xf]
  %v287 = vld [vmem:[%s1 + $0x360] sm:$0xf]
  %v288 = vld [vmem:[%s1 + $0x364] sm:$0xf]
  %v289 = vld [vmem:[%s1 + $0x368] sm:$0xf]
  %v290 = vld [vmem:[%s1 + $0x36c] sm:$0xf]
  %v291 = vld [vmem:[%s1 + $0x370] sm:$0xf]
  %v292 = vld [vmem:[%s1 + $0x374] sm:$0xf]
  %v293 = vld [vmem:[%s1 + $0x378] sm:$0xf]
  %v294 = vld [vmem:[%s1 + $0x37c] sm:$0xf]
  %v295 = vld [vmem:[%s1 + $0x380] sm:$0xf]
  %v296 = vld [vmem:[%s1 + $0x384] sm:$0xf]
  %v297 = vld [vmem:[%s1 + $0x388] sm:$0xf]
  %v298 = vld [vmem:[%s1 + $0x38c] sm:$0xf]
  %v299 = vld [vmem:[%s1 + $0x390] sm:$0xf]
  %v300 = vld [vmem:[%s1 + $0x394] sm:$0xf]
  %v301 = vld [vmem:[%s1 + $0x398] sm:$0xf]
  %v302 = vld [vmem:[%s1 + $0x39c] sm:$0xf]
  %v303 = vld [vmem:[%s1 + $0x3a0] sm:$0xf]
  %v304 = vld [vmem:[%s1 + $0x3a4] sm:$0xf]
  %v305 = vld [vmem:[%s1 + $0x3a8] sm:$0xf]
  %v306 = vld [vmem:[%s1 + $0x3ac] sm:$0xf]
  %v307 = vld [vmem:[%s1 + $0x3b0] sm:$0xf]
  %v308 = vld [vmem:[%s1 + $0x3b4] sm:$0xf]
  %v309 = vld [vmem:[%s1 + $0x3b8] sm:$0xf]
  %v310 = vld [vmem:[%s1 + $0x3bc] sm:$0xf]
  %v311 = vld [vmem:[%s1 + $0x3c0] sm:$0xf]
  %v312 = vld [vmem:[%s1 + $0x3c4] sm:$0xf]
  %v313 = vld [vmem:[%s1 + $0x3c8] sm:$0xf]
  %v314 = vld [vmem:[%s1 + $0x3cc] sm:$0xf]
  %v315 = vld [vmem:[%s1 + $0x3d0] sm:$0xf]
  %v316 = vld [vmem:[%s1 + $0x3d4] sm:$0xf]
  %v317 = vld [vmem:[%s1 + $0x3d8] sm:$0xf]
  %v318 = vld [vmem:[%s1 + $0x3dc] sm:$0xf]
  %v319 = vld [vmem:[%s1 + $0x3e0] sm:$0xf]
  %v320 = vld [vmem:[%s1 + $0x3e4] sm:$0xf]
  %v321 = vld [vmem:[%s1 + $0x3e8] sm:$0xf]
  %v322 = vld [vmem:[%s1 + $0x3ec] sm:$0xf]
  %v323 = vld [vmem:[%s1 + $0x3f0] sm:$0xf]
  %v324 = vld [vmem:[%s1 + $0x3f4] sm:$0xf]
  %v325 = vld [vmem:[%s1 + $0x3f8] sm:$0xf]
  %v326 = vld [vmem:[%s1 + $0x3fc] sm:$0xf]
  %v327 = vld [vmem:[%s1 + $0x400] sm:$0xf]
  %v328 = vld [vmem:[%s1 + $0x404] sm:$0xf]
  %v329 = vld [vmem:[%s1 + $0x408] sm:$0xf]
  %v330 = vld [vmem:[%s1 + $0x40c] sm:$0xf]
  %v331 = vld [vmem:[%s1 + $0x410] sm:$0xf]
  %v332 = vld [vmem:[%s1 + $0x414] sm:$0xf]
  %v333 = vld [vmem:[%s1 + $0x418] sm:$0xf]
  %v334 = vld [vmem:[%s1 + $0x41c] sm:$0xf]
  %v335 = vld [vmem:[%s1 + $0x420] sm:$0xf]
  %v336 = vld [vmem:[%s1 + $0x424] sm:$0xf]
  %v337 = vld [vmem:[%s1 + $0x428] sm:$0xf]
  %v338 = vld [vmem:[%s1 + $0x42c] sm:$0xf]
  %v339 = vld [vmem:[%s1 + $0x430] sm:$0xf]
  %v340 = vld [vmem:[%s1 + $0x434] sm:$0xf]
  %v341 = vld [vmem:[%s1 + $0x438] sm:$0xf]
  %v342 = vld [vmem:[%s1 + $0x43c] sm:$0xf]
  %v343 = vld [vmem:[%s1 + $0x440] sm:$0xf]
  %v344 = vld [vmem:[%s1 + $0x444] sm:$0xf]
  %v345 = vld [vmem:[%s1 + $0x448] sm:$0xf]
  %v346 = vld [vmem:[%s1 + $0x44c] sm:$0xf]
  %v347 = vld [vmem:[%s1 + $0x450] sm:$0xf]
  %v348 = vld [vmem:[%s1 + $0x454] sm:$0xf]
  %v349 = vld [vmem:[%s1 + $0x458] sm:$0xf]
  %v350 = vld [vmem:[%s1 + $0x45c] sm:$0xf]
  %v351 = vld [vmem:[%s1 + $0x460] sm:$0xf]
  %v352 = vld [vmem:[%s1 + $0x464] sm:$0xf]
  %v353 = vld [vmem:[%s1 + $0x468] sm:$0xf]
  %v354 = vld [vmem:[%s1 + $0x46c] sm:$0xf]
  %v355 = vld [vmem:[%s1 + $0x470] sm:$0xf]
  %v356 = vld [vmem:[%s1 + $0x474] sm:$0xf]
  %v357 = vld [vmem:[%s1 + $0x478] sm:$0xf]
  %v358 = vld [vmem:[%s1 + $0x47c] sm:$0xf]
  %v359 = vld [vmem:[%s1 + $0x480] sm:$0xf]
  %v360 = vld [vmem:[%s1 + $0x484] sm:$0xf]
  %v361 = vld [vmem:[%s1 + $0x488] sm:$0xf]
  %v362 = vld [vmem:[%s1 + $0x48c] sm:$0xf]
  %v363 = vld [vmem:[%s1 + $0x490] sm:$0xf]
  %v364 = vld [vmem:[%s1 + $0x494] sm:$0xf]
  %v365 = vld [vmem:[%s1 + $0x498] sm:$0xf]
  %v366 = vld [vmem:[%s1 + $0x49c] sm:$0xf]
  %v367 = vld [vmem:[%s1 + $0x4a0] sm:$0xf]
  %v368 = vld [vmem:[%s1 + $0x4a4] sm:$0xf]
  %v369 = vld [vmem:[%s1 + $0x4a8] sm:$0xf]
  %v370 = vld [vmem:[%s1 + $0x4ac] sm:$0xf]
  %v371 = vld [vmem:[%s1 + $0x4b0] sm:$0xf]
  %v372 = vld [vmem:[%s1 + $0x4b4] sm:$0xf]
  %v373 = vld [vmem:[%s1 + $0x4b8] sm:$0xf]
  %v374 = vld [vmem:[%s1 + $0x4bc] sm:$0xf]
  %v375 = vld [vmem:[%s1 + $0x4c0] sm:$0xf]
  %v376 = vld [vmem:[%s1 + $0x4c4] sm:$0xf]
  %v377 = vld [vmem:[%s1 + $0x4c8] sm:$0xf]
  %v378 = vld [vmem:[%s1 + $0x4cc] sm:$0xf]
  %v379 = vld [vmem:[%s1 + $0x4d0] sm:$0xf]
  %v380 = vld [vmem:[%s1 + $0x4d4] sm:$0xf]
  %v381 = vld [vmem:[%s1 + $0x4d8] sm:$0xf]
  %v382 = vld [vmem:[%s1 + $0x4dc] sm:$0xf]
  %v383 = vld [vmem:[%s1 + $0x4e0] sm:$0xf]
  %v384 = vld [vmem:[%s1 + $0x4e4] sm:$0xf]
  %v385 = vld [vmem:[%s1 + $0x4e8] sm:$0xf]
  %v386 = vld [vmem:[%s1 + $0x4ec] sm:$0xf]
  %v387 = vld [vmem:[%s1 + $0x4f0] sm:$0xf]
  %v388 = vld [vmem:[%s1 + $0x4f4] sm:$0xf]
  %v389 = vld [vmem:[%s1 + $0x4f8] sm:$0xf]
  %v390 = vld [vmem:[%s1 + $0x4fc] sm:$0xf]
  %v391 = vld [vmem:[%s1 + $0x500] sm:$0xf]
  %v392 = vld [vmem:[%s1 + $0x504] sm:$0xf]
  %v393 = vld [vmem:[%s1 + $0x508] sm:$0xf]
  %v394 = vld [vmem:[%s1 + $0x50c] sm:$0xf]
  %v395 = vld [vmem:[%s1 + $0x510] sm:$0xf]
  %v396 = vld [vmem:[%s1 + $0x514] sm:$0xf]
  %v397 = vld [vmem:[%s1 + $0x518] sm:$0xf]
  %v398 = vld [vmem:[%s1 + $0x51c] sm:$0xf]
  %v399 = vld [vmem:[%s1 + $0x520] sm:$0xf]
  %v400 = vld [vmem:[%s1 + $0x524] sm:$0xf]
  %v401 = vld [vmem:[%s1 + $0x528] sm:$0xf]
  %v402 = vld [vmem:[%s1 + $0x52c] sm:$0xf]
  %v403 = vld [vmem:[%s1 + $0x530] sm:$0xf]
  %v404 = vld [vmem:[%s1 + $0x534] sm:$0xf]
  %v405 = vld [vmem:[%s1 + $0x538] sm:$0xf]
  %v406 = vld [vmem:[%s1 + $0x53c] sm:$0xf]
  %v407 = vld [vmem:[%s1 + $0x540] sm:$0xf]
  %v408 = vld [vmem:[%s1 + $0x544] sm:$0xf]
  %v409 = vld [vmem:[%s1 + $0x548] sm:$0xf]
  %v410 = vld [vmem:[%s1 + $0x54c] sm:$0xf]
  %v411 = vld [vmem:[%s1 + $0x550] sm:$0xf]
  %v412 = vld [vmem:[%s1 + $0x554] sm:$0xf]
  %v413 = vld [vmem:[%s1 + $0x558] sm:$0xf]
  %v414 = vld [vmem:[%s1 + $0x55c] sm:$0xf]
  %v415 = vld [vmem:[%s1 + $0x560] sm:$0xf]
  %v416 = vld [vmem:[%s1 + $0x564] sm:$0xf]
  %v417 = vld [vmem:[%s1 + $0x568] sm:$0xf]
  %v418 = vld [vmem:[%s1 + $0x56c] sm:$0xf]
  %v419 = vld [vmem:[%s1 + $0x570] sm:$0xf]
  %v420 = vld [vmem:[%s1 + $0x574] sm:$0xf]
  %v421 = vld [vmem:[%s1 + $0x578] sm:$0xf]
  %v422 = vld [vmem:[%s1 + $0x57c] sm:$0xf]
  %v423 = vld [vmem:[%s1 + $0x580] sm:$0xf]
  %v424 = vld [vmem:[%s1 + $0x584] sm:$0xf]
  %v425 = vld [vmem:[%s1 + $0x588] sm:$0xf]
  %v426 = vld [vmem:[%s1 + $0x58c] sm:$0xf]
  %v427 = vld [vmem:[%s1 + $0x590] sm:$0xf]
  %v428 = vld [vmem:[%s1 + $0x594] sm:$0xf]
  %v429 = vld [vmem:[%s1 + $0x598] sm:$0xf]
  %v430 = vld [vmem:[%s1 + $0x59c] sm:$0xf]
  %v431 = vld [vmem:[%s1 + $0x5a0] sm:$0xf]
  %v432 = vld [vmem:[%s1 + $0x5a4] sm:$0xf]
  %v433 = vld [vmem:[%s1 + $0x5a8] sm:$0xf]
  %v434 = vld [vmem:[%s1 + $0x5ac] sm:$0xf]
  %v435 = vld [vmem:[%s1 + $0x5b0] sm:$0xf]
  %v436 = vld [vmem:[%s1 + $0x5b4] sm:$0xf]
  %v437 = vld [vmem:[%s1 + $0x5b8] sm:$0xf]
  %v438 = vld [vmem:[%s1 + $0x5bc] sm:$0xf]
  %v439 = vld [vmem:[%s1 + $0x5c0] sm:$0xf]
  %v440 = vld [vmem:[%s1 + $0x5c4] sm:$0xf]
  %v441 = vld [vmem:[%s1 + $0x5c8] sm:$0xf]
  %v442 = vld [vmem:[%s1 + $0x5cc] sm:$0xf]
  %v443 = vld [vmem:[%s1 + $0x5d0] sm:$0xf]
  %v444 = vld [vmem:[%s1 + $0x5d4] sm:$0xf]
  %v445 = vld [vmem:[%s1 + $0x5d8] sm:$0xf]
  %v446 = vld [vmem:[%s1 + $0x5dc] sm:$0xf]
  %v447 = vld [vmem:[%s1 + $0x5e0] sm:$0xf]
  %v448 = vld [vmem:[%s1 + $0x5e4] sm:$0xf]
  %v449 = vld [vmem:[%s1 + $0x5e8] sm:$0xf]
  %v450 = vld [vmem:[%s1 + $0x5ec] sm:$0xf]
  %v451 = vld [vmem:[%s1 + $0x5f0] sm:$0xf]
  %v452 = vld [vmem:[%s1 + $0x5f4] sm:$0xf]
  %v453 = vld [vmem:[%s1 + $0x5f8] sm:$0xf]
  %v454 = vld [vmem:[%s1 + $0x5fc] sm:$0xf]
  %v455 = vld [vmem:[%s1 + $0x600] sm:$0xf]
  %v456 = vld [vmem:[%s1 + $0x604] sm:$0xf]
  %v457 = vld [vmem:[%s1 + $0x608] sm:$0xf]
  %v458 = vld [vmem:[%s1 + $0x60c] sm:$0xf]
  %v459 = vld [vmem:[%s1 + $0x610] sm:$0xf]
  %v460 = vld [vmem:[%s1 + $0x614] sm:$0xf]
  %v461 = vld [vmem:[%s1 + $0x618] sm:$0xf]
  %v462 = vld [vmem:[%s1 + $0x61c] sm:$0xf]
  %v463 = vld [vmem:[%s1 + $0x620] sm:$0xf]
  %v464 = vld [vmem:[%s1 + $0x624] sm:$0xf]
  %v465 = vld [vmem:[%s1 + $0x628] sm:$0xf]
  %v466 = vld [vmem:[%s1 + $0x62c] sm:$0xf]
  %v467 = vld [vmem:[%s1 + $0x630] sm:$0xf]
  %v468 = vld [vmem:[%s1 + $0x634] sm:$0xf]
  %v469 = vld [vmem:[%s1 + $0x638] sm:$0xf]
  %v470 = vld [vmem:[%s1 + $0x63c] sm:$0xf]
  %v471 = vld [vmem:[%s1 + $0x640] sm:$0xf]
  %v472 = vld [vmem:[%s1 + $0x644] sm:$0xf]
  %v473 = vld [vmem:[%s1 + $0x648] sm:$0xf]
  %v474 = vld [vmem:[%s1 + $0x64c] sm:$0xf]
  %v475 = vld [vmem:[%s1 + $0x650] sm:$0xf]
  %v476 = vld [vmem:[%s1 + $0x654] sm:$0xf]
  %v477 = vld [vmem:[%s1 + $0x658] sm:$0xf]
  %v478 = vld [vmem:[%s1 + $0x65c] sm:$0xf]
  %v479 = vld [vmem:[%s1 + $0x660] sm:$0xf]
  %v480 = vld [vmem:[%s1 + $0x664] sm:$0xf]
  %v481 = vld [vmem:[%s1 + $0x668] sm:$0xf]
  %v482 = vld [vmem:[%s1 + $0x66c] sm:$0xf]
  %v483 = vld [vmem:[%s1 + $0x670] sm:$0xf]
  %v484 = vld [vmem:[%s1 + $0x674] sm:$0xf]
  %v485 = vld [vmem:[%s1 + $0x678] sm:$0xf]
  %v486 = vld [vmem:[%s1 + $0x67c] sm:$0xf]
  %v487 = vld [vmem:[%s1 + $0x680] sm:$0xf]
  %v488 = vld [vmem:[%s1 + $0x684] sm:$0xf]
  %v489 = vld [vmem:[%s1 + $0x688] sm:$0xf]
  %v490 = vld [vmem:[%s1 + $0x68c] sm:$0xf]
  %v491 = vld [vmem:[%s1 + $0x690] sm:$0xf]
  %v492 = vld [vmem:[%s1 + $0x694] sm:$0xf]
  %v493 = vld [vmem:[%s1 + $0x698] sm:$0xf]
  %v494 = vld [vmem:[%s1 + $0x69c] sm:$0xf]
  %v495 = vld [vmem:[%s1 + $0x6a0] sm:$0xf]
  %v496 = vld [vmem:[%s1 + $0x6a4] sm:$0xf]
  %v497 = vld [vmem:[%s1 + $0x6a8] sm:$0xf]
  %v498 = vld [vmem:[%s1 + $0x6ac] sm:$0xf]
  %v499 = vld [vmem:[%s1 + $0x6b0] sm:$0xf]
  %v500 = vld [vmem:[%s1 + $0x6b4] sm:$0xf]
  %v501 = vld [vmem:[%s1 + $0x6b8] sm:$0xf]
  %v502 = vld [vmem:[%s1 + $0x6bc] sm:$0xf]
  %v503 = vld [vmem:[%s1 + $0x6c0] sm:$0xf]
  %v504 = vld [vmem:[%s1 + $0x6c4] sm:$0xf]
  %v505 = vld [vmem:[%s1 + $0x6c8] sm:$0xf]
  %v506 = vld [vmem:[%s1 + $0x6cc] sm:$0xf]
  %v507 = vld [vmem:[%s1 + $0x6d0] sm:$0xf]
  %v508 = vld [vmem:[%s1 + $0x6d4] sm:$0xf]
  %v509 = vld [vmem:[%s1 + $0x6d8] sm:$0xf]
  %v510 = vld [vmem:[%s1 + $0x6dc] sm:$0xf]
  %v511 = vld [vmem:[%s1 + $0x6e0] sm:$0xf]
  %v512 = vld [vmem:[%s1 + $0x6e4] sm:$0xf]
  %v513 = vld [vmem:[%s1 + $0x6e8] sm:$0xf]
  %v514 = vld [vmem:[%s1 + $0x6ec] sm:$0xf]
  %v515 = vld [vmem:[%s1 + $0x6f0] sm:$0xf]
  %v516 = vld [vmem:[%s1 + $0x6f4] sm:$0xf]
  %v517 = vld [vmem:[%s1 + $0x6f8] sm:$0xf]
  %v518 = vld [vmem:[%s1 + $0x6fc] sm:$0xf]
  %v519 = vld [vmem:[%s1 + $0x700] sm:$0xf]
  %v520 = vld [vmem:[%s1 + $0x704] sm:$0xf]
  %v521 = vld [vmem:[%s1 + $0x708] sm:$0xf]
  %v522 = vld [vmem:[%s1 + $0x70c] sm:$0xf]
  %v523 = vld [vmem:[%s1 + $0x710] sm:$0xf]
  %v524 = vld [vmem:[%s1 + $0x714] sm:$0xf]
  %v525 = vld [vmem:[%s1 + $0x718] sm:$0xf]
  %v526 = vld [vmem:[%s1 + $0x71c] sm:$0xf]
  %v527 = vld [vmem:[%s1 + $0x720] sm:$0xf]
  %v528 = vld [vmem:[%s1 + $0x724] sm:$0xf]
  %v529 = vld [vmem:[%s1 + $0x728] sm:$0xf]
  %v530 = vld [vmem:[%s1 + $0x72c] sm:$0xf]
  %v531 = vld [vmem:[%s1 + $0x730] sm:$0xf]
  %v532 = vld [vmem:[%s1 + $0x734] sm:$0xf]
  %v533 = vld [vmem:[%s1 + $0x738] sm:$0xf]
  %v534 = vld [vmem:[%s1 + $0x73c] sm:$0xf]
  %v535 = vld [vmem:[%s1 + $0x740] sm:$0xf]
  %v536 = vld [vmem:[%s1 + $0x744] sm:$0xf]
  %v537 = vld [vmem:[%s1 + $0x748] sm:$0xf]
  %v538 = vld [vmem:[%s1 + $0x74c] sm:$0xf]
  %v539 = vld [vmem:[%s1 + $0x750] sm:$0xf]
  %v540 = vld [vmem:[%s1 + $0x754] sm:$0xf]
  %v541 = vld [vmem:[%s1 + $0x758] sm:$0xf]
  %v542 = vld [vmem:[%s1 + $0x75c] sm:$0xf]
  %v543 = vld [vmem:[%s1 + $0x760] sm:$0xf]
  %v544 = vld [vmem:[%s1 + $0x764] sm:$0xf]
  %v545 = vld [vmem:[%s1 + $0x768] sm:$0xf]
  %v546 = vld [vmem:[%s1 + $0x76c] sm:$0xf]
  %v547 = vld [vmem:[%s1 + $0x770] sm:$0xf]
  %v548 = vld [vmem:[%s1 + $0x774] sm:$0xf]
  %v549 = vld [vmem:[%s1 + $0x778] sm:$0xf]
  %v550 = vld [vmem:[%s1 + $0x77c] sm:$0xf]
  %v551 = vld [vmem:[%s1 + $0x780] sm:$0xf]
  %v552 = vld [vmem:[%s1 + $0x784] sm:$0xf]
  %v553 = vld [vmem:[%s1 + $0x788] sm:$0xf]
  %v554 = vld [vmem:[%s1 + $0x78c] sm:$0xf]
  %v555 = vld [vmem:[%s1 + $0x790] sm:$0xf]
  %v556 = vld [vmem:[%s1 + $0x794] sm:$0xf]
  %v557 = vld [vmem:[%s1 + $0x798] sm:$0xf]
  %v558 = vld [vmem:[%s1 + $0x79c] sm:$0xf]
  %v559 = vld [vmem:[%s1 + $0x7a0] sm:$0xf]
  %v560 = vld [vmem:[%s1 + $0x7a4] sm:$0xf]
  %v561 = vld [vmem:[%s1 + $0x7a8] sm:$0xf]
  %v562 = vld [vmem:[%s1 + $0x7ac] sm:$0xf]
  %v563 = vld [vmem:[%s1 + $0x7b0] sm:$0xf]
  %v564 = vld [vmem:[%s1 + $0x7b4] sm:$0xf]
  %v565 = vld [vmem:[%s1 + $0x7b8] sm:$0xf]
  %v566 = vld [vmem:[%s1 + $0x7bc] sm:$0xf]
  %v567 = vld [vmem:[%s1 + $0x7c0] sm:$0xf]
  %v568 = vld [vmem:[%s1 + $0x7c4] sm:$0xf]
  %v569 = vld [vmem:[%s1 + $0x7c8] sm:$0xf]
  %v570 = vld [vmem:[%s1 + $0x7cc] sm:$0xf]
  %v571 = vld [vmem:[%s1 + $0x7d0] sm:$0xf]
  %v572 = vld [vmem:[%s1 + $0x7d4] sm:$0xf]
  %v573 = vld [vmem:[%s1 + $0x7d8] sm:$0xf]
  %v574 = vld [vmem:[%s1 + $0x7dc] sm:$0xf]
  %v575 = vld [vmem:[%s1 + $0x7e0] sm:$0xf]
  %v576 = vld [vmem:[%s1 + $0x7e4] sm:$0xf]
  %v577 = vld [vmem:[%s1 + $0x7e8] sm:$0xf]
  %v578 = vld [vmem:[%s1 + $0x7ec] sm:$0xf]
  %v579 = vld [vmem:[%s1 + $0x7f0] sm:$0xf]
  %v580 = vld [vmem:[%s1 + $0x7f4] sm:$0xf]
  %v581 = vld [vmem:[%s1 + $0x7f8] sm:$0xf]
  %v582 = vld [vmem:[%s1 + $0x7fc] sm:$0xf]
  %v583 = vld [vmem:[%s1 + $0x800] sm:$0xf]
  %v584 = vld [vmem:[%s1 + $0x804] sm:$0xf]
  %v585 = vld [vmem:[%s1 + $0x808] sm:$0xf]
  %v586 = vld [vmem:[%s1 + $0x80c] sm:$0xf]
  %v587 = vld [vmem:[%s1 + $0x810] sm:$0xf]
  %v588 = vld [vmem:[%s1 + $0x814] sm:$0xf]
  %v589 = vld [vmem:[%s1 + $0x818] sm:$0xf]
  %v590 = vld [vmem:[%s1 + $0x81c] sm:$0xf]
  %v591 = vld [vmem:[%s1 + $0x820] sm:$0xf]
  %v592 = vld [vmem:[%s1 + $0x824] sm:$0xf]
  %v593 = vld [vmem:[%s1 + $0x828] sm:$0xf]
  %v594 = vld [vmem:[%s1 + $0x82c] sm:$0xf]
  %v595 = vld [vmem:[%s1 + $0x830] sm:$0xf]
  %v596 = vld [vmem:[%s1 + $0x834] sm:$0xf]
  %v597 = vld [vmem:[%s1 + $0x838] sm:$0xf]
  %v598 = vld [vmem:[%s1 + $0x83c] sm:$0xf]
  %v599 = vld [vmem:[%s1 + $0x840] sm:$0xf]
  %v600 = vld [vmem:[%s1 + $0x844] sm:$0xf]
  %v601 = vld [vmem:[%s1 + $0x848] sm:$0xf]
  %v602 = vld [vmem:[%s1 + $0x84c] sm:$0xf]
  %v603 = vld [vmem:[%s1 + $0x850] sm:$0xf]
  %v604 = vld [vmem:[%s1 + $0x854] sm:$0xf]
  %v605 = vld [vmem:[%s1 + $0x858] sm:$0xf]
  %v606 = vld [vmem:[%s1 + $0x85c] sm:$0xf]
  %v607 = vld [vmem:[%s1 + $0x860] sm:$0xf]
  %v608 = vld [vmem:[%s1 + $0x864] sm:$0xf]
  %v609 = vld [vmem:[%s1 + $0x868] sm:$0xf]
  %v610 = vld [vmem:[%s1 + $0x86c] sm:$0xf]
  %v611 = vld [vmem:[%s1 + $0x870] sm:$0xf]
  %v612 = vld [vmem:[%s1 + $0x874] sm:$0xf]
  %v613 = vld [vmem:[%s1 + $0x878] sm:$0xf]
  %v614 = vld [vmem:[%s1 + $0x87c] sm:$0xf]
  %v615 = vld [vmem:[%s1 + $0x880] sm:$0xf]
  %v616 = vld [vmem:[%s1 + $0x884] sm:$0xf]
  %v617 = vld [vmem:[%s1 + $0x888] sm:$0xf]
  %v618 = vld [vmem:[%s1 + $0x88c] sm:$0xf]
  %v619 = vld [vmem:[%s1 + $0x890] sm:$0xf]
  %v620 = vld [vmem:[%s1 + $0x894] sm:$0xf]
  %v621 = vld [vmem:[%s1 + $0x898] sm:$0xf]
  %v622 = vld [vmem:[%s1 + $0x89c] sm:$0xf]
  %v623 = vld [vmem:[%s1 + $0x8a0] sm:$0xf]
  %v624 = vld [vmem:[%s1 + $0x8a4] sm:$0xf]
  %v625 = vld [vmem:[%s1 + $0x8a8] sm:$0xf]
  %v626 = vld [vmem:[%s1 + $0x8ac] sm:$0xf]
  %v627 = vld [vmem:[%s1 + $0x8b0] sm:$0xf]
  %v628 = vld [vmem:[%s1 + $0x8b4] sm:$0xf]
  %v629 = vld [vmem:[%s1 + $0x8b8] sm:$0xf]
  %v630 = vld [vmem:[%s1 + $0x8bc] sm:$0xf]
  %v631 = vld [vmem:[%s1 + $0x8c0] sm:$0xf]
  %v632 = vld [vmem:[%s1 + $0x8c4] sm:$0xf]
  %v633 = vld [vmem:[%s1 + $0x8c8] sm:$0xf]
  %v634 = vld [vmem:[%s1 + $0x8cc] sm:$0xf]
  %v635 = vld [vmem:[%s1 + $0x8d0] sm:$0xf]
  %v636 = vld [vmem:[%s1 + $0x8d4] sm:$0xf]
  %v637 = vld [vmem:[%s1 + $0x8d8] sm:$0xf]
  %v638 = vld [vmem:[%s1 + $0x8dc] sm:$0xf]
  %v639 = vld [vmem:[%s1 + $0x8e0] sm:$0xf]
  %v640 = vld [vmem:[%s1 + $0x8e4] sm:$0xf]
  %v641 = vld [vmem:[%s1 + $0x8e8] sm:$0xf]
  %v642 = vld [vmem:[%s1 + $0x8ec] sm:$0xf]
  %v643 = vld [vmem:[%s1 + $0x8f0] sm:$0xf]
  %v644 = vld [vmem:[%s1 + $0x8f4] sm:$0xf]
  %v645 = vld [vmem:[%s1 + $0x8f8] sm:$0xf]
  %v646 = vld [vmem:[%s1 + $0x8fc] sm:$0xf]
  %v647 = vld [vmem:[%s1 + $0x900] sm:$0xf]
  %v648 = vld [vmem:[%s1 + $0x904] sm:$0xf]
  %v649 = vld [vmem:[%s1 + $0x908] sm:$0xf]
  %v650 = vld [vmem:[%s1 + $0x90c] sm:$0xf]
  %v651 = vld [vmem:[%s1 + $0x910] sm:$0xf]
  %v652 = vld [vmem:[%s1 + $0x914] sm:$0xf]
  %v653 = vld [vmem:[%s1 + $0x918] sm:$0xf]
  %v654 = vld [vmem:[%s1 + $0x91c] sm:$0xf]
  %v655 = vld [vmem:[%s1 + $0x920] sm:$0xf]
  %v656 = vld [vmem:[%s1 + $0x924] sm:$0xf]
  %v657 = vld [vmem:[%s1 + $0x928] sm:$0xf]
  %v658 = vld [vmem:[%s1 + $0x92c] sm:$0xf]
  %v659 = vld [vmem:[%s1 + $0x930] sm:$0xf]
  %v660 = vld [vmem:[%s1 + $0x934] sm:$0xf]
  %v661 = vld [vmem:[%s1 + $0x938] sm:$0xf]
  %v662 = vld [vmem:[%s1 + $0x93c] sm:$0xf]
  %v663 = vld [vmem:[%s1 + $0x940] sm:$0xf]
  %v664 = vld [vmem:[%s1 + $0x944] sm:$0xf]
  %v665 = vld [vmem:[%s1 + $0x948] sm:$0xf]
  %v666 = vld [vmem:[%s1 + $0x94c] sm:$0xf]
  %v667 = vld [vmem:[%s1 + $0x950] sm:$0xf]
  %v668 = vld [vmem:[%s1 + $0x954] sm:$0xf]
  %v669 = vld [vmem:[%s1 + $0x958] sm:$0xf]
  %v670 = vld [vmem:[%s1 + $0x95c] sm:$0xf]
  %v671 = vld [vmem:[%s1 + $0x960] sm:$0xf]
  %v672 = vld [vmem:[%s1 + $0x964] sm:$0xf]
  %v673 = vld [vmem:[%s1 + $0x968] sm:$0xf]
  %v674 = vld [vmem:[%s1 + $0x96c] sm:$0xf]
  %v675 = vld [vmem:[%s1 + $0x970] sm:$0xf]
  %v676 = vld [vmem:[%s1 + $0x974] sm:$0xf]
  %v677 = vld [vmem:[%s1 + $0x978] sm:$0xf]
  %v678 = vld [vmem:[%s1 + $0x97c] sm:$0xf]
  %v679 = vld [vmem:[%s1 + $0x980] sm:$0xf]
  %v680 = vld [vmem:[%s1 + $0x984] sm:$0xf]
  %v681 = vld [vmem:[%s1 + $0x988] sm:$0xf]
  %v682 = vld [vmem:[%s1 + $0x98c] sm:$0xf]
  %v683 = vld [vmem:[%s1 + $0x990] sm:$0xf]
  %v684 = vld [vmem:[%s1 + $0x994] sm:$0xf]
  %v685 = vld [vmem:[%s1 + $0x998] sm:$0xf]
  %v686 = vld [vmem:[%s1 + $0x99c] sm:$0xf]
  %v687 = vld [vmem:[%s1 + $0x9a0] sm:$0xf]
  %v688 = vld [vmem:[%s1 + $0x9a4] sm:$0xf]
  %v689 = vld [vmem:[%s1 + $0x9a8] sm:$0xf]
  %v690 = vld [vmem:[%s1 + $0x9ac] sm:$0xf]
  %v691 = vld [vmem:[%s1 + $0x9b0] sm:$0xf]
  %v692 = vld [vmem:[%s1 + $0x9b4] sm:$0xf]
  %v693 = vld [vmem:[%s1 + $0x9b8] sm:$0xf]
  %v694 = vld [vmem:[%s1 + $0x9bc] sm:$0xf]
  %v695 = vld [vmem:[%s1 + $0x9c0] sm:$0xf]
  %v696 = vld [vmem:[%s1 + $0x9c4] sm:$0xf]
  %v697 = vld [vmem:[%s1 + $0x9c8] sm:$0xf]
  %v698 = vld [vmem:[%s1 + $0x9cc] sm:$0xf]
  %v699 = vld [vmem:[%s1 + $0x9d0] sm:$0xf]
  %v700 = vld [vmem:[%s1 + $0x9d4] sm:$0xf]
  %v701 = vld [vmem:[%s1 + $0x9d8] sm:$0xf]
  %v702 = vld [vmem:[%s1 + $0x9dc] sm:$0xf]
  %v703 = vld [vmem:[%s1 + $0x9e0] sm:$0xf]
  %v704 = vld [vmem:[%s1 + $0x9e4] sm:$0xf]
  %v705 = vld [vmem:[%s1 + $0x9e8] sm:$0xf]
  %v706 = vld [vmem:[%s1 + $0x9ec] sm:$0xf]
  %v707 = vld [vmem:[%s1 + $0x9f0] sm:$0xf]
  %v708 = vld [vmem:[%s1 + $0x9f4] sm:$0xf]
  %v709 = vld [vmem:[%s1 + $0x9f8] sm:$0xf]
  %v710 = vld [vmem:[%s1 + $0x9fc] sm:$0xf]
  %v711 = vld [vmem:[%s1 + $0xa00] sm:$0xf]
  %v712 = vld [vmem:[%s1 + $0xa04] sm:$0xf]
  %v713 = vld [vmem:[%s1 + $0xa08] sm:$0xf]
  %v714 = vld [vmem:[%s1 + $0xa0c] sm:$0xf]
  %v715 = vld [vmem:[%s1 + $0xa10] sm:$0xf]
  %v716 = vld [vmem:[%s1 + $0xa14] sm:$0xf]
  %v717 = vld [vmem:[%s1 + $0xa18] sm:$0xf]
  %v718 = vld [vmem:[%s1 + $0xa1c] sm:$0xf]
  %v719 = vld [vmem:[%s1 + $0xa20] sm:$0xf]
  %v720 = vld [vmem:[%s1 + $0xa24] sm:$0xf]
  %v721 = vld [vmem:[%s1 + $0xa28] sm:$0xf]
  %v722 = vld [vmem:[%s1 + $0xa2c] sm:$0xf]
  %v723 = vld [vmem:[%s1 + $0xa30] sm:$0xf]
  %v724 = vld [vmem:[%s1 + $0xa34] sm:$0xf]
  %v725 = vld [vmem:[%s1 + $0xa38] sm:$0xf]
  %v726 = vld [vmem:[%s1 + $0xa3c] sm:$0xf]
  %v727 = vld [vmem:[%s1 + $0xa40] sm:$0xf]
  %v728 = vld [vmem:[%s1 + $0xa44] sm:$0xf]
  %v729 = vld [vmem:[%s1 + $0xa48] sm:$0xf]
  %v730 = vld [vmem:[%s1 + $0xa4c] sm:$0xf]
  %v731 = vld [vmem:[%s1 + $0xa50] sm:$0xf]
  %v732 = vld [vmem:[%s1 + $0xa54] sm:$0xf]
  %v733 = vld [vmem:[%s1 + $0xa58] sm:$0xf]
  %v734 = vld [vmem:[%s1 + $0xa5c] sm:$0xf]
  %v735 = vld [vmem:[%s1 + $0xa60] sm:$0xf]
  %v736 = vld [vmem:[%s1 + $0xa64] sm:$0xf]
  %v737 = vld [vmem:[%s1 + $0xa68] sm:$0xf]
  %v738 = vld [vmem:[%s1 + $0xa6c] sm:$0xf]
  %v739 = vld [vmem:[%s1 + $0xa70] sm:$0xf]
  %v740 = vld [vmem:[%s1 + $0xa74] sm:$0xf]
  %v741 = vld [vmem:[%s1 + $0xa78] sm:$0xf]
  %v742 = vld [vmem:[%s1 + $0xa7c] sm:$0xf]
  %v743 = vld [vmem:[%s1 + $0xa80] sm:$0xf]
  %v744 = vld [vmem:[%s1 + $0xa84] sm:$0xf]
  %v745 = vld [vmem:[%s1 + $0xa88] sm:$0xf]
  %v746 = vld [vmem:[%s1 + $0xa8c] sm:$0xf]
  %v747 = vld [vmem:[%s1 + $0xa90] sm:$0xf]
  %v748 = vld [vmem:[%s1 + $0xa94] sm:$0xf]
  %v749 = vld [vmem:[%s1 + $0xa98] sm:$0xf]
  %v750 = vld [vmem:[%s1 + $0xa9c] sm:$0xf]
  %v751 = vld [vmem:[%s1 + $0xaa0] sm:$0xf]
  %v752 = vld [vmem:[%s1 + $0xaa4] sm:$0xf]
  %v753 = vld [vmem:[%s1 + $0xaa8] sm:$0xf]
  %v754 = vld [vmem:[%s1 + $0xaac] sm:$0xf]
  %v755 = vld [vmem:[%s1 + $0xab0] sm:$0xf]
  %v756 = vld [vmem:[%s1 + $0xab4] sm:$0xf]
  %v757 = vld [vmem:[%s1 + $0xab8] sm:$0xf]
  %v758 = vld [vmem:[%s1 + $0xabc] sm:$0xf]
  %v759 = vld [vmem:[%s1 + $0xac0] sm:$0xf]
  %v760 = vld [vmem:[%s1 + $0xac4] sm:$0xf]
  %v761 = vld [vmem:[%s1 + $0xac8] sm:$0xf]
  %v762 = vld [vmem:[%s1 + $0xacc] sm:$0xf]
  %v763 = vld [vmem:[%s1 + $0xad0] sm:$0xf]
  %v764 = vld [vmem:[%s1 + $0xad4] sm:$0xf]
  %v765 = vld [vmem:[%s1 + $0xad8] sm:$0xf]
  %v766 = vld [vmem:[%s1 + $0xadc] sm:$0xf]
  %v767 = vld [vmem:[%s1 + $0xae0] sm:$0xf]
  %v768 = vld [vmem:[%s1 + $0xae4] sm:$0xf]
  %v769 = vld [vmem:[%s1 + $0xae8] sm:$0xf]
  %v770 = vld [vmem:[%s1 + $0xaec] sm:$0xf]
  %v771 = vld [vmem:[%s1 + $0xaf0] sm:$0xf]
  %v772 = vld [vmem:[%s1 + $0xaf4] sm:$0xf]
  %v773 = vld [vmem:[%s1 + $0xaf8] sm:$0xf]
  %v774 = vld [vmem:[%s1 + $0xafc] sm:$0xf]
  %v775 = vld [vmem:[%s1 + $0xb00] sm:$0xf]
  %v776 = vld [vmem:[%s1 + $0xb04] sm:$0xf]
  %v777 = vld [vmem:[%s1 + $0xb08] sm:$0xf]
  %v778 = vld [vmem:[%s1 + $0xb0c] sm:$0xf]
  %v779 = vld [vmem:[%s1 + $0xb10] sm:$0xf]
  %v780 = vld [vmem:[%s1 + $0xb14] sm:$0xf]
  %v781 = vld [vmem:[%s1 + $0xb18] sm:$0xf]
  %v782 = vld [vmem:[%s1 + $0xb1c] sm:$0xf]
  %v783 = vld [vmem:[%s1 + $0xb20] sm:$0xf]
  %v784 = vld [vmem:[%s1 + $0xb24] sm:$0xf]
  %v785 = vld [vmem:[%s1 + $0xb28] sm:$0xf]
  %v786 = vld [vmem:[%s1 + $0xb2c] sm:$0xf]
  %v787 = vld [vmem:[%s1 + $0xb30] sm:$0xf]
  %v788 = vld [vmem:[%s1 + $0xb34] sm:$0xf]
  %v789 = vld [vmem:[%s1 + $0xb38] sm:$0xf]
  %v790 = vld [vmem:[%s1 + $0xb3c] sm:$0xf]
  %v791 = vld [vmem:[%s1 + $0xb40] sm:$0xf]
  %v792 = vld [vmem:[%s1 + $0xb44] sm:$0xf]
  %v793 = vld [vmem:[%s1 + $0xb48] sm:$0xf]
  %v794 = vld [vmem:[%s1 + $0xb4c] sm:$0xf]
  %v795 = vld [vmem:[%s1 + $0xb50] sm:$0xf]
  %v796 = vld [vmem:[%s1 + $0xb54] sm:$0xf]
  %v797 = vld [vmem:[%s1 + $0xb58] sm:$0xf]
  %v798 = vld [vmem:[%s1 + $0xb5c] sm:$0xf]
  %v799 = vld [vmem:[%s1 + $0xb60] sm:$0xf]
  %v800 = vld [vmem:[%s1 + $0xb64] sm:$0xf]
  %v801 = vld [vmem:[%s1 + $0xb68] sm:$0xf]
  %v802 = vld [vmem:[%s1 + $0xb6c] sm:$0xf]
  %v803 = vld [vmem:[%s1 + $0xb70] sm:$0xf]
  %v804 = vld [vmem:[%s1 + $0xb74] sm:$0xf]
  %v805 = vld [vmem:[%s1 + $0xb78] sm:$0xf]
  %v806 = vld [vmem:[%s1 + $0xb7c] sm:$0xf]
  %v807 = vld [vmem:[%s1 + $0xb80] sm:$0xf]
  %v808 = vld [vmem:[%s1 + $0xb84] sm:$0xf]
  %v809 = vld [vmem:[%s1 + $0xb88] sm:$0xf]
  %v810 = vld [vmem:[%s1 + $0xb8c] sm:$0xf]
  %v811 = vld [vmem:[%s1 + $0xb90] sm:$0xf]
  %v812 = vld [vmem:[%s1 + $0xb94] sm:$0xf]
  %v813 = vld [vmem:[%s1 + $0xb98] sm:$0xf]
  %v814 = vld [vmem:[%s1 + $0xb9c] sm:$0xf]
  %v815 = vld [vmem:[%s1 + $0xba0] sm:$0xf]
  %v816 = vld [vmem:[%s1 + $0xba4] sm:$0xf]
  %v817 = vld [vmem:[%s1 + $0xba8] sm:$0xf]
  %v818 = vld [vmem:[%s1 + $0xbac] sm:$0xf]
  %v819 = vld [vmem:[%s1 + $0xbb0] sm:$0xf]
  %v820 = vld [vmem:[%s1 + $0xbb4] sm:$0xf]
  %v821 = vld [vmem:[%s1 + $0xbb8] sm:$0xf]
  %v822 = vld [vmem:[%s1 + $0xbbc] sm:$0xf]
  %v823 = vld [vmem:[%s1 + $0xbc0] sm:$0xf]
  %v824 = vld [vmem:[%s1 + $0xbc4] sm:$0xf]
  %v825 = vld [vmem:[%s1 + $0xbc8] sm:$0xf]
  %v826 = vld [vmem:[%s1 + $0xbcc] sm:$0xf]
  %v827 = vld [vmem:[%s1 + $0xbd0] sm:$0xf]
  %v828 = vld [vmem:[%s1 + $0xbd4] sm:$0xf]
  %v829 = vld [vmem:[%s1 + $0xbd8] sm:$0xf]
  %v830 = vld [vmem:[%s1 + $0xbdc] sm:$0xf]
  %v831 = vld [vmem:[%s1 + $0xbe0] sm:$0xf]
  %v832 = vld [vmem:[%s1 + $0xbe4] sm:$0xf]
  %v833 = vld [vmem:[%s1 + $0xbe8] sm:$0xf]
  %v834 = vld [vmem:[%s1 + $0xbec] sm:$0xf]
  %v835 = vld [vmem:[%s1 + $0xbf0] sm:$0xf]
  %v836 = vld [vmem:[%s1 + $0xbf4] sm:$0xf]
  %v837 = vld [vmem:[%s1 + $0xbf8] sm:$0xf]
  %v838 = vld [vmem:[%s1 + $0xbfc] sm:$0xf]
  %v839 = vld [vmem:[%s1 + $0xc00] sm:$0xf]
  %v840 = vld [vmem:[%s1 + $0xc04] sm:$0xf]
  %v841 = vld [vmem:[%s1 + $0xc08] sm:$0xf]
  %v842 = vld [vmem:[%s1 + $0xc0c] sm:$0xf]
  %v843 = vld [vmem:[%s1 + $0xc10] sm:$0xf]
  %v844 = vld [vmem:[%s1 + $0xc14] sm:$0xf]
  %v845 = vld [vmem:[%s1 + $0xc18] sm:$0xf]
  %v846 = vld [vmem:[%s1 + $0xc1c] sm:$0xf]
  %v847 = vld [vmem:[%s1 + $0xc20] sm:$0xf]
  %v848 = vld [vmem:[%s1 + $0xc24] sm:$0xf]
  %v849 = vld [vmem:[%s1 + $0xc28] sm:$0xf]
  %v850 = vld [vmem:[%s1 + $0xc2c] sm:$0xf]
  %v851 = vld [vmem:[%s1 + $0xc30] sm:$0xf]
  %v852 = vld [vmem:[%s1 + $0xc34] sm:$0xf]
  %v853 = vld [vmem:[%s1 + $0xc38] sm:$0xf]
  %v854 = vld [vmem:[%s1 + $0xc3c] sm:$0xf]
  %v855 = vld [vmem:[%s1 + $0xc40] sm:$0xf]
  %v856 = vld [vmem:[%s1 + $0xc44] sm:$0xf]
  %v857 = vld [vmem:[%s1 + $0xc48] sm:$0xf]
  %v858 = vld [vmem:[%s1 + $0xc4c] sm:$0xf]
  %v859 = vld [vmem:[%s1 + $0xc50] sm:$0xf]
  %v860 = vld [vmem:[%s1 + $0xc54] sm:$0xf]
  %v861 = vld [vmem:[%s1 + $0xc58] sm:$0xf]
  %v862 = vld [vmem:[%s1 + $0xc5c] sm:$0xf]
  %v863 = vld [vmem:[%s1 + $0xc60] sm:$0xf]
  %v864 = vld [vmem:[%s1 + $0xc64] sm:$0xf]
  %v865 = vld [vmem:[%s1 + $0xc68] sm:$0xf]
  %v866 = vld [vmem:[%s1 + $0xc6c] sm:$0xf]
  %v867 = vld [vmem:[%s1 + $0xc70] sm:$0xf]
  %v868 = vld [vmem:[%s1 + $0xc74] sm:$0xf]
  %v869 = vld [vmem:[%s1 + $0xc78] sm:$0xf]
  %v870 = vld [vmem:[%s1 + $0xc7c] sm:$0xf]
  %v871 = vld [vmem:[%s1 + $0xc80] sm:$0xf]
  %v872 = vld [vmem:[%s1 + $0xc84] sm:$0xf]
  %v873 = vld [vmem:[%s1 + $0xc88] sm:$0xf]
  %v874 = vld [vmem:[%s1 + $0xc8c] sm:$0xf]
  %v875 = vld [vmem:[%s1 + $0xc90] sm:$0xf]
  %v876 = vld [vmem:[%s1 + $0xc94] sm:$0xf]
  %v877 = vld [vmem:[%s1 + $0xc98] sm:$0xf]
  %v878 = vld [vmem:[%s1 + $0xc9c] sm:$0xf]
  %v879 = vld [vmem:[%s1 + $0xca0] sm:$0xf]
  %v880 = vld [vmem:[%s1 + $0xca4] sm:$0xf]
  %v881 = vld [vmem:[%s1 + $0xca8] sm:$0xf]
  %v882 = vld [vmem:[%s1 + $0xcac] sm:$0xf]
  %v883 = vld [vmem:[%s1 + $0xcb0] sm:$0xf]
  %v884 = vld [vmem:[%s1 + $0xcb4] sm:$0xf]
  %v885 = vld [vmem:[%s1 + $0xcb8] sm:$0xf]
  %v886 = vld [vmem:[%s1 + $0xcbc] sm:$0xf]
  %v887 = vld [vmem:[%s1 + $0xcc0] sm:$0xf]
  %v888 = vld [vmem:[%s1 + $0xcc4] sm:$0xf]
  %v889 = vld [vmem:[%s1 + $0xcc8] sm:$0xf]
  %v890 = vld [vmem:[%s1 + $0xccc] sm:$0xf]
  %v891 = vld [vmem:[%s1 + $0xcd0] sm:$0xf]
  %v892 = vld [vmem:[%s1 + $0xcd4] sm:$0xf]
  %v893 = vld [vmem:[%s1 + $0xcd8] sm:$0xf]
  %v894 = vld [vmem:[%s1 + $0xcdc] sm:$0xf]
  %v895 = vld [vmem:[%s1 + $0xce0] sm:$0xf]
  %v896 = vld [vmem:[%s1 + $0xce4] sm:$0xf]
  %v897 = vld [vmem:[%s1 + $0xce8] sm:$0xf]
  %v898 = vld [vmem:[%s1 + $0xcec] sm:$0xf]
  %v899 = vld [vmem:[%s1 + $0xcf0] sm:$0xf]
  %v900 = vld [vmem:[%s1 + $0xcf4] sm:$0xf]
  %v901 = vld [vmem:[%s1 + $0xcf8] sm:$0xf]
  %v902 = vld [vmem:[%s1 + $0xcfc] sm:$0xf]
  %v903 = vld [vmem:[%s1 + $0xd00] sm:$0xf]
  %v904 = vld [vmem:[%s1 + $0xd04] sm:$0xf]
  %v905 = vld [vmem:[%s1 + $0xd08] sm:$0xf]
  %v906 = vld [vmem:[%s1 + $0xd0c] sm:$0xf]
  %v907 = vld [vmem:[%s1 + $0xd10] sm:$0xf]
  %v908 = vld [vmem:[%s1 + $0xd14] sm:$0xf]
  %v909 = vld [vmem:[%s1 + $0xd18] sm:$0xf]
  %v910 = vld [vmem:[%s1 + $0xd1c] sm:$0xf]
  %v911 = vld [vmem:[%s1 + $0xd20] sm:$0xf]
  %v912 = vld [vmem:[%s1 + $0xd24] sm:$0xf]
  %v913 = vld [vmem:[%s1 + $0xd28] sm:$0xf]
  %v914 = vld [vmem:[%s1 + $0xd2c] sm:$0xf]
  %v915 = vld [vmem:[%s1 + $0xd30] sm:$0xf]
  %v916 = vld [vmem:[%s1 + $0xd34] sm:$0xf]
  %v917 = vld [vmem:[%s1 + $0xd38] sm:$0xf]
  %v918 = vld [vmem:[%s1 + $0xd3c] sm:$0xf]
  %v919 = vld [vmem:[%s1 + $0xd40] sm:$0xf]
  %v920 = vld [vmem:[%s1 + $0xd44] sm:$0xf]
  %v921 = vld [vmem:[%s1 + $0xd48] sm:$0xf]
  %v922 = vld [vmem:[%s1 + $0xd4c] sm:$0xf]
  %v923 = vld [vmem:[%s1 + $0xd50] sm:$0xf]
  %v924 = vld [vmem:[%s1 + $0xd54] sm:$0xf]
  %v925 = vld [vmem:[%s1 + $0xd58] sm:$0xf]
  %v926 = vld [vmem:[%s1 + $0xd5c] sm:$0xf]
  %v927 = vld [vmem:[%s1 + $0xd60] sm:$0xf]
  %v928 = vld [vmem:[%s1 + $0xd64] sm:$0xf]
  %v929 = vld [vmem:[%s1 + $0xd68] sm:$0xf]
  %v930 = vld [vmem:[%s1 + $0xd6c] sm:$0xf]
  %v931 = vld [vmem:[%s1 + $0xd70] sm:$0xf]
  %v932 = vld [vmem:[%s1 + $0xd74] sm:$0xf]
  %v933 = vld [vmem:[%s1 + $0xd78] sm:$0xf]
  %v934 = vld [vmem:[%s1 + $0xd7c] sm:$0xf]
  %v935 = vld [vmem:[#allocation2] sm:$0x1]
  %v937 = vlaneseq
  %v938 = vshrl.u32 %v937, 7
  %v939 = vsub.s32 0, %v938
  %v940 = vrot.slane %v935, %v939
  %v996 = vunpack.c.l.b16 %v17
  %v997 = vunpack.c.h.b16 %v17
  %v998 = vunpack.c.l.b16 %v18
  %v999 = vunpack.c.h.b16 %v18
  %v1000 = vunpack.c.l.b16 %v19
  %v1001 = vunpack.c.h.b16 %v19
  %v1002 = vunpack.c.l.b16 %v20
  %v1003 = vunpack.c.h.b16 %v20
  %v1004 = vunpack.c.l.b16 %v21
  %v1005 = vunpack.c.h.b16 %v21
  %v1006 = vunpack.c.l.b16 %v22
  %v1007 = vunpack.c.h.b16 %v22
  %v1008 = vunpack.c.l.b16 %v23
  %v1009 = vunpack.c.h.b16 %v23
  %v1010 = vunpack.c.l.b16 %v24
  %v1011 = vunpack.c.h.b16 %v24
  %v1012 = vunpack.c.l.b16 %v25
  %v1013 = vunpack.c.h.b16 %v25
  %v1014 = vunpack.c.l.b16 %v26
  %v1015 = vunpack.c.h.b16 %v26
  %v1016 = vunpack.c.l.b16 %v27
  %v1017 = vunpack.c.h.b16 %v27
  %v1018 = vunpack.c.l.b16 %v28
  %v1019 = vunpack.c.h.b16 %v28
  %v1020 = vunpack.c.l.b16 %v29
  %v1021 = vunpack.c.h.b16 %v29
  %v1022 = vunpack.c.l.b16 %v30
  %v1023 = vunpack.c.h.b16 %v30
  %v1024 = vunpack.c.l.b16 %v31
  %v1025 = vunpack.c.h.b16 %v31
  %v1026 = vunpack.c.l.b16 %v32
  %v1027 = vunpack.c.h.b16 %v32
  %v1028 = vunpack.c.l.b16 %v33
  %v1029 = vunpack.c.h.b16 %v33
  %v1030 = vunpack.c.l.b16 %v34
  %v1031 = vunpack.c.h.b16 %v34
  %v1032 = vunpack.c.l.b16 %v35
  %v1033 = vunpack.c.h.b16 %v35
  %v1034 = vunpack.c.l.b16 %v36
  %v1035 = vunpack.c.h.b16 %v36
  %v1036 = vunpack.c.l.b16 %v37
  %v1037 = vunpack.c.h.b16 %v37
  %v1038 = vunpack.c.l.b16 %v38
  %v1039 = vunpack.c.h.b16 %v38
  %v1040 = vunpack.c.l.b16 %v39
  %v1041 = vunpack.c.h.b16 %v39
  %v1042 = vunpack.c.l.b16 %v40
  %v1043 = vunpack.c.h.b16 %v40
  %v1044 = vunpack.c.l.b16 %v41
  %v1045 = vunpack.c.h.b16 %v41
  %v1046 = vunpack.c.l.b16 %v42
  %v1047 = vunpack.c.h.b16 %v42
  %v1048 = vunpack.c.l.b16 %v43
  %v1049 = vunpack.c.h.b16 %v43
  %v1050 = vunpack.c.l.b16 %v44
  %v1051 = vunpack.c.h.b16 %v44
  %v1052 = vunpack.c.l.b16 %v45
  %v1053 = vunpack.c.h.b16 %v45
  %v1054 = vunpack.c.l.b16 %v46
  %v1055 = vunpack.c.h.b16 %v46
  %v1056 = vunpack.c.l.b16 %v47
  %v1057 = vunpack.c.h.b16 %v47
  %v1058 = vunpack.c.l.b16 %v48
  %v1059 = vunpack.c.h.b16 %v48
  %v1060 = vunpack.c.l.b16 %v49
  %v1061 = vunpack.c.h.b16 %v49
  %v1062 = vunpack.c.l.b16 %v50
  %v1063 = vunpack.c.h.b16 %v50
  %v1064 = vunpack.c.l.b16 %v51
  %v1065 = vunpack.c.h.b16 %v51
  %v1066 = vunpack.c.l.b16 %v52
  %v1067 = vunpack.c.h.b16 %v52
  %v1068 = vunpack.c.l.b16 %v53
  %v1069 = vunpack.c.h.b16 %v53
  %v1070 = vunpack.c.l.b16 %v54
  %v1071 = vunpack.c.h.b16 %v54
  %v1072 = vunpack.c.l.b16 %v55
  %v1073 = vunpack.c.h.b16 %v55
  %v1074 = vunpack.c.l.b16 %v56
  %v1075 = vunpack.c.h.b16 %v56
  %v1076 = vunpack.c.l.b16 %v57
  %v1077 = vunpack.c.h.b16 %v57
  %v1078 = vunpack.c.l.b16 %v58
  %v1079 = vunpack.c.h.b16 %v58
  %v1080 = vunpack.c.l.b16 %v59
  %v1081 = vunpack.c.h.b16 %v59
  %v1082 = vunpack.c.l.b16 %v60
  %v1083 = vunpack.c.h.b16 %v60
  %v1084 = vunpack.c.l.b16 %v61
  %v1085 = vunpack.c.h.b16 %v61
  %v1086 = vunpack.c.l.b16 %v62
  %v1087 = vunpack.c.h.b16 %v62
  %v1088 = vunpack.c.l.b16 %v63
  %v1089 = vunpack.c.h.b16 %v63
  %v1090 = vunpack.c.l.b16 %v64
  %v1091 = vunpack.c.h.b16 %v64
  %v1092 = vunpack.c.l.b16 %v65
  %v1093 = vunpack.c.h.b16 %v65
  %v1094 = vunpack.c.l.b16 %v66
  %v1095 = vunpack.c.h.b16 %v66
  %v1096 = vunpack.c.l.b16 %v67
  %v1097 = vunpack.c.h.b16 %v67
  %v1098 = vunpack.c.l.b16 %v68
  %v1099 = vunpack.c.h.b16 %v68
  %v1100 = vunpack.c.l.b16 %v69
  %v1101 = vunpack.c.h.b16 %v69
  %v1102 = vunpack.c.l.b16 %v70
  %v1103 = vunpack.c.h.b16 %v70
  %v1104 = vpack.c.b16 %v1050, %v996
  %v1105 = vpack.c.b16 %v1051, %v997
  %v1106 = vpack.c.b16 %v1052, %v998
  %v1107 = vpack.c.b16 %v1053, %v999
  %v1108 = vpack.c.b16 %v1054, %v1000
  %v1109 = vpack.c.b16 %v1055, %v1001
  %v1110 = vpack.c.b16 %v1056, %v1002
  %v1111 = vpack.c.b16 %v1057, %v1003
  %v1112 = vpack.c.b16 %v1058, %v1004
  %v1113 = vpack.c.b16 %v1059, %v1005
  %v1114 = vpack.c.b16 %v1060, %v1006
  %v1115 = vpack.c.b16 %v1061, %v1007
  %v1116 = vpack.c.b16 %v1062, %v1008
  %v1117 = vpack.c.b16 %v1063, %v1009
  %v1118 = vpack.c.b16 %v1064, %v1010
  %v1119 = vpack.c.b16 %v1065, %v1011
  %v1120 = vpack.c.b16 %v1066, %v1012
  %v1121 = vpack.c.b16 %v1067, %v1013
  %v1122 = vpack.c.b16 %v1068, %v1014
  %v1123 = vpack.c.b16 %v1069, %v1015
  %v1124 = vpack.c.b16 %v1070, %v1016
  %v1125 = vpack.c.b16 %v1071, %v1017
  %v1126 = vpack.c.b16 %v1072, %v1018
  %v1127 = vpack.c.b16 %v1073, %v1019
  %v1128 = vpack.c.b16 %v1074, %v1020
  %v1129 = vpack.c.b16 %v1075, %v1021
  %v1130 = vpack.c.b16 %v1076, %v1022
  %v1131 = vpack.c.b16 %v1077, %v1023
  %v1132 = vpack.c.b16 %v1078, %v1024
  %v1133 = vpack.c.b16 %v1079, %v1025
  %v1134 = vpack.c.b16 %v1080, %v1026
  %v1135 = vpack.c.b16 %v1081, %v1027
  %v1136 = vpack.c.b16 %v1082, %v1028
  %v1137 = vpack.c.b16 %v1083, %v1029
  %v1138 = vpack.c.b16 %v1084, %v1030
  %v1139 = vpack.c.b16 %v1085, %v1031
  %v1140 = vpack.c.b16 %v1086, %v1032
  %v1141 = vpack.c.b16 %v1087, %v1033
  %v1142 = vpack.c.b16 %v1088, %v1034
  %v1143 = vpack.c.b16 %v1089, %v1035
  %v1144 = vpack.c.b16 %v1090, %v1036
  %v1145 = vpack.c.b16 %v1091, %v1037
  %v1146 = vpack.c.b16 %v1092, %v1038
  %v1147 = vpack.c.b16 %v1093, %v1039
  %v1148 = vpack.c.b16 %v1094, %v1040
  %v1149 = vpack.c.b16 %v1095, %v1041
  %v1150 = vpack.c.b16 %v1096, %v1042
  %v1151 = vpack.c.b16 %v1097, %v1043
  %v1152 = vpack.c.b16 %v1098, %v1044
  %v1153 = vpack.c.b16 %v1099, %v1045
  %v1154 = vpack.c.b16 %v1100, %v1046
  %v1155 = vpack.c.b16 %v1101, %v1047
  %v1156 = vpack.c.b16 %v1102, %v1048
  %v1157 = vpack.c.b16 %v1103, %v1049
  %v2076 = vunpack.c.l.b16 %v71
  %v2077 = vunpack.c.l.b16 %v72
  %v2078 = vunpack.c.l.b16 %v73
  %v2079 = vunpack.c.l.b16 %v74
  %v2080 = vunpack.c.l.b16 %v75
  %v2081 = vunpack.c.l.b16 %v76
  %v2082 = vunpack.c.l.b16 %v77
  %v2083 = vunpack.c.l.b16 %v78
  %v2084 = vunpack.c.l.b16 %v79
  %v2085 = vunpack.c.l.b16 %v80
  %v2086 = vunpack.c.l.b16 %v81
  %v2087 = vunpack.c.l.b16 %v82
  %v2088 = vunpack.c.l.b16 %v83
  %v2089 = vunpack.c.l.b16 %v84
  %v2090 = vunpack.c.l.b16 %v85
  %v2091 = vunpack.c.l.b16 %v86
  %v2092 = vunpack.c.l.b16 %v87
  %v2093 = vunpack.c.l.b16 %v88
  %v2094 = vunpack.c.l.b16 %v89
  %v2095 = vunpack.c.l.b16 %v90
  %v2096 = vunpack.c.l.b16 %v91
  %v2097 = vunpack.c.l.b16 %v92
  %v2098 = vunpack.c.l.b16 %v93
  %v2099 = vunpack.c.l.b16 %v94
  %v2100 = vunpack.c.l.b16 %v95
  %v2101 = vunpack.c.l.b16 %v96
  %v2102 = vunpack.c.l.b16 %v97
  %v2103 = vunpack.c.l.b16 %v98
  %v2104 = vunpack.c.l.b16 %v99
  %v2105 = vunpack.c.l.b16 %v100
  %v2106 = vunpack.c.l.b16 %v101
  %v2107 = vunpack.c.l.b16 %v102
  %v2108 = vunpack.c.l.b16 %v103
  %v2109 = vunpack.c.l.b16 %v104
  %v2110 = vunpack.c.l.b16 %v105
  %v2111 = vunpack.c.l.b16 %v106
  %v2112 = vunpack.c.l.b16 %v107
  %v2113 = vunpack.c.l.b16 %v108
  %v2114 = vunpack.c.l.b16 %v109
  %v2115 = vunpack.c.l.b16 %v110
  %v2116 = vunpack.c.l.b16 %v111
  %v2117 = vunpack.c.l.b16 %v112
  %v2118 = vunpack.c.l.b16 %v113
  %v2119 = vunpack.c.l.b16 %v114
  %v2120 = vunpack.c.l.b16 %v115
  %v2121 = vunpack.c.l.b16 %v116
  %v2122 = vunpack.c.l.b16 %v117
  %v2123 = vunpack.c.l.b16 %v118
  %v2124 = vunpack.c.l.b16 %v119
  %v2125 = vunpack.c.l.b16 %v120
  %v2126 = vunpack.c.l.b16 %v121
  %v2127 = vunpack.c.l.b16 %v122
  %v2128 = vunpack.c.l.b16 %v123
  %v2129 = vunpack.c.l.b16 %v124
  %v2130 = vunpack.c.l.b16 %v125
  %v2131 = vunpack.c.l.b16 %v126
  %v2132 = vunpack.c.l.b16 %v127
  %v2133 = vunpack.c.l.b16 %v128
  %v2134 = vunpack.c.l.b16 %v129
  %v2135 = vunpack.c.l.b16 %v130
  %v2136 = vunpack.c.l.b16 %v131
  %v2137 = vunpack.c.l.b16 %v132
  %v2138 = vunpack.c.l.b16 %v133
  %v2139 = vunpack.c.l.b16 %v134
  %v2140 = vunpack.c.l.b16 %v135
  %v2141 = vunpack.c.l.b16 %v136
  %v2142 = vunpack.c.l.b16 %v137
  %v2143 = vunpack.c.l.b16 %v138
  %v2144 = vunpack.c.l.b16 %v139
  %v2145 = vunpack.c.l.b16 %v140
  %v2146 = vunpack.c.l.b16 %v141
  %v2147 = vunpack.c.l.b16 %v142
  %v2148 = vunpack.c.l.b16 %v143
  %v2149 = vunpack.c.l.b16 %v144
  %v2150 = vunpack.c.l.b16 %v145
  %v2151 = vunpack.c.l.b16 %v146
  %v2152 = vunpack.c.l.b16 %v147
  %v2153 = vunpack.c.l.b16 %v148
  %v2154 = vunpack.c.l.b16 %v149
  %v2155 = vunpack.c.l.b16 %v150
  %v2156 = vunpack.c.l.b16 %v151
  %v2157 = vunpack.c.l.b16 %v152
  %v2158 = vunpack.c.l.b16 %v153
  %v2159 = vunpack.c.l.b16 %v154
  %v2160 = vunpack.c.l.b16 %v155
  %v2161 = vunpack.c.l.b16 %v156
  %v2162 = vunpack.c.l.b16 %v157
  %v2163 = vunpack.c.l.b16 %v158
  %v2164 = vunpack.c.l.b16 %v159
  %v2165 = vunpack.c.l.b16 %v160
  %v2166 = vunpack.c.l.b16 %v161
  %v2167 = vunpack.c.l.b16 %v162
  %v2168 = vunpack.c.l.b16 %v163
  %v2169 = vunpack.c.l.b16 %v164
  %v2170 = vunpack.c.l.b16 %v165
  %v2171 = vunpack.c.l.b16 %v166
  %v2172 = vunpack.c.l.b16 %v167
  %v2173 = vunpack.c.l.b16 %v168
  %v2174 = vunpack.c.l.b16 %v169
  %v2175 = vunpack.c.l.b16 %v170
  %v2176 = vunpack.c.l.b16 %v171
  %v2177 = vunpack.c.l.b16 %v172
  %v2178 = vunpack.c.l.b16 %v173
  %v2179 = vunpack.c.l.b16 %v174
  %v2180 = vunpack.c.l.b16 %v175
  %v2181 = vunpack.c.l.b16 %v176
  %v2182 = vunpack.c.l.b16 %v177
  %v2183 = vunpack.c.l.b16 %v178
  %v2184 = vunpack.c.l.b16 %v179
  %v2185 = vunpack.c.l.b16 %v180
  %v2186 = vunpack.c.l.b16 %v181
  %v2187 = vunpack.c.l.b16 %v182
  %v2188 = vunpack.c.l.b16 %v183
  %v2189 = vunpack.c.l.b16 %v184
  %v2190 = vunpack.c.l.b16 %v185
  %v2191 = vunpack.c.l.b16 %v186
  %v2192 = vunpack.c.l.b16 %v187
  %v2193 = vunpack.c.l.b16 %v188
  %v2194 = vunpack.c.l.b16 %v189
  %v2195 = vunpack.c.l.b16 %v190
  %v2196 = vunpack.c.l.b16 %v191
  %v2197 = vunpack.c.l.b16 %v192
  %v2198 = vunpack.c.l.b16 %v193
  %v2199 = vunpack.c.l.b16 %v194
  %v2200 = vunpack.c.l.b16 %v195
  %v2201 = vunpack.c.l.b16 %v196
  %v2202 = vunpack.c.l.b16 %v197
  %v2203 = vunpack.c.l.b16 %v198
  %v2204 = vunpack.c.l.b16 %v199
  %v2205 = vunpack.c.l.b16 %v200
  %v2206 = vunpack.c.l.b16 %v201
  %v2207 = vunpack.c.l.b16 %v202
  %v2208 = vunpack.c.l.b16 %v203
  %v2209 = vunpack.c.l.b16 %v204
  %v2210 = vunpack.c.l.b16 %v205
  %v2211 = vunpack.c.l.b16 %v206
  %v2212 = vunpack.c.l.b16 %v207
  %v2213 = vunpack.c.l.b16 %v208
  %v2214 = vunpack.c.l.b16 %v209
  %v2215 = vunpack.c.l.b16 %v210
  %v2216 = vunpack.c.l.b16 %v211
  %v2217 = vunpack.c.l.b16 %v212
  %v2218 = vunpack.c.l.b16 %v213
  %v2219 = vunpack.c.l.b16 %v214
  %v2220 = vunpack.c.l.b16 %v215
  %v2221 = vunpack.c.l.b16 %v216
  %v2222 = vunpack.c.l.b16 %v217
  %v2223 = vunpack.c.l.b16 %v218
  %v2224 = vunpack.c.l.b16 %v219
  %v2225 = vunpack.c.l.b16 %v220
  %v2226 = vunpack.c.l.b16 %v221
  %v2227 = vunpack.c.l.b16 %v222
  %v2228 = vunpack.c.l.b16 %v223
  %v2229 = vunpack.c.l.b16 %v224
  %v2230 = vunpack.c.l.b16 %v225
  %v2231 = vunpack.c.l.b16 %v226
  %v2232 = vunpack.c.l.b16 %v227
  %v2233 = vunpack.c.l.b16 %v228
  %v2234 = vunpack.c.l.b16 %v229
  %v2235 = vunpack.c.l.b16 %v230
  %v2236 = vunpack.c.l.b16 %v231
  %v2237 = vunpack.c.l.b16 %v232
  %v2238 = vunpack.c.l.b16 %v233
  %v2239 = vunpack.c.l.b16 %v234
  %v2240 = vunpack.c.l.b16 %v235
  %v2241 = vunpack.c.l.b16 %v236
  %v2242 = vunpack.c.l.b16 %v237
  %v2243 = vunpack.c.l.b16 %v238
  %v2244 = vunpack.c.l.b16 %v239
  %v2245 = vunpack.c.l.b16 %v240
  %v2246 = vunpack.c.l.b16 %v241
  %v2247 = vunpack.c.l.b16 %v242
  %v2248 = vunpack.c.l.b16 %v243
  %v2249 = vunpack.c.l.b16 %v244
  %v2250 = vunpack.c.l.b16 %v245
  %v2251 = vunpack.c.l.b16 %v246
  %v2252 = vunpack.c.l.b16 %v247
  %v2253 = vunpack.c.l.b16 %v248
  %v2254 = vunpack.c.l.b16 %v249
  %v2255 = vunpack.c.l.b16 %v250
  %v2256 = vunpack.c.l.b16 %v251
  %v2257 = vunpack.c.l.b16 %v252
  %v2258 = vunpack.c.l.b16 %v253
  %v2259 = vunpack.c.l.b16 %v254
  %v2260 = vunpack.c.l.b16 %v255
  %v2261 = vunpack.c.l.b16 %v256
  %v2262 = vunpack.c.l.b16 %v257
  %v2263 = vunpack.c.l.b16 %v258
  %v2264 = vunpack.c.l.b16 %v259
  %v2265 = vunpack.c.l.b16 %v260
  %v2266 = vunpack.c.l.b16 %v261
  %v2267 = vunpack.c.l.b16 %v262
  %v2268 = vunpack.c.l.b16 %v263
  %v2269 = vunpack.c.l.b16 %v264
  %v2270 = vunpack.c.l.b16 %v265
  %v2271 = vunpack.c.l.b16 %v266
  %v2272 = vunpack.c.l.b16 %v267
  %v2273 = vunpack.c.l.b16 %v268
  %v2274 = vunpack.c.l.b16 %v269
  %v2275 = vunpack.c.l.b16 %v270
  %v2276 = vunpack.c.l.b16 %v271
  %v2277 = vunpack.c.l.b16 %v272
  %v2278 = vunpack.c.l.b16 %v273
  %v2279 = vunpack.c.l.b16 %v274
  %v2280 = vunpack.c.l.b16 %v275
  %v2281 = vunpack.c.l.b16 %v276
  %v2282 = vunpack.c.l.b16 %v277
  %v2283 = vunpack.c.l.b16 %v278
  %v2284 = vunpack.c.l.b16 %v279
  %v2285 = vunpack.c.l.b16 %v280
  %v2286 = vunpack.c.l.b16 %v281
  %v2287 = vunpack.c.l.b16 %v282
  %v2288 = vunpack.c.l.b16 %v283
  %v2289 = vunpack.c.l.b16 %v284
  %v2290 = vunpack.c.l.b16 %v285
  %v2291 = vunpack.c.l.b16 %v286
  %v2292 = vunpack.c.l.b16 %v287
  %v2293 = vunpack.c.l.b16 %v288
  %v2294 = vunpack.c.l.b16 %v289
  %v2295 = vunpack.c.l.b16 %v290
  %v2296 = vunpack.c.l.b16 %v291
  %v2297 = vunpack.c.l.b16 %v292
  %v2298 = vunpack.c.l.b16 %v293
  %v2299 = vunpack.c.l.b16 %v294
  %v2300 = vunpack.c.l.b16 %v295
  %v2301 = vunpack.c.l.b16 %v296
  %v2302 = vunpack.c.l.b16 %v297
  %v2303 = vunpack.c.l.b16 %v298
  %v2304 = vunpack.c.l.b16 %v299
  %v2305 = vunpack.c.l.b16 %v300
  %v2306 = vunpack.c.l.b16 %v301
  %v2307 = vunpack.c.l.b16 %v302
  %v2308 = vunpack.c.l.b16 %v303
  %v2309 = vunpack.c.l.b16 %v304
  %v2310 = vunpack.c.l.b16 %v305
  %v2311 = vunpack.c.l.b16 %v306
  %v2312 = vunpack.c.l.b16 %v307
  %v2313 = vunpack.c.l.b16 %v308
  %v2314 = vunpack.c.l.b16 %v309
  %v2315 = vunpack.c.l.b16 %v310
  %v2316 = vunpack.c.l.b16 %v311
  %v2317 = vunpack.c.l.b16 %v312
  %v2318 = vunpack.c.l.b16 %v313
  %v2319 = vunpack.c.l.b16 %v314
  %v2320 = vunpack.c.l.b16 %v315
  %v2321 = vunpack.c.l.b16 %v316
  %v2322 = vunpack.c.l.b16 %v317
  %v2323 = vunpack.c.l.b16 %v318
  %v2324 = vunpack.c.l.b16 %v319
  %v2325 = vunpack.c.l.b16 %v320
  %v2326 = vunpack.c.l.b16 %v321
  %v2327 = vunpack.c.l.b16 %v322
  %v2328 = vunpack.c.l.b16 %v323
  %v2329 = vunpack.c.l.b16 %v324
  %v2330 = vunpack.c.l.b16 %v325
  %v2331 = vunpack.c.l.b16 %v326
  %v2332 = vunpack.c.l.b16 %v327
  %v2333 = vunpack.c.l.b16 %v328
  %v2334 = vunpack.c.l.b16 %v329
  %v2335 = vunpack.c.l.b16 %v330
  %v2336 = vunpack.c.l.b16 %v331
  %v2337 = vunpack.c.l.b16 %v332
  %v2338 = vunpack.c.l.b16 %v333
  %v2339 = vunpack.c.l.b16 %v334
  %v2340 = vunpack.c.l.b16 %v335
  %v2341 = vunpack.c.l.b16 %v336
  %v2342 = vunpack.c.l.b16 %v337
  %v2343 = vunpack.c.l.b16 %v338
  %v2344 = vunpack.c.l.b16 %v339
  %v2345 = vunpack.c.l.b16 %v340
  %v2346 = vunpack.c.l.b16 %v341
  %v2347 = vunpack.c.l.b16 %v342
  %v2348 = vunpack.c.l.b16 %v343
  %v2349 = vunpack.c.l.b16 %v344
  %v2350 = vunpack.c.l.b16 %v345
  %v2351 = vunpack.c.l.b16 %v346
  %v2352 = vunpack.c.l.b16 %v347
  %v2353 = vunpack.c.l.b16 %v348
  %v2354 = vunpack.c.l.b16 %v349
  %v2355 = vunpack.c.l.b16 %v350
  %v2356 = vunpack.c.l.b16 %v351
  %v2357 = vunpack.c.l.b16 %v352
  %v2358 = vunpack.c.l.b16 %v353
  %v2359 = vunpack.c.l.b16 %v354
  %v2360 = vunpack.c.l.b16 %v355
  %v2361 = vunpack.c.l.b16 %v356
  %v2362 = vunpack.c.l.b16 %v357
  %v2363 = vunpack.c.l.b16 %v358
  %v2364 = vunpack.c.l.b16 %v359
  %v2365 = vunpack.c.l.b16 %v360
  %v2366 = vunpack.c.l.b16 %v361
  %v2367 = vunpack.c.l.b16 %v362
  %v2368 = vunpack.c.l.b16 %v363
  %v2369 = vunpack.c.l.b16 %v364
  %v2370 = vunpack.c.l.b16 %v365
  %v2371 = vunpack.c.l.b16 %v366
  %v2372 = vunpack.c.l.b16 %v367
  %v2373 = vunpack.c.l.b16 %v368
  %v2374 = vunpack.c.l.b16 %v369
  %v2375 = vunpack.c.l.b16 %v370
  %v2376 = vunpack.c.l.b16 %v371
  %v2377 = vunpack.c.l.b16 %v372
  %v2378 = vunpack.c.l.b16 %v373
  %v2379 = vunpack.c.l.b16 %v374
  %v2380 = vunpack.c.l.b16 %v375
  %v2381 = vunpack.c.l.b16 %v376
  %v2382 = vunpack.c.l.b16 %v377
  %v2383 = vunpack.c.l.b16 %v378
  %v2384 = vunpack.c.l.b16 %v379
  %v2385 = vunpack.c.l.b16 %v380
  %v2386 = vunpack.c.l.b16 %v381
  %v2387 = vunpack.c.l.b16 %v382
  %v2388 = vunpack.c.l.b16 %v383
  %v2389 = vunpack.c.l.b16 %v384
  %v2390 = vunpack.c.l.b16 %v385
  %v2391 = vunpack.c.l.b16 %v386
  %v2392 = vunpack.c.l.b16 %v387
  %v2393 = vunpack.c.l.b16 %v388
  %v2394 = vunpack.c.l.b16 %v389
  %v2395 = vunpack.c.l.b16 %v390
  %v2396 = vunpack.c.l.b16 %v391
  %v2397 = vunpack.c.l.b16 %v392
  %v2398 = vunpack.c.l.b16 %v393
  %v2399 = vunpack.c.l.b16 %v394
  %v2400 = vunpack.c.l.b16 %v395
  %v2401 = vunpack.c.l.b16 %v396
  %v2402 = vunpack.c.l.b16 %v397
  %v2403 = vunpack.c.l.b16 %v398
  %v2404 = vunpack.c.l.b16 %v399
  %v2405 = vunpack.c.l.b16 %v400
  %v2406 = vunpack.c.l.b16 %v401
  %v2407 = vunpack.c.l.b16 %v402
  %v2408 = vunpack.c.l.b16 %v403
  %v2409 = vunpack.c.l.b16 %v404
  %v2410 = vunpack.c.l.b16 %v405
  %v2411 = vunpack.c.l.b16 %v406
  %v2412 = vunpack.c.l.b16 %v407
  %v2413 = vunpack.c.l.b16 %v408
  %v2414 = vunpack.c.l.b16 %v409
  %v2415 = vunpack.c.l.b16 %v410
  %v2416 = vunpack.c.l.b16 %v411
  %v2417 = vunpack.c.l.b16 %v412
  %v2418 = vunpack.c.l.b16 %v413
  %v2419 = vunpack.c.l.b16 %v414
  %v2420 = vunpack.c.l.b16 %v415
  %v2421 = vunpack.c.l.b16 %v416
  %v2422 = vunpack.c.l.b16 %v417
  %v2423 = vunpack.c.l.b16 %v418
  %v2424 = vunpack.c.l.b16 %v419
  %v2425 = vunpack.c.l.b16 %v420
  %v2426 = vunpack.c.l.b16 %v421
  %v2427 = vunpack.c.l.b16 %v422
  %v2428 = vunpack.c.l.b16 %v423
  %v2429 = vunpack.c.l.b16 %v424
  %v2430 = vunpack.c.l.b16 %v425
  %v2431 = vunpack.c.l.b16 %v426
  %v2432 = vunpack.c.l.b16 %v427
  %v2433 = vunpack.c.l.b16 %v428
  %v2434 = vunpack.c.l.b16 %v429
  %v2435 = vunpack.c.l.b16 %v430
  %v2436 = vunpack.c.l.b16 %v431
  %v2437 = vunpack.c.l.b16 %v432
  %v2438 = vunpack.c.l.b16 %v433
  %v2439 = vunpack.c.l.b16 %v434
  %v2440 = vunpack.c.l.b16 %v435
  %v2441 = vunpack.c.l.b16 %v436
  %v2442 = vunpack.c.l.b16 %v437
  %v2443 = vunpack.c.l.b16 %v438
  %v2444 = vunpack.c.l.b16 %v439
  %v2445 = vunpack.c.l.b16 %v440
  %v2446 = vunpack.c.l.b16 %v441
  %v2447 = vunpack.c.l.b16 %v442
  %v2448 = vunpack.c.l.b16 %v443
  %v2449 = vunpack.c.l.b16 %v444
  %v2450 = vunpack.c.l.b16 %v445
  %v2451 = vunpack.c.l.b16 %v446
  %v2452 = vunpack.c.l.b16 %v447
  %v2453 = vunpack.c.l.b16 %v448
  %v2454 = vunpack.c.l.b16 %v449
  %v2455 = vunpack.c.l.b16 %v450
  %v2456 = vunpack.c.l.b16 %v451
  %v2457 = vunpack.c.l.b16 %v452
  %v2458 = vunpack.c.l.b16 %v453
  %v2459 = vunpack.c.l.b16 %v454
  %v2460 = vunpack.c.l.b16 %v455
  %v2461 = vunpack.c.l.b16 %v456
  %v2462 = vunpack.c.l.b16 %v457
  %v2463 = vunpack.c.l.b16 %v458
  %v2464 = vunpack.c.l.b16 %v459
  %v2465 = vunpack.c.l.b16 %v460
  %v2466 = vunpack.c.l.b16 %v461
  %v2467 = vunpack.c.l.b16 %v462
  %v2468 = vunpack.c.l.b16 %v463
  %v2469 = vunpack.c.l.b16 %v464
  %v2470 = vunpack.c.l.b16 %v465
  %v2471 = vunpack.c.l.b16 %v466
  %v2472 = vunpack.c.l.b16 %v467
  %v2473 = vunpack.c.l.b16 %v468
  %v2474 = vunpack.c.l.b16 %v469
  %v2475 = vunpack.c.l.b16 %v470
  %v2476 = vunpack.c.l.b16 %v471
  %v2477 = vunpack.c.l.b16 %v472
  %v2478 = vunpack.c.l.b16 %v473
  %v2479 = vunpack.c.l.b16 %v474
  %v2480 = vunpack.c.l.b16 %v475
  %v2481 = vunpack.c.l.b16 %v476
  %v2482 = vunpack.c.l.b16 %v477
  %v2483 = vunpack.c.l.b16 %v478
  %v2484 = vunpack.c.l.b16 %v479
  %v2485 = vunpack.c.l.b16 %v480
  %v2486 = vunpack.c.l.b16 %v481
  %v2487 = vunpack.c.l.b16 %v482
  %v2488 = vunpack.c.l.b16 %v483
  %v2489 = vunpack.c.l.b16 %v484
  %v2490 = vunpack.c.l.b16 %v485
  %v2491 = vunpack.c.l.b16 %v486
  %v2492 = vunpack.c.l.b16 %v487
  %v2493 = vunpack.c.l.b16 %v488
  %v2494 = vunpack.c.l.b16 %v489
  %v2495 = vunpack.c.l.b16 %v490
  %v2496 = vunpack.c.l.b16 %v491
  %v2497 = vunpack.c.l.b16 %v492
  %v2498 = vunpack.c.l.b16 %v493
  %v2499 = vunpack.c.l.b16 %v494
  %v2500 = vunpack.c.l.b16 %v495
  %v2501 = vunpack.c.l.b16 %v496
  %v2502 = vunpack.c.l.b16 %v497
  %v2503 = vunpack.c.l.b16 %v498
  %v2504 = vunpack.c.l.b16 %v499
  %v2505 = vunpack.c.l.b16 %v500
  %v2506 = vunpack.c.l.b16 %v501
  %v2507 = vunpack.c.l.b16 %v502
  %v2508 = vunpack.c.l.b16 %v503
  %v2509 = vunpack.c.l.b16 %v504
  %v2510 = vunpack.c.l.b16 %v505
  %v2511 = vunpack.c.l.b16 %v506
  %v2512 = vunpack.c.l.b16 %v507
  %v2513 = vunpack.c.l.b16 %v508
  %v2514 = vunpack.c.l.b16 %v509
  %v2515 = vunpack.c.l.b16 %v510
  %v2516 = vunpack.c.l.b16 %v511
  %v2517 = vunpack.c.l.b16 %v512
  %v2518 = vunpack.c.l.b16 %v513
  %v2519 = vunpack.c.l.b16 %v514
  %v2520 = vunpack.c.l.b16 %v515
  %v2521 = vunpack.c.l.b16 %v516
  %v2522 = vunpack.c.l.b16 %v517
  %v2523 = vunpack.c.l.b16 %v518
  %v2524 = vunpack.c.l.b16 %v519
  %v2525 = vunpack.c.l.b16 %v520
  %v2526 = vunpack.c.l.b16 %v521
  %v2527 = vunpack.c.l.b16 %v522
  %v2528 = vunpack.c.l.b16 %v523
  %v2529 = vunpack.c.l.b16 %v524
  %v2530 = vunpack.c.l.b16 %v525
  %v2531 = vunpack.c.l.b16 %v526
  %v2532 = vunpack.c.l.b16 %v527
  %v2533 = vunpack.c.l.b16 %v528
  %v2534 = vunpack.c.l.b16 %v529
  %v2535 = vunpack.c.l.b16 %v530
  %v2536 = vunpack.c.l.b16 %v531
  %v2537 = vunpack.c.l.b16 %v532
  %v2538 = vunpack.c.l.b16 %v533
  %v2539 = vunpack.c.l.b16 %v534
  %v2540 = vunpack.c.l.b16 %v535
  %v2541 = vunpack.c.l.b16 %v536
  %v2542 = vunpack.c.l.b16 %v537
  %v2543 = vunpack.c.l.b16 %v538
  %v2544 = vunpack.c.l.b16 %v539
  %v2545 = vunpack.c.l.b16 %v540
  %v2546 = vunpack.c.l.b16 %v541
  %v2547 = vunpack.c.l.b16 %v542
  %v2548 = vunpack.c.l.b16 %v543
  %v2549 = vunpack.c.l.b16 %v544
  %v2550 = vunpack.c.l.b16 %v545
  %v2551 = vunpack.c.l.b16 %v546
  %v2552 = vunpack.c.l.b16 %v547
  %v2553 = vunpack.c.l.b16 %v548
  %v2554 = vunpack.c.l.b16 %v549
  %v2555 = vunpack.c.l.b16 %v550
  %v2556 = vunpack.c.l.b16 %v551
  %v2557 = vunpack.c.l.b16 %v552
  %v2558 = vunpack.c.l.b16 %v553
  %v2559 = vunpack.c.l.b16 %v554
  %v2560 = vunpack.c.l.b16 %v555
  %v2561 = vunpack.c.l.b16 %v556
  %v2562 = vunpack.c.l.b16 %v557
  %v2563 = vunpack.c.l.b16 %v558
  %v2564 = vunpack.c.l.b16 %v559
  %v2565 = vunpack.c.l.b16 %v560
  %v2566 = vunpack.c.l.b16 %v561
  %v2567 = vunpack.c.l.b16 %v562
  %v2568 = vunpack.c.l.b16 %v563
  %v2569 = vunpack.c.l.b16 %v564
  %v2570 = vunpack.c.l.b16 %v565
  %v2571 = vunpack.c.l.b16 %v566
  %v2572 = vunpack.c.l.b16 %v567
  %v2573 = vunpack.c.l.b16 %v568
  %v2574 = vunpack.c.l.b16 %v569
  %v2575 = vunpack.c.l.b16 %v570
  %v2576 = vunpack.c.l.b16 %v571
  %v2577 = vunpack.c.l.b16 %v572
  %v2578 = vunpack.c.l.b16 %v573
  %v2579 = vunpack.c.l.b16 %v574
  %v2580 = vunpack.c.l.b16 %v575
  %v2581 = vunpack.c.l.b16 %v576
  %v2582 = vunpack.c.l.b16 %v577
  %v2583 = vunpack.c.l.b16 %v578
  %v2584 = vunpack.c.l.b16 %v579
  %v2585 = vunpack.c.l.b16 %v580
  %v2586 = vunpack.c.l.b16 %v581
  %v2587 = vunpack.c.l.b16 %v582
  %v2588 = vunpack.c.l.b16 %v583
  %v2589 = vunpack.c.l.b16 %v584
  %v2590 = vunpack.c.l.b16 %v585
  %v2591 = vunpack.c.l.b16 %v586
  %v2592 = vunpack.c.l.b16 %v587
  %v2593 = vunpack.c.l.b16 %v588
  %v2594 = vunpack.c.l.b16 %v589
  %v2595 = vunpack.c.l.b16 %v590
  %v2596 = vunpack.c.l.b16 %v591
  %v2597 = vunpack.c.l.b16 %v592
  %v2598 = vunpack.c.l.b16 %v593
  %v2599 = vunpack.c.l.b16 %v594
  %v2600 = vunpack.c.l.b16 %v595
  %v2601 = vunpack.c.l.b16 %v596
  %v2602 = vunpack.c.l.b16 %v597
  %v2603 = vunpack.c.l.b16 %v598
  %v2604 = vunpack.c.l.b16 %v599
  %v2605 = vunpack.c.l.b16 %v600
  %v2606 = vunpack.c.l.b16 %v601
  %v2607 = vunpack.c.l.b16 %v602
  %v2608 = vunpack.c.l.b16 %v603
  %v2609 = vunpack.c.l.b16 %v604
  %v2610 = vunpack.c.l.b16 %v605
  %v2611 = vunpack.c.l.b16 %v606
  %v2612 = vunpack.c.l.b16 %v607
  %v2613 = vunpack.c.l.b16 %v608
  %v2614 = vunpack.c.l.b16 %v609
  %v2615 = vunpack.c.l.b16 %v610
  %v2616 = vunpack.c.l.b16 %v611
  %v2617 = vunpack.c.l.b16 %v612
  %v2618 = vunpack.c.l.b16 %v613
  %v2619 = vunpack.c.l.b16 %v614
  %v2620 = vunpack.c.l.b16 %v615
  %v2621 = vunpack.c.l.b16 %v616
  %v2622 = vunpack.c.l.b16 %v617
  %v2623 = vunpack.c.l.b16 %v618
  %v2624 = vunpack.c.l.b16 %v619
  %v2625 = vunpack.c.l.b16 %v620
  %v2626 = vunpack.c.l.b16 %v621
  %v2627 = vunpack.c.l.b16 %v622
  %v2628 = vunpack.c.l.b16 %v623
  %v2629 = vunpack.c.l.b16 %v624
  %v2630 = vunpack.c.l.b16 %v625
  %v2631 = vunpack.c.l.b16 %v626
  %v2632 = vunpack.c.l.b16 %v627
  %v2633 = vunpack.c.l.b16 %v628
  %v2634 = vunpack.c.l.b16 %v629
  %v2635 = vunpack.c.l.b16 %v630
  %v2636 = vunpack.c.l.b16 %v631
  %v2637 = vunpack.c.l.b16 %v632
  %v2638 = vunpack.c.l.b16 %v633
  %v2639 = vunpack.c.l.b16 %v634
  %v2640 = vunpack.c.l.b16 %v635
  %v2641 = vunpack.c.l.b16 %v636
  %v2642 = vunpack.c.l.b16 %v637
  %v2643 = vunpack.c.l.b16 %v638
  %v2644 = vunpack.c.l.b16 %v639
  %v2645 = vunpack.c.l.b16 %v640
  %v2646 = vunpack.c.l.b16 %v641
  %v2647 = vunpack.c.l.b16 %v642
  %v2648 = vunpack.c.l.b16 %v643
  %v2649 = vunpack.c.l.b16 %v644
  %v2650 = vunpack.c.l.b16 %v645
  %v2651 = vunpack.c.l.b16 %v646
  %v2652 = vunpack.c.l.b16 %v647
  %v2653 = vunpack.c.l.b16 %v648
  %v2654 = vunpack.c.l.b16 %v649
  %v2655 = vunpack.c.l.b16 %v650
  %v2656 = vunpack.c.l.b16 %v651
  %v2657 = vunpack.c.l.b16 %v652
  %v2658 = vunpack.c.l.b16 %v653
  %v2659 = vunpack.c.l.b16 %v654
  %v2660 = vunpack.c.l.b16 %v655
  %v2661 = vunpack.c.l.b16 %v656
  %v2662 = vunpack.c.l.b16 %v657
  %v2663 = vunpack.c.l.b16 %v658
  %v2664 = vunpack.c.l.b16 %v659
  %v2665 = vunpack.c.l.b16 %v660
  %v2666 = vunpack.c.l.b16 %v661
  %v2667 = vunpack.c.l.b16 %v662
  %v2668 = vunpack.c.l.b16 %v663
  %v2669 = vunpack.c.l.b16 %v664
  %v2670 = vunpack.c.l.b16 %v665
  %v2671 = vunpack.c.l.b16 %v666
  %v2672 = vunpack.c.l.b16 %v667
  %v2673 = vunpack.c.l.b16 %v668
  %v2674 = vunpack.c.l.b16 %v669
  %v2675 = vunpack.c.l.b16 %v670
  %v2676 = vunpack.c.l.b16 %v671
  %v2677 = vunpack.c.l.b16 %v672
  %v2678 = vunpack.c.l.b16 %v673
  %v2679 = vunpack.c.l.b16 %v674
  %v2680 = vunpack.c.l.b16 %v675
  %v2681 = vunpack.c.l.b16 %v676
  %v2682 = vunpack.c.l.b16 %v677
  %v2683 = vunpack.c.l.b16 %v678
  %v2684 = vunpack.c.l.b16 %v679
  %v2685 = vunpack.c.l.b16 %v680
  %v2686 = vunpack.c.l.b16 %v681
  %v2687 = vunpack.c.l.b16 %v682
  %v2688 = vunpack.c.l.b16 %v683
  %v2689 = vunpack.c.l.b16 %v684
  %v2690 = vunpack.c.l.b16 %v685
  %v2691 = vunpack.c.l.b16 %v686
  %v2692 = vunpack.c.l.b16 %v687
  %v2693 = vunpack.c.l.b16 %v688
  %v2694 = vunpack.c.l.b16 %v689
  %v2695 = vunpack.c.l.b16 %v690
  %v2696 = vunpack.c.l.b16 %v691
  %v2697 = vunpack.c.l.b16 %v692
  %v2698 = vunpack.c.l.b16 %v693
  %v2699 = vunpack.c.l.b16 %v694
  %v2700 = vunpack.c.l.b16 %v695
  %v2701 = vunpack.c.l.b16 %v696
  %v2702 = vunpack.c.l.b16 %v697
  %v2703 = vunpack.c.l.b16 %v698
  %v2704 = vunpack.c.l.b16 %v699
  %v2705 = vunpack.c.l.b16 %v700
  %v2706 = vunpack.c.l.b16 %v701
  %v2707 = vunpack.c.l.b16 %v702
  %v2708 = vunpack.c.l.b16 %v703
  %v2709 = vunpack.c.l.b16 %v704
  %v2710 = vunpack.c.l.b16 %v705
  %v2711 = vunpack.c.l.b16 %v706
  %v2712 = vunpack.c.l.b16 %v707
  %v2713 = vunpack.c.l.b16 %v708
  %v2714 = vunpack.c.l.b16 %v709
  %v2715 = vunpack.c.l.b16 %v710
  %v2716 = vunpack.c.l.b16 %v711
  %v2717 = vunpack.c.l.b16 %v712
  %v2718 = vunpack.c.l.b16 %v713
  %v2719 = vunpack.c.l.b16 %v714
  %v2720 = vunpack.c.l.b16 %v715
  %v2721 = vunpack.c.l.b16 %v716
  %v2722 = vunpack.c.l.b16 %v717
  %v2723 = vunpack.c.l.b16 %v718
  %v2724 = vunpack.c.l.b16 %v719
  %v2725 = vunpack.c.l.b16 %v720
  %v2726 = vunpack.c.l.b16 %v721
  %v2727 = vunpack.c.l.b16 %v722
  %v2728 = vunpack.c.l.b16 %v723
  %v2729 = vunpack.c.l.b16 %v724
  %v2730 = vunpack.c.l.b16 %v725
  %v2731 = vunpack.c.l.b16 %v726
  %v2732 = vunpack.c.l.b16 %v727
  %v2733 = vunpack.c.l.b16 %v728
  %v2734 = vunpack.c.l.b16 %v729
  %v2735 = vunpack.c.l.b16 %v730
  %v2736 = vunpack.c.l.b16 %v731
  %v2737 = vunpack.c.l.b16 %v732
  %v2738 = vunpack.c.l.b16 %v733
  %v2739 = vunpack.c.l.b16 %v734
  %v2740 = vunpack.c.l.b16 %v735
  %v2741 = vunpack.c.l.b16 %v736
  %v2742 = vunpack.c.l.b16 %v737
  %v2743 = vunpack.c.l.b16 %v738
  %v2744 = vunpack.c.l.b16 %v739
  %v2745 = vunpack.c.l.b16 %v740
  %v2746 = vunpack.c.l.b16 %v741
  %v2747 = vunpack.c.l.b16 %v742
  %v2748 = vunpack.c.l.b16 %v743
  %v2749 = vunpack.c.l.b16 %v744
  %v2750 = vunpack.c.l.b16 %v745
  %v2751 = vunpack.c.l.b16 %v746
  %v2752 = vunpack.c.l.b16 %v747
  %v2753 = vunpack.c.l.b16 %v748
  %v2754 = vunpack.c.l.b16 %v749
  %v2755 = vunpack.c.l.b16 %v750
  %v2756 = vunpack.c.l.b16 %v751
  %v2757 = vunpack.c.l.b16 %v752
  %v2758 = vunpack.c.l.b16 %v753
  %v2759 = vunpack.c.l.b16 %v754
  %v2760 = vunpack.c.l.b16 %v755
  %v2761 = vunpack.c.l.b16 %v756
  %v2762 = vunpack.c.l.b16 %v757
  %v2763 = vunpack.c.l.b16 %v758
  %v2764 = vunpack.c.l.b16 %v759
  %v2765 = vunpack.c.l.b16 %v760
  %v2766 = vunpack.c.l.b16 %v761
  %v2767 = vunpack.c.l.b16 %v762
  %v2768 = vunpack.c.l.b16 %v763
  %v2769 = vunpack.c.l.b16 %v764
  %v2770 = vunpack.c.l.b16 %v765
  %v2771 = vunpack.c.l.b16 %v766
  %v2772 = vunpack.c.l.b16 %v767
  %v2773 = vunpack.c.l.b16 %v768
  %v2774 = vunpack.c.l.b16 %v769
  %v2775 = vunpack.c.l.b16 %v770
  %v2776 = vunpack.c.l.b16 %v771
  %v2777 = vunpack.c.l.b16 %v772
  %v2778 = vunpack.c.l.b16 %v773
  %v2779 = vunpack.c.l.b16 %v774
  %v2780 = vunpack.c.l.b16 %v775
  %v2781 = vunpack.c.l.b16 %v776
  %v2782 = vunpack.c.l.b16 %v777
  %v2783 = vunpack.c.l.b16 %v778
  %v2784 = vunpack.c.l.b16 %v779
  %v2785 = vunpack.c.l.b16 %v780
  %v2786 = vunpack.c.l.b16 %v781
  %v2787 = vunpack.c.l.b16 %v782
  %v2788 = vunpack.c.l.b16 %v783
  %v2789 = vunpack.c.l.b16 %v784
  %v2790 = vunpack.c.l.b16 %v785
  %v2791 = vunpack.c.l.b16 %v786
  %v2792 = vunpack.c.l.b16 %v787
  %v2793 = vunpack.c.l.b16 %v788
  %v2794 = vunpack.c.l.b16 %v789
  %v2795 = vunpack.c.l.b16 %v790
  %v2796 = vunpack.c.l.b16 %v791
  %v2797 = vunpack.c.l.b16 %v792
  %v2798 = vunpack.c.l.b16 %v793
  %v2799 = vunpack.c.l.b16 %v794
  %v2800 = vunpack.c.l.b16 %v795
  %v2801 = vunpack.c.l.b16 %v796
  %v2802 = vunpack.c.l.b16 %v797
  %v2803 = vunpack.c.l.b16 %v798
  %v2804 = vunpack.c.l.b16 %v799
  %v2805 = vunpack.c.l.b16 %v800
  %v2806 = vunpack.c.l.b16 %v801
  %v2807 = vunpack.c.l.b16 %v802
  %v2808 = vunpack.c.l.b16 %v803
  %v2809 = vunpack.c.l.b16 %v804
  %v2810 = vunpack.c.l.b16 %v805
  %v2811 = vunpack.c.l.b16 %v806
  %v2812 = vunpack.c.l.b16 %v807
  %v2813 = vunpack.c.l.b16 %v808
  %v2814 = vunpack.c.l.b16 %v809
  %v2815 = vunpack.c.l.b16 %v810
  %v2816 = vunpack.c.l.b16 %v811
  %v2817 = vunpack.c.l.b16 %v812
  %v2818 = vunpack.c.l.b16 %v813
  %v2819 = vunpack.c.l.b16 %v814
  %v2820 = vunpack.c.l.b16 %v815
  %v2821 = vunpack.c.l.b16 %v816
  %v2822 = vunpack.c.l.b16 %v817
  %v2823 = vunpack.c.l.b16 %v818
  %v2824 = vunpack.c.l.b16 %v819
  %v2825 = vunpack.c.l.b16 %v820
  %v2826 = vunpack.c.l.b16 %v821
  %v2827 = vunpack.c.l.b16 %v822
  %v2828 = vunpack.c.l.b16 %v823
  %v2829 = vunpack.c.l.b16 %v824
  %v2830 = vunpack.c.l.b16 %v825
  %v2831 = vunpack.c.l.b16 %v826
  %v2832 = vunpack.c.l.b16 %v827
  %v2833 = vunpack.c.l.b16 %v828
  %v2834 = vunpack.c.l.b16 %v829
  %v2835 = vunpack.c.l.b16 %v830
  %v2836 = vunpack.c.l.b16 %v831
  %v2837 = vunpack.c.l.b16 %v832
  %v2838 = vunpack.c.l.b16 %v833
  %v2839 = vunpack.c.l.b16 %v834
  %v2840 = vunpack.c.l.b16 %v835
  %v2841 = vunpack.c.l.b16 %v836
  %v2842 = vunpack.c.l.b16 %v837
  %v2843 = vunpack.c.l.b16 %v838
  %v2844 = vunpack.c.l.b16 %v839
  %v2845 = vunpack.c.l.b16 %v840
  %v2846 = vunpack.c.l.b16 %v841
  %v2847 = vunpack.c.l.b16 %v842
  %v2848 = vunpack.c.l.b16 %v843
  %v2849 = vunpack.c.l.b16 %v844
  %v2850 = vunpack.c.l.b16 %v845
  %v2851 = vunpack.c.l.b16 %v846
  %v2852 = vunpack.c.l.b16 %v847
  %v2853 = vunpack.c.l.b16 %v848
  %v2854 = vunpack.c.l.b16 %v849
  %v2855 = vunpack.c.l.b16 %v850
  %v2856 = vunpack.c.l.b16 %v851
  %v2857 = vunpack.c.l.b16 %v852
  %v2858 = vunpack.c.l.b16 %v853
  %v2859 = vunpack.c.l.b16 %v854
  %v2860 = vunpack.c.l.b16 %v855
  %v2861 = vunpack.c.l.b16 %v856
  %v2862 = vunpack.c.l.b16 %v857
  %v2863 = vunpack.c.l.b16 %v858
  %v2864 = vunpack.c.l.b16 %v859
  %v2865 = vunpack.c.l.b16 %v860
  %v2866 = vunpack.c.l.b16 %v861
  %v2867 = vunpack.c.l.b16 %v862
  %v2868 = vunpack.c.l.b16 %v863
  %v2869 = vunpack.c.l.b16 %v864
  %v2870 = vunpack.c.l.b16 %v865
  %v2871 = vunpack.c.l.b16 %v866
  %v2872 = vunpack.c.l.b16 %v867
  %v2873 = vunpack.c.l.b16 %v868
  %v2874 = vunpack.c.l.b16 %v869
  %v2875 = vunpack.c.l.b16 %v870
  %v2876 = vunpack.c.l.b16 %v871
  %v2877 = vunpack.c.l.b16 %v872
  %v2878 = vunpack.c.l.b16 %v873
  %v2879 = vunpack.c.l.b16 %v874
  %v2880 = vunpack.c.l.b16 %v875
  %v2881 = vunpack.c.l.b16 %v876
  %v2882 = vunpack.c.l.b16 %v877
  %v2883 = vunpack.c.l.b16 %v878
  %v2884 = vunpack.c.l.b16 %v879
  %v2885 = vunpack.c.l.b16 %v880
  %v2886 = vunpack.c.l.b16 %v881
  %v2887 = vunpack.c.l.b16 %v882
  %v2888 = vunpack.c.l.b16 %v883
  %v2889 = vunpack.c.l.b16 %v884
  %v2890 = vunpack.c.l.b16 %v885
  %v2891 = vunpack.c.l.b16 %v886
  %v2892 = vunpack.c.l.b16 %v887
  %v2893 = vunpack.c.l.b16 %v888
  %v2894 = vunpack.c.l.b16 %v889
  %v2895 = vunpack.c.l.b16 %v890
  %v2896 = vunpack.c.l.b16 %v891
  %v2897 = vunpack.c.l.b16 %v892
  %v2898 = vunpack.c.l.b16 %v893
  %v2899 = vunpack.c.l.b16 %v894
  %v2900 = vunpack.c.l.b16 %v895
  %v2901 = vunpack.c.l.b16 %v896
  %v2902 = vunpack.c.l.b16 %v897
  %v2903 = vunpack.c.l.b16 %v898
  %v2904 = vunpack.c.l.b16 %v899
  %v2905 = vunpack.c.l.b16 %v900
  %v2906 = vunpack.c.l.b16 %v901
  %v2907 = vunpack.c.l.b16 %v902
  %v2908 = vunpack.c.l.b16 %v903
  %v2909 = vunpack.c.l.b16 %v904
  %v2910 = vunpack.c.l.b16 %v905
  %v2911 = vunpack.c.l.b16 %v906
  %v2912 = vunpack.c.l.b16 %v907
  %v2913 = vunpack.c.l.b16 %v908
  %v2914 = vunpack.c.l.b16 %v909
  %v2915 = vunpack.c.l.b16 %v910
  %v2916 = vunpack.c.l.b16 %v911
  %v2917 = vunpack.c.l.b16 %v912
  %v2918 = vunpack.c.l.b16 %v913
  %v2919 = vunpack.c.l.b16 %v914
  %v2920 = vunpack.c.l.b16 %v915
  %v2921 = vunpack.c.l.b16 %v916
  %v2922 = vunpack.c.l.b16 %v917
  %v2923 = vunpack.c.l.b16 %v918
  %v2924 = vunpack.c.l.b16 %v919
  %v2925 = vunpack.c.l.b16 %v920
  %v2926 = vunpack.c.l.b16 %v921
  %v2927 = vunpack.c.l.b16 %v922
  %v2928 = vunpack.c.l.b16 %v923
  %v2929 = vunpack.c.l.b16 %v924
  %v2930 = vunpack.c.l.b16 %v925
  %v2931 = vunpack.c.l.b16 %v926
  %v2932 = vunpack.c.l.b16 %v927
  %v2933 = vunpack.c.l.b16 %v928
  %v2934 = vunpack.c.l.b16 %v929
  %v2935 = vunpack.c.l.b16 %v930
  %v2936 = vunpack.c.l.b16 %v931
  %v2937 = vunpack.c.l.b16 %v932
  %v2938 = vunpack.c.l.b16 %v933
  %v2939 = vunpack.c.l.b16 %v934
  %v2940 = vpack.c.b16 %v2077, %v2076
  %v2941 = vpack.c.b16 %v2079, %v2078
  %v2942 = vpack.c.b16 %v2081, %v2080
  %v2943 = vpack.c.b16 %v2083, %v2082
  %v2944 = vpack.c.b16 %v2085, %v2084
  %v2945 = vpack.c.b16 %v2087, %v2086
  %v2946 = vpack.c.b16 %v2089, %v2088
  %v2947 = vpack.c.b16 %v2091, %v2090
  %v2948 = vpack.c.b16 %v2093, %v2092
  %v2949 = vpack.c.b16 %v2095, %v2094
  %v2950 = vpack.c.b16 %v2097, %v2096
  %v2951 = vpack.c.b16 %v2099, %v2098
  %v2952 = vpack.c.b16 %v2101, %v2100
  %v2953 = vpack.c.b16 %v2103, %v2102
  %v2954 = vpack.c.b16 %v2105, %v2104
  %v2955 = vpack.c.b16 %v2107, %v2106
  %v2956 = vpack.c.b16 %v2109, %v2108
  %v2957 = vpack.c.b16 %v2111, %v2110
  %v2958 = vpack.c.b16 %v2113, %v2112
  %v2959 = vpack.c.b16 %v2115, %v2114
  %v2960 = vpack.c.b16 %v2117, %v2116
  %v2961 = vpack.c.b16 %v2119, %v2118
  %v2962 = vpack.c.b16 %v2121, %v2120
  %v2963 = vpack.c.b16 %v2123, %v2122
  %v2964 = vpack.c.b16 %v2125, %v2124
  %v2965 = vpack.c.b16 %v2127, %v2126
  %v2966 = vpack.c.b16 %v2129, %v2128
  %v2967 = vpack.c.b16 %v2131, %v2130
  %v2968 = vpack.c.b16 %v2133, %v2132
  %v2969 = vpack.c.b16 %v2135, %v2134
  %v2970 = vpack.c.b16 %v2137, %v2136
  %v2971 = vpack.c.b16 %v2139, %v2138
  %v2972 = vpack.c.b16 %v2141, %v2140
  %v2973 = vpack.c.b16 %v2143, %v2142
  %v2974 = vpack.c.b16 %v2145, %v2144
  %v2975 = vpack.c.b16 %v2147, %v2146
  %v2976 = vpack.c.b16 %v2149, %v2148
  %v2977 = vpack.c.b16 %v2151, %v2150
  %v2978 = vpack.c.b16 %v2153, %v2152
  %v2979 = vpack.c.b16 %v2155, %v2154
  %v2980 = vpack.c.b16 %v2157, %v2156
  %v2981 = vpack.c.b16 %v2159, %v2158
  %v2982 = vpack.c.b16 %v2161, %v2160
  %v2983 = vpack.c.b16 %v2163, %v2162
  %v2984 = vpack.c.b16 %v2165, %v2164
  %v2985 = vpack.c.b16 %v2167, %v2166
  %v2986 = vpack.c.b16 %v2169, %v2168
  %v2987 = vpack.c.b16 %v2171, %v2170
  %v2988 = vpack.c.b16 %v2173, %v2172
  %v2989 = vpack.c.b16 %v2175, %v2174
  %v2990 = vpack.c.b16 %v2177, %v2176
  %v2991 = vpack.c.b16 %v2179, %v2178
  %v2992 = vpack.c.b16 %v2181, %v2180
  %v2993 = vpack.c.b16 %v2183, %v2182
  %v2994 = vpack.c.b16 %v2185, %v2184
  %v2995 = vpack.c.b16 %v2187, %v2186
  %v2996 = vpack.c.b16 %v2189, %v2188
  %v2997 = vpack.c.b16 %v2191, %v2190
  %v2998 = vpack.c.b16 %v2193, %v2192
  %v2999 = vpack.c.b16 %v2195, %v2194
  %v3000 = vpack.c.b16 %v2197, %v2196
  %v3001 = vpack.c.b16 %v2199, %v2198
  %v3002 = vpack.c.b16 %v2201, %v2200
  %v3003 = vpack.c.b16 %v2203, %v2202
  %v3004 = vpack.c.b16 %v2205, %v2204
  %v3005 = vpack.c.b16 %v2207, %v2206
  %v3006 = vpack.c.b16 %v2209, %v2208
  %v3007 = vpack.c.b16 %v2211, %v2210
  %v3008 = vpack.c.b16 %v2213, %v2212
  %v3009 = vpack.c.b16 %v2215, %v2214
  %v3010 = vpack.c.b16 %v2217, %v2216
  %v3011 = vpack.c.b16 %v2219, %v2218
  %v3012 = vpack.c.b16 %v2221, %v2220
  %v3013 = vpack.c.b16 %v2223, %v2222
  %v3014 = vpack.c.b16 %v2225, %v2224
  %v3015 = vpack.c.b16 %v2227, %v2226
  %v3016 = vpack.c.b16 %v2229, %v2228
  %v3017 = vpack.c.b16 %v2231, %v2230
  %v3018 = vpack.c.b16 %v2233, %v2232
  %v3019 = vpack.c.b16 %v2235, %v2234
  %v3020 = vpack.c.b16 %v2237, %v2236
  %v3021 = vpack.c.b16 %v2239, %v2238
  %v3022 = vpack.c.b16 %v2241, %v2240
  %v3023 = vpack.c.b16 %v2243, %v2242
  %v3024 = vpack.c.b16 %v2245, %v2244
  %v3025 = vpack.c.b16 %v2247, %v2246
  %v3026 = vpack.c.b16 %v2249, %v2248
  %v3027 = vpack.c.b16 %v2251, %v2250
  %v3028 = vpack.c.b16 %v2253, %v2252
  %v3029 = vpack.c.b16 %v2255, %v2254
  %v3030 = vpack.c.b16 %v2257, %v2256
  %v3031 = vpack.c.b16 %v2259, %v2258
  %v3032 = vpack.c.b16 %v2261, %v2260
  %v3033 = vpack.c.b16 %v2263, %v2262
  %v3034 = vpack.c.b16 %v2265, %v2264
  %v3035 = vpack.c.b16 %v2267, %v2266
  %v3036 = vpack.c.b16 %v2269, %v2268
  %v3037 = vpack.c.b16 %v2271, %v2270
  %v3038 = vpack.c.b16 %v2273, %v2272
  %v3039 = vpack.c.b16 %v2275, %v2274
  %v3040 = vpack.c.b16 %v2277, %v2276
  %v3041 = vpack.c.b16 %v2279, %v2278
  %v3042 = vpack.c.b16 %v2281, %v2280
  %v3043 = vpack.c.b16 %v2283, %v2282
  %v3044 = vpack.c.b16 %v2285, %v2284
  %v3045 = vpack.c.b16 %v2287, %v2286
  %v3046 = vpack.c.b16 %v2289, %v2288
  %v3047 = vpack.c.b16 %v2291, %v2290
  %v3048 = vpack.c.b16 %v2293, %v2292
  %v3049 = vpack.c.b16 %v2295, %v2294
  %v3050 = vpack.c.b16 %v2297, %v2296
  %v3051 = vpack.c.b16 %v2299, %v2298
  %v3052 = vpack.c.b16 %v2301, %v2300
  %v3053 = vpack.c.b16 %v2303, %v2302
  %v3054 = vpack.c.b16 %v2305, %v2304
  %v3055 = vpack.c.b16 %v2307, %v2306
  %v3056 = vpack.c.b16 %v2309, %v2308
  %v3057 = vpack.c.b16 %v2311, %v2310
  %v3058 = vpack.c.b16 %v2313, %v2312
  %v3059 = vpack.c.b16 %v2315, %v2314
  %v3060 = vpack.c.b16 %v2317, %v2316
  %v3061 = vpack.c.b16 %v2319, %v2318
  %v3062 = vpack.c.b16 %v2321, %v2320
  %v3063 = vpack.c.b16 %v2323, %v2322
  %v3064 = vpack.c.b16 %v2325, %v2324
  %v3065 = vpack.c.b16 %v2327, %v2326
  %v3066 = vpack.c.b16 %v2329, %v2328
  %v3067 = vpack.c.b16 %v2331, %v2330
  %v3068 = vpack.c.b16 %v2333, %v2332
  %v3069 = vpack.c.b16 %v2335, %v2334
  %v3070 = vpack.c.b16 %v2337, %v2336
  %v3071 = vpack.c.b16 %v2339, %v2338
  %v3072 = vpack.c.b16 %v2341, %v2340
  %v3073 = vpack.c.b16 %v2343, %v2342
  %v3074 = vpack.c.b16 %v2345, %v2344
  %v3075 = vpack.c.b16 %v2347, %v2346
  %v3076 = vpack.c.b16 %v2349, %v2348
  %v3077 = vpack.c.b16 %v2351, %v2350
  %v3078 = vpack.c.b16 %v2353, %v2352
  %v3079 = vpack.c.b16 %v2355, %v2354
  %v3080 = vpack.c.b16 %v2357, %v2356
  %v3081 = vpack.c.b16 %v2359, %v2358
  %v3082 = vpack.c.b16 %v2361, %v2360
  %v3083 = vpack.c.b16 %v2363, %v2362
  %v3084 = vpack.c.b16 %v2365, %v2364
  %v3085 = vpack.c.b16 %v2367, %v2366
  %v3086 = vpack.c.b16 %v2369, %v2368
  %v3087 = vpack.c.b16 %v2371, %v2370
  %v3088 = vpack.c.b16 %v2373, %v2372
  %v3089 = vpack.c.b16 %v2375, %v2374
  %v3090 = vpack.c.b16 %v2377, %v2376
  %v3091 = vpack.c.b16 %v2379, %v2378
  %v3092 = vpack.c.b16 %v2381, %v2380
  %v3093 = vpack.c.b16 %v2383, %v2382
  %v3094 = vpack.c.b16 %v2385, %v2384
  %v3095 = vpack.c.b16 %v2387, %v2386
  %v3096 = vpack.c.b16 %v2389, %v2388
  %v3097 = vpack.c.b16 %v2391, %v2390
  %v3098 = vpack.c.b16 %v2393, %v2392
  %v3099 = vpack.c.b16 %v2395, %v2394
  %v3100 = vpack.c.b16 %v2397, %v2396
  %v3101 = vpack.c.b16 %v2399, %v2398
  %v3102 = vpack.c.b16 %v2401, %v2400
  %v3103 = vpack.c.b16 %v2403, %v2402
  %v3104 = vpack.c.b16 %v2405, %v2404
  %v3105 = vpack.c.b16 %v2407, %v2406
  %v3106 = vpack.c.b16 %v2409, %v2408
  %v3107 = vpack.c.b16 %v2411, %v2410
  %v3108 = vpack.c.b16 %v2413, %v2412
  %v3109 = vpack.c.b16 %v2415, %v2414
  %v3110 = vpack.c.b16 %v2417, %v2416
  %v3111 = vpack.c.b16 %v2419, %v2418
  %v3112 = vpack.c.b16 %v2421, %v2420
  %v3113 = vpack.c.b16 %v2423, %v2422
  %v3114 = vpack.c.b16 %v2425, %v2424
  %v3115 = vpack.c.b16 %v2427, %v2426
  %v3116 = vpack.c.b16 %v2429, %v2428
  %v3117 = vpack.c.b16 %v2431, %v2430
  %v3118 = vpack.c.b16 %v2433, %v2432
  %v3119 = vpack.c.b16 %v2435, %v2434
  %v3120 = vpack.c.b16 %v2437, %v2436
  %v3121 = vpack.c.b16 %v2439, %v2438
  %v3122 = vpack.c.b16 %v2441, %v2440
  %v3123 = vpack.c.b16 %v2443, %v2442
  %v3124 = vpack.c.b16 %v2445, %v2444
  %v3125 = vpack.c.b16 %v2447, %v2446
  %v3126 = vpack.c.b16 %v2449, %v2448
  %v3127 = vpack.c.b16 %v2451, %v2450
  %v3128 = vpack.c.b16 %v2453, %v2452
  %v3129 = vpack.c.b16 %v2455, %v2454
  %v3130 = vpack.c.b16 %v2457, %v2456
  %v3131 = vpack.c.b16 %v2459, %v2458
  %v3132 = vpack.c.b16 %v2461, %v2460
  %v3133 = vpack.c.b16 %v2463, %v2462
  %v3134 = vpack.c.b16 %v2465, %v2464
  %v3135 = vpack.c.b16 %v2467, %v2466
  %v3136 = vpack.c.b16 %v2469, %v2468
  %v3137 = vpack.c.b16 %v2471, %v2470
  %v3138 = vpack.c.b16 %v2473, %v2472
  %v3139 = vpack.c.b16 %v2475, %v2474
  %v3140 = vpack.c.b16 %v2477, %v2476
  %v3141 = vpack.c.b16 %v2479, %v2478
  %v3142 = vpack.c.b16 %v2481, %v2480
  %v3143 = vpack.c.b16 %v2483, %v2482
  %v3144 = vpack.c.b16 %v2485, %v2484
  %v3145 = vpack.c.b16 %v2487, %v2486
  %v3146 = vpack.c.b16 %v2489, %v2488
  %v3147 = vpack.c.b16 %v2491, %v2490
  %v3148 = vpack.c.b16 %v2493, %v2492
  %v3149 = vpack.c.b16 %v2495, %v2494
  %v3150 = vpack.c.b16 %v2497, %v2496
  %v3151 = vpack.c.b16 %v2499, %v2498
  %v3152 = vpack.c.b16 %v2501, %v2500
  %v3153 = vpack.c.b16 %v2503, %v2502
  %v3154 = vpack.c.b16 %v2505, %v2504
  %v3155 = vpack.c.b16 %v2507, %v2506
  %v3156 = vpack.c.b16 %v2509, %v2508
  %v3157 = vpack.c.b16 %v2511, %v2510
  %v3158 = vpack.c.b16 %v2513, %v2512
  %v3159 = vpack.c.b16 %v2515, %v2514
  %v3160 = vpack.c.b16 %v2517, %v2516
  %v3161 = vpack.c.b16 %v2519, %v2518
  %v3162 = vpack.c.b16 %v2521, %v2520
  %v3163 = vpack.c.b16 %v2523, %v2522
  %v3164 = vpack.c.b16 %v2525, %v2524
  %v3165 = vpack.c.b16 %v2527, %v2526
  %v3166 = vpack.c.b16 %v2529, %v2528
  %v3167 = vpack.c.b16 %v2531, %v2530
  %v3168 = vpack.c.b16 %v2533, %v2532
  %v3169 = vpack.c.b16 %v2535, %v2534
  %v3170 = vpack.c.b16 %v2537, %v2536
  %v3171 = vpack.c.b16 %v2539, %v2538
  %v3172 = vpack.c.b16 %v2541, %v2540
  %v3173 = vpack.c.b16 %v2543, %v2542
  %v3174 = vpack.c.b16 %v2545, %v2544
  %v3175 = vpack.c.b16 %v2547, %v2546
  %v3176 = vpack.c.b16 %v2549, %v2548
  %v3177 = vpack.c.b16 %v2551, %v2550
  %v3178 = vpack.c.b16 %v2553, %v2552
  %v3179 = vpack.c.b16 %v2555, %v2554
  %v3180 = vpack.c.b16 %v2557, %v2556
  %v3181 = vpack.c.b16 %v2559, %v2558
  %v3182 = vpack.c.b16 %v2561, %v2560
  %v3183 = vpack.c.b16 %v2563, %v2562
  %v3184 = vpack.c.b16 %v2565, %v2564
  %v3185 = vpack.c.b16 %v2567, %v2566
  %v3186 = vpack.c.b16 %v2569, %v2568
  %v3187 = vpack.c.b16 %v2571, %v2570
  %v3188 = vpack.c.b16 %v2573, %v2572
  %v3189 = vpack.c.b16 %v2575, %v2574
  %v3190 = vpack.c.b16 %v2577, %v2576
  %v3191 = vpack.c.b16 %v2579, %v2578
  %v3192 = vpack.c.b16 %v2581, %v2580
  %v3193 = vpack.c.b16 %v2583, %v2582
  %v3194 = vpack.c.b16 %v2585, %v2584
  %v3195 = vpack.c.b16 %v2587, %v2586
  %v3196 = vpack.c.b16 %v2589, %v2588
  %v3197 = vpack.c.b16 %v2591, %v2590
  %v3198 = vpack.c.b16 %v2593, %v2592
  %v3199 = vpack.c.b16 %v2595, %v2594
  %v3200 = vpack.c.b16 %v2597, %v2596
  %v3201 = vpack.c.b16 %v2599, %v2598
  %v3202 = vpack.c.b16 %v2601, %v2600
  %v3203 = vpack.c.b16 %v2603, %v2602
  %v3204 = vpack.c.b16 %v2605, %v2604
  %v3205 = vpack.c.b16 %v2607, %v2606
  %v3206 = vpack.c.b16 %v2609, %v2608
  %v3207 = vpack.c.b16 %v2611, %v2610
  %v3208 = vpack.c.b16 %v2613, %v2612
  %v3209 = vpack.c.b16 %v2615, %v2614
  %v3210 = vpack.c.b16 %v2617, %v2616
  %v3211 = vpack.c.b16 %v2619, %v2618
  %v3212 = vpack.c.b16 %v2621, %v2620
  %v3213 = vpack.c.b16 %v2623, %v2622
  %v3214 = vpack.c.b16 %v2625, %v2624
  %v3215 = vpack.c.b16 %v2627, %v2626
  %v3216 = vpack.c.b16 %v2629, %v2628
  %v3217 = vpack.c.b16 %v2631, %v2630
  %v3218 = vpack.c.b16 %v2633, %v2632
  %v3219 = vpack.c.b16 %v2635, %v2634
  %v3220 = vpack.c.b16 %v2637, %v2636
  %v3221 = vpack.c.b16 %v2639, %v2638
  %v3222 = vpack.c.b16 %v2641, %v2640
  %v3223 = vpack.c.b16 %v2643, %v2642
  %v3224 = vpack.c.b16 %v2645, %v2644
  %v3225 = vpack.c.b16 %v2647, %v2646
  %v3226 = vpack.c.b16 %v2649, %v2648
  %v3227 = vpack.c.b16 %v2651, %v2650
  %v3228 = vpack.c.b16 %v2653, %v2652
  %v3229 = vpack.c.b16 %v2655, %v2654
  %v3230 = vpack.c.b16 %v2657, %v2656
  %v3231 = vpack.c.b16 %v2659, %v2658
  %v3232 = vpack.c.b16 %v2661, %v2660
  %v3233 = vpack.c.b16 %v2663, %v2662
  %v3234 = vpack.c.b16 %v2665, %v2664
  %v3235 = vpack.c.b16 %v2667, %v2666
  %v3236 = vpack.c.b16 %v2669, %v2668
  %v3237 = vpack.c.b16 %v2671, %v2670
  %v3238 = vpack.c.b16 %v2673, %v2672
  %v3239 = vpack.c.b16 %v2675, %v2674
  %v3240 = vpack.c.b16 %v2677, %v2676
  %v3241 = vpack.c.b16 %v2679, %v2678
  %v3242 = vpack.c.b16 %v2681, %v2680
  %v3243 = vpack.c.b16 %v2683, %v2682
  %v3244 = vpack.c.b16 %v2685, %v2684
  %v3245 = vpack.c.b16 %v2687, %v2686
  %v3246 = vpack.c.b16 %v2689, %v2688
  %v3247 = vpack.c.b16 %v2691, %v2690
  %v3248 = vpack.c.b16 %v2693, %v2692
  %v3249 = vpack.c.b16 %v2695, %v2694
  %v3250 = vpack.c.b16 %v2697, %v2696
  %v3251 = vpack.c.b16 %v2699, %v2698
  %v3252 = vpack.c.b16 %v2701, %v2700
  %v3253 = vpack.c.b16 %v2703, %v2702
  %v3254 = vpack.c.b16 %v2705, %v2704
  %v3255 = vpack.c.b16 %v2707, %v2706
  %v3256 = vpack.c.b16 %v2709, %v2708
  %v3257 = vpack.c.b16 %v2711, %v2710
  %v3258 = vpack.c.b16 %v2713, %v2712
  %v3259 = vpack.c.b16 %v2715, %v2714
  %v3260 = vpack.c.b16 %v2717, %v2716
  %v3261 = vpack.c.b16 %v2719, %v2718
  %v3262 = vpack.c.b16 %v2721, %v2720
  %v3263 = vpack.c.b16 %v2723, %v2722
  %v3264 = vpack.c.b16 %v2725, %v2724
  %v3265 = vpack.c.b16 %v2727, %v2726
  %v3266 = vpack.c.b16 %v2729, %v2728
  %v3267 = vpack.c.b16 %v2731, %v2730
  %v3268 = vpack.c.b16 %v2733, %v2732
  %v3269 = vpack.c.b16 %v2735, %v2734
  %v3270 = vpack.c.b16 %v2737, %v2736
  %v3271 = vpack.c.b16 %v2739, %v2738
  %v3272 = vpack.c.b16 %v2741, %v2740
  %v3273 = vpack.c.b16 %v2743, %v2742
  %v3274 = vpack.c.b16 %v2745, %v2744
  %v3275 = vpack.c.b16 %v2747, %v2746
  %v3276 = vpack.c.b16 %v2749, %v2748
  %v3277 = vpack.c.b16 %v2751, %v2750
  %v3278 = vpack.c.b16 %v2753, %v2752
  %v3279 = vpack.c.b16 %v2755, %v2754
  %v3280 = vpack.c.b16 %v2757, %v2756
  %v3281 = vpack.c.b16 %v2759, %v2758
  %v3282 = vpack.c.b16 %v2761, %v2760
  %v3283 = vpack.c.b16 %v2763, %v2762
  %v3284 = vpack.c.b16 %v2765, %v2764
  %v3285 = vpack.c.b16 %v2767, %v2766
  %v3286 = vpack.c.b16 %v2769, %v2768
  %v3287 = vpack.c.b16 %v2771, %v2770
  %v3288 = vpack.c.b16 %v2773, %v2772
  %v3289 = vpack.c.b16 %v2775, %v2774
  %v3290 = vpack.c.b16 %v2777, %v2776
  %v3291 = vpack.c.b16 %v2779, %v2778
  %v3292 = vpack.c.b16 %v2781, %v2780
  %v3293 = vpack.c.b16 %v2783, %v2782
  %v3294 = vpack.c.b16 %v2785, %v2784
  %v3295 = vpack.c.b16 %v2787, %v2786
  %v3296 = vpack.c.b16 %v2789, %v2788
  %v3297 = vpack.c.b16 %v2791, %v2790
  %v3298 = vpack.c.b16 %v2793, %v2792
  %v3299 = vpack.c.b16 %v2795, %v2794
  %v3300 = vpack.c.b16 %v2797, %v2796
  %v3301 = vpack.c.b16 %v2799, %v2798
  %v3302 = vpack.c.b16 %v2801, %v2800
  %v3303 = vpack.c.b16 %v2803, %v2802
  %v3304 = vpack.c.b16 %v2805, %v2804
  %v3305 = vpack.c.b16 %v2807, %v2806
  %v3306 = vpack.c.b16 %v2809, %v2808
  %v3307 = vpack.c.b16 %v2811, %v2810
  %v3308 = vpack.c.b16 %v2813, %v2812
  %v3309 = vpack.c.b16 %v2815, %v2814
  %v3310 = vpack.c.b16 %v2817, %v2816
  %v3311 = vpack.c.b16 %v2819, %v2818
  %v3312 = vpack.c.b16 %v2821, %v2820
  %v3313 = vpack.c.b16 %v2823, %v2822
  %v3314 = vpack.c.b16 %v2825, %v2824
  %v3315 = vpack.c.b16 %v2827, %v2826
  %v3316 = vpack.c.b16 %v2829, %v2828
  %v3317 = vpack.c.b16 %v2831, %v2830
  %v3318 = vpack.c.b16 %v2833, %v2832
  %v3319 = vpack.c.b16 %v2835, %v2834
  %v3320 = vpack.c.b16 %v2837, %v2836
  %v3321 = vpack.c.b16 %v2839, %v2838
  %v3322 = vpack.c.b16 %v2841, %v2840
  %v3323 = vpack.c.b16 %v2843, %v2842
  %v3324 = vpack.c.b16 %v2845, %v2844
  %v3325 = vpack.c.b16 %v2847, %v2846
  %v3326 = vpack.c.b16 %v2849, %v2848
  %v3327 = vpack.c.b16 %v2851, %v2850
  %v3328 = vpack.c.b16 %v2853, %v2852
  %v3329 = vpack.c.b16 %v2855, %v2854
  %v3330 = vpack.c.b16 %v2857, %v2856
  %v3331 = vpack.c.b16 %v2859, %v2858
  %v3332 = vpack.c.b16 %v2861, %v2860
  %v3333 = vpack.c.b16 %v2863, %v2862
  %v3334 = vpack.c.b16 %v2865, %v2864
  %v3335 = vpack.c.b16 %v2867, %v2866
  %v3336 = vpack.c.b16 %v2869, %v2868
  %v3337 = vpack.c.b16 %v2871, %v2870
  %v3338 = vpack.c.b16 %v2873, %v2872
  %v3339 = vpack.c.b16 %v2875, %v2874
  %v3340 = vpack.c.b16 %v2877, %v2876
  %v3341 = vpack.c.b16 %v2879, %v2878
  %v3342 = vpack.c.b16 %v2881, %v2880
  %v3343 = vpack.c.b16 %v2883, %v2882
  %v3344 = vpack.c.b16 %v2885, %v2884
  %v3345 = vpack.c.b16 %v2887, %v2886
  %v3346 = vpack.c.b16 %v2889, %v2888
  %v3347 = vpack.c.b16 %v2891, %v2890
  %v3348 = vpack.c.b16 %v2893, %v2892
  %v3349 = vpack.c.b16 %v2895, %v2894
  %v3350 = vpack.c.b16 %v2897, %v2896
  %v3351 = vpack.c.b16 %v2899, %v2898
  %v3352 = vpack.c.b16 %v2901, %v2900
  %v3353 = vpack.c.b16 %v2903, %v2902
  %v3354 = vpack.c.b16 %v2905, %v2904
  %v3355 = vpack.c.b16 %v2907, %v2906
  %v3356 = vpack.c.b16 %v2909, %v2908
  %v3357 = vpack.c.b16 %v2911, %v2910
  %v3358 = vpack.c.b16 %v2913, %v2912
  %v3359 = vpack.c.b16 %v2915, %v2914
  %v3360 = vpack.c.b16 %v2917, %v2916
  %v3361 = vpack.c.b16 %v2919, %v2918
  %v3362 = vpack.c.b16 %v2921, %v2920
  %v3363 = vpack.c.b16 %v2923, %v2922
  %v3364 = vpack.c.b16 %v2925, %v2924
  %v3365 = vpack.c.b16 %v2927, %v2926
  %v3366 = vpack.c.b16 %v2929, %v2928
  %v3367 = vpack.c.b16 %v2931, %v2930
  %v3368 = vpack.c.b16 %v2933, %v2932
  %v3369 = vpack.c.b16 %v2935, %v2934
  %v3370 = vpack.c.b16 %v2937, %v2936
  %v3371 = vpack.c.b16 %v2939, %v2938
  %3804 = vmatprep.subr.bf16.mxu0 0
  %3805 = vmatpush1.bf16.msra.mxu0 %v2947
  %3806 = vmatprep.subr.bf16.mxu0 0
  %3807 = vmatpush1.bf16.msra.mxu0 %v2946
  %3808 = vmatprep.subr.bf16.mxu0 0
  %3809 = vmatpush1.bf16.msra.mxu0 %v2945
  %3810 = vmatprep.subr.bf16.mxu0 0
  %3811 = vmatpush1.bf16.msra.mxu0 %v2944
  %3812 = vmatprep.subr.bf16.mxu0 0
  %3813 = vmatpush1.bf16.msra.mxu0 %v2943
  %3814 = vmatprep.subr.bf16.mxu0 0
  %3815 = vmatpush1.bf16.msra.mxu0 %v2942
  %3816 = vmatprep.subr.bf16.mxu0 0
  %3817 = vmatpush1.bf16.msra.mxu0 %v2941
  %3818 = vmatprep.subr.bf16.mxu0 0
  %3819 = vmatpush1.bf16.msra.mxu0 %v2940
  %3820 = vmatprep.subr.bf16.mxu0 0
  %3821 = vmatpush2.bf16.msra.mxu0 %v2955
  %3822 = vmatprep.subr.bf16.mxu0 0
  %3823 = vmatpush2.bf16.msra.mxu0 %v2954
  %3824 = vmatprep.subr.bf16.mxu0 0
  %3825 = vmatpush2.bf16.msra.mxu0 %v2953
  %3826 = vmatprep.subr.bf16.mxu0 0
  %3827 = vmatpush2.bf16.msra.mxu0 %v2952
  %3828 = vmatprep.subr.bf16.mxu0 0
  %3829 = vmatpush2.bf16.msra.mxu0 %v2951
  %3830 = vmatprep.subr.bf16.mxu0 0
  %3831 = vmatpush2.bf16.msra.mxu0 %v2950
  %3832 = vmatprep.subr.bf16.mxu0 0
  %3833 = vmatpush2.bf16.msra.mxu0 %v2949
  %3834 = vmatprep.subr.bf16.mxu0 0
  %3835 = vmatpush2.bf16.msra.mxu0 %v2948
  %3836 = vmatprep.mubr.bf16.mxu0 %v1105
  %3837 = vmatmul.mubr.bf16.gmra.mxu0 %v1104
  %v3838 = vpop.f32.mrf.mxu0
  %v3839 = vadd.f32 %v940, %v3838
  %v3840 = vpop.f32.mrf.mxu0
  %v3841 = vpop.f32.mrf.mxu0
  %v3842 = vadd.f32 %v940, %v3841
  %v3843 = vpop.f32.mrf.mxu0
  %3844 = vdwg.mxu0
  %3845 = vmatprep.subr.bf16.mxu0 0
  %3846 = vmatpush1.bf16.msra.mxu0 %v2963
  %3847 = vmatprep.subr.bf16.mxu0 0
  %3848 = vmatpush1.bf16.msra.mxu0 %v2962
  %3849 = vmatprep.subr.bf16.mxu0 0
  %3850 = vmatpush1.bf16.msra.mxu0 %v2961
  %3851 = vmatprep.subr.bf16.mxu0 0
  %3852 = vmatpush1.bf16.msra.mxu0 %v2960
  %3853 = vmatprep.subr.bf16.mxu0 0
  %3854 = vmatpush1.bf16.msra.mxu0 %v2959
  %3855 = vmatprep.subr.bf16.mxu0 0
  %3856 = vmatpush1.bf16.msra.mxu0 %v2958
  %3857 = vmatprep.subr.bf16.mxu0 0
  %3858 = vmatpush1.bf16.msra.mxu0 %v2957
  %3859 = vmatprep.subr.bf16.mxu0 0
  %3860 = vmatpush1.bf16.msra.mxu0 %v2956
  %3861 = vmatprep.subr.bf16.mxu0 0
  %3862 = vmatpush2.bf16.msra.mxu0 %v2971
  %3863 = vmatprep.subr.bf16.mxu0 0
  %3864 = vmatpush2.bf16.msra.mxu0 %v2970
  %3865 = vmatprep.subr.bf16.mxu0 0
  %3866 = vmatpush2.bf16.msra.mxu0 %v2969
  %3867 = vmatprep.subr.bf16.mxu0 0
  %3868 = vmatpush2.bf16.msra.mxu0 %v2968
  %3869 = vmatprep.subr.bf16.mxu0 0
  %3870 = vmatpush2.bf16.msra.mxu0 %v2967
  %3871 = vmatprep.subr.bf16.mxu0 0
  %3872 = vmatpush2.bf16.msra.mxu0 %v2966
  %3873 = vmatprep.subr.bf16.mxu0 0
  %3874 = vmatpush2.bf16.msra.mxu0 %v2965
  %3875 = vmatprep.subr.bf16.mxu0 0
  %3876 = vmatpush2.bf16.msra.mxu0 %v2964
  %3877 = vmatprep.mubr.bf16.mxu0 %v1107
  %3878 = vmatmul.mubr.bf16.gmra.mxu0 %v1106
  %v3879 = vpop.f32.mrf.mxu0
  %v3880 = vadd.f32 %v3839, %v3879
  %v3881 = vpop.f32.mrf.mxu0
  %v3882 = vpop.f32.mrf.mxu0
  %v3883 = vadd.f32 %v3842, %v3882
  %v3884 = vpop.f32.mrf.mxu0
  %3885 = vdwg.mxu0
  %3886 = vmatprep.subr.bf16.mxu0 0
  %3887 = vmatpush1.bf16.msra.mxu0 %v2979
  %3888 = vmatprep.subr.bf16.mxu0 0
  %3889 = vmatpush1.bf16.msra.mxu0 %v2978
  %3890 = vmatprep.subr.bf16.mxu0 0
  %3891 = vmatpush1.bf16.msra.mxu0 %v2977
  %3892 = vmatprep.subr.bf16.mxu0 0
  %3893 = vmatpush1.bf16.msra.mxu0 %v2976
  %3894 = vmatprep.subr.bf16.mxu0 0
  %3895 = vmatpush1.bf16.msra.mxu0 %v2975
  %3896 = vmatprep.subr.bf16.mxu0 0
  %3897 = vmatpush1.bf16.msra.mxu0 %v2974
  %3898 = vmatprep.subr.bf16.mxu0 0
  %3899 = vmatpush1.bf16.msra.mxu0 %v2973
  %3900 = vmatprep.subr.bf16.mxu0 0
  %3901 = vmatpush1.bf16.msra.mxu0 %v2972
  %3902 = vmatprep.subr.bf16.mxu0 0
  %3903 = vmatpush2.bf16.msra.mxu0 %v2987
  %3904 = vmatprep.subr.bf16.mxu0 0
  %3905 = vmatpush2.bf16.msra.mxu0 %v2986
  %3906 = vmatprep.subr.bf16.mxu0 0
  %3907 = vmatpush2.bf16.msra.mxu0 %v2985
  %3908 = vmatprep.subr.bf16.mxu0 0
  %3909 = vmatpush2.bf16.msra.mxu0 %v2984
  %3910 = vmatprep.subr.bf16.mxu0 0
  %3911 = vmatpush2.bf16.msra.mxu0 %v2983
  %3912 = vmatprep.subr.bf16.mxu0 0
  %3913 = vmatpush2.bf16.msra.mxu0 %v2982
  %3914 = vmatprep.subr.bf16.mxu0 0
  %3915 = vmatpush2.bf16.msra.mxu0 %v2981
  %3916 = vmatprep.subr.bf16.mxu0 0
  %3917 = vmatpush2.bf16.msra.mxu0 %v2980
  %3918 = vmatprep.mubr.bf16.mxu0 %v1109
  %3919 = vmatmul.mubr.bf16.gmra.mxu0 %v1108
  %v3920 = vpop.f32.mrf.mxu0
  %v3921 = vadd.f32 %v3880, %v3920
  %v3922 = vpop.f32.mrf.mxu0
  %v3923 = vpop.f32.mrf.mxu0
  %v3924 = vadd.f32 %v3883, %v3923
  %v3925 = vpop.f32.mrf.mxu0
  %3926 = vdwg.mxu0
  %3927 = vmatprep.subr.bf16.mxu0 0
  %3928 = vmatpush1.bf16.msra.mxu0 %v2995
  %3929 = vmatprep.subr.bf16.mxu0 0
  %3930 = vmatpush1.bf16.msra.mxu0 %v2994
  %3931 = vmatprep.subr.bf16.mxu0 0
  %3932 = vmatpush1.bf16.msra.mxu0 %v2993
  %3933 = vmatprep.subr.bf16.mxu0 0
  %3934 = vmatpush1.bf16.msra.mxu0 %v2992
  %3935 = vmatprep.subr.bf16.mxu0 0
  %3936 = vmatpush1.bf16.msra.mxu0 %v2991
  %3937 = vmatprep.subr.bf16.mxu0 0
  %3938 = vmatpush1.bf16.msra.mxu0 %v2990
  %3939 = vmatprep.subr.bf16.mxu0 0
  %3940 = vmatpush1.bf16.msra.mxu0 %v2989
  %3941 = vmatprep.subr.bf16.mxu0 0
  %3942 = vmatpush1.bf16.msra.mxu0 %v2988
  %3943 = vmatprep.subr.bf16.mxu0 0
  %3944 = vmatpush2.bf16.msra.mxu0 %v3003
  %3945 = vmatprep.subr.bf16.mxu0 0
  %3946 = vmatpush2.bf16.msra.mxu0 %v3002
  %3947 = vmatprep.subr.bf16.mxu0 0
  %3948 = vmatpush2.bf16.msra.mxu0 %v3001
  %3949 = vmatprep.subr.bf16.mxu0 0
  %3950 = vmatpush2.bf16.msra.mxu0 %v3000
  %3951 = vmatprep.subr.bf16.mxu0 0
  %3952 = vmatpush2.bf16.msra.mxu0 %v2999
  %3953 = vmatprep.subr.bf16.mxu0 0
  %3954 = vmatpush2.bf16.msra.mxu0 %v2998
  %3955 = vmatprep.subr.bf16.mxu0 0
  %3956 = vmatpush2.bf16.msra.mxu0 %v2997
  %3957 = vmatprep.subr.bf16.mxu0 0
  %3958 = vmatpush2.bf16.msra.mxu0 %v2996
  %3959 = vmatprep.mubr.bf16.mxu0 %v1111
  %3960 = vmatmul.mubr.bf16.gmra.mxu0 %v1110
  %v3961 = vpop.f32.mrf.mxu0
  %v3962 = vadd.f32 %v3921, %v3961
  %v3963 = vpop.f32.mrf.mxu0
  %v3964 = vpop.f32.mrf.mxu0
  %v3965 = vadd.f32 %v3924, %v3964
  %v3966 = vpop.f32.mrf.mxu0
  %3967 = vdwg.mxu0
  %3968 = vmatprep.subr.bf16.mxu0 0
  %3969 = vmatpush1.bf16.msra.mxu0 %v3011
  %3970 = vmatprep.subr.bf16.mxu0 0
  %3971 = vmatpush1.bf16.msra.mxu0 %v3010
  %3972 = vmatprep.subr.bf16.mxu0 0
  %3973 = vmatpush1.bf16.msra.mxu0 %v3009
  %3974 = vmatprep.subr.bf16.mxu0 0
  %3975 = vmatpush1.bf16.msra.mxu0 %v3008
  %3976 = vmatprep.subr.bf16.mxu0 0
  %3977 = vmatpush1.bf16.msra.mxu0 %v3007
  %3978 = vmatprep.subr.bf16.mxu0 0
  %3979 = vmatpush1.bf16.msra.mxu0 %v3006
  %3980 = vmatprep.subr.bf16.mxu0 0
  %3981 = vmatpush1.bf16.msra.mxu0 %v3005
  %3982 = vmatprep.subr.bf16.mxu0 0
  %3983 = vmatpush1.bf16.msra.mxu0 %v3004
  %3984 = vmatprep.subr.bf16.mxu0 0
  %3985 = vmatpush2.bf16.msra.mxu0 %v3019
  %3986 = vmatprep.subr.bf16.mxu0 0
  %3987 = vmatpush2.bf16.msra.mxu0 %v3018
  %3988 = vmatprep.subr.bf16.mxu0 0
  %3989 = vmatpush2.bf16.msra.mxu0 %v3017
  %3990 = vmatprep.subr.bf16.mxu0 0
  %3991 = vmatpush2.bf16.msra.mxu0 %v3016
  %3992 = vmatprep.subr.bf16.mxu0 0
  %3993 = vmatpush2.bf16.msra.mxu0 %v3015
  %3994 = vmatprep.subr.bf16.mxu0 0
  %3995 = vmatpush2.bf16.msra.mxu0 %v3014
  %3996 = vmatprep.subr.bf16.mxu0 0
  %3997 = vmatpush2.bf16.msra.mxu0 %v3013
  %3998 = vmatprep.subr.bf16.mxu0 0
  %3999 = vmatpush2.bf16.msra.mxu0 %v3012
  %4000 = vmatprep.mubr.bf16.mxu0 %v1113
  %4001 = vmatmul.mubr.bf16.gmra.mxu0 %v1112
  %v4002 = vpop.f32.mrf.mxu0
  %v4003 = vadd.f32 %v3962, %v4002
  %v4004 = vpop.f32.mrf.mxu0
  %v4005 = vpop.f32.mrf.mxu0
  %v4006 = vadd.f32 %v3965, %v4005
  %v4007 = vpop.f32.mrf.mxu0
  %4008 = vdwg.mxu0
  %4009 = vmatprep.subr.bf16.mxu0 0
  %4010 = vmatpush1.bf16.msra.mxu0 %v3027
  %4011 = vmatprep.subr.bf16.mxu0 0
  %4012 = vmatpush1.bf16.msra.mxu0 %v3026
  %4013 = vmatprep.subr.bf16.mxu0 0
  %4014 = vmatpush1.bf16.msra.mxu0 %v3025
  %4015 = vmatprep.subr.bf16.mxu0 0
  %4016 = vmatpush1.bf16.msra.mxu0 %v3024
  %4017 = vmatprep.subr.bf16.mxu0 0
  %4018 = vmatpush1.bf16.msra.mxu0 %v3023
  %4019 = vmatprep.subr.bf16.mxu0 0
  %4020 = vmatpush1.bf16.msra.mxu0 %v3022
  %4021 = vmatprep.subr.bf16.mxu0 0
  %4022 = vmatpush1.bf16.msra.mxu0 %v3021
  %4023 = vmatprep.subr.bf16.mxu0 0
  %4024 = vmatpush1.bf16.msra.mxu0 %v3020
  %4025 = vmatprep.subr.bf16.mxu0 0
  %4026 = vmatpush2.bf16.msra.mxu0 %v3035
  %4027 = vmatprep.subr.bf16.mxu0 0
  %4028 = vmatpush2.bf16.msra.mxu0 %v3034
  %4029 = vmatprep.subr.bf16.mxu0 0
  %4030 = vmatpush2.bf16.msra.mxu0 %v3033
  %4031 = vmatprep.subr.bf16.mxu0 0
  %4032 = vmatpush2.bf16.msra.mxu0 %v3032
  %4033 = vmatprep.subr.bf16.mxu0 0
  %4034 = vmatpush2.bf16.msra.mxu0 %v3031
  %4035 = vmatprep.subr.bf16.mxu0 0
  %4036 = vmatpush2.bf16.msra.mxu0 %v3030
  %4037 = vmatprep.subr.bf16.mxu0 0
  %4038 = vmatpush2.bf16.msra.mxu0 %v3029
  %4039 = vmatprep.subr.bf16.mxu0 0
  %4040 = vmatpush2.bf16.msra.mxu0 %v3028
  %4041 = vmatprep.mubr.bf16.mxu0 %v1115
  %4042 = vmatmul.mubr.bf16.gmra.mxu0 %v1114
  %v4043 = vpop.f32.mrf.mxu0
  %v4044 = vadd.f32 %v4003, %v4043
  %v4045 = vpop.f32.mrf.mxu0
  %v4046 = vpop.f32.mrf.mxu0
  %v4047 = vadd.f32 %v4006, %v4046
  %v4048 = vpop.f32.mrf.mxu0
  %4049 = vdwg.mxu0
  %4050 = vmatprep.subr.bf16.mxu0 0
  %4051 = vmatpush1.bf16.msra.mxu0 %v3043
  %4052 = vmatprep.subr.bf16.mxu0 0
  %4053 = vmatpush1.bf16.msra.mxu0 %v3042
  %4054 = vmatprep.subr.bf16.mxu0 0
  %4055 = vmatpush1.bf16.msra.mxu0 %v3041
  %4056 = vmatprep.subr.bf16.mxu0 0
  %4057 = vmatpush1.bf16.msra.mxu0 %v3040
  %4058 = vmatprep.subr.bf16.mxu0 0
  %4059 = vmatpush1.bf16.msra.mxu0 %v3039
  %4060 = vmatprep.subr.bf16.mxu0 0
  %4061 = vmatpush1.bf16.msra.mxu0 %v3038
  %4062 = vmatprep.subr.bf16.mxu0 0
  %4063 = vmatpush1.bf16.msra.mxu0 %v3037
  %4064 = vmatprep.subr.bf16.mxu0 0
  %4065 = vmatpush1.bf16.msra.mxu0 %v3036
  %4066 = vmatprep.subr.bf16.mxu0 0
  %4067 = vmatpush2.bf16.msra.mxu0 %v3051
  %4068 = vmatprep.subr.bf16.mxu0 0
  %4069 = vmatpush2.bf16.msra.mxu0 %v3050
  %4070 = vmatprep.subr.bf16.mxu0 0
  %4071 = vmatpush2.bf16.msra.mxu0 %v3049
  %4072 = vmatprep.subr.bf16.mxu0 0
  %4073 = vmatpush2.bf16.msra.mxu0 %v3048
  %4074 = vmatprep.subr.bf16.mxu0 0
  %4075 = vmatpush2.bf16.msra.mxu0 %v3047
  %4076 = vmatprep.subr.bf16.mxu0 0
  %4077 = vmatpush2.bf16.msra.mxu0 %v3046
  %4078 = vmatprep.subr.bf16.mxu0 0
  %4079 = vmatpush2.bf16.msra.mxu0 %v3045
  %4080 = vmatprep.subr.bf16.mxu0 0
  %4081 = vmatpush2.bf16.msra.mxu0 %v3044
  %4082 = vmatprep.mubr.bf16.mxu0 %v1117
  %4083 = vmatmul.mubr.bf16.gmra.mxu0 %v1116
  %v4084 = vpop.f32.mrf.mxu0
  %v4085 = vadd.f32 %v4044, %v4084
  %v4086 = vpop.f32.mrf.mxu0
  %v4087 = vpop.f32.mrf.mxu0
  %v4088 = vadd.f32 %v4047, %v4087
  %v4089 = vpop.f32.mrf.mxu0
  %4090 = vdwg.mxu0
  %4091 = vmatprep.subr.bf16.mxu0 0
  %4092 = vmatpush1.bf16.msra.mxu0 %v3059
  %4093 = vmatprep.subr.bf16.mxu0 0
  %4094 = vmatpush1.bf16.msra.mxu0 %v3058
  %4095 = vmatprep.subr.bf16.mxu0 0
  %4096 = vmatpush1.bf16.msra.mxu0 %v3057
  %4097 = vmatprep.subr.bf16.mxu0 0
  %4098 = vmatpush1.bf16.msra.mxu0 %v3056
  %4099 = vmatprep.subr.bf16.mxu0 0
  %4100 = vmatpush1.bf16.msra.mxu0 %v3055
  %4101 = vmatprep.subr.bf16.mxu0 0
  %4102 = vmatpush1.bf16.msra.mxu0 %v3054
  %4103 = vmatprep.subr.bf16.mxu0 0
  %4104 = vmatpush1.bf16.msra.mxu0 %v3053
  %4105 = vmatprep.subr.bf16.mxu0 0
  %4106 = vmatpush1.bf16.msra.mxu0 %v3052
  %4107 = vmatprep.subr.bf16.mxu0 0
  %4108 = vmatpush2.bf16.msra.mxu0 %v3067
  %4109 = vmatprep.subr.bf16.mxu0 0
  %4110 = vmatpush2.bf16.msra.mxu0 %v3066
  %4111 = vmatprep.subr.bf16.mxu0 0
  %4112 = vmatpush2.bf16.msra.mxu0 %v3065
  %4113 = vmatprep.subr.bf16.mxu0 0
  %4114 = vmatpush2.bf16.msra.mxu0 %v3064
  %4115 = vmatprep.subr.bf16.mxu0 0
  %4116 = vmatpush2.bf16.msra.mxu0 %v3063
  %4117 = vmatprep.subr.bf16.mxu0 0
  %4118 = vmatpush2.bf16.msra.mxu0 %v3062
  %4119 = vmatprep.subr.bf16.mxu0 0
  %4120 = vmatpush2.bf16.msra.mxu0 %v3061
  %4121 = vmatprep.subr.bf16.mxu0 0
  %4122 = vmatpush2.bf16.msra.mxu0 %v3060
  %4123 = vmatprep.mubr.bf16.mxu0 %v1119
  %4124 = vmatmul.mubr.bf16.gmra.mxu0 %v1118
  %v4125 = vpop.f32.mrf.mxu0
  %v4126 = vadd.f32 %v4085, %v4125
  %v4127 = vpop.f32.mrf.mxu0
  %v4128 = vpop.f32.mrf.mxu0
  %v4129 = vadd.f32 %v4088, %v4128
  %v4130 = vpop.f32.mrf.mxu0
  %4131 = vdwg.mxu0
  %4132 = vmatprep.subr.bf16.mxu0 0
  %4133 = vmatpush1.bf16.msra.mxu0 %v3075
  %4134 = vmatprep.subr.bf16.mxu0 0
  %4135 = vmatpush1.bf16.msra.mxu0 %v3074
  %4136 = vmatprep.subr.bf16.mxu0 0
  %4137 = vmatpush1.bf16.msra.mxu0 %v3073
  %4138 = vmatprep.subr.bf16.mxu0 0
  %4139 = vmatpush1.bf16.msra.mxu0 %v3072
  %4140 = vmatprep.subr.bf16.mxu0 0
  %4141 = vmatpush1.bf16.msra.mxu0 %v3071
  %4142 = vmatprep.subr.bf16.mxu0 0
  %4143 = vmatpush1.bf16.msra.mxu0 %v3070
  %4144 = vmatprep.subr.bf16.mxu0 0
  %4145 = vmatpush1.bf16.msra.mxu0 %v3069
  %4146 = vmatprep.subr.bf16.mxu0 0
  %4147 = vmatpush1.bf16.msra.mxu0 %v3068
  %4148 = vmatprep.subr.bf16.mxu0 0
  %4149 = vmatpush2.bf16.msra.mxu0 %v3083
  %4150 = vmatprep.subr.bf16.mxu0 0
  %4151 = vmatpush2.bf16.msra.mxu0 %v3082
  %4152 = vmatprep.subr.bf16.mxu0 0
  %4153 = vmatpush2.bf16.msra.mxu0 %v3081
  %4154 = vmatprep.subr.bf16.mxu0 0
  %4155 = vmatpush2.bf16.msra.mxu0 %v3080
  %4156 = vmatprep.subr.bf16.mxu0 0
  %4157 = vmatpush2.bf16.msra.mxu0 %v3079
  %4158 = vmatprep.subr.bf16.mxu0 0
  %4159 = vmatpush2.bf16.msra.mxu0 %v3078
  %4160 = vmatprep.subr.bf16.mxu0 0
  %4161 = vmatpush2.bf16.msra.mxu0 %v3077
  %4162 = vmatprep.subr.bf16.mxu0 0
  %4163 = vmatpush2.bf16.msra.mxu0 %v3076
  %4164 = vmatprep.mubr.bf16.mxu0 %v1121
  %4165 = vmatmul.mubr.bf16.gmra.mxu0 %v1120
  %v4166 = vpop.f32.mrf.mxu0
  %v4167 = vadd.f32 %v4126, %v4166
  %v4168 = vpop.f32.mrf.mxu0
  %v4169 = vpop.f32.mrf.mxu0
  %v4170 = vadd.f32 %v4129, %v4169
  %v4171 = vpop.f32.mrf.mxu0
  %4172 = vdwg.mxu0
  %4173 = vmatprep.subr.bf16.mxu0 0
  %4174 = vmatpush1.bf16.msra.mxu0 %v3091
  %4175 = vmatprep.subr.bf16.mxu0 0
  %4176 = vmatpush1.bf16.msra.mxu0 %v3090
  %4177 = vmatprep.subr.bf16.mxu0 0
  %4178 = vmatpush1.bf16.msra.mxu0 %v3089
  %4179 = vmatprep.subr.bf16.mxu0 0
  %4180 = vmatpush1.bf16.msra.mxu0 %v3088
  %4181 = vmatprep.subr.bf16.mxu0 0
  %4182 = vmatpush1.bf16.msra.mxu0 %v3087
  %4183 = vmatprep.subr.bf16.mxu0 0
  %4184 = vmatpush1.bf16.msra.mxu0 %v3086
  %4185 = vmatprep.subr.bf16.mxu0 0
  %4186 = vmatpush1.bf16.msra.mxu0 %v3085
  %4187 = vmatprep.subr.bf16.mxu0 0
  %4188 = vmatpush1.bf16.msra.mxu0 %v3084
  %4189 = vmatprep.subr.bf16.mxu0 0
  %4190 = vmatpush2.bf16.msra.mxu0 %v3099
  %4191 = vmatprep.subr.bf16.mxu0 0
  %4192 = vmatpush2.bf16.msra.mxu0 %v3098
  %4193 = vmatprep.subr.bf16.mxu0 0
  %4194 = vmatpush2.bf16.msra.mxu0 %v3097
  %4195 = vmatprep.subr.bf16.mxu0 0
  %4196 = vmatpush2.bf16.msra.mxu0 %v3096
  %4197 = vmatprep.subr.bf16.mxu0 0
  %4198 = vmatpush2.bf16.msra.mxu0 %v3095
  %4199 = vmatprep.subr.bf16.mxu0 0
  %4200 = vmatpush2.bf16.msra.mxu0 %v3094
  %4201 = vmatprep.subr.bf16.mxu0 0
  %4202 = vmatpush2.bf16.msra.mxu0 %v3093
  %4203 = vmatprep.subr.bf16.mxu0 0
  %4204 = vmatpush2.bf16.msra.mxu0 %v3092
  %4205 = vmatprep.mubr.bf16.mxu0 %v1123
  %4206 = vmatmul.mubr.bf16.gmra.mxu0 %v1122
  %v4207 = vpop.f32.mrf.mxu0
  %v4208 = vadd.f32 %v4167, %v4207
  %v4209 = vpop.f32.mrf.mxu0
  %v4210 = vpop.f32.mrf.mxu0
  %v4211 = vadd.f32 %v4170, %v4210
  %v4212 = vpop.f32.mrf.mxu0
  %4213 = vdwg.mxu0
  %4214 = vmatprep.subr.bf16.mxu0 0
  %4215 = vmatpush1.bf16.msra.mxu0 %v3107
  %4216 = vmatprep.subr.bf16.mxu0 0
  %4217 = vmatpush1.bf16.msra.mxu0 %v3106
  %4218 = vmatprep.subr.bf16.mxu0 0
  %4219 = vmatpush1.bf16.msra.mxu0 %v3105
  %4220 = vmatprep.subr.bf16.mxu0 0
  %4221 = vmatpush1.bf16.msra.mxu0 %v3104
  %4222 = vmatprep.subr.bf16.mxu0 0
  %4223 = vmatpush1.bf16.msra.mxu0 %v3103
  %4224 = vmatprep.subr.bf16.mxu0 0
  %4225 = vmatpush1.bf16.msra.mxu0 %v3102
  %4226 = vmatprep.subr.bf16.mxu0 0
  %4227 = vmatpush1.bf16.msra.mxu0 %v3101
  %4228 = vmatprep.subr.bf16.mxu0 0
  %4229 = vmatpush1.bf16.msra.mxu0 %v3100
  %4230 = vmatprep.subr.bf16.mxu0 0
  %4231 = vmatpush2.bf16.msra.mxu0 %v3115
  %4232 = vmatprep.subr.bf16.mxu0 0
  %4233 = vmatpush2.bf16.msra.mxu0 %v3114
  %4234 = vmatprep.subr.bf16.mxu0 0
  %4235 = vmatpush2.bf16.msra.mxu0 %v3113
  %4236 = vmatprep.subr.bf16.mxu0 0
  %4237 = vmatpush2.bf16.msra.mxu0 %v3112
  %4238 = vmatprep.subr.bf16.mxu0 0
  %4239 = vmatpush2.bf16.msra.mxu0 %v3111
  %4240 = vmatprep.subr.bf16.mxu0 0
  %4241 = vmatpush2.bf16.msra.mxu0 %v3110
  %4242 = vmatprep.subr.bf16.mxu0 0
  %4243 = vmatpush2.bf16.msra.mxu0 %v3109
  %4244 = vmatprep.subr.bf16.mxu0 0
  %4245 = vmatpush2.bf16.msra.mxu0 %v3108
  %4246 = vmatprep.mubr.bf16.mxu0 %v1125
  %4247 = vmatmul.mubr.bf16.gmra.mxu0 %v1124
  %v4248 = vpop.f32.mrf.mxu0
  %v4249 = vadd.f32 %v4208, %v4248
  %v4250 = vpop.f32.mrf.mxu0
  %v4251 = vpop.f32.mrf.mxu0
  %v4252 = vadd.f32 %v4211, %v4251
  %v4253 = vpop.f32.mrf.mxu0
  %4254 = vdwg.mxu0
  %4255 = vmatprep.subr.bf16.mxu0 0
  %4256 = vmatpush1.bf16.msra.mxu0 %v3123
  %4257 = vmatprep.subr.bf16.mxu0 0
  %4258 = vmatpush1.bf16.msra.mxu0 %v3122
  %4259 = vmatprep.subr.bf16.mxu0 0
  %4260 = vmatpush1.bf16.msra.mxu0 %v3121
  %4261 = vmatprep.subr.bf16.mxu0 0
  %4262 = vmatpush1.bf16.msra.mxu0 %v3120
  %4263 = vmatprep.subr.bf16.mxu0 0
  %4264 = vmatpush1.bf16.msra.mxu0 %v3119
  %4265 = vmatprep.subr.bf16.mxu0 0
  %4266 = vmatpush1.bf16.msra.mxu0 %v3118
  %4267 = vmatprep.subr.bf16.mxu0 0
  %4268 = vmatpush1.bf16.msra.mxu0 %v3117
  %4269 = vmatprep.subr.bf16.mxu0 0
  %4270 = vmatpush1.bf16.msra.mxu0 %v3116
  %4271 = vmatprep.subr.bf16.mxu0 0
  %4272 = vmatpush2.bf16.msra.mxu0 %v3131
  %4273 = vmatprep.subr.bf16.mxu0 0
  %4274 = vmatpush2.bf16.msra.mxu0 %v3130
  %4275 = vmatprep.subr.bf16.mxu0 0
  %4276 = vmatpush2.bf16.msra.mxu0 %v3129
  %4277 = vmatprep.subr.bf16.mxu0 0
  %4278 = vmatpush2.bf16.msra.mxu0 %v3128
  %4279 = vmatprep.subr.bf16.mxu0 0
  %4280 = vmatpush2.bf16.msra.mxu0 %v3127
  %4281 = vmatprep.subr.bf16.mxu0 0
  %4282 = vmatpush2.bf16.msra.mxu0 %v3126
  %4283 = vmatprep.subr.bf16.mxu0 0
  %4284 = vmatpush2.bf16.msra.mxu0 %v3125
  %4285 = vmatprep.subr.bf16.mxu0 0
  %4286 = vmatpush2.bf16.msra.mxu0 %v3124
  %4287 = vmatprep.mubr.bf16.mxu0 %v1127
  %4288 = vmatmul.mubr.bf16.gmra.mxu0 %v1126
  %v4289 = vpop.f32.mrf.mxu0
  %v4290 = vadd.f32 %v4249, %v4289
  %v4291 = vpop.f32.mrf.mxu0
  %v4292 = vpop.f32.mrf.mxu0
  %v4293 = vadd.f32 %v4252, %v4292
  %v4294 = vpop.f32.mrf.mxu0
  %4295 = vdwg.mxu0
  %4296 = vmatprep.subr.bf16.mxu0 0
  %4297 = vmatpush1.bf16.msra.mxu0 %v3139
  %4298 = vmatprep.subr.bf16.mxu0 0
  %4299 = vmatpush1.bf16.msra.mxu0 %v3138
  %4300 = vmatprep.subr.bf16.mxu0 0
  %4301 = vmatpush1.bf16.msra.mxu0 %v3137
  %4302 = vmatprep.subr.bf16.mxu0 0
  %4303 = vmatpush1.bf16.msra.mxu0 %v3136
  %4304 = vmatprep.subr.bf16.mxu0 0
  %4305 = vmatpush1.bf16.msra.mxu0 %v3135
  %4306 = vmatprep.subr.bf16.mxu0 0
  %4307 = vmatpush1.bf16.msra.mxu0 %v3134
  %4308 = vmatprep.subr.bf16.mxu0 0
  %4309 = vmatpush1.bf16.msra.mxu0 %v3133
  %4310 = vmatprep.subr.bf16.mxu0 0
  %4311 = vmatpush1.bf16.msra.mxu0 %v3132
  %4312 = vmatprep.subr.bf16.mxu0 0
  %4313 = vmatpush2.bf16.msra.mxu0 %v3147
  %4314 = vmatprep.subr.bf16.mxu0 0
  %4315 = vmatpush2.bf16.msra.mxu0 %v3146
  %4316 = vmatprep.subr.bf16.mxu0 0
  %4317 = vmatpush2.bf16.msra.mxu0 %v3145
  %4318 = vmatprep.subr.bf16.mxu0 0
  %4319 = vmatpush2.bf16.msra.mxu0 %v3144
  %4320 = vmatprep.subr.bf16.mxu0 0
  %4321 = vmatpush2.bf16.msra.mxu0 %v3143
  %4322 = vmatprep.subr.bf16.mxu0 0
  %4323 = vmatpush2.bf16.msra.mxu0 %v3142
  %4324 = vmatprep.subr.bf16.mxu0 0
  %4325 = vmatpush2.bf16.msra.mxu0 %v3141
  %4326 = vmatprep.subr.bf16.mxu0 0
  %4327 = vmatpush2.bf16.msra.mxu0 %v3140
  %4328 = vmatprep.mubr.bf16.mxu0 %v1129
  %4329 = vmatmul.mubr.bf16.gmra.mxu0 %v1128
  %v4330 = vpop.f32.mrf.mxu0
  %v4331 = vadd.f32 %v4290, %v4330
  %v4332 = vpop.f32.mrf.mxu0
  %v4333 = vpop.f32.mrf.mxu0
  %v4334 = vadd.f32 %v4293, %v4333
  %v4335 = vpop.f32.mrf.mxu0
  %4336 = vdwg.mxu0
  %4337 = vmatprep.subr.bf16.mxu0 0
  %4338 = vmatpush1.bf16.msra.mxu0 %v3155
  %4339 = vmatprep.subr.bf16.mxu0 0
  %4340 = vmatpush1.bf16.msra.mxu0 %v3154
  %4341 = vmatprep.subr.bf16.mxu0 0
  %4342 = vmatpush1.bf16.msra.mxu0 %v3153
  %4343 = vmatprep.subr.bf16.mxu0 0
  %4344 = vmatpush1.bf16.msra.mxu0 %v3152
  %4345 = vmatprep.subr.bf16.mxu0 0
  %4346 = vmatpush1.bf16.msra.mxu0 %v3151
  %4347 = vmatprep.subr.bf16.mxu0 0
  %4348 = vmatpush1.bf16.msra.mxu0 %v3150
  %4349 = vmatprep.subr.bf16.mxu0 0
  %4350 = vmatpush1.bf16.msra.mxu0 %v3149
  %4351 = vmatprep.subr.bf16.mxu0 0
  %4352 = vmatpush1.bf16.msra.mxu0 %v3148
  %4353 = vmatprep.subr.bf16.mxu0 0
  %4354 = vmatpush2.bf16.msra.mxu0 %v3163
  %4355 = vmatprep.subr.bf16.mxu0 0
  %4356 = vmatpush2.bf16.msra.mxu0 %v3162
  %4357 = vmatprep.subr.bf16.mxu0 0
  %4358 = vmatpush2.bf16.msra.mxu0 %v3161
  %4359 = vmatprep.subr.bf16.mxu0 0
  %4360 = vmatpush2.bf16.msra.mxu0 %v3160
  %4361 = vmatprep.subr.bf16.mxu0 0
  %4362 = vmatpush2.bf16.msra.mxu0 %v3159
  %4363 = vmatprep.subr.bf16.mxu0 0
  %4364 = vmatpush2.bf16.msra.mxu0 %v3158
  %4365 = vmatprep.subr.bf16.mxu0 0
  %4366 = vmatpush2.bf16.msra.mxu0 %v3157
  %4367 = vmatprep.subr.bf16.mxu0 0
  %4368 = vmatpush2.bf16.msra.mxu0 %v3156
  %4369 = vmatprep.mubr.bf16.mxu0 %v1131
  %4370 = vmatmul.mubr.bf16.gmra.mxu0 %v1130
  %v4371 = vpop.f32.mrf.mxu0
  %v4372 = vadd.f32 %v4331, %v4371
  %v4373 = vpop.f32.mrf.mxu0
  %v4374 = vpop.f32.mrf.mxu0
  %v4375 = vadd.f32 %v4334, %v4374
  %v4376 = vpop.f32.mrf.mxu0
  %4377 = vdwg.mxu0
  %4378 = vmatprep.subr.bf16.mxu0 0
  %4379 = vmatpush1.bf16.msra.mxu0 %v3171
  %4380 = vmatprep.subr.bf16.mxu0 0
  %4381 = vmatpush1.bf16.msra.mxu0 %v3170
  %4382 = vmatprep.subr.bf16.mxu0 0
  %4383 = vmatpush1.bf16.msra.mxu0 %v3169
  %4384 = vmatprep.subr.bf16.mxu0 0
  %4385 = vmatpush1.bf16.msra.mxu0 %v3168
  %4386 = vmatprep.subr.bf16.mxu0 0
  %4387 = vmatpush1.bf16.msra.mxu0 %v3167
  %4388 = vmatprep.subr.bf16.mxu0 0
  %4389 = vmatpush1.bf16.msra.mxu0 %v3166
  %4390 = vmatprep.subr.bf16.mxu0 0
  %4391 = vmatpush1.bf16.msra.mxu0 %v3165
  %4392 = vmatprep.subr.bf16.mxu0 0
  %4393 = vmatpush1.bf16.msra.mxu0 %v3164
  %4394 = vmatprep.subr.bf16.mxu0 0
  %4395 = vmatpush2.bf16.msra.mxu0 %v3179
  %4396 = vmatprep.subr.bf16.mxu0 0
  %4397 = vmatpush2.bf16.msra.mxu0 %v3178
  %4398 = vmatprep.subr.bf16.mxu0 0
  %4399 = vmatpush2.bf16.msra.mxu0 %v3177
  %4400 = vmatprep.subr.bf16.mxu0 0
  %4401 = vmatpush2.bf16.msra.mxu0 %v3176
  %4402 = vmatprep.subr.bf16.mxu0 0
  %4403 = vmatpush2.bf16.msra.mxu0 %v3175
  %4404 = vmatprep.subr.bf16.mxu0 0
  %4405 = vmatpush2.bf16.msra.mxu0 %v3174
  %4406 = vmatprep.subr.bf16.mxu0 0
  %4407 = vmatpush2.bf16.msra.mxu0 %v3173
  %4408 = vmatprep.subr.bf16.mxu0 0
  %4409 = vmatpush2.bf16.msra.mxu0 %v3172
  %4410 = vmatprep.mubr.bf16.mxu0 %v1133
  %4411 = vmatmul.mubr.bf16.gmra.mxu0 %v1132
  %v4412 = vpop.f32.mrf.mxu0
  %v4413 = vadd.f32 %v4372, %v4412
  %v4414 = vpop.f32.mrf.mxu0
  %v4415 = vpop.f32.mrf.mxu0
  %v4416 = vadd.f32 %v4375, %v4415
  %v4417 = vpop.f32.mrf.mxu0
  %4418 = vdwg.mxu0
  %4419 = vmatprep.subr.bf16.mxu0 0
  %4420 = vmatpush1.bf16.msra.mxu0 %v3187
  %4421 = vmatprep.subr.bf16.mxu0 0
  %4422 = vmatpush1.bf16.msra.mxu0 %v3186
  %4423 = vmatprep.subr.bf16.mxu0 0
  %4424 = vmatpush1.bf16.msra.mxu0 %v3185
  %4425 = vmatprep.subr.bf16.mxu0 0
  %4426 = vmatpush1.bf16.msra.mxu0 %v3184
  %4427 = vmatprep.subr.bf16.mxu0 0
  %4428 = vmatpush1.bf16.msra.mxu0 %v3183
  %4429 = vmatprep.subr.bf16.mxu0 0
  %4430 = vmatpush1.bf16.msra.mxu0 %v3182
  %4431 = vmatprep.subr.bf16.mxu0 0
  %4432 = vmatpush1.bf16.msra.mxu0 %v3181
  %4433 = vmatprep.subr.bf16.mxu0 0
  %4434 = vmatpush1.bf16.msra.mxu0 %v3180
  %4435 = vmatprep.subr.bf16.mxu0 0
  %4436 = vmatpush2.bf16.msra.mxu0 %v3195
  %4437 = vmatprep.subr.bf16.mxu0 0
  %4438 = vmatpush2.bf16.msra.mxu0 %v3194
  %4439 = vmatprep.subr.bf16.mxu0 0
  %4440 = vmatpush2.bf16.msra.mxu0 %v3193
  %4441 = vmatprep.subr.bf16.mxu0 0
  %4442 = vmatpush2.bf16.msra.mxu0 %v3192
  %4443 = vmatprep.subr.bf16.mxu0 0
  %4444 = vmatpush2.bf16.msra.mxu0 %v3191
  %4445 = vmatprep.subr.bf16.mxu0 0
  %4446 = vmatpush2.bf16.msra.mxu0 %v3190
  %4447 = vmatprep.subr.bf16.mxu0 0
  %4448 = vmatpush2.bf16.msra.mxu0 %v3189
  %4449 = vmatprep.subr.bf16.mxu0 0
  %4450 = vmatpush2.bf16.msra.mxu0 %v3188
  %4451 = vmatprep.mubr.bf16.mxu0 %v1135
  %4452 = vmatmul.mubr.bf16.gmra.mxu0 %v1134
  %v4453 = vpop.f32.mrf.mxu0
  %v4454 = vadd.f32 %v4413, %v4453
  %v4455 = vpop.f32.mrf.mxu0
  %v4456 = vpop.f32.mrf.mxu0
  %v4457 = vadd.f32 %v4416, %v4456
  %v4458 = vpop.f32.mrf.mxu0
  %4459 = vdwg.mxu0
  %4460 = vmatprep.subr.bf16.mxu0 0
  %4461 = vmatpush1.bf16.msra.mxu0 %v3203
  %4462 = vmatprep.subr.bf16.mxu0 0
  %4463 = vmatpush1.bf16.msra.mxu0 %v3202
  %4464 = vmatprep.subr.bf16.mxu0 0
  %4465 = vmatpush1.bf16.msra.mxu0 %v3201
  %4466 = vmatprep.subr.bf16.mxu0 0
  %4467 = vmatpush1.bf16.msra.mxu0 %v3200
  %4468 = vmatprep.subr.bf16.mxu0 0
  %4469 = vmatpush1.bf16.msra.mxu0 %v3199
  %4470 = vmatprep.subr.bf16.mxu0 0
  %4471 = vmatpush1.bf16.msra.mxu0 %v3198
  %4472 = vmatprep.subr.bf16.mxu0 0
  %4473 = vmatpush1.bf16.msra.mxu0 %v3197
  %4474 = vmatprep.subr.bf16.mxu0 0
  %4475 = vmatpush1.bf16.msra.mxu0 %v3196
  %4476 = vmatprep.subr.bf16.mxu0 0
  %4477 = vmatpush2.bf16.msra.mxu0 %v3211
  %4478 = vmatprep.subr.bf16.mxu0 0
  %4479 = vmatpush2.bf16.msra.mxu0 %v3210
  %4480 = vmatprep.subr.bf16.mxu0 0
  %4481 = vmatpush2.bf16.msra.mxu0 %v3209
  %4482 = vmatprep.subr.bf16.mxu0 0
  %4483 = vmatpush2.bf16.msra.mxu0 %v3208
  %4484 = vmatprep.subr.bf16.mxu0 0
  %4485 = vmatpush2.bf16.msra.mxu0 %v3207
  %4486 = vmatprep.subr.bf16.mxu0 0
  %4487 = vmatpush2.bf16.msra.mxu0 %v3206
  %4488 = vmatprep.subr.bf16.mxu0 0
  %4489 = vmatpush2.bf16.msra.mxu0 %v3205
  %4490 = vmatprep.subr.bf16.mxu0 0
  %4491 = vmatpush2.bf16.msra.mxu0 %v3204
  %4492 = vmatprep.mubr.bf16.mxu0 %v1137
  %4493 = vmatmul.mubr.bf16.gmra.mxu0 %v1136
  %v4494 = vpop.f32.mrf.mxu0
  %v4495 = vadd.f32 %v4454, %v4494
  %v4496 = vpop.f32.mrf.mxu0
  %v4497 = vpop.f32.mrf.mxu0
  %v4498 = vadd.f32 %v4457, %v4497
  %v4499 = vpop.f32.mrf.mxu0
  %4500 = vdwg.mxu0
  %4501 = vmatprep.subr.bf16.mxu0 0
  %4502 = vmatpush1.bf16.msra.mxu0 %v3219
  %4503 = vmatprep.subr.bf16.mxu0 0
  %4504 = vmatpush1.bf16.msra.mxu0 %v3218
  %4505 = vmatprep.subr.bf16.mxu0 0
  %4506 = vmatpush1.bf16.msra.mxu0 %v3217
  %4507 = vmatprep.subr.bf16.mxu0 0
  %4508 = vmatpush1.bf16.msra.mxu0 %v3216
  %4509 = vmatprep.subr.bf16.mxu0 0
  %4510 = vmatpush1.bf16.msra.mxu0 %v3215
  %4511 = vmatprep.subr.bf16.mxu0 0
  %4512 = vmatpush1.bf16.msra.mxu0 %v3214
  %4513 = vmatprep.subr.bf16.mxu0 0
  %4514 = vmatpush1.bf16.msra.mxu0 %v3213
  %4515 = vmatprep.subr.bf16.mxu0 0
  %4516 = vmatpush1.bf16.msra.mxu0 %v3212
  %4517 = vmatprep.subr.bf16.mxu0 0
  %4518 = vmatpush2.bf16.msra.mxu0 %v3227
  %4519 = vmatprep.subr.bf16.mxu0 0
  %4520 = vmatpush2.bf16.msra.mxu0 %v3226
  %4521 = vmatprep.subr.bf16.mxu0 0
  %4522 = vmatpush2.bf16.msra.mxu0 %v3225
  %4523 = vmatprep.subr.bf16.mxu0 0
  %4524 = vmatpush2.bf16.msra.mxu0 %v3224
  %4525 = vmatprep.subr.bf16.mxu0 0
  %4526 = vmatpush2.bf16.msra.mxu0 %v3223
  %4527 = vmatprep.subr.bf16.mxu0 0
  %4528 = vmatpush2.bf16.msra.mxu0 %v3222
  %4529 = vmatprep.subr.bf16.mxu0 0
  %4530 = vmatpush2.bf16.msra.mxu0 %v3221
  %4531 = vmatprep.subr.bf16.mxu0 0
  %4532 = vmatpush2.bf16.msra.mxu0 %v3220
  %4533 = vmatprep.mubr.bf16.mxu0 %v1139
  %4534 = vmatmul.mubr.bf16.gmra.mxu0 %v1138
  %v4535 = vpop.f32.mrf.mxu0
  %v4536 = vadd.f32 %v4495, %v4535
  %v4537 = vpop.f32.mrf.mxu0
  %v4538 = vpop.f32.mrf.mxu0
  %v4539 = vadd.f32 %v4498, %v4538
  %v4540 = vpop.f32.mrf.mxu0
  %4541 = vdwg.mxu0
  %4542 = vmatprep.subr.bf16.mxu0 0
  %4543 = vmatpush1.bf16.msra.mxu0 %v3235
  %4544 = vmatprep.subr.bf16.mxu0 0
  %4545 = vmatpush1.bf16.msra.mxu0 %v3234
  %4546 = vmatprep.subr.bf16.mxu0 0
  %4547 = vmatpush1.bf16.msra.mxu0 %v3233
  %4548 = vmatprep.subr.bf16.mxu0 0
  %4549 = vmatpush1.bf16.msra.mxu0 %v3232
  %4550 = vmatprep.subr.bf16.mxu0 0
  %4551 = vmatpush1.bf16.msra.mxu0 %v3231
  %4552 = vmatprep.subr.bf16.mxu0 0
  %4553 = vmatpush1.bf16.msra.mxu0 %v3230
  %4554 = vmatprep.subr.bf16.mxu0 0
  %4555 = vmatpush1.bf16.msra.mxu0 %v3229
  %4556 = vmatprep.subr.bf16.mxu0 0
  %4557 = vmatpush1.bf16.msra.mxu0 %v3228
  %4558 = vmatprep.subr.bf16.mxu0 0
  %4559 = vmatpush2.bf16.msra.mxu0 %v3243
  %4560 = vmatprep.subr.bf16.mxu0 0
  %4561 = vmatpush2.bf16.msra.mxu0 %v3242
  %4562 = vmatprep.subr.bf16.mxu0 0
  %4563 = vmatpush2.bf16.msra.mxu0 %v3241
  %4564 = vmatprep.subr.bf16.mxu0 0
  %4565 = vmatpush2.bf16.msra.mxu0 %v3240
  %4566 = vmatprep.subr.bf16.mxu0 0
  %4567 = vmatpush2.bf16.msra.mxu0 %v3239
  %4568 = vmatprep.subr.bf16.mxu0 0
  %4569 = vmatpush2.bf16.msra.mxu0 %v3238
  %4570 = vmatprep.subr.bf16.mxu0 0
  %4571 = vmatpush2.bf16.msra.mxu0 %v3237
  %4572 = vmatprep.subr.bf16.mxu0 0
  %4573 = vmatpush2.bf16.msra.mxu0 %v3236
  %4574 = vmatprep.mubr.bf16.mxu0 %v1141
  %4575 = vmatmul.mubr.bf16.gmra.mxu0 %v1140
  %v4576 = vpop.f32.mrf.mxu0
  %v4577 = vadd.f32 %v4536, %v4576
  %v4578 = vpop.f32.mrf.mxu0
  %v4579 = vpop.f32.mrf.mxu0
  %v4580 = vadd.f32 %v4539, %v4579
  %v4581 = vpop.f32.mrf.mxu0
  %4582 = vdwg.mxu0
  %4583 = vmatprep.subr.bf16.mxu0 0
  %4584 = vmatpush1.bf16.msra.mxu0 %v3251
  %4585 = vmatprep.subr.bf16.mxu0 0
  %4586 = vmatpush1.bf16.msra.mxu0 %v3250
  %4587 = vmatprep.subr.bf16.mxu0 0
  %4588 = vmatpush1.bf16.msra.mxu0 %v3249
  %4589 = vmatprep.subr.bf16.mxu0 0
  %4590 = vmatpush1.bf16.msra.mxu0 %v3248
  %4591 = vmatprep.subr.bf16.mxu0 0
  %4592 = vmatpush1.bf16.msra.mxu0 %v3247
  %4593 = vmatprep.subr.bf16.mxu0 0
  %4594 = vmatpush1.bf16.msra.mxu0 %v3246
  %4595 = vmatprep.subr.bf16.mxu0 0
  %4596 = vmatpush1.bf16.msra.mxu0 %v3245
  %4597 = vmatprep.subr.bf16.mxu0 0
  %4598 = vmatpush1.bf16.msra.mxu0 %v3244
  %4599 = vmatprep.subr.bf16.mxu0 0
  %4600 = vmatpush2.bf16.msra.mxu0 %v3259
  %4601 = vmatprep.subr.bf16.mxu0 0
  %4602 = vmatpush2.bf16.msra.mxu0 %v3258
  %4603 = vmatprep.subr.bf16.mxu0 0
  %4604 = vmatpush2.bf16.msra.mxu0 %v3257
  %4605 = vmatprep.subr.bf16.mxu0 0
  %4606 = vmatpush2.bf16.msra.mxu0 %v3256
  %4607 = vmatprep.subr.bf16.mxu0 0
  %4608 = vmatpush2.bf16.msra.mxu0 %v3255
  %4609 = vmatprep.subr.bf16.mxu0 0
  %4610 = vmatpush2.bf16.msra.mxu0 %v3254
  %4611 = vmatprep.subr.bf16.mxu0 0
  %4612 = vmatpush2.bf16.msra.mxu0 %v3253
  %4613 = vmatprep.subr.bf16.mxu0 0
  %4614 = vmatpush2.bf16.msra.mxu0 %v3252
  %4615 = vmatprep.mubr.bf16.mxu0 %v1143
  %4616 = vmatmul.mubr.bf16.gmra.mxu0 %v1142
  %v4617 = vpop.f32.mrf.mxu0
  %v4618 = vadd.f32 %v4577, %v4617
  %v4619 = vpop.f32.mrf.mxu0
  %v4620 = vpop.f32.mrf.mxu0
  %v4621 = vadd.f32 %v4580, %v4620
  %v4622 = vpop.f32.mrf.mxu0
  %4623 = vdwg.mxu0
  %4624 = vmatprep.subr.bf16.mxu0 0
  %4625 = vmatpush1.bf16.msra.mxu0 %v3267
  %4626 = vmatprep.subr.bf16.mxu0 0
  %4627 = vmatpush1.bf16.msra.mxu0 %v3266
  %4628 = vmatprep.subr.bf16.mxu0 0
  %4629 = vmatpush1.bf16.msra.mxu0 %v3265
  %4630 = vmatprep.subr.bf16.mxu0 0
  %4631 = vmatpush1.bf16.msra.mxu0 %v3264
  %4632 = vmatprep.subr.bf16.mxu0 0
  %4633 = vmatpush1.bf16.msra.mxu0 %v3263
  %4634 = vmatprep.subr.bf16.mxu0 0
  %4635 = vmatpush1.bf16.msra.mxu0 %v3262
  %4636 = vmatprep.subr.bf16.mxu0 0
  %4637 = vmatpush1.bf16.msra.mxu0 %v3261
  %4638 = vmatprep.subr.bf16.mxu0 0
  %4639 = vmatpush1.bf16.msra.mxu0 %v3260
  %4640 = vmatprep.subr.bf16.mxu0 0
  %4641 = vmatpush2.bf16.msra.mxu0 %v3275
  %4642 = vmatprep.subr.bf16.mxu0 0
  %4643 = vmatpush2.bf16.msra.mxu0 %v3274
  %4644 = vmatprep.subr.bf16.mxu0 0
  %4645 = vmatpush2.bf16.msra.mxu0 %v3273
  %4646 = vmatprep.subr.bf16.mxu0 0
  %4647 = vmatpush2.bf16.msra.mxu0 %v3272
  %4648 = vmatprep.subr.bf16.mxu0 0
  %4649 = vmatpush2.bf16.msra.mxu0 %v3271
  %4650 = vmatprep.subr.bf16.mxu0 0
  %4651 = vmatpush2.bf16.msra.mxu0 %v3270
  %4652 = vmatprep.subr.bf16.mxu0 0
  %4653 = vmatpush2.bf16.msra.mxu0 %v3269
  %4654 = vmatprep.subr.bf16.mxu0 0
  %4655 = vmatpush2.bf16.msra.mxu0 %v3268
  %4656 = vmatprep.mubr.bf16.mxu0 %v1145
  %4657 = vmatmul.mubr.bf16.gmra.mxu0 %v1144
  %v4658 = vpop.f32.mrf.mxu0
  %v4659 = vadd.f32 %v4618, %v4658
  %v4660 = vpop.f32.mrf.mxu0
  %v4661 = vpop.f32.mrf.mxu0
  %v4662 = vadd.f32 %v4621, %v4661
  %v4663 = vpop.f32.mrf.mxu0
  %4664 = vdwg.mxu0
  %4665 = vmatprep.subr.bf16.mxu0 0
  %4666 = vmatpush1.bf16.msra.mxu0 %v3283
  %4667 = vmatprep.subr.bf16.mxu0 0
  %4668 = vmatpush1.bf16.msra.mxu0 %v3282
  %4669 = vmatprep.subr.bf16.mxu0 0
  %4670 = vmatpush1.bf16.msra.mxu0 %v3281
  %4671 = vmatprep.subr.bf16.mxu0 0
  %4672 = vmatpush1.bf16.msra.mxu0 %v3280
  %4673 = vmatprep.subr.bf16.mxu0 0
  %4674 = vmatpush1.bf16.msra.mxu0 %v3279
  %4675 = vmatprep.subr.bf16.mxu0 0
  %4676 = vmatpush1.bf16.msra.mxu0 %v3278
  %4677 = vmatprep.subr.bf16.mxu0 0
  %4678 = vmatpush1.bf16.msra.mxu0 %v3277
  %4679 = vmatprep.subr.bf16.mxu0 0
  %4680 = vmatpush1.bf16.msra.mxu0 %v3276
  %4681 = vmatprep.subr.bf16.mxu0 0
  %4682 = vmatpush2.bf16.msra.mxu0 %v3291
  %4683 = vmatprep.subr.bf16.mxu0 0
  %4684 = vmatpush2.bf16.msra.mxu0 %v3290
  %4685 = vmatprep.subr.bf16.mxu0 0
  %4686 = vmatpush2.bf16.msra.mxu0 %v3289
  %4687 = vmatprep.subr.bf16.mxu0 0
  %4688 = vmatpush2.bf16.msra.mxu0 %v3288
  %4689 = vmatprep.subr.bf16.mxu0 0
  %4690 = vmatpush2.bf16.msra.mxu0 %v3287
  %4691 = vmatprep.subr.bf16.mxu0 0
  %4692 = vmatpush2.bf16.msra.mxu0 %v3286
  %4693 = vmatprep.subr.bf16.mxu0 0
  %4694 = vmatpush2.bf16.msra.mxu0 %v3285
  %4695 = vmatprep.subr.bf16.mxu0 0
  %4696 = vmatpush2.bf16.msra.mxu0 %v3284
  %4697 = vmatprep.mubr.bf16.mxu0 %v1147
  %4698 = vmatmul.mubr.bf16.gmra.mxu0 %v1146
  %v4699 = vpop.f32.mrf.mxu0
  %v4700 = vadd.f32 %v4659, %v4699
  %v4701 = vpop.f32.mrf.mxu0
  %v4702 = vpop.f32.mrf.mxu0
  %v4703 = vadd.f32 %v4662, %v4702
  %v4704 = vpop.f32.mrf.mxu0
  %4705 = vdwg.mxu0
  %4706 = vmatprep.subr.bf16.mxu0 0
  %4707 = vmatpush1.bf16.msra.mxu0 %v3299
  %4708 = vmatprep.subr.bf16.mxu0 0
  %4709 = vmatpush1.bf16.msra.mxu0 %v3298
  %4710 = vmatprep.subr.bf16.mxu0 0
  %4711 = vmatpush1.bf16.msra.mxu0 %v3297
  %4712 = vmatprep.subr.bf16.mxu0 0
  %4713 = vmatpush1.bf16.msra.mxu0 %v3296
  %4714 = vmatprep.subr.bf16.mxu0 0
  %4715 = vmatpush1.bf16.msra.mxu0 %v3295
  %4716 = vmatprep.subr.bf16.mxu0 0
  %4717 = vmatpush1.bf16.msra.mxu0 %v3294
  %4718 = vmatprep.subr.bf16.mxu0 0
  %4719 = vmatpush1.bf16.msra.mxu0 %v3293
  %4720 = vmatprep.subr.bf16.mxu0 0
  %4721 = vmatpush1.bf16.msra.mxu0 %v3292
  %4722 = vmatprep.subr.bf16.mxu0 0
  %4723 = vmatpush2.bf16.msra.mxu0 %v3307
  %4724 = vmatprep.subr.bf16.mxu0 0
  %4725 = vmatpush2.bf16.msra.mxu0 %v3306
  %4726 = vmatprep.subr.bf16.mxu0 0
  %4727 = vmatpush2.bf16.msra.mxu0 %v3305
  %4728 = vmatprep.subr.bf16.mxu0 0
  %4729 = vmatpush2.bf16.msra.mxu0 %v3304
  %4730 = vmatprep.subr.bf16.mxu0 0
  %4731 = vmatpush2.bf16.msra.mxu0 %v3303
  %4732 = vmatprep.subr.bf16.mxu0 0
  %4733 = vmatpush2.bf16.msra.mxu0 %v3302
  %4734 = vmatprep.subr.bf16.mxu0 0
  %4735 = vmatpush2.bf16.msra.mxu0 %v3301
  %4736 = vmatprep.subr.bf16.mxu0 0
  %4737 = vmatpush2.bf16.msra.mxu0 %v3300
  %4738 = vmatprep.mubr.bf16.mxu0 %v1149
  %4739 = vmatmul.mubr.bf16.gmra.mxu0 %v1148
  %v4740 = vpop.f32.mrf.mxu0
  %v4741 = vadd.f32 %v4700, %v4740
  %v4742 = vpop.f32.mrf.mxu0
  %v4743 = vpop.f32.mrf.mxu0
  %v4744 = vadd.f32 %v4703, %v4743
  %v4745 = vpop.f32.mrf.mxu0
  %4746 = vdwg.mxu0
  %4747 = vmatprep.subr.bf16.mxu0 0
  %4748 = vmatpush1.bf16.msra.mxu0 %v3315
  %4749 = vmatprep.subr.bf16.mxu0 0
  %4750 = vmatpush1.bf16.msra.mxu0 %v3314
  %4751 = vmatprep.subr.bf16.mxu0 0
  %4752 = vmatpush1.bf16.msra.mxu0 %v3313
  %4753 = vmatprep.subr.bf16.mxu0 0
  %4754 = vmatpush1.bf16.msra.mxu0 %v3312
  %4755 = vmatprep.subr.bf16.mxu0 0
  %4756 = vmatpush1.bf16.msra.mxu0 %v3311
  %4757 = vmatprep.subr.bf16.mxu0 0
  %4758 = vmatpush1.bf16.msra.mxu0 %v3310
  %4759 = vmatprep.subr.bf16.mxu0 0
  %4760 = vmatpush1.bf16.msra.mxu0 %v3309
  %4761 = vmatprep.subr.bf16.mxu0 0
  %4762 = vmatpush1.bf16.msra.mxu0 %v3308
  %4763 = vmatprep.subr.bf16.mxu0 0
  %4764 = vmatpush2.bf16.msra.mxu0 %v3323
  %4765 = vmatprep.subr.bf16.mxu0 0
  %4766 = vmatpush2.bf16.msra.mxu0 %v3322
  %4767 = vmatprep.subr.bf16.mxu0 0
  %4768 = vmatpush2.bf16.msra.mxu0 %v3321
  %4769 = vmatprep.subr.bf16.mxu0 0
  %4770 = vmatpush2.bf16.msra.mxu0 %v3320
  %4771 = vmatprep.subr.bf16.mxu0 0
  %4772 = vmatpush2.bf16.msra.mxu0 %v3319
  %4773 = vmatprep.subr.bf16.mxu0 0
  %4774 = vmatpush2.bf16.msra.mxu0 %v3318
  %4775 = vmatprep.subr.bf16.mxu0 0
  %4776 = vmatpush2.bf16.msra.mxu0 %v3317
  %4777 = vmatprep.subr.bf16.mxu0 0
  %4778 = vmatpush2.bf16.msra.mxu0 %v3316
  %4779 = vmatprep.mubr.bf16.mxu0 %v1151
  %4780 = vmatmul.mubr.bf16.gmra.mxu0 %v1150
  %v4781 = vpop.f32.mrf.mxu0
  %v4782 = vadd.f32 %v4741, %v4781
  %v4783 = vpop.f32.mrf.mxu0
  %v4784 = vpop.f32.mrf.mxu0
  %v4785 = vadd.f32 %v4744, %v4784
  %v4786 = vpop.f32.mrf.mxu0
  %4787 = vdwg.mxu0
  %4788 = vmatprep.subr.bf16.mxu0 0
  %4789 = vmatpush1.bf16.msra.mxu0 %v3331
  %4790 = vmatprep.subr.bf16.mxu0 0
  %4791 = vmatpush1.bf16.msra.mxu0 %v3330
  %4792 = vmatprep.subr.bf16.mxu0 0
  %4793 = vmatpush1.bf16.msra.mxu0 %v3329
  %4794 = vmatprep.subr.bf16.mxu0 0
  %4795 = vmatpush1.bf16.msra.mxu0 %v3328
  %4796 = vmatprep.subr.bf16.mxu0 0
  %4797 = vmatpush1.bf16.msra.mxu0 %v3327
  %4798 = vmatprep.subr.bf16.mxu0 0
  %4799 = vmatpush1.bf16.msra.mxu0 %v3326
  %4800 = vmatprep.subr.bf16.mxu0 0
  %4801 = vmatpush1.bf16.msra.mxu0 %v3325
  %4802 = vmatprep.subr.bf16.mxu0 0
  %4803 = vmatpush1.bf16.msra.mxu0 %v3324
  %4804 = vmatprep.subr.bf16.mxu0 0
  %4805 = vmatpush2.bf16.msra.mxu0 %v3339
  %4806 = vmatprep.subr.bf16.mxu0 0
  %4807 = vmatpush2.bf16.msra.mxu0 %v3338
  %4808 = vmatprep.subr.bf16.mxu0 0
  %4809 = vmatpush2.bf16.msra.mxu0 %v3337
  %4810 = vmatprep.subr.bf16.mxu0 0
  %4811 = vmatpush2.bf16.msra.mxu0 %v3336
  %4812 = vmatprep.subr.bf16.mxu0 0
  %4813 = vmatpush2.bf16.msra.mxu0 %v3335
  %4814 = vmatprep.subr.bf16.mxu0 0
  %4815 = vmatpush2.bf16.msra.mxu0 %v3334
  %4816 = vmatprep.subr.bf16.mxu0 0
  %4817 = vmatpush2.bf16.msra.mxu0 %v3333
  %4818 = vmatprep.subr.bf16.mxu0 0
  %4819 = vmatpush2.bf16.msra.mxu0 %v3332
  %4820 = vmatprep.mubr.bf16.mxu0 %v1153
  %4821 = vmatmul.mubr.bf16.gmra.mxu0 %v1152
  %v4822 = vpop.f32.mrf.mxu0
  %v4823 = vadd.f32 %v4782, %v4822
  %v4824 = vpop.f32.mrf.mxu0
  %v4825 = vpop.f32.mrf.mxu0
  %v4826 = vadd.f32 %v4785, %v4825
  %v4827 = vpop.f32.mrf.mxu0
  %4828 = vdwg.mxu0
  %4829 = vmatprep.subr.bf16.mxu0 0
  %4830 = vmatpush1.bf16.msra.mxu0 %v3347
  %4831 = vmatprep.subr.bf16.mxu0 0
  %4832 = vmatpush1.bf16.msra.mxu0 %v3346
  %4833 = vmatprep.subr.bf16.mxu0 0
  %4834 = vmatpush1.bf16.msra.mxu0 %v3345
  %4835 = vmatprep.subr.bf16.mxu0 0
  %4836 = vmatpush1.bf16.msra.mxu0 %v3344
  %4837 = vmatprep.subr.bf16.mxu0 0
  %4838 = vmatpush1.bf16.msra.mxu0 %v3343
  %4839 = vmatprep.subr.bf16.mxu0 0
  %4840 = vmatpush1.bf16.msra.mxu0 %v3342
  %4841 = vmatprep.subr.bf16.mxu0 0
  %4842 = vmatpush1.bf16.msra.mxu0 %v3341
  %4843 = vmatprep.subr.bf16.mxu0 0
  %4844 = vmatpush1.bf16.msra.mxu0 %v3340
  %4845 = vmatprep.subr.bf16.mxu0 0
  %4846 = vmatpush2.bf16.msra.mxu0 %v3355
  %4847 = vmatprep.subr.bf16.mxu0 0
  %4848 = vmatpush2.bf16.msra.mxu0 %v3354
  %4849 = vmatprep.subr.bf16.mxu0 0
  %4850 = vmatpush2.bf16.msra.mxu0 %v3353
  %4851 = vmatprep.subr.bf16.mxu0 0
  %4852 = vmatpush2.bf16.msra.mxu0 %v3352
  %4853 = vmatprep.subr.bf16.mxu0 0
  %4854 = vmatpush2.bf16.msra.mxu0 %v3351
  %4855 = vmatprep.subr.bf16.mxu0 0
  %4856 = vmatpush2.bf16.msra.mxu0 %v3350
  %4857 = vmatprep.subr.bf16.mxu0 0
  %4858 = vmatpush2.bf16.msra.mxu0 %v3349
  %4859 = vmatprep.subr.bf16.mxu0 0
  %4860 = vmatpush2.bf16.msra.mxu0 %v3348
  %4861 = vmatprep.mubr.bf16.mxu0 %v1155
  %4862 = vmatmul.mubr.bf16.gmra.mxu0 %v1154
  %v4863 = vpop.f32.mrf.mxu0
  %v4864 = vadd.f32 %v4823, %v4863
  %v4865 = vpop.f32.mrf.mxu0
  %v4866 = vpop.f32.mrf.mxu0
  %v4867 = vadd.f32 %v4826, %v4866
  %v4868 = vpop.f32.mrf.mxu0
  %4869 = vdwg.mxu0
  %4870 = vmatprep.subr.bf16.mxu0 0
  %4871 = vmatpush1.bf16.msra.mxu0 %v3363
  %4872 = vmatprep.subr.bf16.mxu0 0
  %4873 = vmatpush1.bf16.msra.mxu0 %v3362
  %4874 = vmatprep.subr.bf16.mxu0 0
  %4875 = vmatpush1.bf16.msra.mxu0 %v3361
  %4876 = vmatprep.subr.bf16.mxu0 0
  %4877 = vmatpush1.bf16.msra.mxu0 %v3360
  %4878 = vmatprep.subr.bf16.mxu0 0
  %4879 = vmatpush1.bf16.msra.mxu0 %v3359
  %4880 = vmatprep.subr.bf16.mxu0 0
  %4881 = vmatpush1.bf16.msra.mxu0 %v3358
  %4882 = vmatprep.subr.bf16.mxu0 0
  %4883 = vmatpush1.bf16.msra.mxu0 %v3357
  %4884 = vmatprep.subr.bf16.mxu0 0
  %4885 = vmatpush1.bf16.msra.mxu0 %v3356
  %4886 = vmatprep.subr.bf16.mxu0 0
  %4887 = vmatpush2.bf16.msra.mxu0 %v3371
  %4888 = vmatprep.subr.bf16.mxu0 0
  %4889 = vmatpush2.bf16.msra.mxu0 %v3370
  %4890 = vmatprep.subr.bf16.mxu0 0
  %4891 = vmatpush2.bf16.msra.mxu0 %v3369
  %4892 = vmatprep.subr.bf16.mxu0 0
  %4893 = vmatpush2.bf16.msra.mxu0 %v3368
  %4894 = vmatprep.subr.bf16.mxu0 0
  %4895 = vmatpush2.bf16.msra.mxu0 %v3367
  %4896 = vmatprep.subr.bf16.mxu0 0
  %4897 = vmatpush2.bf16.msra.mxu0 %v3366
  %4898 = vmatprep.subr.bf16.mxu0 0
  %4899 = vmatpush2.bf16.msra.mxu0 %v3365
  %4900 = vmatprep.subr.bf16.mxu0 0
  %4901 = vmatpush2.bf16.msra.mxu0 %v3364
  %4902 = vmatprep.mubr.bf16.mxu0 %v1157
  %4903 = vmatmul.mubr.bf16.gmra.mxu0 %v1156
  %v4904 = vpop.f32.mrf.mxu0
  %v4905 = vadd.f32 %v4864, %v4904
  %v4906 = vpop.f32.mrf.mxu0
  %v4907 = vpop.f32.mrf.mxu0
  %v4908 = vadd.f32 %v4867, %v4907
  %v4909 = vpop.f32.mrf.mxu0
  %4910 = vdwg.mxu0
  %v4911 = vxor.u32 %v4905, 2147483648
  %v4912 = vxor.u32 %v4908, 2147483648
  %v4913 = vmul.f32 %v4911, 1.442695
  %v4914 = vpow.pop %v4913
  %v4915 = vmul.f32 %v4912, 1.442695
  %v4916 = vpow.pop %v4915
  %v4917 = vadd.f32 %v4914, 1.0
  %v4918 = vadd.f32 %v4916, 1.0
  %v4919 = vrcp.pop %v4917
  %v4920 = vmul.f32 1.0, %v4919
  %v4921 = vrcp.pop %v4918
  %v4922 = vmul.f32 1.0, %v4921
  %vm4923 = vcmask 7168
  %4924 = vst.msk [vmem:[%s3] sm:$0xff] %vm4923, %v4920
  %4925 = vst.msk [vmem:[%s3 + $0x8] sm:$0xff] %vm4923, %v4922
  // Predicated region
  $region14: #{discriminator_forward.7} parent=0 // pred_check
    _
  $region15: #{discriminator_forward.7} parent=0 // pred_check_branch
    %4927 = sbr.rel (0) target = $region17
  $region16: #{discriminator_forward.7} parent=0 // pred_region
    _
  $region17: #{discriminator_forward.7} parent=0 // pred_fallthru
    _
  // Predicated region
  $region18: #{discriminator_forward.7} parent=0 // pred_check
    _
  $region19: #{discriminator_forward.7} parent=0 // pred_check_branch
    %4929 = sbr.rel (0) target = $region21
  $region20: #{discriminator_forward.7} parent=0 // pred_region
    _
  $region21: #{discriminator_forward.7} parent=0 // pred_fallthru
    _

</llo_original>
